<compile_context>
chip_gen: v6e
topology: v6e:2x2x1
jax: 0.10.0
libtpu: 0.0.40
codegen_flags: <defaults>
</compile_context>

<pallas_src>
import math
from functools import partial

import jax
import jax.numpy as jnp
from jax.experimental import pallas as pl
from jax.experimental.pallas import tpu as pltpu


def _round_up(n, m):
    return (n + m - 1) // m * m


# ---------------------------------------------------------------------------
# Pallas kernel
# ---------------------------------------------------------------------------

def _attn_kernel(x_ref, wkqv_ref, bkqv_ref, wo_ref, bo_ref, o_ref, *, depth, shrink):
    """Residual depth-attention for one (batch, pixel-tile) block.

    x_ref / o_ref : (C*D, HWb)  native NCDHW row order (row = c*D + d), pixels on lanes
    wkqv_ref      : (3*D*S, C*D) bf16   depth-block-diagonal fused K/Q/V weight
    bkqv_ref      : (3*D*S, 1)   f32
    wo_ref        : (C*D, D*S)   bf16   depth-block-diagonal output weight
    bo_ref        : (C*D, 1)     f32
    """
    D, S = depth, shrink
    DS = D * S
    inv_sqrt_s = 1.0 / math.sqrt(S)

    x = x_ref[...]                                        # (C*D, HWb) f32

    # Fused K/Q/V projection *and* depth un-interleave in one MXU matmul:
    # kqv rows are ordered (g, d, s) with g in {k, q, v}.
    kqv = jnp.dot(wkqv_ref[...], x.astype(jnp.bfloat16),
                  preferred_element_type=jnp.float32) + bkqv_ref[...]      # (3*D*S, HWb)
    k = kqv[0:DS]                                         # rows d*S + s
    q = kqv[DS:2 * DS]
    v = kqv[2 * DS:3 * DS]

    # Streaming softmax over the output depth j.  Every intermediate keeps the pixel
    # axis (HWb, multiple of 128) on lanes -> fully lane-dense VPU/EUP work.
    ctx_parts = []
    for j in range(D):
        qj = q[j * S:(j + 1) * S]                                           # (S, HWb)
        rows = [jnp.sum(k[i * S:(i + 1) * S] * qj, axis=0, keepdims=True)
                for i in range(D)]
        sj = jnp.concatenate(rows, axis=0) * inv_sqrt_s                     # (D, HWb)
        m = jnp.max(sj, axis=0, keepdims=True)                              # (1, HWb)
        e = jnp.exp(sj - m)                                                 # (D, HWb)
        denom = jnp.sum(e, axis=0, keepdims=True)                           # (1, HWb)
        aj = e * pl.reciprocal(denom, approx=True)                          # softmax over i
        cj = aj[0:1] * v[0:S]
        for i in range(1, D):
            cj = cj + aj[i:i + 1] * v[i * S:(i + 1) * S]
        ctx_parts.append(cj)                                                # (S, HWb)
    ctx = jnp.concatenate(ctx_parts, axis=0)                                # (D*S, HWb)

    # Output projection *and* depth re-interleave in one MXU matmul, then one bias add,
    # one residual add and a single full lane-dense store in native layout.
    out = jnp.dot(wo_ref[...], ctx.astype(jnp.bfloat16),
                  preferred_element_type=jnp.float32) + bo_ref[...]         # (C*D, HWb)
    o_ref[...] = x + out


# ---------------------------------------------------------------------------
# Wrapper
# ---------------------------------------------------------------------------

def attention_layer(x, params, *, pixel_block=1024):
    """Attention_layer.forward with PyTorch layout.

    x: (B, C, D, H, W) float32;  returns the same shape.
    params: wk/wq/wv (S, C), bk/bq/bv (S,), wo (C, S), bo (C,), S = C // 2
            (weights are the squeezed 1x1x1 Conv3d kernels: w[out, in]).
    """
    B, C, D, H, W = x.shape
    assert C % 2 == 0
    S = C // 2
    HW = H * W
    CD = C * D
    DS = D * S

    # --- lane-tile selection: power-of-two multiple of 128, capped by a VMEM budget ---
    budget = 28 * 2 ** 20                   # conservative (v7x default scoped VMEM is 32 MiB)
    hwb = 128
    while hwb * 2 <= pixel_block and 10 * CD * (hwb * 2) * 4 <= budget:
        hwb *= 2
    if HW <= hwb:
        hwp = _round_up(HW, 128)
        hwb = hwp
    else:
        hwp = _round_up(HW, hwb)

    # Free reshape: NCDHW is contiguous, so (B, C, D, H, W) -> (B, C*D, H*W) is metadata-only.
    x2 = x.reshape(B, CD, HW).astype(jnp.float32)
    if hwp != HW:
        x2 = jnp.pad(x2, ((0, 0), (0, 0), (0, hwp - HW)))

    # --- expand the 1x1x1 conv weights into depth-block-diagonal matrices (bf16, resident) ---
    eye = jnp.eye(D, dtype=jnp.float32)

    def expand_in(w):    # (S, C) -> (D*S, C*D): rows d*S+s, cols c*D+e, nonzero iff d == e
        return jnp.einsum('sc,de->dsce', w.astype(jnp.float32), eye).reshape(DS, CD)

    def expand_out(w):   # (C, S) -> (C*D, D*S): rows c*D+d, cols e*S+s, nonzero iff d == e
        return jnp.einsum('cs,de->cdes', w.astype(jnp.float32), eye).reshape(CD, DS)

    wkqv = jnp.concatenate([expand_in(params['wk']), expand_in(params['wq']),
                            expand_in(params['wv'])], axis=0).astype(jnp.bfloat16)
    bkqv = jnp.concatenate([jnp.tile(params['bk'], D), jnp.tile(params['bq'], D),
                            jnp.tile(params['bv'], D)]).reshape(3 * DS, 1).astype(jnp.float32)
    wo_big = expand_out(params['wo']).astype(jnp.bfloat16)
    bo_big = jnp.repeat(params['bo'], D).reshape(CD, 1).astype(jnp.float32)

    grid = (B, hwp // hwb)
    kernel = partial(_attn_kernel, depth=D, shrink=S)

    y = pl.pallas_call(
        kernel,
        out_shape=jax.ShapeDtypeStruct((B, CD, hwp), jnp.float32),
        grid=grid,
        in_specs=[
            pl.BlockSpec((None, CD, hwb), lambda b, t: (b, 0, t)),   # x, native layout
            pl.BlockSpec((3 * DS, CD), lambda b, t: (0, 0)),         # fused KQV weight
            pl.BlockSpec((3 * DS, 1), lambda b, t: (0, 0)),
            pl.BlockSpec((CD, DS), lambda b, t: (0, 0)),             # output weight
            pl.BlockSpec((CD, 1), lambda b, t: (0, 0)),
        ],
        out_specs=pl.BlockSpec((None, CD, hwb), lambda b, t: (b, 0, t)),
        compiler_params=pltpu.CompilerParams(
            dimension_semantics=("parallel", "parallel")),
    )(x2, wkqv, bkqv, wo_big, bo_big)

    y = y[:, :, :HW].reshape(B, C, D, H, W)
    return y


# ---------------------------------------------------------------------------
# Pure-JAX reference (mirrors the PyTorch math; same bf16 matmul casts)
# ---------------------------------------------------------------------------

def attention_layer_ref(x, params):
    B, C, D, H, W = x.shape
    S = C // 2
    bf = jnp.bfloat16
    xf = x.astype(jnp.float32)

    def conv(w, b):  # 1x1x1 Conv3d == per-position channel matmul
        o = jnp.einsum('oc,bcdhw->bodhw', w.astype(bf), xf.astype(bf),
                       preferred_element_type=jnp.float32)
        return o + b[None, :, None, None, None]

    k = conv(params['wk'], params['bk'])        # (B, S, D, H, W)
    q = conv(params['wq'], params['bq'])
    v = conv(params['wv'], params['bv'])

    scores = jnp.einsum('bsihw,bsjhw->bhwij', k, q) / math.sqrt(S)
    a = jax.nn.softmax(scores, axis=3)          # softmax over the K-depth i
    ctx = jnp.einsum('bsihw,bhwij->bsjhw', v, a)
    out = jnp.einsum('cs,bsjhw->bcjhw', params['wo'].astype(bf), ctx.astype(bf),
                     preferred_element_type=jnp.float32)
    out = out + params['bo'][None, :, None, None, None]
    return xf + out


# ---------------------------------------------------------------------------
# Deterministic synthetic parameters + demo
# ---------------------------------------------------------------------------

def init_params(key, ch_in):
    s = ch_in // 2
    ks = jax.random.split(key, 8)

    def w(k, cout, cin):
        return jax.random.normal(k, (cout, cin), jnp.float32) / math.sqrt(cin)

    def b(k, c):
        return jax.random.normal(k, (c,), jnp.float32) * 0.05

    return dict(wk=w(ks[0], s, ch_in), bk=b(ks[1], s),
                wq=w(ks[2], s, ch_in), bq=b(ks[3], s),
                wv=w(ks[4], s, ch_in), bv=b(ks[5], s),
                wo=w(ks[6], ch_in, s), bo=b(ks[7], ch_in))


if __name__ == "__main__":
    key = jax.random.PRNGKey(0)
    kx, kp = jax.random.split(key)

    # (B, C, D, H, W): ch_in=64 -> shrink=32, 8 lights, 16x16 spatial.
    B, C, D, H, W = 2, 64, 8, 16, 16
    x = jax.random.normal(kx, (B, C, D, H, W), jnp.float32)
    params = init_params(kp, C)

    fwd = jax.jit(attention_layer)
    y = jax.block_until_ready(fwd(x, params))

    assert y.shape == (B, C, D, H, W), y.shape
    assert bool(jnp.all(jnp.isfinite(y)))

    y_ref = jax.block_until_ready(jax.jit(attention_layer_ref)(x, params))
    err = float(jnp.max(jnp.abs(y - y_ref)))
    assert err < 5e-2, f"max abs diff vs reference: {err}"

    print("KERNEL_OK")
</pallas_src>

<mosaic_0001>
module attributes {stable_mosaic.version = 11 : i64} {
  func.func @_attn_kernel(%arg0: i32, %arg1: i32, %arg2: memref<1x512x256xf32, #tpu.memory_space<vmem>>, %arg3: memref<768x512xbf16, #tpu.memory_space<vmem>>, %arg4: memref<768x1xf32, #tpu.memory_space<vmem>>, %arg5: memref<512x256xbf16, #tpu.memory_space<vmem>>, %arg6: memref<512x1xf32, #tpu.memory_space<vmem>>, %arg7: memref<1x512x256xf32, #tpu.memory_space<vmem>>) attributes {dimension_semantics = [#tpu.dimension_semantics<parallel>, #tpu.dimension_semantics<parallel>], iteration_bounds = array<i64: 2, 1>, scalar_prefetch = 0 : i64, scratch_operands = 0 : i64, tpu.core_type = #tpu.core_type<tc>, window_params = [{transform_indices = @transform_0, window_bounds = array<i64: 1, 512, 256>}, {pipeline_mode = #tpu.pipeline_mode<synchronous>, transform_indices = @transform_1, window_bounds = array<i64: 768, 512>}, {pipeline_mode = #tpu.pipeline_mode<synchronous>, transform_indices = @transform_2, window_bounds = array<i64: 768, 1>}, {pipeline_mode = #tpu.pipeline_mode<synchronous>, transform_indices = @transform_3, window_bounds = array<i64: 512, 256>}, {pipeline_mode = #tpu.pipeline_mode<synchronous>, transform_indices = @transform_4, window_bounds = array<i64: 512, 1>}, {transform_indices = @transform_5, window_bounds = array<i64: 1, 512, 256>}]} {
    %c0 = arith.constant 0 : index
    %c0_0 = arith.constant 0 : index
    %c0_1 = arith.constant 0 : index
    %0 = vector.load %arg2[%c0, %c0_0, %c0_1] : memref<1x512x256xf32, #tpu.memory_space<vmem>>, vector<1x512x256xf32>
    %1 = vector.shape_cast %0 : vector<1x512x256xf32> to vector<512x256xf32>
    %c0_2 = arith.constant 0 : index
    %c0_3 = arith.constant 0 : index
    %2 = vector.load %arg3[%c0_2, %c0_3] : memref<768x512xbf16, #tpu.memory_space<vmem>>, vector<768x512xbf16>
    %3 = arith.truncf %1 : vector<512x256xf32> to vector<512x256xbf16>
    %cst = arith.constant dense<0.000000e+00> : vector<768x256xf32>
    %4 = tpu.matmul %2, %3, %cst {dimension_numbers = #tpu.dot_dimension_numbers<[1], [0], [0], [1], [0, 0, 1, 1], [], []>} : vector<768x512xbf16>, vector<512x256xbf16>, vector<768x256xf32> -> vector<768x256xf32>
    %c0_4 = arith.constant 0 : index
    %c0_5 = arith.constant 0 : index
    %5 = vector.load %arg4[%c0_4, %c0_5] : memref<768x1xf32, #tpu.memory_space<vmem>>, vector<768x1xf32>
    %6 = vector.broadcast %5 : vector<768x1xf32> to vector<768x256xf32>
    %7 = arith.addf %4, %6 : vector<768x256xf32>
    %8 = vector.extract_strided_slice %7 {offsets = [0, 0], sizes = [256, 256], strides = [1, 1]} : vector<768x256xf32> to vector<256x256xf32>
    %9 = vector.extract_strided_slice %7 {offsets = [256, 0], sizes = [256, 256], strides = [1, 1]} : vector<768x256xf32> to vector<256x256xf32>
    %10 = vector.extract_strided_slice %7 {offsets = [512, 0], sizes = [256, 256], strides = [1, 1]} : vector<768x256xf32> to vector<256x256xf32>
    %11 = vector.extract_strided_slice %9 {offsets = [0, 0], sizes = [32, 256], strides = [1, 1]} : vector<256x256xf32> to vector<32x256xf32>
    %12 = vector.extract_strided_slice %8 {offsets = [0, 0], sizes = [32, 256], strides = [1, 1]} : vector<256x256xf32> to vector<32x256xf32>
    %13 = arith.mulf %12, %11 : vector<32x256xf32>
    %cst_6 = arith.constant dense<0.000000e+00> : vector<256xf32>
    %14 = vector.multi_reduction <add>, %13, %cst_6 [0] : vector<32x256xf32> to vector<256xf32>
    %15 = vector.shape_cast %14 : vector<256xf32> to vector<1x256xf32>
    %16 = vector.extract_strided_slice %8 {offsets = [32, 0], sizes = [32, 256], strides = [1, 1]} : vector<256x256xf32> to vector<32x256xf32>
    %17 = arith.mulf %16, %11 : vector<32x256xf32>
    %cst_7 = arith.constant dense<0.000000e+00> : vector<256xf32>
    %18 = vector.multi_reduction <add>, %17, %cst_7 [0] : vector<32x256xf32> to vector<256xf32>
    %19 = vector.shape_cast %18 : vector<256xf32> to vector<1x256xf32>
    %20 = vector.extract_strided_slice %8 {offsets = [64, 0], sizes = [32, 256], strides = [1, 1]} : vector<256x256xf32> to vector<32x256xf32>
    %21 = arith.mulf %20, %11 : vector<32x256xf32>
    %cst_8 = arith.constant dense<0.000000e+00> : vector<256xf32>
    %22 = vector.multi_reduction <add>, %21, %cst_8 [0] : vector<32x256xf32> to vector<256xf32>
    %23 = vector.shape_cast %22 : vector<256xf32> to vector<1x256xf32>
    %24 = vector.extract_strided_slice %8 {offsets = [96, 0], sizes = [32, 256], strides = [1, 1]} : vector<256x256xf32> to vector<32x256xf32>
    %25 = arith.mulf %24, %11 : vector<32x256xf32>
    %cst_9 = arith.constant dense<0.000000e+00> : vector<256xf32>
    %26 = vector.multi_reduction <add>, %25, %cst_9 [0] : vector<32x256xf32> to vector<256xf32>
    %27 = vector.shape_cast %26 : vector<256xf32> to vector<1x256xf32>
    %28 = vector.extract_strided_slice %8 {offsets = [128, 0], sizes = [32, 256], strides = [1, 1]} : vector<256x256xf32> to vector<32x256xf32>
    %29 = arith.mulf %28, %11 : vector<32x256xf32>
    %cst_10 = arith.constant dense<0.000000e+00> : vector<256xf32>
    %30 = vector.multi_reduction <add>, %29, %cst_10 [0] : vector<32x256xf32> to vector<256xf32>
    %31 = vector.shape_cast %30 : vector<256xf32> to vector<1x256xf32>
    %32 = vector.extract_strided_slice %8 {offsets = [160, 0], sizes = [32, 256], strides = [1, 1]} : vector<256x256xf32> to vector<32x256xf32>
    %33 = arith.mulf %32, %11 : vector<32x256xf32>
    %cst_11 = arith.constant dense<0.000000e+00> : vector<256xf32>
    %34 = vector.multi_reduction <add>, %33, %cst_11 [0] : vector<32x256xf32> to vector<256xf32>
    %35 = vector.shape_cast %34 : vector<256xf32> to vector<1x256xf32>
    %36 = vector.extract_strided_slice %8 {offsets = [192, 0], sizes = [32, 256], strides = [1, 1]} : vector<256x256xf32> to vector<32x256xf32>
    %37 = arith.mulf %36, %11 : vector<32x256xf32>
    %cst_12 = arith.constant dense<0.000000e+00> : vector<256xf32>
    %38 = vector.multi_reduction <add>, %37, %cst_12 [0] : vector<32x256xf32> to vector<256xf32>
    %39 = vector.shape_cast %38 : vector<256xf32> to vector<1x256xf32>
    %40 = vector.extract_strided_slice %8 {offsets = [224, 0], sizes = [32, 256], strides = [1, 1]} : vector<256x256xf32> to vector<32x256xf32>
    %41 = arith.mulf %40, %11 : vector<32x256xf32>
    %cst_13 = arith.constant dense<0.000000e+00> : vector<256xf32>
    %42 = vector.multi_reduction <add>, %41, %cst_13 [0] : vector<32x256xf32> to vector<256xf32>
    %43 = vector.shape_cast %42 : vector<256xf32> to vector<1x256xf32>
    %44 = tpu.concatenate %15, %19, %23, %27, %31, %35, %39, %43 in 0 : vector<1x256xf32>, vector<1x256xf32>, vector<1x256xf32>, vector<1x256xf32>, vector<1x256xf32>, vector<1x256xf32>, vector<1x256xf32>, vector<1x256xf32> -> vector<8x256xf32>
    %cst_14 = arith.constant 0.176776692 : f32
    %45 = vector.broadcast %cst_14 : f32 to vector<8x256xf32>
    %46 = arith.mulf %44, %45 : vector<8x256xf32>
    %cst_15 = arith.constant dense<0xFF800000> : vector<256xf32>
    %47 = vector.multi_reduction <maximumf>, %46, %cst_15 [0] : vector<8x256xf32> to vector<256xf32>
    %48 = vector.shape_cast %47 : vector<256xf32> to vector<1x256xf32>
    %49 = vector.broadcast %48 : vector<1x256xf32> to vector<8x256xf32>
    %50 = arith.subf %46, %49 : vector<8x256xf32>
    %51 = math.exp %50 : vector<8x256xf32>
    %cst_16 = arith.constant dense<0.000000e+00> : vector<256xf32>
    %52 = vector.multi_reduction <add>, %51, %cst_16 [0] : vector<8x256xf32> to vector<256xf32>
    %53 = vector.shape_cast %52 : vector<256xf32> to vector<1x256xf32>
    %54 = tpu.reciprocal %53 {approx = true} : vector<1x256xf32> -> vector<1x256xf32>
    %55 = vector.broadcast %54 : vector<1x256xf32> to vector<8x256xf32>
    %56 = arith.mulf %51, %55 : vector<8x256xf32>
    %57 = vector.extract_strided_slice %56 {offsets = [0, 0], sizes = [1, 256], strides = [1, 1]} : vector<8x256xf32> to vector<1x256xf32>
    %58 = vector.extract_strided_slice %10 {offsets = [0, 0], sizes = [32, 256], strides = [1, 1]} : vector<256x256xf32> to vector<32x256xf32>
    %59 = vector.broadcast %57 : vector<1x256xf32> to vector<32x256xf32>
    %60 = arith.mulf %59, %58 : vector<32x256xf32>
    %61 = vector.extract_strided_slice %56 {offsets = [1, 0], sizes = [1, 256], strides = [1, 1]} : vector<8x256xf32> to vector<1x256xf32>
    %62 = vector.extract_strided_slice %10 {offsets = [32, 0], sizes = [32, 256], strides = [1, 1]} : vector<256x256xf32> to vector<32x256xf32>
    %63 = vector.broadcast %61 : vector<1x256xf32> to vector<32x256xf32>
    %64 = arith.mulf %63, %62 : vector<32x256xf32>
    %65 = arith.addf %60, %64 : vector<32x256xf32>
    %66 = vector.extract_strided_slice %56 {offsets = [2, 0], sizes = [1, 256], strides = [1, 1]} : vector<8x256xf32> to vector<1x256xf32>
    %67 = vector.extract_strided_slice %10 {offsets = [64, 0], sizes = [32, 256], strides = [1, 1]} : vector<256x256xf32> to vector<32x256xf32>
    %68 = vector.broadcast %66 : vector<1x256xf32> to vector<32x256xf32>
    %69 = arith.mulf %68, %67 : vector<32x256xf32>
    %70 = arith.addf %65, %69 : vector<32x256xf32>
    %71 = vector.extract_strided_slice %56 {offsets = [3, 0], sizes = [1, 256], strides = [1, 1]} : vector<8x256xf32> to vector<1x256xf32>
    %72 = vector.extract_strided_slice %10 {offsets = [96, 0], sizes = [32, 256], strides = [1, 1]} : vector<256x256xf32> to vector<32x256xf32>
    %73 = vector.broadcast %71 : vector<1x256xf32> to vector<32x256xf32>
    %74 = arith.mulf %73, %72 : vector<32x256xf32>
    %75 = arith.addf %70, %74 : vector<32x256xf32>
    %76 = vector.extract_strided_slice %56 {offsets = [4, 0], sizes = [1, 256], strides = [1, 1]} : vector<8x256xf32> to vector<1x256xf32>
    %77 = vector.extract_strided_slice %10 {offsets = [128, 0], sizes = [32, 256], strides = [1, 1]} : vector<256x256xf32> to vector<32x256xf32>
    %78 = vector.broadcast %76 : vector<1x256xf32> to vector<32x256xf32>
    %79 = arith.mulf %78, %77 : vector<32x256xf32>
    %80 = arith.addf %75, %79 : vector<32x256xf32>
    %81 = vector.extract_strided_slice %56 {offsets = [5, 0], sizes = [1, 256], strides = [1, 1]} : vector<8x256xf32> to vector<1x256xf32>
    %82 = vector.extract_strided_slice %10 {offsets = [160, 0], sizes = [32, 256], strides = [1, 1]} : vector<256x256xf32> to vector<32x256xf32>
    %83 = vector.broadcast %81 : vector<1x256xf32> to vector<32x256xf32>
    %84 = arith.mulf %83, %82 : vector<32x256xf32>
    %85 = arith.addf %80, %84 : vector<32x256xf32>
    %86 = vector.extract_strided_slice %56 {offsets = [6, 0], sizes = [1, 256], strides = [1, 1]} : vector<8x256xf32> to vector<1x256xf32>
    %87 = vector.extract_strided_slice %10 {offsets = [192, 0], sizes = [32, 256], strides = [1, 1]} : vector<256x256xf32> to vector<32x256xf32>
    %88 = vector.broadcast %86 : vector<1x256xf32> to vector<32x256xf32>
    %89 = arith.mulf %88, %87 : vector<32x256xf32>
    %90 = arith.addf %85, %89 : vector<32x256xf32>
    %91 = vector.extract_strided_slice %56 {offsets = [7, 0], sizes = [1, 256], strides = [1, 1]} : vector<8x256xf32> to vector<1x256xf32>
    %92 = vector.extract_strided_slice %10 {offsets = [224, 0], sizes = [32, 256], strides = [1, 1]} : vector<256x256xf32> to vector<32x256xf32>
    %93 = vector.broadcast %91 : vector<1x256xf32> to vector<32x256xf32>
    %94 = arith.mulf %93, %92 : vector<32x256xf32>
    %95 = arith.addf %90, %94 : vector<32x256xf32>
    %96 = vector.extract_strided_slice %9 {offsets = [32, 0], sizes = [32, 256], strides = [1, 1]} : vector<256x256xf32> to vector<32x256xf32>
    %97 = vector.extract_strided_slice %8 {offsets = [0, 0], sizes = [32, 256], strides = [1, 1]} : vector<256x256xf32> to vector<32x256xf32>
    %98 = arith.mulf %97, %96 : vector<32x256xf32>
    %cst_17 = arith.constant dense<0.000000e+00> : vector<256xf32>
    %99 = vector.multi_reduction <add>, %98, %cst_17 [0] : vector<32x256xf32> to vector<256xf32>
    %100 = vector.shape_cast %99 : vector<256xf32> to vector<1x256xf32>
    %101 = vector.extract_strided_slice %8 {offsets = [32, 0], sizes = [32, 256], strides = [1, 1]} : vector<256x256xf32> to vector<32x256xf32>
    %102 = arith.mulf %101, %96 : vector<32x256xf32>
    %cst_18 = arith.constant dense<0.000000e+00> : vector<256xf32>
    %103 = vector.multi_reduction <add>, %102, %cst_18 [0] : vector<32x256xf32> to vector<256xf32>
    %104 = vector.shape_cast %103 : vector<256xf32> to vector<1x256xf32>
    %105 = vector.extract_strided_slice %8 {offsets = [64, 0], sizes = [32, 256], strides = [1, 1]} : vector<256x256xf32> to vector<32x256xf32>
    %106 = arith.mulf %105, %96 : vector<32x256xf32>
    %cst_19 = arith.constant dense<0.000000e+00> : vector<256xf32>
    %107 = vector.multi_reduction <add>, %106, %cst_19 [0] : vector<32x256xf32> to vector<256xf32>
    %108 = vector.shape_cast %107 : vector<256xf32> to vector<1x256xf32>
    %109 = vector.extract_strided_slice %8 {offsets = [96, 0], sizes = [32, 256], strides = [1, 1]} : vector<256x256xf32> to vector<32x256xf32>
    %110 = arith.mulf %109, %96 : vector<32x256xf32>
    %cst_20 = arith.constant dense<0.000000e+00> : vector<256xf32>
    %111 = vector.multi_reduction <add>, %110, %cst_20 [0] : vector<32x256xf32> to vector<256xf32>
    %112 = vector.shape_cast %111 : vector<256xf32> to vector<1x256xf32>
    %113 = vector.extract_strided_slice %8 {offsets = [128, 0], sizes = [32, 256], strides = [1, 1]} : vector<256x256xf32> to vector<32x256xf32>
    %114 = arith.mulf %113, %96 : vector<32x256xf32>
    %cst_21 = arith.constant dense<0.000000e+00> : vector<256xf32>
    %115 = vector.multi_reduction <add>, %114, %cst_21 [0] : vector<32x256xf32> to vector<256xf32>
    %116 = vector.shape_cast %115 : vector<256xf32> to vector<1x256xf32>
    %117 = vector.extract_strided_slice %8 {offsets = [160, 0], sizes = [32, 256], strides = [1, 1]} : vector<256x256xf32> to vector<32x256xf32>
    %118 = arith.mulf %117, %96 : vector<32x256xf32>
    %cst_22 = arith.constant dense<0.000000e+00> : vector<256xf32>
    %119 = vector.multi_reduction <add>, %118, %cst_22 [0] : vector<32x256xf32> to vector<256xf32>
    %120 = vector.shape_cast %119 : vector<256xf32> to vector<1x256xf32>
    %121 = vector.extract_strided_slice %8 {offsets = [192, 0], sizes = [32, 256], strides = [1, 1]} : vector<256x256xf32> to vector<32x256xf32>
    %122 = arith.mulf %121, %96 : vector<32x256xf32>
    %cst_23 = arith.constant dense<0.000000e+00> : vector<256xf32>
    %123 = vector.multi_reduction <add>, %122, %cst_23 [0] : vector<32x256xf32> to vector<256xf32>
    %124 = vector.shape_cast %123 : vector<256xf32> to vector<1x256xf32>
    %125 = vector.extract_strided_slice %8 {offsets = [224, 0], sizes = [32, 256], strides = [1, 1]} : vector<256x256xf32> to vector<32x256xf32>
    %126 = arith.mulf %125, %96 : vector<32x256xf32>
    %cst_24 = arith.constant dense<0.000000e+00> : vector<256xf32>
    %127 = vector.multi_reduction <add>, %126, %cst_24 [0] : vector<32x256xf32> to vector<256xf32>
    %128 = vector.shape_cast %127 : vector<256xf32> to vector<1x256xf32>
    %129 = tpu.concatenate %100, %104, %108, %112, %116, %120, %124, %128 in 0 : vector<1x256xf32>, vector<1x256xf32>, vector<1x256xf32>, vector<1x256xf32>, vector<1x256xf32>, vector<1x256xf32>, vector<1x256xf32>, vector<1x256xf32> -> vector<8x256xf32>
    %cst_25 = arith.constant 0.176776692 : f32
    %130 = vector.broadcast %cst_25 : f32 to vector<8x256xf32>
    %131 = arith.mulf %129, %130 : vector<8x256xf32>
    %cst_26 = arith.constant dense<0xFF800000> : vector<256xf32>
    %132 = vector.multi_reduction <maximumf>, %131, %cst_26 [0] : vector<8x256xf32> to vector<256xf32>
    %133 = vector.shape_cast %132 : vector<256xf32> to vector<1x256xf32>
    %134 = vector.broadcast %133 : vector<1x256xf32> to vector<8x256xf32>
    %135 = arith.subf %131, %134 : vector<8x256xf32>
    %136 = math.exp %135 : vector<8x256xf32>
    %cst_27 = arith.constant dense<0.000000e+00> : vector<256xf32>
    %137 = vector.multi_reduction <add>, %136, %cst_27 [0] : vector<8x256xf32> to vector<256xf32>
    %138 = vector.shape_cast %137 : vector<256xf32> to vector<1x256xf32>
    %139 = tpu.reciprocal %138 {approx = true} : vector<1x256xf32> -> vector<1x256xf32>
    %140 = vector.broadcast %139 : vector<1x256xf32> to vector<8x256xf32>
    %141 = arith.mulf %136, %140 : vector<8x256xf32>
    %142 = vector.extract_strided_slice %141 {offsets = [0, 0], sizes = [1, 256], strides = [1, 1]} : vector<8x256xf32> to vector<1x256xf32>
    %143 = vector.extract_strided_slice %10 {offsets = [0, 0], sizes = [32, 256], strides = [1, 1]} : vector<256x256xf32> to vector<32x256xf32>
    %144 = vector.broadcast %142 : vector<1x256xf32> to vector<32x256xf32>
    %145 = arith.mulf %144, %143 : vector<32x256xf32>
    %146 = vector.extract_strided_slice %141 {offsets = [1, 0], sizes = [1, 256], strides = [1, 1]} : vector<8x256xf32> to vector<1x256xf32>
    %147 = vector.extract_strided_slice %10 {offsets = [32, 0], sizes = [32, 256], strides = [1, 1]} : vector<256x256xf32> to vector<32x256xf32>
    %148 = vector.broadcast %146 : vector<1x256xf32> to vector<32x256xf32>
    %149 = arith.mulf %148, %147 : vector<32x256xf32>
    %150 = arith.addf %145, %149 : vector<32x256xf32>
    %151 = vector.extract_strided_slice %141 {offsets = [2, 0], sizes = [1, 256], strides = [1, 1]} : vector<8x256xf32> to vector<1x256xf32>
    %152 = vector.extract_strided_slice %10 {offsets = [64, 0], sizes = [32, 256], strides = [1, 1]} : vector<256x256xf32> to vector<32x256xf32>
    %153 = vector.broadcast %151 : vector<1x256xf32> to vector<32x256xf32>
    %154 = arith.mulf %153, %152 : vector<32x256xf32>
    %155 = arith.addf %150, %154 : vector<32x256xf32>
    %156 = vector.extract_strided_slice %141 {offsets = [3, 0], sizes = [1, 256], strides = [1, 1]} : vector<8x256xf32> to vector<1x256xf32>
    %157 = vector.extract_strided_slice %10 {offsets = [96, 0], sizes = [32, 256], strides = [1, 1]} : vector<256x256xf32> to vector<32x256xf32>
    %158 = vector.broadcast %156 : vector<1x256xf32> to vector<32x256xf32>
    %159 = arith.mulf %158, %157 : vector<32x256xf32>
    %160 = arith.addf %155, %159 : vector<32x256xf32>
    %161 = vector.extract_strided_slice %141 {offsets = [4, 0], sizes = [1, 256], strides = [1, 1]} : vector<8x256xf32> to vector<1x256xf32>
    %162 = vector.extract_strided_slice %10 {offsets = [128, 0], sizes = [32, 256], strides = [1, 1]} : vector<256x256xf32> to vector<32x256xf32>
    %163 = vector.broadcast %161 : vector<1x256xf32> to vector<32x256xf32>
    %164 = arith.mulf %163, %162 : vector<32x256xf32>
    %165 = arith.addf %160, %164 : vector<32x256xf32>
    %166 = vector.extract_strided_slice %141 {offsets = [5, 0], sizes = [1, 256], strides = [1, 1]} : vector<8x256xf32> to vector<1x256xf32>
    %167 = vector.extract_strided_slice %10 {offsets = [160, 0], sizes = [32, 256], strides = [1, 1]} : vector<256x256xf32> to vector<32x256xf32>
    %168 = vector.broadcast %166 : vector<1x256xf32> to vector<32x256xf32>
    %169 = arith.mulf %168, %167 : vector<32x256xf32>
    %170 = arith.addf %165, %169 : vector<32x256xf32>
    %171 = vector.extract_strided_slice %141 {offsets = [6, 0], sizes = [1, 256], strides = [1, 1]} : vector<8x256xf32> to vector<1x256xf32>
    %172 = vector.extract_strided_slice %10 {offsets = [192, 0], sizes = [32, 256], strides = [1, 1]} : vector<256x256xf32> to vector<32x256xf32>
    %173 = vector.broadcast %171 : vector<1x256xf32> to vector<32x256xf32>
    %174 = arith.mulf %173, %172 : vector<32x256xf32>
    %175 = arith.addf %170, %174 : vector<32x256xf32>
    %176 = vector.extract_strided_slice %141 {offsets = [7, 0], sizes = [1, 256], strides = [1, 1]} : vector<8x256xf32> to vector<1x256xf32>
    %177 = vector.extract_strided_slice %10 {offsets = [224, 0], sizes = [32, 256], strides = [1, 1]} : vector<256x256xf32> to vector<32x256xf32>
    %178 = vector.broadcast %176 : vector<1x256xf32> to vector<32x256xf32>
    %179 = arith.mulf %178, %177 : vector<32x256xf32>
    %180 = arith.addf %175, %179 : vector<32x256xf32>
    %181 = vector.extract_strided_slice %9 {offsets = [64, 0], sizes = [32, 256], strides = [1, 1]} : vector<256x256xf32> to vector<32x256xf32>
    %182 = vector.extract_strided_slice %8 {offsets = [0, 0], sizes = [32, 256], strides = [1, 1]} : vector<256x256xf32> to vector<32x256xf32>
    %183 = arith.mulf %182, %181 : vector<32x256xf32>
    %cst_28 = arith.constant dense<0.000000e+00> : vector<256xf32>
    %184 = vector.multi_reduction <add>, %183, %cst_28 [0] : vector<32x256xf32> to vector<256xf32>
    %185 = vector.shape_cast %184 : vector<256xf32> to vector<1x256xf32>
    %186 = vector.extract_strided_slice %8 {offsets = [32, 0], sizes = [32, 256], strides = [1, 1]} : vector<256x256xf32> to vector<32x256xf32>
    %187 = arith.mulf %186, %181 : vector<32x256xf32>
    %cst_29 = arith.constant dense<0.000000e+00> : vector<256xf32>
    %188 = vector.multi_reduction <add>, %187, %cst_29 [0] : vector<32x256xf32> to vector<256xf32>
    %189 = vector.shape_cast %188 : vector<256xf32> to vector<1x256xf32>
    %190 = vector.extract_strided_slice %8 {offsets = [64, 0], sizes = [32, 256], strides = [1, 1]} : vector<256x256xf32> to vector<32x256xf32>
    %191 = arith.mulf %190, %181 : vector<32x256xf32>
    %cst_30 = arith.constant dense<0.000000e+00> : vector<256xf32>
    %192 = vector.multi_reduction <add>, %191, %cst_30 [0] : vector<32x256xf32> to vector<256xf32>
    %193 = vector.shape_cast %192 : vector<256xf32> to vector<1x256xf32>
    %194 = vector.extract_strided_slice %8 {offsets = [96, 0], sizes = [32, 256], strides = [1, 1]} : vector<256x256xf32> to vector<32x256xf32>
    %195 = arith.mulf %194, %181 : vector<32x256xf32>
    %cst_31 = arith.constant dense<0.000000e+00> : vector<256xf32>
    %196 = vector.multi_reduction <add>, %195, %cst_31 [0] : vector<32x256xf32> to vector<256xf32>
    %197 = vector.shape_cast %196 : vector<256xf32> to vector<1x256xf32>
    %198 = vector.extract_strided_slice %8 {offsets = [128, 0], sizes = [32, 256], strides = [1, 1]} : vector<256x256xf32> to vector<32x256xf32>
    %199 = arith.mulf %198, %181 : vector<32x256xf32>
    %cst_32 = arith.constant dense<0.000000e+00> : vector<256xf32>
    %200 = vector.multi_reduction <add>, %199, %cst_32 [0] : vector<32x256xf32> to vector<256xf32>
    %201 = vector.shape_cast %200 : vector<256xf32> to vector<1x256xf32>
    %202 = vector.extract_strided_slice %8 {offsets = [160, 0], sizes = [32, 256], strides = [1, 1]} : vector<256x256xf32> to vector<32x256xf32>
    %203 = arith.mulf %202, %181 : vector<32x256xf32>
    %cst_33 = arith.constant dense<0.000000e+00> : vector<256xf32>
    %204 = vector.multi_reduction <add>, %203, %cst_33 [0] : vector<32x256xf32> to vector<256xf32>
    %205 = vector.shape_cast %204 : vector<256xf32> to vector<1x256xf32>
    %206 = vector.extract_strided_slice %8 {offsets = [192, 0], sizes = [32, 256], strides = [1, 1]} : vector<256x256xf32> to vector<32x256xf32>
    %207 = arith.mulf %206, %181 : vector<32x256xf32>
    %cst_34 = arith.constant dense<0.000000e+00> : vector<256xf32>
    %208 = vector.multi_reduction <add>, %207, %cst_34 [0] : vector<32x256xf32> to vector<256xf32>
    %209 = vector.shape_cast %208 : vector<256xf32> to vector<1x256xf32>
    %210 = vector.extract_strided_slice %8 {offsets = [224, 0], sizes = [32, 256], strides = [1, 1]} : vector<256x256xf32> to vector<32x256xf32>
    %211 = arith.mulf %210, %181 : vector<32x256xf32>
    %cst_35 = arith.constant dense<0.000000e+00> : vector<256xf32>
    %212 = vector.multi_reduction <add>, %211, %cst_35 [0] : vector<32x256xf32> to vector<256xf32>
    %213 = vector.shape_cast %212 : vector<256xf32> to vector<1x256xf32>
    %214 = tpu.concatenate %185, %189, %193, %197, %201, %205, %209, %213 in 0 : vector<1x256xf32>, vector<1x256xf32>, vector<1x256xf32>, vector<1x256xf32>, vector<1x256xf32>, vector<1x256xf32>, vector<1x256xf32>, vector<1x256xf32> -> vector<8x256xf32>
    %cst_36 = arith.constant 0.176776692 : f32
    %215 = vector.broadcast %cst_36 : f32 to vector<8x256xf32>
    %216 = arith.mulf %214, %215 : vector<8x256xf32>
    %cst_37 = arith.constant dense<0xFF800000> : vector<256xf32>
    %217 = vector.multi_reduction <maximumf>, %216, %cst_37 [0] : vector<8x256xf32> to vector<256xf32>
    %218 = vector.shape_cast %217 : vector<256xf32> to vector<1x256xf32>
    %219 = vector.broadcast %218 : vector<1x256xf32> to vector<8x256xf32>
    %220 = arith.subf %216, %219 : vector<8x256xf32>
    %221 = math.exp %220 : vector<8x256xf32>
    %cst_38 = arith.constant dense<0.000000e+00> : vector<256xf32>
    %222 = vector.multi_reduction <add>, %221, %cst_38 [0] : vector<8x256xf32> to vector<256xf32>
    %223 = vector.shape_cast %222 : vector<256xf32> to vector<1x256xf32>
    %224 = tpu.reciprocal %223 {approx = true} : vector<1x256xf32> -> vector<1x256xf32>
    %225 = vector.broadcast %224 : vector<1x256xf32> to vector<8x256xf32>
    %226 = arith.mulf %221, %225 : vector<8x256xf32>
    %227 = vector.extract_strided_slice %226 {offsets = [0, 0], sizes = [1, 256], strides = [1, 1]} : vector<8x256xf32> to vector<1x256xf32>
    %228 = vector.extract_strided_slice %10 {offsets = [0, 0], sizes = [32, 256], strides = [1, 1]} : vector<256x256xf32> to vector<32x256xf32>
    %229 = vector.broadcast %227 : vector<1x256xf32> to vector<32x256xf32>
    %230 = arith.mulf %229, %228 : vector<32x256xf32>
    %231 = vector.extract_strided_slice %226 {offsets = [1, 0], sizes = [1, 256], strides = [1, 1]} : vector<8x256xf32> to vector<1x256xf32>
    %232 = vector.extract_strided_slice %10 {offsets = [32, 0], sizes = [32, 256], strides = [1, 1]} : vector<256x256xf32> to vector<32x256xf32>
    %233 = vector.broadcast %231 : vector<1x256xf32> to vector<32x256xf32>
    %234 = arith.mulf %233, %232 : vector<32x256xf32>
    %235 = arith.addf %230, %234 : vector<32x256xf32>
    %236 = vector.extract_strided_slice %226 {offsets = [2, 0], sizes = [1, 256], strides = [1, 1]} : vector<8x256xf32> to vector<1x256xf32>
    %237 = vector.extract_strided_slice %10 {offsets = [64, 0], sizes = [32, 256], strides = [1, 1]} : vector<256x256xf32> to vector<32x256xf32>
    %238 = vector.broadcast %236 : vector<1x256xf32> to vector<32x256xf32>
    %239 = arith.mulf %238, %237 : vector<32x256xf32>
    %240 = arith.addf %235, %239 : vector<32x256xf32>
    %241 = vector.extract_strided_slice %226 {offsets = [3, 0], sizes = [1, 256], strides = [1, 1]} : vector<8x256xf32> to vector<1x256xf32>
    %242 = vector.extract_strided_slice %10 {offsets = [96, 0], sizes = [32, 256], strides = [1, 1]} : vector<256x256xf32> to vector<32x256xf32>
    %243 = vector.broadcast %241 : vector<1x256xf32> to vector<32x256xf32>
    %244 = arith.mulf %243, %242 : vector<32x256xf32>
    %245 = arith.addf %240, %244 : vector<32x256xf32>
    %246 = vector.extract_strided_slice %226 {offsets = [4, 0], sizes = [1, 256], strides = [1, 1]} : vector<8x256xf32> to vector<1x256xf32>
    %247 = vector.extract_strided_slice %10 {offsets = [128, 0], sizes = [32, 256], strides = [1, 1]} : vector<256x256xf32> to vector<32x256xf32>
    %248 = vector.broadcast %246 : vector<1x256xf32> to vector<32x256xf32>
    %249 = arith.mulf %248, %247 : vector<32x256xf32>
    %250 = arith.addf %245, %249 : vector<32x256xf32>
    %251 = vector.extract_strided_slice %226 {offsets = [5, 0], sizes = [1, 256], strides = [1, 1]} : vector<8x256xf32> to vector<1x256xf32>
    %252 = vector.extract_strided_slice %10 {offsets = [160, 0], sizes = [32, 256], strides = [1, 1]} : vector<256x256xf32> to vector<32x256xf32>
    %253 = vector.broadcast %251 : vector<1x256xf32> to vector<32x256xf32>
    %254 = arith.mulf %253, %252 : vector<32x256xf32>
    %255 = arith.addf %250, %254 : vector<32x256xf32>
    %256 = vector.extract_strided_slice %226 {offsets = [6, 0], sizes = [1, 256], strides = [1, 1]} : vector<8x256xf32> to vector<1x256xf32>
    %257 = vector.extract_strided_slice %10 {offsets = [192, 0], sizes = [32, 256], strides = [1, 1]} : vector<256x256xf32> to vector<32x256xf32>
    %258 = vector.broadcast %256 : vector<1x256xf32> to vector<32x256xf32>
    %259 = arith.mulf %258, %257 : vector<32x256xf32>
    %260 = arith.addf %255, %259 : vector<32x256xf32>
    %261 = vector.extract_strided_slice %226 {offsets = [7, 0], sizes = [1, 256], strides = [1, 1]} : vector<8x256xf32> to vector<1x256xf32>
    %262 = vector.extract_strided_slice %10 {offsets = [224, 0], sizes = [32, 256], strides = [1, 1]} : vector<256x256xf32> to vector<32x256xf32>
    %263 = vector.broadcast %261 : vector<1x256xf32> to vector<32x256xf32>
    %264 = arith.mulf %263, %262 : vector<32x256xf32>
    %265 = arith.addf %260, %264 : vector<32x256xf32>
    %266 = vector.extract_strided_slice %9 {offsets = [96, 0], sizes = [32, 256], strides = [1, 1]} : vector<256x256xf32> to vector<32x256xf32>
    %267 = vector.extract_strided_slice %8 {offsets = [0, 0], sizes = [32, 256], strides = [1, 1]} : vector<256x256xf32> to vector<32x256xf32>
    %268 = arith.mulf %267, %266 : vector<32x256xf32>
    %cst_39 = arith.constant dense<0.000000e+00> : vector<256xf32>
    %269 = vector.multi_reduction <add>, %268, %cst_39 [0] : vector<32x256xf32> to vector<256xf32>
    %270 = vector.shape_cast %269 : vector<256xf32> to vector<1x256xf32>
    %271 = vector.extract_strided_slice %8 {offsets = [32, 0], sizes = [32, 256], strides = [1, 1]} : vector<256x256xf32> to vector<32x256xf32>
    %272 = arith.mulf %271, %266 : vector<32x256xf32>
    %cst_40 = arith.constant dense<0.000000e+00> : vector<256xf32>
    %273 = vector.multi_reduction <add>, %272, %cst_40 [0] : vector<32x256xf32> to vector<256xf32>
    %274 = vector.shape_cast %273 : vector<256xf32> to vector<1x256xf32>
    %275 = vector.extract_strided_slice %8 {offsets = [64, 0], sizes = [32, 256], strides = [1, 1]} : vector<256x256xf32> to vector<32x256xf32>
    %276 = arith.mulf %275, %266 : vector<32x256xf32>
    %cst_41 = arith.constant dense<0.000000e+00> : vector<256xf32>
    %277 = vector.multi_reduction <add>, %276, %cst_41 [0] : vector<32x256xf32> to vector<256xf32>
    %278 = vector.shape_cast %277 : vector<256xf32> to vector<1x256xf32>
    %279 = vector.extract_strided_slice %8 {offsets = [96, 0], sizes = [32, 256], strides = [1, 1]} : vector<256x256xf32> to vector<32x256xf32>
    %280 = arith.mulf %279, %266 : vector<32x256xf32>
    %cst_42 = arith.constant dense<0.000000e+00> : vector<256xf32>
    %281 = vector.multi_reduction <add>, %280, %cst_42 [0] : vector<32x256xf32> to vector<256xf32>
    %282 = vector.shape_cast %281 : vector<256xf32> to vector<1x256xf32>
    %283 = vector.extract_strided_slice %8 {offsets = [128, 0], sizes = [32, 256], strides = [1, 1]} : vector<256x256xf32> to vector<32x256xf32>
    %284 = arith.mulf %283, %266 : vector<32x256xf32>
    %cst_43 = arith.constant dense<0.000000e+00> : vector<256xf32>
    %285 = vector.multi_reduction <add>, %284, %cst_43 [0] : vector<32x256xf32> to vector<256xf32>
    %286 = vector.shape_cast %285 : vector<256xf32> to vector<1x256xf32>
    %287 = vector.extract_strided_slice %8 {offsets = [160, 0], sizes = [32, 256], strides = [1, 1]} : vector<256x256xf32> to vector<32x256xf32>
    %288 = arith.mulf %287, %266 : vector<32x256xf32>
    %cst_44 = arith.constant dense<0.000000e+00> : vector<256xf32>
    %289 = vector.multi_reduction <add>, %288, %cst_44 [0] : vector<32x256xf32> to vector<256xf32>
    %290 = vector.shape_cast %289 : vector<256xf32> to vector<1x256xf32>
    %291 = vector.extract_strided_slice %8 {offsets = [192, 0], sizes = [32, 256], strides = [1, 1]} : vector<256x256xf32> to vector<32x256xf32>
    %292 = arith.mulf %291, %266 : vector<32x256xf32>
    %cst_45 = arith.constant dense<0.000000e+00> : vector<256xf32>
    %293 = vector.multi_reduction <add>, %292, %cst_45 [0] : vector<32x256xf32> to vector<256xf32>
    %294 = vector.shape_cast %293 : vector<256xf32> to vector<1x256xf32>
    %295 = vector.extract_strided_slice %8 {offsets = [224, 0], sizes = [32, 256], strides = [1, 1]} : vector<256x256xf32> to vector<32x256xf32>
    %296 = arith.mulf %295, %266 : vector<32x256xf32>
    %cst_46 = arith.constant dense<0.000000e+00> : vector<256xf32>
    %297 = vector.multi_reduction <add>, %296, %cst_46 [0] : vector<32x256xf32> to vector<256xf32>
    %298 = vector.shape_cast %297 : vector<256xf32> to vector<1x256xf32>
    %299 = tpu.concatenate %270, %274, %278, %282, %286, %290, %294, %298 in 0 : vector<1x256xf32>, vector<1x256xf32>, vector<1x256xf32>, vector<1x256xf32>, vector<1x256xf32>, vector<1x256xf32>, vector<1x256xf32>, vector<1x256xf32> -> vector<8x256xf32>
    %cst_47 = arith.constant 0.176776692 : f32
    %300 = vector.broadcast %cst_47 : f32 to vector<8x256xf32>
    %301 = arith.mulf %299, %300 : vector<8x256xf32>
    %cst_48 = arith.constant dense<0xFF800000> : vector<256xf32>
    %302 = vector.multi_reduction <maximumf>, %301, %cst_48 [0] : vector<8x256xf32> to vector<256xf32>
    %303 = vector.shape_cast %302 : vector<256xf32> to vector<1x256xf32>
    %304 = vector.broadcast %303 : vector<1x256xf32> to vector<8x256xf32>
    %305 = arith.subf %301, %304 : vector<8x256xf32>
    %306 = math.exp %305 : vector<8x256xf32>
    %cst_49 = arith.constant dense<0.000000e+00> : vector<256xf32>
    %307 = vector.multi_reduction <add>, %306, %cst_49 [0] : vector<8x256xf32> to vector<256xf32>
    %308 = vector.shape_cast %307 : vector<256xf32> to vector<1x256xf32>
    %309 = tpu.reciprocal %308 {approx = true} : vector<1x256xf32> -> vector<1x256xf32>
    %310 = vector.broadcast %309 : vector<1x256xf32> to vector<8x256xf32>
    %311 = arith.mulf %306, %310 : vector<8x256xf32>
    %312 = vector.extract_strided_slice %311 {offsets = [0, 0], sizes = [1, 256], strides = [1, 1]} : vector<8x256xf32> to vector<1x256xf32>
    %313 = vector.extract_strided_slice %10 {offsets = [0, 0], sizes = [32, 256], strides = [1, 1]} : vector<256x256xf32> to vector<32x256xf32>
    %314 = vector.broadcast %312 : vector<1x256xf32> to vector<32x256xf32>
    %315 = arith.mulf %314, %313 : vector<32x256xf32>
    %316 = vector.extract_strided_slice %311 {offsets = [1, 0], sizes = [1, 256], strides = [1, 1]} : vector<8x256xf32> to vector<1x256xf32>
    %317 = vector.extract_strided_slice %10 {offsets = [32, 0], sizes = [32, 256], strides = [1, 1]} : vector<256x256xf32> to vector<32x256xf32>
    %318 = vector.broadcast %316 : vector<1x256xf32> to vector<32x256xf32>
    %319 = arith.mulf %318, %317 : vector<32x256xf32>
    %320 = arith.addf %315, %319 : vector<32x256xf32>
    %321 = vector.extract_strided_slice %311 {offsets = [2, 0], sizes = [1, 256], strides = [1, 1]} : vector<8x256xf32> to vector<1x256xf32>
    %322 = vector.extract_strided_slice %10 {offsets = [64, 0], sizes = [32, 256], strides = [1, 1]} : vector<256x256xf32> to vector<32x256xf32>
    %323 = vector.broadcast %321 : vector<1x256xf32> to vector<32x256xf32>
    %324 = arith.mulf %323, %322 : vector<32x256xf32>
    %325 = arith.addf %320, %324 : vector<32x256xf32>
    %326 = vector.extract_strided_slice %311 {offsets = [3, 0], sizes = [1, 256], strides = [1, 1]} : vector<8x256xf32> to vector<1x256xf32>
    %327 = vector.extract_strided_slice %10 {offsets = [96, 0], sizes = [32, 256], strides = [1, 1]} : vector<256x256xf32> to vector<32x256xf32>
    %328 = vector.broadcast %326 : vector<1x256xf32> to vector<32x256xf32>
    %329 = arith.mulf %328, %327 : vector<32x256xf32>
    %330 = arith.addf %325, %329 : vector<32x256xf32>
    %331 = vector.extract_strided_slice %311 {offsets = [4, 0], sizes = [1, 256], strides = [1, 1]} : vector<8x256xf32> to vector<1x256xf32>
    %332 = vector.extract_strided_slice %10 {offsets = [128, 0], sizes = [32, 256], strides = [1, 1]} : vector<256x256xf32> to vector<32x256xf32>
    %333 = vector.broadcast %331 : vector<1x256xf32> to vector<32x256xf32>
    %334 = arith.mulf %333, %332 : vector<32x256xf32>
    %335 = arith.addf %330, %334 : vector<32x256xf32>
    %336 = vector.extract_strided_slice %311 {offsets = [5, 0], sizes = [1, 256], strides = [1, 1]} : vector<8x256xf32> to vector<1x256xf32>
    %337 = vector.extract_strided_slice %10 {offsets = [160, 0], sizes = [32, 256], strides = [1, 1]} : vector<256x256xf32> to vector<32x256xf32>
    %338 = vector.broadcast %336 : vector<1x256xf32> to vector<32x256xf32>
    %339 = arith.mulf %338, %337 : vector<32x256xf32>
    %340 = arith.addf %335, %339 : vector<32x256xf32>
    %341 = vector.extract_strided_slice %311 {offsets = [6, 0], sizes = [1, 256], strides = [1, 1]} : vector<8x256xf32> to vector<1x256xf32>
    %342 = vector.extract_strided_slice %10 {offsets = [192, 0], sizes = [32, 256], strides = [1, 1]} : vector<256x256xf32> to vector<32x256xf32>
    %343 = vector.broadcast %341 : vector<1x256xf32> to vector<32x256xf32>
    %344 = arith.mulf %343, %342 : vector<32x256xf32>
    %345 = arith.addf %340, %344 : vector<32x256xf32>
    %346 = vector.extract_strided_slice %311 {offsets = [7, 0], sizes = [1, 256], strides = [1, 1]} : vector<8x256xf32> to vector<1x256xf32>
    %347 = vector.extract_strided_slice %10 {offsets = [224, 0], sizes = [32, 256], strides = [1, 1]} : vector<256x256xf32> to vector<32x256xf32>
    %348 = vector.broadcast %346 : vector<1x256xf32> to vector<32x256xf32>
    %349 = arith.mulf %348, %347 : vector<32x256xf32>
    %350 = arith.addf %345, %349 : vector<32x256xf32>
    %351 = vector.extract_strided_slice %9 {offsets = [128, 0], sizes = [32, 256], strides = [1, 1]} : vector<256x256xf32> to vector<32x256xf32>
    %352 = vector.extract_strided_slice %8 {offsets = [0, 0], sizes = [32, 256], strides = [1, 1]} : vector<256x256xf32> to vector<32x256xf32>
    %353 = arith.mulf %352, %351 : vector<32x256xf32>
    %cst_50 = arith.constant dense<0.000000e+00> : vector<256xf32>
    %354 = vector.multi_reduction <add>, %353, %cst_50 [0] : vector<32x256xf32> to vector<256xf32>
    %355 = vector.shape_cast %354 : vector<256xf32> to vector<1x256xf32>
    %356 = vector.extract_strided_slice %8 {offsets = [32, 0], sizes = [32, 256], strides = [1, 1]} : vector<256x256xf32> to vector<32x256xf32>
    %357 = arith.mulf %356, %351 : vector<32x256xf32>
    %cst_51 = arith.constant dense<0.000000e+00> : vector<256xf32>
    %358 = vector.multi_reduction <add>, %357, %cst_51 [0] : vector<32x256xf32> to vector<256xf32>
    %359 = vector.shape_cast %358 : vector<256xf32> to vector<1x256xf32>
    %360 = vector.extract_strided_slice %8 {offsets = [64, 0], sizes = [32, 256], strides = [1, 1]} : vector<256x256xf32> to vector<32x256xf32>
    %361 = arith.mulf %360, %351 : vector<32x256xf32>
    %cst_52 = arith.constant dense<0.000000e+00> : vector<256xf32>
    %362 = vector.multi_reduction <add>, %361, %cst_52 [0] : vector<32x256xf32> to vector<256xf32>
    %363 = vector.shape_cast %362 : vector<256xf32> to vector<1x256xf32>
    %364 = vector.extract_strided_slice %8 {offsets = [96, 0], sizes = [32, 256], strides = [1, 1]} : vector<256x256xf32> to vector<32x256xf32>
    %365 = arith.mulf %364, %351 : vector<32x256xf32>
    %cst_53 = arith.constant dense<0.000000e+00> : vector<256xf32>
    %366 = vector.multi_reduction <add>, %365, %cst_53 [0] : vector<32x256xf32> to vector<256xf32>
    %367 = vector.shape_cast %366 : vector<256xf32> to vector<1x256xf32>
    %368 = vector.extract_strided_slice %8 {offsets = [128, 0], sizes = [32, 256], strides = [1, 1]} : vector<256x256xf32> to vector<32x256xf32>
    %369 = arith.mulf %368, %351 : vector<32x256xf32>
    %cst_54 = arith.constant dense<0.000000e+00> : vector<256xf32>
    %370 = vector.multi_reduction <add>, %369, %cst_54 [0] : vector<32x256xf32> to vector<256xf32>
    %371 = vector.shape_cast %370 : vector<256xf32> to vector<1x256xf32>
    %372 = vector.extract_strided_slice %8 {offsets = [160, 0], sizes = [32, 256], strides = [1, 1]} : vector<256x256xf32> to vector<32x256xf32>
    %373 = arith.mulf %372, %351 : vector<32x256xf32>
    %cst_55 = arith.constant dense<0.000000e+00> : vector<256xf32>
    %374 = vector.multi_reduction <add>, %373, %cst_55 [0] : vector<32x256xf32> to vector<256xf32>
    %375 = vector.shape_cast %374 : vector<256xf32> to vector<1x256xf32>
    %376 = vector.extract_strided_slice %8 {offsets = [192, 0], sizes = [32, 256], strides = [1, 1]} : vector<256x256xf32> to vector<32x256xf32>
    %377 = arith.mulf %376, %351 : vector<32x256xf32>
    %cst_56 = arith.constant dense<0.000000e+00> : vector<256xf32>
    %378 = vector.multi_reduction <add>, %377, %cst_56 [0] : vector<32x256xf32> to vector<256xf32>
    %379 = vector.shape_cast %378 : vector<256xf32> to vector<1x256xf32>
    %380 = vector.extract_strided_slice %8 {offsets = [224, 0], sizes = [32, 256], strides = [1, 1]} : vector<256x256xf32> to vector<32x256xf32>
    %381 = arith.mulf %380, %351 : vector<32x256xf32>
    %cst_57 = arith.constant dense<0.000000e+00> : vector<256xf32>
    %382 = vector.multi_reduction <add>, %381, %cst_57 [0] : vector<32x256xf32> to vector<256xf32>
    %383 = vector.shape_cast %382 : vector<256xf32> to vector<1x256xf32>
    %384 = tpu.concatenate %355, %359, %363, %367, %371, %375, %379, %383 in 0 : vector<1x256xf32>, vector<1x256xf32>, vector<1x256xf32>, vector<1x256xf32>, vector<1x256xf32>, vector<1x256xf32>, vector<1x256xf32>, vector<1x256xf32> -> vector<8x256xf32>
    %cst_58 = arith.constant 0.176776692 : f32
    %385 = vector.broadcast %cst_58 : f32 to vector<8x256xf32>
    %386 = arith.mulf %384, %385 : vector<8x256xf32>
    %cst_59 = arith.constant dense<0xFF800000> : vector<256xf32>
    %387 = vector.multi_reduction <maximumf>, %386, %cst_59 [0] : vector<8x256xf32> to vector<256xf32>
    %388 = vector.shape_cast %387 : vector<256xf32> to vector<1x256xf32>
    %389 = vector.broadcast %388 : vector<1x256xf32> to vector<8x256xf32>
    %390 = arith.subf %386, %389 : vector<8x256xf32>
    %391 = math.exp %390 : vector<8x256xf32>
    %cst_60 = arith.constant dense<0.000000e+00> : vector<256xf32>
    %392 = vector.multi_reduction <add>, %391, %cst_60 [0] : vector<8x256xf32> to vector<256xf32>
    %393 = vector.shape_cast %392 : vector<256xf32> to vector<1x256xf32>
    %394 = tpu.reciprocal %393 {approx = true} : vector<1x256xf32> -> vector<1x256xf32>
    %395 = vector.broadcast %394 : vector<1x256xf32> to vector<8x256xf32>
    %396 = arith.mulf %391, %395 : vector<8x256xf32>
    %397 = vector.extract_strided_slice %396 {offsets = [0, 0], sizes = [1, 256], strides = [1, 1]} : vector<8x256xf32> to vector<1x256xf32>
    %398 = vector.extract_strided_slice %10 {offsets = [0, 0], sizes = [32, 256], strides = [1, 1]} : vector<256x256xf32> to vector<32x256xf32>
    %399 = vector.broadcast %397 : vector<1x256xf32> to vector<32x256xf32>
    %400 = arith.mulf %399, %398 : vector<32x256xf32>
    %401 = vector.extract_strided_slice %396 {offsets = [1, 0], sizes = [1, 256], strides = [1, 1]} : vector<8x256xf32> to vector<1x256xf32>
    %402 = vector.extract_strided_slice %10 {offsets = [32, 0], sizes = [32, 256], strides = [1, 1]} : vector<256x256xf32> to vector<32x256xf32>
    %403 = vector.broadcast %401 : vector<1x256xf32> to vector<32x256xf32>
    %404 = arith.mulf %403, %402 : vector<32x256xf32>
    %405 = arith.addf %400, %404 : vector<32x256xf32>
    %406 = vector.extract_strided_slice %396 {offsets = [2, 0], sizes = [1, 256], strides = [1, 1]} : vector<8x256xf32> to vector<1x256xf32>
    %407 = vector.extract_strided_slice %10 {offsets = [64, 0], sizes = [32, 256], strides = [1, 1]} : vector<256x256xf32> to vector<32x256xf32>
    %408 = vector.broadcast %406 : vector<1x256xf32> to vector<32x256xf32>
    %409 = arith.mulf %408, %407 : vector<32x256xf32>
    %410 = arith.addf %405, %409 : vector<32x256xf32>
    %411 = vector.extract_strided_slice %396 {offsets = [3, 0], sizes = [1, 256], strides = [1, 1]} : vector<8x256xf32> to vector<1x256xf32>
    %412 = vector.extract_strided_slice %10 {offsets = [96, 0], sizes = [32, 256], strides = [1, 1]} : vector<256x256xf32> to vector<32x256xf32>
    %413 = vector.broadcast %411 : vector<1x256xf32> to vector<32x256xf32>
    %414 = arith.mulf %413, %412 : vector<32x256xf32>
    %415 = arith.addf %410, %414 : vector<32x256xf32>
    %416 = vector.extract_strided_slice %396 {offsets = [4, 0], sizes = [1, 256], strides = [1, 1]} : vector<8x256xf32> to vector<1x256xf32>
    %417 = vector.extract_strided_slice %10 {offsets = [128, 0], sizes = [32, 256], strides = [1, 1]} : vector<256x256xf32> to vector<32x256xf32>
    %418 = vector.broadcast %416 : vector<1x256xf32> to vector<32x256xf32>
    %419 = arith.mulf %418, %417 : vector<32x256xf32>
    %420 = arith.addf %415, %419 : vector<32x256xf32>
    %421 = vector.extract_strided_slice %396 {offsets = [5, 0], sizes = [1, 256], strides = [1, 1]} : vector<8x256xf32> to vector<1x256xf32>
    %422 = vector.extract_strided_slice %10 {offsets = [160, 0], sizes = [32, 256], strides = [1, 1]} : vector<256x256xf32> to vector<32x256xf32>
    %423 = vector.broadcast %421 : vector<1x256xf32> to vector<32x256xf32>
    %424 = arith.mulf %423, %422 : vector<32x256xf32>
    %425 = arith.addf %420, %424 : vector<32x256xf32>
    %426 = vector.extract_strided_slice %396 {offsets = [6, 0], sizes = [1, 256], strides = [1, 1]} : vector<8x256xf32> to vector<1x256xf32>
    %427 = vector.extract_strided_slice %10 {offsets = [192, 0], sizes = [32, 256], strides = [1, 1]} : vector<256x256xf32> to vector<32x256xf32>
    %428 = vector.broadcast %426 : vector<1x256xf32> to vector<32x256xf32>
    %429 = arith.mulf %428, %427 : vector<32x256xf32>
    %430 = arith.addf %425, %429 : vector<32x256xf32>
    %431 = vector.extract_strided_slice %396 {offsets = [7, 0], sizes = [1, 256], strides = [1, 1]} : vector<8x256xf32> to vector<1x256xf32>
    %432 = vector.extract_strided_slice %10 {offsets = [224, 0], sizes = [32, 256], strides = [1, 1]} : vector<256x256xf32> to vector<32x256xf32>
    %433 = vector.broadcast %431 : vector<1x256xf32> to vector<32x256xf32>
    %434 = arith.mulf %433, %432 : vector<32x256xf32>
    %435 = arith.addf %430, %434 : vector<32x256xf32>
    %436 = vector.extract_strided_slice %9 {offsets = [160, 0], sizes = [32, 256], strides = [1, 1]} : vector<256x256xf32> to vector<32x256xf32>
    %437 = vector.extract_strided_slice %8 {offsets = [0, 0], sizes = [32, 256], strides = [1, 1]} : vector<256x256xf32> to vector<32x256xf32>
    %438 = arith.mulf %437, %436 : vector<32x256xf32>
    %cst_61 = arith.constant dense<0.000000e+00> : vector<256xf32>
    %439 = vector.multi_reduction <add>, %438, %cst_61 [0] : vector<32x256xf32> to vector<256xf32>
    %440 = vector.shape_cast %439 : vector<256xf32> to vector<1x256xf32>
    %441 = vector.extract_strided_slice %8 {offsets = [32, 0], sizes = [32, 256], strides = [1, 1]} : vector<256x256xf32> to vector<32x256xf32>
    %442 = arith.mulf %441, %436 : vector<32x256xf32>
    %cst_62 = arith.constant dense<0.000000e+00> : vector<256xf32>
    %443 = vector.multi_reduction <add>, %442, %cst_62 [0] : vector<32x256xf32> to vector<256xf32>
    %444 = vector.shape_cast %443 : vector<256xf32> to vector<1x256xf32>
    %445 = vector.extract_strided_slice %8 {offsets = [64, 0], sizes = [32, 256], strides = [1, 1]} : vector<256x256xf32> to vector<32x256xf32>
    %446 = arith.mulf %445, %436 : vector<32x256xf32>
    %cst_63 = arith.constant dense<0.000000e+00> : vector<256xf32>
    %447 = vector.multi_reduction <add>, %446, %cst_63 [0] : vector<32x256xf32> to vector<256xf32>
    %448 = vector.shape_cast %447 : vector<256xf32> to vector<1x256xf32>
    %449 = vector.extract_strided_slice %8 {offsets = [96, 0], sizes = [32, 256], strides = [1, 1]} : vector<256x256xf32> to vector<32x256xf32>
    %450 = arith.mulf %449, %436 : vector<32x256xf32>
    %cst_64 = arith.constant dense<0.000000e+00> : vector<256xf32>
    %451 = vector.multi_reduction <add>, %450, %cst_64 [0] : vector<32x256xf32> to vector<256xf32>
    %452 = vector.shape_cast %451 : vector<256xf32> to vector<1x256xf32>
    %453 = vector.extract_strided_slice %8 {offsets = [128, 0], sizes = [32, 256], strides = [1, 1]} : vector<256x256xf32> to vector<32x256xf32>
    %454 = arith.mulf %453, %436 : vector<32x256xf32>
    %cst_65 = arith.constant dense<0.000000e+00> : vector<256xf32>
    %455 = vector.multi_reduction <add>, %454, %cst_65 [0] : vector<32x256xf32> to vector<256xf32>
    %456 = vector.shape_cast %455 : vector<256xf32> to vector<1x256xf32>
    %457 = vector.extract_strided_slice %8 {offsets = [160, 0], sizes = [32, 256], strides = [1, 1]} : vector<256x256xf32> to vector<32x256xf32>
    %458 = arith.mulf %457, %436 : vector<32x256xf32>
    %cst_66 = arith.constant dense<0.000000e+00> : vector<256xf32>
    %459 = vector.multi_reduction <add>, %458, %cst_66 [0] : vector<32x256xf32> to vector<256xf32>
    %460 = vector.shape_cast %459 : vector<256xf32> to vector<1x256xf32>
    %461 = vector.extract_strided_slice %8 {offsets = [192, 0], sizes = [32, 256], strides = [1, 1]} : vector<256x256xf32> to vector<32x256xf32>
    %462 = arith.mulf %461, %436 : vector<32x256xf32>
    %cst_67 = arith.constant dense<0.000000e+00> : vector<256xf32>
    %463 = vector.multi_reduction <add>, %462, %cst_67 [0] : vector<32x256xf32> to vector<256xf32>
    %464 = vector.shape_cast %463 : vector<256xf32> to vector<1x256xf32>
    %465 = vector.extract_strided_slice %8 {offsets = [224, 0], sizes = [32, 256], strides = [1, 1]} : vector<256x256xf32> to vector<32x256xf32>
    %466 = arith.mulf %465, %436 : vector<32x256xf32>
    %cst_68 = arith.constant dense<0.000000e+00> : vector<256xf32>
    %467 = vector.multi_reduction <add>, %466, %cst_68 [0] : vector<32x256xf32> to vector<256xf32>
    %468 = vector.shape_cast %467 : vector<256xf32> to vector<1x256xf32>
    %469 = tpu.concatenate %440, %444, %448, %452, %456, %460, %464, %468 in 0 : vector<1x256xf32>, vector<1x256xf32>, vector<1x256xf32>, vector<1x256xf32>, vector<1x256xf32>, vector<1x256xf32>, vector<1x256xf32>, vector<1x256xf32> -> vector<8x256xf32>
    %cst_69 = arith.constant 0.176776692 : f32
    %470 = vector.broadcast %cst_69 : f32 to vector<8x256xf32>
    %471 = arith.mulf %469, %470 : vector<8x256xf32>
    %cst_70 = arith.constant dense<0xFF800000> : vector<256xf32>
    %472 = vector.multi_reduction <maximumf>, %471, %cst_70 [0] : vector<8x256xf32> to vector<256xf32>
    %473 = vector.shape_cast %472 : vector<256xf32> to vector<1x256xf32>
    %474 = vector.broadcast %473 : vector<1x256xf32> to vector<8x256xf32>
    %475 = arith.subf %471, %474 : vector<8x256xf32>
    %476 = math.exp %475 : vector<8x256xf32>
    %cst_71 = arith.constant dense<0.000000e+00> : vector<256xf32>
    %477 = vector.multi_reduction <add>, %476, %cst_71 [0] : vector<8x256xf32> to vector<256xf32>
    %478 = vector.shape_cast %477 : vector<256xf32> to vector<1x256xf32>
    %479 = tpu.reciprocal %478 {approx = true} : vector<1x256xf32> -> vector<1x256xf32>
    %480 = vector.broadcast %479 : vector<1x256xf32> to vector<8x256xf32>
    %481 = arith.mulf %476, %480 : vector<8x256xf32>
    %482 = vector.extract_strided_slice %481 {offsets = [0, 0], sizes = [1, 256], strides = [1, 1]} : vector<8x256xf32> to vector<1x256xf32>
    %483 = vector.extract_strided_slice %10 {offsets = [0, 0], sizes = [32, 256], strides = [1, 1]} : vector<256x256xf32> to vector<32x256xf32>
    %484 = vector.broadcast %482 : vector<1x256xf32> to vector<32x256xf32>
    %485 = arith.mulf %484, %483 : vector<32x256xf32>
    %486 = vector.extract_strided_slice %481 {offsets = [1, 0], sizes = [1, 256], strides = [1, 1]} : vector<8x256xf32> to vector<1x256xf32>
    %487 = vector.extract_strided_slice %10 {offsets = [32, 0], sizes = [32, 256], strides = [1, 1]} : vector<256x256xf32> to vector<32x256xf32>
    %488 = vector.broadcast %486 : vector<1x256xf32> to vector<32x256xf32>
    %489 = arith.mulf %488, %487 : vector<32x256xf32>
    %490 = arith.addf %485, %489 : vector<32x256xf32>
    %491 = vector.extract_strided_slice %481 {offsets = [2, 0], sizes = [1, 256], strides = [1, 1]} : vector<8x256xf32> to vector<1x256xf32>
    %492 = vector.extract_strided_slice %10 {offsets = [64, 0], sizes = [32, 256], strides = [1, 1]} : vector<256x256xf32> to vector<32x256xf32>
    %493 = vector.broadcast %491 : vector<1x256xf32> to vector<32x256xf32>
    %494 = arith.mulf %493, %492 : vector<32x256xf32>
    %495 = arith.addf %490, %494 : vector<32x256xf32>
    %496 = vector.extract_strided_slice %481 {offsets = [3, 0], sizes = [1, 256], strides = [1, 1]} : vector<8x256xf32> to vector<1x256xf32>
    %497 = vector.extract_strided_slice %10 {offsets = [96, 0], sizes = [32, 256], strides = [1, 1]} : vector<256x256xf32> to vector<32x256xf32>
    %498 = vector.broadcast %496 : vector<1x256xf32> to vector<32x256xf32>
    %499 = arith.mulf %498, %497 : vector<32x256xf32>
    %500 = arith.addf %495, %499 : vector<32x256xf32>
    %501 = vector.extract_strided_slice %481 {offsets = [4, 0], sizes = [1, 256], strides = [1, 1]} : vector<8x256xf32> to vector<1x256xf32>
    %502 = vector.extract_strided_slice %10 {offsets = [128, 0], sizes = [32, 256], strides = [1, 1]} : vector<256x256xf32> to vector<32x256xf32>
    %503 = vector.broadcast %501 : vector<1x256xf32> to vector<32x256xf32>
    %504 = arith.mulf %503, %502 : vector<32x256xf32>
    %505 = arith.addf %500, %504 : vector<32x256xf32>
    %506 = vector.extract_strided_slice %481 {offsets = [5, 0], sizes = [1, 256], strides = [1, 1]} : vector<8x256xf32> to vector<1x256xf32>
    %507 = vector.extract_strided_slice %10 {offsets = [160, 0], sizes = [32, 256], strides = [1, 1]} : vector<256x256xf32> to vector<32x256xf32>
    %508 = vector.broadcast %506 : vector<1x256xf32> to vector<32x256xf32>
    %509 = arith.mulf %508, %507 : vector<32x256xf32>
    %510 = arith.addf %505, %509 : vector<32x256xf32>
    %511 = vector.extract_strided_slice %481 {offsets = [6, 0], sizes = [1, 256], strides = [1, 1]} : vector<8x256xf32> to vector<1x256xf32>
    %512 = vector.extract_strided_slice %10 {offsets = [192, 0], sizes = [32, 256], strides = [1, 1]} : vector<256x256xf32> to vector<32x256xf32>
    %513 = vector.broadcast %511 : vector<1x256xf32> to vector<32x256xf32>
    %514 = arith.mulf %513, %512 : vector<32x256xf32>
    %515 = arith.addf %510, %514 : vector<32x256xf32>
    %516 = vector.extract_strided_slice %481 {offsets = [7, 0], sizes = [1, 256], strides = [1, 1]} : vector<8x256xf32> to vector<1x256xf32>
    %517 = vector.extract_strided_slice %10 {offsets = [224, 0], sizes = [32, 256], strides = [1, 1]} : vector<256x256xf32> to vector<32x256xf32>
    %518 = vector.broadcast %516 : vector<1x256xf32> to vector<32x256xf32>
    %519 = arith.mulf %518, %517 : vector<32x256xf32>
    %520 = arith.addf %515, %519 : vector<32x256xf32>
    %521 = vector.extract_strided_slice %9 {offsets = [192, 0], sizes = [32, 256], strides = [1, 1]} : vector<256x256xf32> to vector<32x256xf32>
    %522 = vector.extract_strided_slice %8 {offsets = [0, 0], sizes = [32, 256], strides = [1, 1]} : vector<256x256xf32> to vector<32x256xf32>
    %523 = arith.mulf %522, %521 : vector<32x256xf32>
    %cst_72 = arith.constant dense<0.000000e+00> : vector<256xf32>
    %524 = vector.multi_reduction <add>, %523, %cst_72 [0] : vector<32x256xf32> to vector<256xf32>
    %525 = vector.shape_cast %524 : vector<256xf32> to vector<1x256xf32>
    %526 = vector.extract_strided_slice %8 {offsets = [32, 0], sizes = [32, 256], strides = [1, 1]} : vector<256x256xf32> to vector<32x256xf32>
    %527 = arith.mulf %526, %521 : vector<32x256xf32>
    %cst_73 = arith.constant dense<0.000000e+00> : vector<256xf32>
    %528 = vector.multi_reduction <add>, %527, %cst_73 [0] : vector<32x256xf32> to vector<256xf32>
    %529 = vector.shape_cast %528 : vector<256xf32> to vector<1x256xf32>
    %530 = vector.extract_strided_slice %8 {offsets = [64, 0], sizes = [32, 256], strides = [1, 1]} : vector<256x256xf32> to vector<32x256xf32>
    %531 = arith.mulf %530, %521 : vector<32x256xf32>
    %cst_74 = arith.constant dense<0.000000e+00> : vector<256xf32>
    %532 = vector.multi_reduction <add>, %531, %cst_74 [0] : vector<32x256xf32> to vector<256xf32>
    %533 = vector.shape_cast %532 : vector<256xf32> to vector<1x256xf32>
    %534 = vector.extract_strided_slice %8 {offsets = [96, 0], sizes = [32, 256], strides = [1, 1]} : vector<256x256xf32> to vector<32x256xf32>
    %535 = arith.mulf %534, %521 : vector<32x256xf32>
    %cst_75 = arith.constant dense<0.000000e+00> : vector<256xf32>
    %536 = vector.multi_reduction <add>, %535, %cst_75 [0] : vector<32x256xf32> to vector<256xf32>
    %537 = vector.shape_cast %536 : vector<256xf32> to vector<1x256xf32>
    %538 = vector.extract_strided_slice %8 {offsets = [128, 0], sizes = [32, 256], strides = [1, 1]} : vector<256x256xf32> to vector<32x256xf32>
    %539 = arith.mulf %538, %521 : vector<32x256xf32>
    %cst_76 = arith.constant dense<0.000000e+00> : vector<256xf32>
    %540 = vector.multi_reduction <add>, %539, %cst_76 [0] : vector<32x256xf32> to vector<256xf32>
    %541 = vector.shape_cast %540 : vector<256xf32> to vector<1x256xf32>
    %542 = vector.extract_strided_slice %8 {offsets = [160, 0], sizes = [32, 256], strides = [1, 1]} : vector<256x256xf32> to vector<32x256xf32>
    %543 = arith.mulf %542, %521 : vector<32x256xf32>
    %cst_77 = arith.constant dense<0.000000e+00> : vector<256xf32>
    %544 = vector.multi_reduction <add>, %543, %cst_77 [0] : vector<32x256xf32> to vector<256xf32>
    %545 = vector.shape_cast %544 : vector<256xf32> to vector<1x256xf32>
    %546 = vector.extract_strided_slice %8 {offsets = [192, 0], sizes = [32, 256], strides = [1, 1]} : vector<256x256xf32> to vector<32x256xf32>
    %547 = arith.mulf %546, %521 : vector<32x256xf32>
    %cst_78 = arith.constant dense<0.000000e+00> : vector<256xf32>
    %548 = vector.multi_reduction <add>, %547, %cst_78 [0] : vector<32x256xf32> to vector<256xf32>
    %549 = vector.shape_cast %548 : vector<256xf32> to vector<1x256xf32>
    %550 = vector.extract_strided_slice %8 {offsets = [224, 0], sizes = [32, 256], strides = [1, 1]} : vector<256x256xf32> to vector<32x256xf32>
    %551 = arith.mulf %550, %521 : vector<32x256xf32>
    %cst_79 = arith.constant dense<0.000000e+00> : vector<256xf32>
    %552 = vector.multi_reduction <add>, %551, %cst_79 [0] : vector<32x256xf32> to vector<256xf32>
    %553 = vector.shape_cast %552 : vector<256xf32> to vector<1x256xf32>
    %554 = tpu.concatenate %525, %529, %533, %537, %541, %545, %549, %553 in 0 : vector<1x256xf32>, vector<1x256xf32>, vector<1x256xf32>, vector<1x256xf32>, vector<1x256xf32>, vector<1x256xf32>, vector<1x256xf32>, vector<1x256xf32> -> vector<8x256xf32>
    %cst_80 = arith.constant 0.176776692 : f32
    %555 = vector.broadcast %cst_80 : f32 to vector<8x256xf32>
    %556 = arith.mulf %554, %555 : vector<8x256xf32>
    %cst_81 = arith.constant dense<0xFF800000> : vector<256xf32>
    %557 = vector.multi_reduction <maximumf>, %556, %cst_81 [0] : vector<8x256xf32> to vector<256xf32>
    %558 = vector.shape_cast %557 : vector<256xf32> to vector<1x256xf32>
    %559 = vector.broadcast %558 : vector<1x256xf32> to vector<8x256xf32>
    %560 = arith.subf %556, %559 : vector<8x256xf32>
    %561 = math.exp %560 : vector<8x256xf32>
    %cst_82 = arith.constant dense<0.000000e+00> : vector<256xf32>
    %562 = vector.multi_reduction <add>, %561, %cst_82 [0] : vector<8x256xf32> to vector<256xf32>
    %563 = vector.shape_cast %562 : vector<256xf32> to vector<1x256xf32>
    %564 = tpu.reciprocal %563 {approx = true} : vector<1x256xf32> -> vector<1x256xf32>
    %565 = vector.broadcast %564 : vector<1x256xf32> to vector<8x256xf32>
    %566 = arith.mulf %561, %565 : vector<8x256xf32>
    %567 = vector.extract_strided_slice %566 {offsets = [0, 0], sizes = [1, 256], strides = [1, 1]} : vector<8x256xf32> to vector<1x256xf32>
    %568 = vector.extract_strided_slice %10 {offsets = [0, 0], sizes = [32, 256], strides = [1, 1]} : vector<256x256xf32> to vector<32x256xf32>
    %569 = vector.broadcast %567 : vector<1x256xf32> to vector<32x256xf32>
    %570 = arith.mulf %569, %568 : vector<32x256xf32>
    %571 = vector.extract_strided_slice %566 {offsets = [1, 0], sizes = [1, 256], strides = [1, 1]} : vector<8x256xf32> to vector<1x256xf32>
    %572 = vector.extract_strided_slice %10 {offsets = [32, 0], sizes = [32, 256], strides = [1, 1]} : vector<256x256xf32> to vector<32x256xf32>
    %573 = vector.broadcast %571 : vector<1x256xf32> to vector<32x256xf32>
    %574 = arith.mulf %573, %572 : vector<32x256xf32>
    %575 = arith.addf %570, %574 : vector<32x256xf32>
    %576 = vector.extract_strided_slice %566 {offsets = [2, 0], sizes = [1, 256], strides = [1, 1]} : vector<8x256xf32> to vector<1x256xf32>
    %577 = vector.extract_strided_slice %10 {offsets = [64, 0], sizes = [32, 256], strides = [1, 1]} : vector<256x256xf32> to vector<32x256xf32>
    %578 = vector.broadcast %576 : vector<1x256xf32> to vector<32x256xf32>
    %579 = arith.mulf %578, %577 : vector<32x256xf32>
    %580 = arith.addf %575, %579 : vector<32x256xf32>
    %581 = vector.extract_strided_slice %566 {offsets = [3, 0], sizes = [1, 256], strides = [1, 1]} : vector<8x256xf32> to vector<1x256xf32>
    %582 = vector.extract_strided_slice %10 {offsets = [96, 0], sizes = [32, 256], strides = [1, 1]} : vector<256x256xf32> to vector<32x256xf32>
    %583 = vector.broadcast %581 : vector<1x256xf32> to vector<32x256xf32>
    %584 = arith.mulf %583, %582 : vector<32x256xf32>
    %585 = arith.addf %580, %584 : vector<32x256xf32>
    %586 = vector.extract_strided_slice %566 {offsets = [4, 0], sizes = [1, 256], strides = [1, 1]} : vector<8x256xf32> to vector<1x256xf32>
    %587 = vector.extract_strided_slice %10 {offsets = [128, 0], sizes = [32, 256], strides = [1, 1]} : vector<256x256xf32> to vector<32x256xf32>
    %588 = vector.broadcast %586 : vector<1x256xf32> to vector<32x256xf32>
    %589 = arith.mulf %588, %587 : vector<32x256xf32>
    %590 = arith.addf %585, %589 : vector<32x256xf32>
    %591 = vector.extract_strided_slice %566 {offsets = [5, 0], sizes = [1, 256], strides = [1, 1]} : vector<8x256xf32> to vector<1x256xf32>
    %592 = vector.extract_strided_slice %10 {offsets = [160, 0], sizes = [32, 256], strides = [1, 1]} : vector<256x256xf32> to vector<32x256xf32>
    %593 = vector.broadcast %591 : vector<1x256xf32> to vector<32x256xf32>
    %594 = arith.mulf %593, %592 : vector<32x256xf32>
    %595 = arith.addf %590, %594 : vector<32x256xf32>
    %596 = vector.extract_strided_slice %566 {offsets = [6, 0], sizes = [1, 256], strides = [1, 1]} : vector<8x256xf32> to vector<1x256xf32>
    %597 = vector.extract_strided_slice %10 {offsets = [192, 0], sizes = [32, 256], strides = [1, 1]} : vector<256x256xf32> to vector<32x256xf32>
    %598 = vector.broadcast %596 : vector<1x256xf32> to vector<32x256xf32>
    %599 = arith.mulf %598, %597 : vector<32x256xf32>
    %600 = arith.addf %595, %599 : vector<32x256xf32>
    %601 = vector.extract_strided_slice %566 {offsets = [7, 0], sizes = [1, 256], strides = [1, 1]} : vector<8x256xf32> to vector<1x256xf32>
    %602 = vector.extract_strided_slice %10 {offsets = [224, 0], sizes = [32, 256], strides = [1, 1]} : vector<256x256xf32> to vector<32x256xf32>
    %603 = vector.broadcast %601 : vector<1x256xf32> to vector<32x256xf32>
    %604 = arith.mulf %603, %602 : vector<32x256xf32>
    %605 = arith.addf %600, %604 : vector<32x256xf32>
    %606 = vector.extract_strided_slice %9 {offsets = [224, 0], sizes = [32, 256], strides = [1, 1]} : vector<256x256xf32> to vector<32x256xf32>
    %607 = vector.extract_strided_slice %8 {offsets = [0, 0], sizes = [32, 256], strides = [1, 1]} : vector<256x256xf32> to vector<32x256xf32>
    %608 = arith.mulf %607, %606 : vector<32x256xf32>
    %cst_83 = arith.constant dense<0.000000e+00> : vector<256xf32>
    %609 = vector.multi_reduction <add>, %608, %cst_83 [0] : vector<32x256xf32> to vector<256xf32>
    %610 = vector.shape_cast %609 : vector<256xf32> to vector<1x256xf32>
    %611 = vector.extract_strided_slice %8 {offsets = [32, 0], sizes = [32, 256], strides = [1, 1]} : vector<256x256xf32> to vector<32x256xf32>
    %612 = arith.mulf %611, %606 : vector<32x256xf32>
    %cst_84 = arith.constant dense<0.000000e+00> : vector<256xf32>
    %613 = vector.multi_reduction <add>, %612, %cst_84 [0] : vector<32x256xf32> to vector<256xf32>
    %614 = vector.shape_cast %613 : vector<256xf32> to vector<1x256xf32>
    %615 = vector.extract_strided_slice %8 {offsets = [64, 0], sizes = [32, 256], strides = [1, 1]} : vector<256x256xf32> to vector<32x256xf32>
    %616 = arith.mulf %615, %606 : vector<32x256xf32>
    %cst_85 = arith.constant dense<0.000000e+00> : vector<256xf32>
    %617 = vector.multi_reduction <add>, %616, %cst_85 [0] : vector<32x256xf32> to vector<256xf32>
    %618 = vector.shape_cast %617 : vector<256xf32> to vector<1x256xf32>
    %619 = vector.extract_strided_slice %8 {offsets = [96, 0], sizes = [32, 256], strides = [1, 1]} : vector<256x256xf32> to vector<32x256xf32>
    %620 = arith.mulf %619, %606 : vector<32x256xf32>
    %cst_86 = arith.constant dense<0.000000e+00> : vector<256xf32>
    %621 = vector.multi_reduction <add>, %620, %cst_86 [0] : vector<32x256xf32> to vector<256xf32>
    %622 = vector.shape_cast %621 : vector<256xf32> to vector<1x256xf32>
    %623 = vector.extract_strided_slice %8 {offsets = [128, 0], sizes = [32, 256], strides = [1, 1]} : vector<256x256xf32> to vector<32x256xf32>
    %624 = arith.mulf %623, %606 : vector<32x256xf32>
    %cst_87 = arith.constant dense<0.000000e+00> : vector<256xf32>
    %625 = vector.multi_reduction <add>, %624, %cst_87 [0] : vector<32x256xf32> to vector<256xf32>
    %626 = vector.shape_cast %625 : vector<256xf32> to vector<1x256xf32>
    %627 = vector.extract_strided_slice %8 {offsets = [160, 0], sizes = [32, 256], strides = [1, 1]} : vector<256x256xf32> to vector<32x256xf32>
    %628 = arith.mulf %627, %606 : vector<32x256xf32>
    %cst_88 = arith.constant dense<0.000000e+00> : vector<256xf32>
    %629 = vector.multi_reduction <add>, %628, %cst_88 [0] : vector<32x256xf32> to vector<256xf32>
    %630 = vector.shape_cast %629 : vector<256xf32> to vector<1x256xf32>
    %631 = vector.extract_strided_slice %8 {offsets = [192, 0], sizes = [32, 256], strides = [1, 1]} : vector<256x256xf32> to vector<32x256xf32>
    %632 = arith.mulf %631, %606 : vector<32x256xf32>
    %cst_89 = arith.constant dense<0.000000e+00> : vector<256xf32>
    %633 = vector.multi_reduction <add>, %632, %cst_89 [0] : vector<32x256xf32> to vector<256xf32>
    %634 = vector.shape_cast %633 : vector<256xf32> to vector<1x256xf32>
    %635 = vector.extract_strided_slice %8 {offsets = [224, 0], sizes = [32, 256], strides = [1, 1]} : vector<256x256xf32> to vector<32x256xf32>
    %636 = arith.mulf %635, %606 : vector<32x256xf32>
    %cst_90 = arith.constant dense<0.000000e+00> : vector<256xf32>
    %637 = vector.multi_reduction <add>, %636, %cst_90 [0] : vector<32x256xf32> to vector<256xf32>
    %638 = vector.shape_cast %637 : vector<256xf32> to vector<1x256xf32>
    %639 = tpu.concatenate %610, %614, %618, %622, %626, %630, %634, %638 in 0 : vector<1x256xf32>, vector<1x256xf32>, vector<1x256xf32>, vector<1x256xf32>, vector<1x256xf32>, vector<1x256xf32>, vector<1x256xf32>, vector<1x256xf32> -> vector<8x256xf32>
    %cst_91 = arith.constant 0.176776692 : f32
    %640 = vector.broadcast %cst_91 : f32 to vector<8x256xf32>
    %641 = arith.mulf %639, %640 : vector<8x256xf32>
    %cst_92 = arith.constant dense<0xFF800000> : vector<256xf32>
    %642 = vector.multi_reduction <maximumf>, %641, %cst_92 [0] : vector<8x256xf32> to vector<256xf32>
    %643 = vector.shape_cast %642 : vector<256xf32> to vector<1x256xf32>
    %644 = vector.broadcast %643 : vector<1x256xf32> to vector<8x256xf32>
    %645 = arith.subf %641, %644 : vector<8x256xf32>
    %646 = math.exp %645 : vector<8x256xf32>
    %cst_93 = arith.constant dense<0.000000e+00> : vector<256xf32>
    %647 = vector.multi_reduction <add>, %646, %cst_93 [0] : vector<8x256xf32> to vector<256xf32>
    %648 = vector.shape_cast %647 : vector<256xf32> to vector<1x256xf32>
    %649 = tpu.reciprocal %648 {approx = true} : vector<1x256xf32> -> vector<1x256xf32>
    %650 = vector.broadcast %649 : vector<1x256xf32> to vector<8x256xf32>
    %651 = arith.mulf %646, %650 : vector<8x256xf32>
    %652 = vector.extract_strided_slice %651 {offsets = [0, 0], sizes = [1, 256], strides = [1, 1]} : vector<8x256xf32> to vector<1x256xf32>
    %653 = vector.extract_strided_slice %10 {offsets = [0, 0], sizes = [32, 256], strides = [1, 1]} : vector<256x256xf32> to vector<32x256xf32>
    %654 = vector.broadcast %652 : vector<1x256xf32> to vector<32x256xf32>
    %655 = arith.mulf %654, %653 : vector<32x256xf32>
    %656 = vector.extract_strided_slice %651 {offsets = [1, 0], sizes = [1, 256], strides = [1, 1]} : vector<8x256xf32> to vector<1x256xf32>
    %657 = vector.extract_strided_slice %10 {offsets = [32, 0], sizes = [32, 256], strides = [1, 1]} : vector<256x256xf32> to vector<32x256xf32>
    %658 = vector.broadcast %656 : vector<1x256xf32> to vector<32x256xf32>
    %659 = arith.mulf %658, %657 : vector<32x256xf32>
    %660 = arith.addf %655, %659 : vector<32x256xf32>
    %661 = vector.extract_strided_slice %651 {offsets = [2, 0], sizes = [1, 256], strides = [1, 1]} : vector<8x256xf32> to vector<1x256xf32>
    %662 = vector.extract_strided_slice %10 {offsets = [64, 0], sizes = [32, 256], strides = [1, 1]} : vector<256x256xf32> to vector<32x256xf32>
    %663 = vector.broadcast %661 : vector<1x256xf32> to vector<32x256xf32>
    %664 = arith.mulf %663, %662 : vector<32x256xf32>
    %665 = arith.addf %660, %664 : vector<32x256xf32>
    %666 = vector.extract_strided_slice %651 {offsets = [3, 0], sizes = [1, 256], strides = [1, 1]} : vector<8x256xf32> to vector<1x256xf32>
    %667 = vector.extract_strided_slice %10 {offsets = [96, 0], sizes = [32, 256], strides = [1, 1]} : vector<256x256xf32> to vector<32x256xf32>
    %668 = vector.broadcast %666 : vector<1x256xf32> to vector<32x256xf32>
    %669 = arith.mulf %668, %667 : vector<32x256xf32>
    %670 = arith.addf %665, %669 : vector<32x256xf32>
    %671 = vector.extract_strided_slice %651 {offsets = [4, 0], sizes = [1, 256], strides = [1, 1]} : vector<8x256xf32> to vector<1x256xf32>
    %672 = vector.extract_strided_slice %10 {offsets = [128, 0], sizes = [32, 256], strides = [1, 1]} : vector<256x256xf32> to vector<32x256xf32>
    %673 = vector.broadcast %671 : vector<1x256xf32> to vector<32x256xf32>
    %674 = arith.mulf %673, %672 : vector<32x256xf32>
    %675 = arith.addf %670, %674 : vector<32x256xf32>
    %676 = vector.extract_strided_slice %651 {offsets = [5, 0], sizes = [1, 256], strides = [1, 1]} : vector<8x256xf32> to vector<1x256xf32>
    %677 = vector.extract_strided_slice %10 {offsets = [160, 0], sizes = [32, 256], strides = [1, 1]} : vector<256x256xf32> to vector<32x256xf32>
    %678 = vector.broadcast %676 : vector<1x256xf32> to vector<32x256xf32>
    %679 = arith.mulf %678, %677 : vector<32x256xf32>
    %680 = arith.addf %675, %679 : vector<32x256xf32>
    %681 = vector.extract_strided_slice %651 {offsets = [6, 0], sizes = [1, 256], strides = [1, 1]} : vector<8x256xf32> to vector<1x256xf32>
    %682 = vector.extract_strided_slice %10 {offsets = [192, 0], sizes = [32, 256], strides = [1, 1]} : vector<256x256xf32> to vector<32x256xf32>
    %683 = vector.broadcast %681 : vector<1x256xf32> to vector<32x256xf32>
    %684 = arith.mulf %683, %682 : vector<32x256xf32>
    %685 = arith.addf %680, %684 : vector<32x256xf32>
    %686 = vector.extract_strided_slice %651 {offsets = [7, 0], sizes = [1, 256], strides = [1, 1]} : vector<8x256xf32> to vector<1x256xf32>
    %687 = vector.extract_strided_slice %10 {offsets = [224, 0], sizes = [32, 256], strides = [1, 1]} : vector<256x256xf32> to vector<32x256xf32>
    %688 = vector.broadcast %686 : vector<1x256xf32> to vector<32x256xf32>
    %689 = arith.mulf %688, %687 : vector<32x256xf32>
    %690 = arith.addf %685, %689 : vector<32x256xf32>
    %691 = tpu.concatenate %95, %180, %265, %350, %435, %520, %605, %690 in 0 : vector<32x256xf32>, vector<32x256xf32>, vector<32x256xf32>, vector<32x256xf32>, vector<32x256xf32>, vector<32x256xf32>, vector<32x256xf32>, vector<32x256xf32> -> vector<256x256xf32>
    %c0_94 = arith.constant 0 : index
    %c0_95 = arith.constant 0 : index
    %692 = vector.load %arg5[%c0_94, %c0_95] : memref<512x256xbf16, #tpu.memory_space<vmem>>, vector<512x256xbf16>
    %693 = arith.truncf %691 : vector<256x256xf32> to vector<256x256xbf16>
    %cst_96 = arith.constant dense<0.000000e+00> : vector<512x256xf32>
    %694 = tpu.matmul %692, %693, %cst_96 {dimension_numbers = #tpu.dot_dimension_numbers<[1], [0], [0], [1], [0, 0, 1, 1], [], []>} : vector<512x256xbf16>, vector<256x256xbf16>, vector<512x256xf32> -> vector<512x256xf32>
    %c0_97 = arith.constant 0 : index
    %c0_98 = arith.constant 0 : index
    %695 = vector.load %arg6[%c0_97, %c0_98] : memref<512x1xf32, #tpu.memory_space<vmem>>, vector<512x1xf32>
    %696 = vector.broadcast %695 : vector<512x1xf32> to vector<512x256xf32>
    %697 = arith.addf %694, %696 : vector<512x256xf32>
    %698 = arith.addf %1, %697 : vector<512x256xf32>
    %c0_99 = arith.constant 0 : index
    %c0_100 = arith.constant 0 : index
    %c0_101 = arith.constant 0 : index
    %699 = vector.load %arg7[%c0_99, %c0_100, %c0_101] : memref<1x512x256xf32, #tpu.memory_space<vmem>>, vector<1x512x256xf32>
    %700 = vector.shape_cast %699 : vector<1x512x256xf32> to vector<512x256xf32>
    %701 = vector.shape_cast %698 : vector<512x256xf32> to vector<1x512x256xf32>
    tpu.vector_store %arg7[%c0_99, %c0_100, %c0_101], %701 {strides = array<i32>} : memref<1x512x256xf32, #tpu.memory_space<vmem>>, vector<1x512x256xf32>,
    return
  }
  func.func @transform_0(%arg0: i32, %arg1: i32) -> (i32, i32, i32) {
    %c0_i32 = arith.constant 0 : i32
    %c0_i32_0 = arith.constant 0 : i32
    return %arg0, %c0_i32, %arg1 : i32, i32, i32
  }
  func.func @transform_1(%arg0: i32, %arg1: i32) -> (i32, i32) {
    %c0_i32 = arith.constant 0 : i32
    %c0_i32_0 = arith.constant 0 : i32
    %c0_i32_1 = arith.constant 0 : i32
    return %c0_i32, %c0_i32_0 : i32, i32
  }
  func.func @transform_2(%arg0: i32, %arg1: i32) -> (i32, i32) {
    %c0_i32 = arith.constant 0 : i32
    %c0_i32_0 = arith.constant 0 : i32
    %c0_i32_1 = arith.constant 0 : i32
    return %c0_i32, %c0_i32_0 : i32, i32
  }
  func.func @transform_3(%arg0: i32, %arg1: i32) -> (i32, i32) {
    %c0_i32 = arith.constant 0 : i32
    %c0_i32_0 = arith.constant 0 : i32
    %c0_i32_1 = arith.constant 0 : i32
    return %c0_i32, %c0_i32_0 : i32, i32
  }
  func.func @transform_4(%arg0: i32, %arg1: i32) -> (i32, i32) {
    %c0_i32 = arith.constant 0 : i32
    %c0_i32_0 = arith.constant 0 : i32
    %c0_i32_1 = arith.constant 0 : i32
    return %c0_i32, %c0_i32_0 : i32, i32
  }
  func.func @transform_5(%arg0: i32, %arg1: i32) -> (i32, i32, i32) {
    %c0_i32 = arith.constant 0 : i32
    %c0_i32_0 = arith.constant 0 : i32
    return %arg0, %c0_i32, %arg1 : i32, i32, i32
  }
}

</mosaic_0001>

<llo_original>
// kernel: tile.18
$region0: #{tile.18}
  #allocation0 [shape = 's32[1]{0}', space=sflag, size = 0x4, scoped, tag = 'scoped memory for tile.18']
  %s0 = inlined_call_operand.vmem [shape: f32[32], index: 0, kind: input, shape index: {}]
  %s1 = inlined_call_operand.vmem [shape: f32[8,32], index: 1, kind: output, shape index: {}]
  // Predicated region
  $region2: #{tile.18} parent=0 // pred_check
    _
  $region3: #{tile.18} parent=0 // pred_check_branch
    %3 = sbr.rel (0) target = $region5
  $region4: #{tile.18} parent=0 // pred_region
    _
  $region5: #{tile.18} parent=0 // pred_fallthru
    _
  %v4 = vld [vmem:[%s0] ss:$0 sm:$0xff]
  %5 = vst [vmem:[%s1] sm:$0xff] %v4

// kernel: tile.19
$region0: #{tile.19}
  %s0 = inlined_call_operand.vmem [shape: f32[8,32], index: 0, kind: input, shape index: {}]
  %s1 = inlined_call_operand.vmem [shape: f32[256], index: 1, kind: output, shape index: {}]
  $region1: #{tile.19} parent=0
    #allocation0 [shape = 'u8[4096]{0}', space=vmem, size = 0x1000, scoped, tag = 'scoped mem for output reshape']
    %s2 = smov 3
    %v3 = vld [vmem:[%s0] ss:$4 sm:%s2]
    %vm4 = vcmask 261120
    %5 = vst.msk [vmem:[#allocation0] sm:$0x3] %vm4, %v3
    %s6 = scalar_lea.vmem %s0, 3
    %s7 = smov 3
    %v8 = vld [vmem:[%s6] ss:$4 sm:%s7]
    %9 = vrot.lane.b32.xlu0 %v8, 96
    %v10 = vpop.permute.xlu0 %9
    %vm11 = vcmask 1048320
    %12 = vst.msk [vmem:[#allocation0] sm:$0x3] %vm11, %v10
    %s13 = scalar_lea.vmem %s0, 2
    %s14 = smov 3
    %v15 = vld [vmem:[%s13] ss:$4 sm:%s14]
    %16 = vrot.lane.b32.xlu0 %v15, 64
    %v17 = vpop.permute.xlu0 %16
    %vm18 = vcmask 785920
    %19 = vst.msk [vmem:[#allocation0] sm:$0x3] %vm18, %v17
    %s20 = scalar_lea.vmem %s0, 1
    %s21 = smov 3
    %v22 = vld [vmem:[%s20] ss:$4 sm:%s21]
    %23 = vrot.lane.b32.xlu0 %v22, 32
    %v24 = vpop.permute.xlu0 %23
    %vm25 = vcmask 523520
    %26 = vst.msk [vmem:[#allocation0] sm:$0x3] %vm25, %v24
    %s28 = sshll.u32 1, 2
    %s29 = ssub.s32 %s28, 1
    %v31 = vld [vmem:[#allocation0] sm:%s29]
    %s32 = sshll.u32 1, 2
    %s33 = ssub.s32 %s32, 1
    %34 = vst [vmem:[%s1] sm:%s33] %v31

// kernel: attention_layer.1
$region0: #{attention_layer.1}
  #allocation0 [shape = 'u32[]', space=smem, size = 0x4, offset = 0x4, fixed_abs, tag = 'smem constant byte address 0x4 - core index']
  #allocation1 [shape = 'u32[144,128]{1,0:T(1,128)}', space=vmem, size = 0x12000, scoped, tag = 'internal scratch']
  %s0 = inlined_call_operand.vmem [shape: f32[2,512,256], index: 0, kind: input, shape index: {}]
  %s1 = inlined_call_operand.vmem [shape: bf16[768,512], index: 1, kind: input, shape index: {}]
  %s2 = inlined_call_operand.vmem [shape: f32[768,1], index: 2, kind: input, shape index: {}]
  %s3 = inlined_call_operand.vmem [shape: bf16[512,256], index: 3, kind: input, shape index: {}]
  %s4 = inlined_call_operand.vmem [shape: f32[512,1], index: 4, kind: input, shape index: {}]
  %s5 = inlined_call_operand.vmem [shape: f32[2,512,256], index: 5, kind: output, shape index: {}]
  %s6 = sld [smem:[#allocation0]]
  $region53: #{attention_layer.1} parent=0
    _
  %s8 = ssub.s32 1, %s6
  %s9 = scalar_select 0, %s8, %s6
  loop: start=0, step=1, limit=4
  $region2: #{attention_layer.1} parent=0 // loop_pre_header
    _
  $region3: #{attention_layer.1} parent=0 // loop_header
    %s11 = sphi 0, %s15
    %p12 = scmp.ge.s32.totalorder %s11, 4
    %s18 = sphi 0, %s30
    %s19 = sphi 0, %s26
    %s20 = sphi 0, %s18
    %s21 = sphi 0, %s19
    %s22 = sphi 0, %s20
    %s23 = sphi 0, %s21
    %s35 = sphi 0, %s37
    %s38 = sphi 0, %s35
    %s39 = sphi 0, %s38
    %s55 = sphi 0, %s39
    %s59 = sphi 0, %s59
    %s61 = sphi 0, %s59
    %s62 = sphi 0, %s61
    %s76 = sphi 0, %s62
    %s80 = sphi 0, %s80
    %s82 = sphi 0, %s80
    %s83 = sphi 0, %s82
    %s97 = sphi 0, %s83
    %s101 = sphi 0, %s101
    %s103 = sphi 0, %s101
    %s104 = sphi 0, %s103
    %s118 = sphi 0, %s104
    %s122 = sphi 0, %s122
    %s124 = sphi 0, %s122
    %s125 = sphi 0, %s124
    %s139 = sphi 0, %s125
    %s147 = sphi 0, %s149
    %s150 = sphi 0, %s147
    %s151 = sphi 0, %s150
    %s167 = sphi 0, %s151
  $region4: #{attention_layer.1} parent=0 // loop_header_branch
    %14 = sbr.rel (%p12) target = $region8
  $region5: #{attention_layer.1} parent=0 // loop_body
    %s16 = ssub.s32 %s11, 1
    %s17 = ssub.s32 %s11, 2
    %s24 = sadd.s32 1, %s19
    %p25 = scmp.ge.s32.totalorder %s24, 1
    %s26 = scalar_select %p25, 0, %s24
    %s27 = sadd.s32 1, %s18
    %s28 = scalar_select %p25, %s27, %s18
    %p29 = scmp.ge.s32.totalorder %s28, 2
    %s30 = scalar_select %p29, 0, %s28
    %s31 = ssub.s32 %s18, %s30
    %s32 = ssub.s32 %s19, %s26
    %s33 = sor.u32 %s31, %s32
    %p34 = scmp.eq.s32.totalorder %s33, 0
    %s36 = sadd.s32 %s35, 1
    %s37 = scalar_select %p34, %s35, %s36
    %p40 = pneg %p34
    %p41 = scmp.eq.s32.totalorder %s11, 1
    %p42 = por %p40, %p41
    %p43 = scmp.ne.s32.totalorder %s35, %s38
    %p44 = scmp.eq.s32.totalorder %s11, 0
    %p45 = por %p43, %p44
    %p46 = scmp.ne.s32.totalorder %s35, %s38
    %p47 = scmp.eq.s32.totalorder %s16, 1
    %p48 = por %p46, %p47
    %p49 = scmp.ne.s32.totalorder %s38, %s39
    %p50 = scmp.eq.s32.totalorder %s16, 0
    %p51 = por %p49, %p50
    %p52 = scmp.ne.s32.totalorder %s38, %s39
    %p53 = scmp.eq.s32.totalorder %s17, 1
    %p54 = por %p52, %p53
    %p56 = scmp.ne.s32.totalorder %s39, %s55
    %p57 = scmp.eq.s32.totalorder %s17, 0
    %p58 = por %p56, %p57
    %s60 = sadd.s32 %s59, 1
    %p63 = scmp.eq.s32.totalorder %s11, 1
    %p64 = scmp.ne.s32.totalorder %s59, %s61
    %p65 = scmp.eq.s32.totalorder %s11, 0
    %p66 = por %p64, %p65
    %p67 = scmp.ne.s32.totalorder %s59, %s61
    %p68 = scmp.eq.s32.totalorder %s16, 1
    %p69 = por %p67, %p68
    %p70 = scmp.ne.s32.totalorder %s61, %s62
    %p71 = scmp.eq.s32.totalorder %s16, 0
    %p72 = por %p70, %p71
    %p73 = scmp.ne.s32.totalorder %s61, %s62
    %p74 = scmp.eq.s32.totalorder %s17, 1
    %p75 = por %p73, %p74
    %p77 = scmp.ne.s32.totalorder %s62, %s76
    %p78 = scmp.eq.s32.totalorder %s17, 0
    %p79 = por %p77, %p78
    %s81 = sadd.s32 %s80, 1
    %p84 = scmp.eq.s32.totalorder %s11, 1
    %p85 = scmp.ne.s32.totalorder %s80, %s82
    %p86 = scmp.eq.s32.totalorder %s11, 0
    %p87 = por %p85, %p86
    %p88 = scmp.ne.s32.totalorder %s80, %s82
    %p89 = scmp.eq.s32.totalorder %s16, 1
    %p90 = por %p88, %p89
    %p91 = scmp.ne.s32.totalorder %s82, %s83
    %p92 = scmp.eq.s32.totalorder %s16, 0
    %p93 = por %p91, %p92
    %p94 = scmp.ne.s32.totalorder %s82, %s83
    %p95 = scmp.eq.s32.totalorder %s17, 1
    %p96 = por %p94, %p95
    %p98 = scmp.ne.s32.totalorder %s83, %s97
    %p99 = scmp.eq.s32.totalorder %s17, 0
    %p100 = por %p98, %p99
    %s102 = sadd.s32 %s101, 1
    %p105 = scmp.eq.s32.totalorder %s11, 1
    %p106 = scmp.ne.s32.totalorder %s101, %s103
    %p107 = scmp.eq.s32.totalorder %s11, 0
    %p108 = por %p106, %p107
    %p109 = scmp.ne.s32.totalorder %s101, %s103
    %p110 = scmp.eq.s32.totalorder %s16, 1
    %p111 = por %p109, %p110
    %p112 = scmp.ne.s32.totalorder %s103, %s104
    %p113 = scmp.eq.s32.totalorder %s16, 0
    %p114 = por %p112, %p113
    %p115 = scmp.ne.s32.totalorder %s103, %s104
    %p116 = scmp.eq.s32.totalorder %s17, 1
    %p117 = por %p115, %p116
    %p119 = scmp.ne.s32.totalorder %s104, %s118
    %p120 = scmp.eq.s32.totalorder %s17, 0
    %p121 = por %p119, %p120
    %s123 = sadd.s32 %s122, 1
    %p126 = scmp.eq.s32.totalorder %s11, 1
    %p127 = scmp.ne.s32.totalorder %s122, %s124
    %p128 = scmp.eq.s32.totalorder %s11, 0
    %p129 = por %p127, %p128
    %p130 = scmp.ne.s32.totalorder %s122, %s124
    %p131 = scmp.eq.s32.totalorder %s16, 1
    %p132 = por %p130, %p131
    %p133 = scmp.ne.s32.totalorder %s124, %s125
    %p134 = scmp.eq.s32.totalorder %s16, 0
    %p135 = por %p133, %p134
    %p136 = scmp.ne.s32.totalorder %s124, %s125
    %p137 = scmp.eq.s32.totalorder %s17, 1
    %p138 = por %p136, %p137
    %p140 = scmp.ne.s32.totalorder %s125, %s139
    %p141 = scmp.eq.s32.totalorder %s17, 0
    %p142 = por %p140, %p141
    %s143 = ssub.s32 %s18, %s30
    %s144 = ssub.s32 %s19, %s26
    %s145 = sor.u32 %s143, %s144
    %p146 = scmp.eq.s32.totalorder %s145, 0
    %s148 = sadd.s32 %s147, 1
    %s149 = scalar_select %p146, %s147, %s148
    %p152 = pneg %p146
    %p153 = scmp.eq.s32.totalorder %s11, 1
    %p154 = por %p152, %p153
    %p155 = scmp.ne.s32.totalorder %s147, %s150
    %p156 = scmp.eq.s32.totalorder %s11, 0
    %p157 = por %p155, %p156
    %p158 = scmp.ne.s32.totalorder %s147, %s150
    %p159 = scmp.eq.s32.totalorder %s16, 1
    %p160 = por %p158, %p159
    %p161 = scmp.ne.s32.totalorder %s150, %s151
    %p162 = scmp.eq.s32.totalorder %s16, 0
    %p163 = por %p161, %p162
    %p164 = scmp.ne.s32.totalorder %s150, %s151
    %p165 = scmp.eq.s32.totalorder %s17, 1
    %p166 = por %p164, %p165
    %p168 = scmp.ne.s32.totalorder %s151, %s167
    %p169 = scmp.eq.s32.totalorder %s17, 0
    %p170 = por %p168, %p169
    %p171 = scmp.le.s32.totalorder 1, %s11
    %p172 = scmp.lt.s32.totalorder %s11, 3
    %p173 = pnand %p171, %p172
    %p174 = pneg %p173
    // Predicated region
    $region9: #{attention_layer.1} parent=5 // pred_check
      _
    $region10: #{attention_layer.1} parent=5 // pred_check_branch
      %176 = sbr.rel (%p173) target = $region12
    $region11: #{attention_layer.1} parent=5 // pred_region
      %s177 = ssub.s32 %s11, 1
      // Predicated region
      $region13: #{attention_layer.1} parent=11 // pred_check
        %p178 = pneg %p72
      $region14: #{attention_layer.1} parent=11 // pred_check_branch
        %180 = sbr.rel (%p178) target = $region16
      $region15: #{attention_layer.1} parent=11 // pred_region
        _
      $region16: #{attention_layer.1} parent=11 // pred_fallthru
        _
      // Predicated region
      $region17: #{attention_layer.1} parent=11 // pred_check
        %p181 = pneg %p93
      $region18: #{attention_layer.1} parent=11 // pred_check_branch
        %183 = sbr.rel (%p181) target = $region20
      $region19: #{attention_layer.1} parent=11 // pred_region
        _
      $region20: #{attention_layer.1} parent=11 // pred_fallthru
        _
      // Predicated region
      $region21: #{attention_layer.1} parent=11 // pred_check
        %p184 = pneg %p114
      $region22: #{attention_layer.1} parent=11 // pred_check_branch
        %186 = sbr.rel (%p184) target = $region24
      $region23: #{attention_layer.1} parent=11 // pred_region
        _
      $region24: #{attention_layer.1} parent=11 // pred_fallthru
        _
      // Predicated region
      $region25: #{attention_layer.1} parent=11 // pred_check
        %p187 = pneg %p135
      $region26: #{attention_layer.1} parent=11 // pred_check_branch
        %189 = sbr.rel (%p187) target = $region28
      $region27: #{attention_layer.1} parent=11 // pred_region
        _
      $region28: #{attention_layer.1} parent=11 // pred_fallthru
        _
    $region12: #{attention_layer.1} parent=5 // pred_fallthru
      _
    %p190 = scmp.lt.s32.totalorder %s11, 2
    // Predicated region
    $region29: #{attention_layer.1} parent=5 // pred_check
      %p191 = pneg %p190
    $region30: #{attention_layer.1} parent=5 // pred_check_branch
      %193 = sbr.rel (%p191) target = $region32
    $region31: #{attention_layer.1} parent=5 // pred_region
      // Predicated region
      $region33: #{attention_layer.1} parent=31 // pred_check
        %p194 = pneg %p45
      $region34: #{attention_layer.1} parent=31 // pred_check_branch
        %196 = sbr.rel (%p194) target = $region36
      $region35: #{attention_layer.1} parent=31 // pred_region
        %s197 = smul.u32 2, %s19
        %p198 = scmp.lt.s32.totalorder %s18, 1
        %s199 = scalar_select %p198, %s18, 1
        %p200 = scmp.lt.s32.totalorder %s197, 1
        %s201 = scalar_select %p200, %s197, 1
        %s202 = smul.addr %s199, 128
        %s203 = sadd.s32 %s201, %s202
        %s204 = smul.addr %s203, 8
        %s205 = scalar_lea.vmem %s0, %s204
        %s206 = smul.u32 2, %s19
      $region36: #{attention_layer.1} parent=31 // pred_fallthru
        _
    $region32: #{attention_layer.1} parent=5 // pred_fallthru
      _
    %p207 = scmp.le.s32.totalorder 1, %s11
    %p208 = scmp.lt.s32.totalorder %s11, 3
    %p209 = pnand %p207, %p208
    %p210 = pneg %p209
    // Predicated region
    $region37: #{attention_layer.1} parent=5 // pred_check
      _
    $region38: #{attention_layer.1} parent=5 // pred_check_branch
      %212 = sbr.rel (%p209) target = $region40
    $region39: #{attention_layer.1} parent=5 // pred_region
      %s213 = ssub.s32 %s11, 1
      %s214 = smul.u32 2, %s21
      %p215 = scmp.lt.s32.totalorder %s20, 1
      %s216 = scalar_select %p215, %s20, 1
      %p217 = scmp.lt.s32.totalorder %s214, 1
      %s218 = scalar_select %p217, %s214, 1
      %s219 = smul.addr %s216, 128
      %s220 = sadd.s32 %s218, %s219
      %s221 = smul.addr %s220, 8
      %s222 = scalar_lea.vmem %s0, %s221
      %p223 = pneg %p51
      %p224 = pneg %p48
      %p225 = pneg %p72
      %p226 = pneg %p69
      %p227 = pneg %p93
      %p228 = pneg %p90
      %p229 = pneg %p114
      %p230 = pneg %p111
      %p231 = pneg %p135
      %p232 = pneg %p132
      %p233 = pneg %p163
      %p234 = pneg %p160
      %s235 = smul.u32 2, %s21
      %p236 = scmp.lt.s32.totalorder %s20, 1
      %s237 = scalar_select %p236, %s20, 1
      %p238 = scmp.lt.s32.totalorder %s235, 1
      %s239 = scalar_select %p238, %s235, 1
      %s240 = smul.addr %s237, 128
      %s241 = sadd.s32 %s239, %s240
      %s242 = smul.addr %s241, 8
      %s243 = scalar_lea.vmem %s5, %s242
      %s244 = smul.u32 2, %s21
      %p245 = scmp.lt.s32.totalorder %s20, 1
      %s246 = scalar_select %p245, %s20, 1
      %p247 = scmp.lt.s32.totalorder %s244, 1
      %s248 = scalar_select %p247, %s244, 1
      %s249 = smul.addr %s246, 128
      %s250 = sadd.s32 %s248, %s249
      %s251 = smul.addr %s250, 8
      %s252 = scalar_lea.vmem %s0, %s251
      %s253 = smul.u32 2, %s21
      %s254 = smul.u32 2, %s21
      %p255 = scmp.lt.s32.totalorder %s20, 1
      %s256 = scalar_select %p255, %s20, 1
      %p257 = scmp.lt.s32.totalorder %s254, 1
      %s258 = scalar_select %p257, %s254, 1
      %s259 = smul.addr %s256, 128
      %s260 = sadd.s32 %s258, %s259
      %s261 = smul.addr %s260, 8
      %s262 = scalar_lea.vmem %s5, %s261
      %s263 = smul.u32 2, %s21
      %v264 = vld [vmem:[%s252] sm:$0xff]
      %v265 = vld [vmem:[%s252 + $0x8] sm:$0xff]
      %v266 = vld [vmem:[%s252 + $0x10] sm:$0xff]
      %v267 = vld [vmem:[%s252 + $0x18] sm:$0xff]
      %v268 = vld [vmem:[%s252 + $0x20] sm:$0xff]
      %v269 = vld [vmem:[%s252 + $0x28] sm:$0xff]
      %v270 = vld [vmem:[%s252 + $0x30] sm:$0xff]
      %v271 = vld [vmem:[%s252 + $0x38] sm:$0xff]
      %v272 = vld [vmem:[%s252 + $0x40] sm:$0xff]
      %v273 = vld [vmem:[%s252 + $0x48] sm:$0xff]
      %v274 = vld [vmem:[%s252 + $0x50] sm:$0xff]
      %v275 = vld [vmem:[%s252 + $0x58] sm:$0xff]
      %v276 = vld [vmem:[%s252 + $0x60] sm:$0xff]
      %v277 = vld [vmem:[%s252 + $0x68] sm:$0xff]
      %v278 = vld [vmem:[%s252 + $0x70] sm:$0xff]
      %v279 = vld [vmem:[%s252 + $0x78] sm:$0xff]
      %v280 = vld [vmem:[%s252 + $0x80] sm:$0xff]
      %v281 = vld [vmem:[%s252 + $0x88] sm:$0xff]
      %v282 = vld [vmem:[%s252 + $0x90] sm:$0xff]
      %v283 = vld [vmem:[%s252 + $0x98] sm:$0xff]
      %v284 = vld [vmem:[%s252 + $0xa0] sm:$0xff]
      %v285 = vld [vmem:[%s252 + $0xa8] sm:$0xff]
      %v286 = vld [vmem:[%s252 + $0xb0] sm:$0xff]
      %v287 = vld [vmem:[%s252 + $0xb8] sm:$0xff]
      %v288 = vld [vmem:[%s252 + $0xc0] sm:$0xff]
      %v289 = vld [vmem:[%s252 + $0xc8] sm:$0xff]
      %v290 = vld [vmem:[%s252 + $0xd0] sm:$0xff]
      %v291 = vld [vmem:[%s252 + $0xd8] sm:$0xff]
      %v292 = vld [vmem:[%s252 + $0xe0] sm:$0xff]
      %v293 = vld [vmem:[%s252 + $0xe8] sm:$0xff]
      %v294 = vld [vmem:[%s252 + $0xf0] sm:$0xff]
      %v295 = vld [vmem:[%s252 + $0xf8] sm:$0xff]
      %v296 = vld [vmem:[%s252 + $0x100] sm:$0xff]
      %v297 = vld [vmem:[%s252 + $0x108] sm:$0xff]
      %v298 = vld [vmem:[%s252 + $0x110] sm:$0xff]
      %v299 = vld [vmem:[%s252 + $0x118] sm:$0xff]
      %v300 = vld [vmem:[%s252 + $0x120] sm:$0xff]
      %v301 = vld [vmem:[%s252 + $0x128] sm:$0xff]
      %v302 = vld [vmem:[%s252 + $0x130] sm:$0xff]
      %v303 = vld [vmem:[%s252 + $0x138] sm:$0xff]
      %v304 = vld [vmem:[%s252 + $0x140] sm:$0xff]
      %v305 = vld [vmem:[%s252 + $0x148] sm:$0xff]
      %v306 = vld [vmem:[%s252 + $0x150] sm:$0xff]
      %v307 = vld [vmem:[%s252 + $0x158] sm:$0xff]
      %v308 = vld [vmem:[%s252 + $0x160] sm:$0xff]
      %v309 = vld [vmem:[%s252 + $0x168] sm:$0xff]
      %v310 = vld [vmem:[%s252 + $0x170] sm:$0xff]
      %v311 = vld [vmem:[%s252 + $0x178] sm:$0xff]
      %v312 = vld [vmem:[%s252 + $0x180] sm:$0xff]
      %v313 = vld [vmem:[%s252 + $0x188] sm:$0xff]
      %v314 = vld [vmem:[%s252 + $0x190] sm:$0xff]
      %v315 = vld [vmem:[%s252 + $0x198] sm:$0xff]
      %v316 = vld [vmem:[%s252 + $0x1a0] sm:$0xff]
      %v317 = vld [vmem:[%s252 + $0x1a8] sm:$0xff]
      %v318 = vld [vmem:[%s252 + $0x1b0] sm:$0xff]
      %v319 = vld [vmem:[%s252 + $0x1b8] sm:$0xff]
      %v320 = vld [vmem:[%s252 + $0x1c0] sm:$0xff]
      %v321 = vld [vmem:[%s252 + $0x1c8] sm:$0xff]
      %v322 = vld [vmem:[%s252 + $0x1d0] sm:$0xff]
      %v323 = vld [vmem:[%s252 + $0x1d8] sm:$0xff]
      %v324 = vld [vmem:[%s252 + $0x1e0] sm:$0xff]
      %v325 = vld [vmem:[%s252 + $0x1e8] sm:$0xff]
      %v326 = vld [vmem:[%s252 + $0x1f0] sm:$0xff]
      %v327 = vld [vmem:[%s252 + $0x1f8] sm:$0xff]
      %v328 = vld [vmem:[%s252 + $0x200] sm:$0xff]
      %v329 = vld [vmem:[%s252 + $0x208] sm:$0xff]
      %v330 = vld [vmem:[%s252 + $0x210] sm:$0xff]
      %v331 = vld [vmem:[%s252 + $0x218] sm:$0xff]
      %v332 = vld [vmem:[%s252 + $0x220] sm:$0xff]
      %v333 = vld [vmem:[%s252 + $0x228] sm:$0xff]
      %v334 = vld [vmem:[%s252 + $0x230] sm:$0xff]
      %v335 = vld [vmem:[%s252 + $0x238] sm:$0xff]
      %v336 = vld [vmem:[%s252 + $0x240] sm:$0xff]
      %v337 = vld [vmem:[%s252 + $0x248] sm:$0xff]
      %v338 = vld [vmem:[%s252 + $0x250] sm:$0xff]
      %v339 = vld [vmem:[%s252 + $0x258] sm:$0xff]
      %v340 = vld [vmem:[%s252 + $0x260] sm:$0xff]
      %v341 = vld [vmem:[%s252 + $0x268] sm:$0xff]
      %v342 = vld [vmem:[%s252 + $0x270] sm:$0xff]
      %v343 = vld [vmem:[%s252 + $0x278] sm:$0xff]
      %v344 = vld [vmem:[%s252 + $0x280] sm:$0xff]
      %v345 = vld [vmem:[%s252 + $0x288] sm:$0xff]
      %v346 = vld [vmem:[%s252 + $0x290] sm:$0xff]
      %v347 = vld [vmem:[%s252 + $0x298] sm:$0xff]
      %v348 = vld [vmem:[%s252 + $0x2a0] sm:$0xff]
      %v349 = vld [vmem:[%s252 + $0x2a8] sm:$0xff]
      %v350 = vld [vmem:[%s252 + $0x2b0] sm:$0xff]
      %v351 = vld [vmem:[%s252 + $0x2b8] sm:$0xff]
      %v352 = vld [vmem:[%s252 + $0x2c0] sm:$0xff]
      %v353 = vld [vmem:[%s252 + $0x2c8] sm:$0xff]
      %v354 = vld [vmem:[%s252 + $0x2d0] sm:$0xff]
      %v355 = vld [vmem:[%s252 + $0x2d8] sm:$0xff]
      %v356 = vld [vmem:[%s252 + $0x2e0] sm:$0xff]
      %v357 = vld [vmem:[%s252 + $0x2e8] sm:$0xff]
      %v358 = vld [vmem:[%s252 + $0x2f0] sm:$0xff]
      %v359 = vld [vmem:[%s252 + $0x2f8] sm:$0xff]
      %v360 = vld [vmem:[%s252 + $0x300] sm:$0xff]
      %v361 = vld [vmem:[%s252 + $0x308] sm:$0xff]
      %v362 = vld [vmem:[%s252 + $0x310] sm:$0xff]
      %v363 = vld [vmem:[%s252 + $0x318] sm:$0xff]
      %v364 = vld [vmem:[%s252 + $0x320] sm:$0xff]
      %v365 = vld [vmem:[%s252 + $0x328] sm:$0xff]
      %v366 = vld [vmem:[%s252 + $0x330] sm:$0xff]
      %v367 = vld [vmem:[%s252 + $0x338] sm:$0xff]
      %v368 = vld [vmem:[%s252 + $0x340] sm:$0xff]
      %v369 = vld [vmem:[%s252 + $0x348] sm:$0xff]
      %v370 = vld [vmem:[%s252 + $0x350] sm:$0xff]
      %v371 = vld [vmem:[%s252 + $0x358] sm:$0xff]
      %v372 = vld [vmem:[%s252 + $0x360] sm:$0xff]
      %v373 = vld [vmem:[%s252 + $0x368] sm:$0xff]
      %v374 = vld [vmem:[%s252 + $0x370] sm:$0xff]
      %v375 = vld [vmem:[%s252 + $0x378] sm:$0xff]
      %v376 = vld [vmem:[%s252 + $0x380] sm:$0xff]
      %v377 = vld [vmem:[%s252 + $0x388] sm:$0xff]
      %v378 = vld [vmem:[%s252 + $0x390] sm:$0xff]
      %v379 = vld [vmem:[%s252 + $0x398] sm:$0xff]
      %v380 = vld [vmem:[%s252 + $0x3a0] sm:$0xff]
      %v381 = vld [vmem:[%s252 + $0x3a8] sm:$0xff]
      %v382 = vld [vmem:[%s252 + $0x3b0] sm:$0xff]
      %v383 = vld [vmem:[%s252 + $0x3b8] sm:$0xff]
      %v384 = vld [vmem:[%s252 + $0x3c0] sm:$0xff]
      %v385 = vld [vmem:[%s252 + $0x3c8] sm:$0xff]
      %v386 = vld [vmem:[%s252 + $0x3d0] sm:$0xff]
      %v387 = vld [vmem:[%s252 + $0x3d8] sm:$0xff]
      %v388 = vld [vmem:[%s252 + $0x3e0] sm:$0xff]
      %v389 = vld [vmem:[%s252 + $0x3e8] sm:$0xff]
      %v390 = vld [vmem:[%s252 + $0x3f0] sm:$0xff]
      %v391 = vld [vmem:[%s252 + $0x3f8] sm:$0xff]
      %v392 = vld [vmem:[%s1] sm:$0xff]
      %v393 = vld [vmem:[%s1 + $0x8] sm:$0xff]
      %v394 = vld [vmem:[%s1 + $0x10] sm:$0xff]
      %v395 = vld [vmem:[%s1 + $0x18] sm:$0xff]
      %v396 = vld [vmem:[%s1 + $0x20] sm:$0xff]
      %v397 = vld [vmem:[%s1 + $0x28] sm:$0xff]
      %v398 = vld [vmem:[%s1 + $0x30] sm:$0xff]
      %v399 = vld [vmem:[%s1 + $0x38] sm:$0xff]
      %v400 = vld [vmem:[%s1 + $0x40] sm:$0xff]
      %v401 = vld [vmem:[%s1 + $0x48] sm:$0xff]
      %v402 = vld [vmem:[%s1 + $0x50] sm:$0xff]
      %v403 = vld [vmem:[%s1 + $0x58] sm:$0xff]
      %v404 = vld [vmem:[%s1 + $0x60] sm:$0xff]
      %v405 = vld [vmem:[%s1 + $0x68] sm:$0xff]
      %v406 = vld [vmem:[%s1 + $0x70] sm:$0xff]
      %v407 = vld [vmem:[%s1 + $0x78] sm:$0xff]
      %v408 = vld [vmem:[%s1 + $0x80] sm:$0xff]
      %v409 = vld [vmem:[%s1 + $0x88] sm:$0xff]
      %v410 = vld [vmem:[%s1 + $0x90] sm:$0xff]
      %v411 = vld [vmem:[%s1 + $0x98] sm:$0xff]
      %v412 = vld [vmem:[%s1 + $0xa0] sm:$0xff]
      %v413 = vld [vmem:[%s1 + $0xa8] sm:$0xff]
      %v414 = vld [vmem:[%s1 + $0xb0] sm:$0xff]
      %v415 = vld [vmem:[%s1 + $0xb8] sm:$0xff]
      %v416 = vld [vmem:[%s1 + $0xc0] sm:$0xff]
      %v417 = vld [vmem:[%s1 + $0xc8] sm:$0xff]
      %v418 = vld [vmem:[%s1 + $0xd0] sm:$0xff]
      %v419 = vld [vmem:[%s1 + $0xd8] sm:$0xff]
      %v420 = vld [vmem:[%s1 + $0xe0] sm:$0xff]
      %v421 = vld [vmem:[%s1 + $0xe8] sm:$0xff]
      %v422 = vld [vmem:[%s1 + $0xf0] sm:$0xff]
      %v423 = vld [vmem:[%s1 + $0xf8] sm:$0xff]
      %v424 = vld [vmem:[%s1 + $0x100] sm:$0xff]
      %v425 = vld [vmem:[%s1 + $0x108] sm:$0xff]
      %v426 = vld [vmem:[%s1 + $0x110] sm:$0xff]
      %v427 = vld [vmem:[%s1 + $0x118] sm:$0xff]
      %v428 = vld [vmem:[%s1 + $0x120] sm:$0xff]
      %v429 = vld [vmem:[%s1 + $0x128] sm:$0xff]
      %v430 = vld [vmem:[%s1 + $0x130] sm:$0xff]
      %v431 = vld [vmem:[%s1 + $0x138] sm:$0xff]
      %v432 = vld [vmem:[%s1 + $0x140] sm:$0xff]
      %v433 = vld [vmem:[%s1 + $0x148] sm:$0xff]
      %v434 = vld [vmem:[%s1 + $0x150] sm:$0xff]
      %v435 = vld [vmem:[%s1 + $0x158] sm:$0xff]
      %v436 = vld [vmem:[%s1 + $0x160] sm:$0xff]
      %v437 = vld [vmem:[%s1 + $0x168] sm:$0xff]
      %v438 = vld [vmem:[%s1 + $0x170] sm:$0xff]
      %v439 = vld [vmem:[%s1 + $0x178] sm:$0xff]
      %v440 = vld [vmem:[%s1 + $0x180] sm:$0xff]
      %v441 = vld [vmem:[%s1 + $0x188] sm:$0xff]
      %v442 = vld [vmem:[%s1 + $0x190] sm:$0xff]
      %v443 = vld [vmem:[%s1 + $0x198] sm:$0xff]
      %v444 = vld [vmem:[%s1 + $0x1a0] sm:$0xff]
      %v445 = vld [vmem:[%s1 + $0x1a8] sm:$0xff]
      %v446 = vld [vmem:[%s1 + $0x1b0] sm:$0xff]
      %v447 = vld [vmem:[%s1 + $0x1b8] sm:$0xff]
      %v448 = vld [vmem:[%s1 + $0x1c0] sm:$0xff]
      %v449 = vld [vmem:[%s1 + $0x1c8] sm:$0xff]
      %v450 = vld [vmem:[%s1 + $0x1d0] sm:$0xff]
      %v451 = vld [vmem:[%s1 + $0x1d8] sm:$0xff]
      %v452 = vld [vmem:[%s1 + $0x1e0] sm:$0xff]
      %v453 = vld [vmem:[%s1 + $0x1e8] sm:$0xff]
      %v454 = vld [vmem:[%s1 + $0x1f0] sm:$0xff]
      %v455 = vld [vmem:[%s1 + $0x1f8] sm:$0xff]
      %v456 = vld [vmem:[%s1 + $0x200] sm:$0xff]
      %v457 = vld [vmem:[%s1 + $0x208] sm:$0xff]
      %v458 = vld [vmem:[%s1 + $0x210] sm:$0xff]
      %v459 = vld [vmem:[%s1 + $0x218] sm:$0xff]
      %v460 = vld [vmem:[%s1 + $0x220] sm:$0xff]
      %v461 = vld [vmem:[%s1 + $0x228] sm:$0xff]
      %v462 = vld [vmem:[%s1 + $0x230] sm:$0xff]
      %v463 = vld [vmem:[%s1 + $0x238] sm:$0xff]
      %v464 = vld [vmem:[%s1 + $0x240] sm:$0xff]
      %v465 = vld [vmem:[%s1 + $0x248] sm:$0xff]
      %v466 = vld [vmem:[%s1 + $0x250] sm:$0xff]
      %v467 = vld [vmem:[%s1 + $0x258] sm:$0xff]
      %v468 = vld [vmem:[%s1 + $0x260] sm:$0xff]
      %v469 = vld [vmem:[%s1 + $0x268] sm:$0xff]
      %v470 = vld [vmem:[%s1 + $0x270] sm:$0xff]
      %v471 = vld [vmem:[%s1 + $0x278] sm:$0xff]
      %v472 = vld [vmem:[%s1 + $0x280] sm:$0xff]
      %v473 = vld [vmem:[%s1 + $0x288] sm:$0xff]
      %v474 = vld [vmem:[%s1 + $0x290] sm:$0xff]
      %v475 = vld [vmem:[%s1 + $0x298] sm:$0xff]
      %v476 = vld [vmem:[%s1 + $0x2a0] sm:$0xff]
      %v477 = vld [vmem:[%s1 + $0x2a8] sm:$0xff]
      %v478 = vld [vmem:[%s1 + $0x2b0] sm:$0xff]
      %v479 = vld [vmem:[%s1 + $0x2b8] sm:$0xff]
      %v480 = vld [vmem:[%s1 + $0x2c0] sm:$0xff]
      %v481 = vld [vmem:[%s1 + $0x2c8] sm:$0xff]
      %v482 = vld [vmem:[%s1 + $0x2d0] sm:$0xff]
      %v483 = vld [vmem:[%s1 + $0x2d8] sm:$0xff]
      %v484 = vld [vmem:[%s1 + $0x2e0] sm:$0xff]
      %v485 = vld [vmem:[%s1 + $0x2e8] sm:$0xff]
      %v486 = vld [vmem:[%s1 + $0x2f0] sm:$0xff]
      %v487 = vld [vmem:[%s1 + $0x2f8] sm:$0xff]
      %v488 = vld [vmem:[%s1 + $0x300] sm:$0xff]
      %v489 = vld [vmem:[%s1 + $0x308] sm:$0xff]
      %v490 = vld [vmem:[%s1 + $0x310] sm:$0xff]
      %v491 = vld [vmem:[%s1 + $0x318] sm:$0xff]
      %v492 = vld [vmem:[%s1 + $0x320] sm:$0xff]
      %v493 = vld [vmem:[%s1 + $0x328] sm:$0xff]
      %v494 = vld [vmem:[%s1 + $0x330] sm:$0xff]
      %v495 = vld [vmem:[%s1 + $0x338] sm:$0xff]
      %v496 = vld [vmem:[%s1 + $0x340] sm:$0xff]
      %v497 = vld [vmem:[%s1 + $0x348] sm:$0xff]
      %v498 = vld [vmem:[%s1 + $0x350] sm:$0xff]
      %v499 = vld [vmem:[%s1 + $0x358] sm:$0xff]
      %v500 = vld [vmem:[%s1 + $0x360] sm:$0xff]
      %v501 = vld [vmem:[%s1 + $0x368] sm:$0xff]
      %v502 = vld [vmem:[%s1 + $0x370] sm:$0xff]
      %v503 = vld [vmem:[%s1 + $0x378] sm:$0xff]
      %v504 = vld [vmem:[%s1 + $0x380] sm:$0xff]
      %v505 = vld [vmem:[%s1 + $0x388] sm:$0xff]
      %v506 = vld [vmem:[%s1 + $0x390] sm:$0xff]
      %v507 = vld [vmem:[%s1 + $0x398] sm:$0xff]
      %v508 = vld [vmem:[%s1 + $0x3a0] sm:$0xff]
      %v509 = vld [vmem:[%s1 + $0x3a8] sm:$0xff]
      %v510 = vld [vmem:[%s1 + $0x3b0] sm:$0xff]
      %v511 = vld [vmem:[%s1 + $0x3b8] sm:$0xff]
      %v512 = vld [vmem:[%s1 + $0x3c0] sm:$0xff]
      %v513 = vld [vmem:[%s1 + $0x3c8] sm:$0xff]
      %v514 = vld [vmem:[%s1 + $0x3d0] sm:$0xff]
      %v515 = vld [vmem:[%s1 + $0x3d8] sm:$0xff]
      %v516 = vld [vmem:[%s1 + $0x3e0] sm:$0xff]
      %v517 = vld [vmem:[%s1 + $0x3e8] sm:$0xff]
      %v518 = vld [vmem:[%s1 + $0x3f0] sm:$0xff]
      %v519 = vld [vmem:[%s1 + $0x3f8] sm:$0xff]
      %v520 = vld [vmem:[%s1 + $0x400] sm:$0xff]
      %v521 = vld [vmem:[%s1 + $0x408] sm:$0xff]
      %v522 = vld [vmem:[%s1 + $0x410] sm:$0xff]
      %v523 = vld [vmem:[%s1 + $0x418] sm:$0xff]
      %v524 = vld [vmem:[%s1 + $0x420] sm:$0xff]
      %v525 = vld [vmem:[%s1 + $0x428] sm:$0xff]
      %v526 = vld [vmem:[%s1 + $0x430] sm:$0xff]
      %v527 = vld [vmem:[%s1 + $0x438] sm:$0xff]
      %v528 = vld [vmem:[%s1 + $0x440] sm:$0xff]
      %v529 = vld [vmem:[%s1 + $0x448] sm:$0xff]
      %v530 = vld [vmem:[%s1 + $0x450] sm:$0xff]
      %v531 = vld [vmem:[%s1 + $0x458] sm:$0xff]
      %v532 = vld [vmem:[%s1 + $0x460] sm:$0xff]
      %v533 = vld [vmem:[%s1 + $0x468] sm:$0xff]
      %v534 = vld [vmem:[%s1 + $0x470] sm:$0xff]
      %v535 = vld [vmem:[%s1 + $0x478] sm:$0xff]
      %v536 = vld [vmem:[%s1 + $0x480] sm:$0xff]
      %v537 = vld [vmem:[%s1 + $0x488] sm:$0xff]
      %v538 = vld [vmem:[%s1 + $0x490] sm:$0xff]
      %v539 = vld [vmem:[%s1 + $0x498] sm:$0xff]
      %v540 = vld [vmem:[%s1 + $0x4a0] sm:$0xff]
      %v541 = vld [vmem:[%s1 + $0x4a8] sm:$0xff]
      %v542 = vld [vmem:[%s1 + $0x4b0] sm:$0xff]
      %v543 = vld [vmem:[%s1 + $0x4b8] sm:$0xff]
      %v544 = vld [vmem:[%s1 + $0x4c0] sm:$0xff]
      %v545 = vld [vmem:[%s1 + $0x4c8] sm:$0xff]
      %v546 = vld [vmem:[%s1 + $0x4d0] sm:$0xff]
      %v547 = vld [vmem:[%s1 + $0x4d8] sm:$0xff]
      %v548 = vld [vmem:[%s1 + $0x4e0] sm:$0xff]
      %v549 = vld [vmem:[%s1 + $0x4e8] sm:$0xff]
      %v550 = vld [vmem:[%s1 + $0x4f0] sm:$0xff]
      %v551 = vld [vmem:[%s1 + $0x4f8] sm:$0xff]
      %v552 = vld [vmem:[%s1 + $0x500] sm:$0xff]
      %v553 = vld [vmem:[%s1 + $0x508] sm:$0xff]
      %v554 = vld [vmem:[%s1 + $0x510] sm:$0xff]
      %v555 = vld [vmem:[%s1 + $0x518] sm:$0xff]
      %v556 = vld [vmem:[%s1 + $0x520] sm:$0xff]
      %v557 = vld [vmem:[%s1 + $0x528] sm:$0xff]
      %v558 = vld [vmem:[%s1 + $0x530] sm:$0xff]
      %v559 = vld [vmem:[%s1 + $0x538] sm:$0xff]
      %v560 = vld [vmem:[%s1 + $0x540] sm:$0xff]
      %v561 = vld [vmem:[%s1 + $0x548] sm:$0xff]
      %v562 = vld [vmem:[%s1 + $0x550] sm:$0xff]
      %v563 = vld [vmem:[%s1 + $0x558] sm:$0xff]
      %v564 = vld [vmem:[%s1 + $0x560] sm:$0xff]
      %v565 = vld [vmem:[%s1 + $0x568] sm:$0xff]
      %v566 = vld [vmem:[%s1 + $0x570] sm:$0xff]
      %v567 = vld [vmem:[%s1 + $0x578] sm:$0xff]
      %v568 = vld [vmem:[%s1 + $0x580] sm:$0xff]
      %v569 = vld [vmem:[%s1 + $0x588] sm:$0xff]
      %v570 = vld [vmem:[%s1 + $0x590] sm:$0xff]
      %v571 = vld [vmem:[%s1 + $0x598] sm:$0xff]
      %v572 = vld [vmem:[%s1 + $0x5a0] sm:$0xff]
      %v573 = vld [vmem:[%s1 + $0x5a8] sm:$0xff]
      %v574 = vld [vmem:[%s1 + $0x5b0] sm:$0xff]
      %v575 = vld [vmem:[%s1 + $0x5b8] sm:$0xff]
      %v576 = vld [vmem:[%s1 + $0x5c0] sm:$0xff]
      %v577 = vld [vmem:[%s1 + $0x5c8] sm:$0xff]
      %v578 = vld [vmem:[%s1 + $0x5d0] sm:$0xff]
      %v579 = vld [vmem:[%s1 + $0x5d8] sm:$0xff]
      %v580 = vld [vmem:[%s1 + $0x5e0] sm:$0xff]
      %v581 = vld [vmem:[%s1 + $0x5e8] sm:$0xff]
      %v582 = vld [vmem:[%s1 + $0x5f0] sm:$0xff]
      %v583 = vld [vmem:[%s1 + $0x5f8] sm:$0xff]
      %v584 = vpack.c.bf16 %v266, %v264
      %v585 = vpack.c.bf16 %v267, %v265
      %v586 = vpack.c.bf16 %v270, %v268
      %v587 = vpack.c.bf16 %v271, %v269
      %v588 = vpack.c.bf16 %v274, %v272
      %v589 = vpack.c.bf16 %v275, %v273
      %v590 = vpack.c.bf16 %v278, %v276
      %v591 = vpack.c.bf16 %v279, %v277
      %v592 = vpack.c.bf16 %v282, %v280
      %v593 = vpack.c.bf16 %v283, %v281
      %v594 = vpack.c.bf16 %v286, %v284
      %v595 = vpack.c.bf16 %v287, %v285
      %v596 = vpack.c.bf16 %v290, %v288
      %v597 = vpack.c.bf16 %v291, %v289
      %v598 = vpack.c.bf16 %v294, %v292
      %v599 = vpack.c.bf16 %v295, %v293
      %v600 = vpack.c.bf16 %v298, %v296
      %v601 = vpack.c.bf16 %v299, %v297
      %v602 = vpack.c.bf16 %v302, %v300
      %v603 = vpack.c.bf16 %v303, %v301
      %v604 = vpack.c.bf16 %v306, %v304
      %v605 = vpack.c.bf16 %v307, %v305
      %v606 = vpack.c.bf16 %v310, %v308
      %v607 = vpack.c.bf16 %v311, %v309
      %v608 = vpack.c.bf16 %v314, %v312
      %v609 = vpack.c.bf16 %v315, %v313
      %v610 = vpack.c.bf16 %v318, %v316
      %v611 = vpack.c.bf16 %v319, %v317
      %v612 = vpack.c.bf16 %v322, %v320
      %v613 = vpack.c.bf16 %v323, %v321
      %v614 = vpack.c.bf16 %v326, %v324
      %v615 = vpack.c.bf16 %v327, %v325
      %v616 = vpack.c.bf16 %v330, %v328
      %v617 = vpack.c.bf16 %v331, %v329
      %v618 = vpack.c.bf16 %v334, %v332
      %v619 = vpack.c.bf16 %v335, %v333
      %v620 = vpack.c.bf16 %v338, %v336
      %v621 = vpack.c.bf16 %v339, %v337
      %v622 = vpack.c.bf16 %v342, %v340
      %v623 = vpack.c.bf16 %v343, %v341
      %v624 = vpack.c.bf16 %v346, %v344
      %v625 = vpack.c.bf16 %v347, %v345
      %v626 = vpack.c.bf16 %v350, %v348
      %v627 = vpack.c.bf16 %v351, %v349
      %v628 = vpack.c.bf16 %v354, %v352
      %v629 = vpack.c.bf16 %v355, %v353
      %v630 = vpack.c.bf16 %v358, %v356
      %v631 = vpack.c.bf16 %v359, %v357
      %v632 = vpack.c.bf16 %v362, %v360
      %v633 = vpack.c.bf16 %v363, %v361
      %v634 = vpack.c.bf16 %v366, %v364
      %v635 = vpack.c.bf16 %v367, %v365
      %v636 = vpack.c.bf16 %v370, %v368
      %v637 = vpack.c.bf16 %v371, %v369
      %v638 = vpack.c.bf16 %v374, %v372
      %v639 = vpack.c.bf16 %v375, %v373
      %v640 = vpack.c.bf16 %v378, %v376
      %v641 = vpack.c.bf16 %v379, %v377
      %v642 = vpack.c.bf16 %v382, %v380
      %v643 = vpack.c.bf16 %v383, %v381
      %v644 = vpack.c.bf16 %v386, %v384
      %v645 = vpack.c.bf16 %v387, %v385
      %v646 = vpack.c.bf16 %v390, %v388
      %v647 = vpack.c.bf16 %v391, %v389
      %v648 = vld [vmem:[%s2] sm:$0xff]
      %v649 = vld [vmem:[%s2 + $0x8] sm:$0xff]
      %v650 = vld [vmem:[%s2 + $0x10] sm:$0xff]
      %v651 = vld [vmem:[%s2 + $0x18] sm:$0xff]
      %v652 = vld [vmem:[%s2 + $0x20] sm:$0xff]
      %v653 = vld [vmem:[%s2 + $0x28] sm:$0xff]
      %v654 = vld [vmem:[%s2 + $0x30] sm:$0xff]
      %v655 = vld [vmem:[%s2 + $0x38] sm:$0xff]
      %v656 = vld [vmem:[%s2 + $0x40] sm:$0xff]
      %v657 = vld [vmem:[%s2 + $0x48] sm:$0xff]
      %v658 = vld [vmem:[%s2 + $0x50] sm:$0xff]
      %v659 = vld [vmem:[%s2 + $0x58] sm:$0xff]
      %v660 = vld [vmem:[%s2 + $0x60] sm:$0xff]
      %v661 = vld [vmem:[%s2 + $0x68] sm:$0xff]
      %v662 = vld [vmem:[%s2 + $0x70] sm:$0xff]
      %v663 = vld [vmem:[%s2 + $0x78] sm:$0xff]
      %v664 = vld [vmem:[%s2 + $0x80] sm:$0xff]
      %v665 = vld [vmem:[%s2 + $0x88] sm:$0xff]
      %v666 = vld [vmem:[%s2 + $0x90] sm:$0xff]
      %v667 = vld [vmem:[%s2 + $0x98] sm:$0xff]
      %v668 = vld [vmem:[%s2 + $0xa0] sm:$0xff]
      %v669 = vld [vmem:[%s2 + $0xa8] sm:$0xff]
      %v670 = vld [vmem:[%s2 + $0xb0] sm:$0xff]
      %v671 = vld [vmem:[%s2 + $0xb8] sm:$0xff]
      %v672 = vld [vmem:[%s2 + $0xc0] sm:$0xff]
      %v673 = vld [vmem:[%s2 + $0xc8] sm:$0xff]
      %v674 = vld [vmem:[%s2 + $0xd0] sm:$0xff]
      %v675 = vld [vmem:[%s2 + $0xd8] sm:$0xff]
      %v676 = vld [vmem:[%s2 + $0xe0] sm:$0xff]
      %v677 = vld [vmem:[%s2 + $0xe8] sm:$0xff]
      %v678 = vld [vmem:[%s2 + $0xf0] sm:$0xff]
      %v679 = vld [vmem:[%s2 + $0xf8] sm:$0xff]
      %v680 = vld [vmem:[%s2 + $0x100] sm:$0xff]
      %v681 = vld [vmem:[%s2 + $0x108] sm:$0xff]
      %v682 = vld [vmem:[%s2 + $0x110] sm:$0xff]
      %v683 = vld [vmem:[%s2 + $0x118] sm:$0xff]
      %v684 = vld [vmem:[%s2 + $0x120] sm:$0xff]
      %v685 = vld [vmem:[%s2 + $0x128] sm:$0xff]
      %v686 = vld [vmem:[%s2 + $0x130] sm:$0xff]
      %v687 = vld [vmem:[%s2 + $0x138] sm:$0xff]
      %v688 = vld [vmem:[%s2 + $0x140] sm:$0xff]
      %v689 = vld [vmem:[%s2 + $0x148] sm:$0xff]
      %v690 = vld [vmem:[%s2 + $0x150] sm:$0xff]
      %v691 = vld [vmem:[%s2 + $0x158] sm:$0xff]
      %v692 = vld [vmem:[%s2 + $0x160] sm:$0xff]
      %v693 = vld [vmem:[%s2 + $0x168] sm:$0xff]
      %v694 = vld [vmem:[%s2 + $0x170] sm:$0xff]
      %v695 = vld [vmem:[%s2 + $0x178] sm:$0xff]
      %v696 = vld [vmem:[%s2 + $0x180] sm:$0xff]
      %v697 = vld [vmem:[%s2 + $0x188] sm:$0xff]
      %v698 = vld [vmem:[%s2 + $0x190] sm:$0xff]
      %v699 = vld [vmem:[%s2 + $0x198] sm:$0xff]
      %v700 = vld [vmem:[%s2 + $0x1a0] sm:$0xff]
      %v701 = vld [vmem:[%s2 + $0x1a8] sm:$0xff]
      %v702 = vld [vmem:[%s2 + $0x1b0] sm:$0xff]
      %v703 = vld [vmem:[%s2 + $0x1b8] sm:$0xff]
      %v704 = vld [vmem:[%s2 + $0x1c0] sm:$0xff]
      %v705 = vld [vmem:[%s2 + $0x1c8] sm:$0xff]
      %v706 = vld [vmem:[%s2 + $0x1d0] sm:$0xff]
      %v707 = vld [vmem:[%s2 + $0x1d8] sm:$0xff]
      %v708 = vld [vmem:[%s2 + $0x1e0] sm:$0xff]
      %v709 = vld [vmem:[%s2 + $0x1e8] sm:$0xff]
      %v710 = vld [vmem:[%s2 + $0x1f0] sm:$0xff]
      %v711 = vld [vmem:[%s2 + $0x1f8] sm:$0xff]
      %v712 = vld [vmem:[%s2 + $0x200] sm:$0xff]
      %v713 = vld [vmem:[%s2 + $0x208] sm:$0xff]
      %v714 = vld [vmem:[%s2 + $0x210] sm:$0xff]
      %v715 = vld [vmem:[%s2 + $0x218] sm:$0xff]
      %v716 = vld [vmem:[%s2 + $0x220] sm:$0xff]
      %v717 = vld [vmem:[%s2 + $0x228] sm:$0xff]
      %v718 = vld [vmem:[%s2 + $0x230] sm:$0xff]
      %v719 = vld [vmem:[%s2 + $0x238] sm:$0xff]
      %v720 = vld [vmem:[%s2 + $0x240] sm:$0xff]
      %v721 = vld [vmem:[%s2 + $0x248] sm:$0xff]
      %v722 = vld [vmem:[%s2 + $0x250] sm:$0xff]
      %v723 = vld [vmem:[%s2 + $0x258] sm:$0xff]
      %v724 = vld [vmem:[%s2 + $0x260] sm:$0xff]
      %v725 = vld [vmem:[%s2 + $0x268] sm:$0xff]
      %v726 = vld [vmem:[%s2 + $0x270] sm:$0xff]
      %v727 = vld [vmem:[%s2 + $0x278] sm:$0xff]
      %v728 = vld [vmem:[%s2 + $0x280] sm:$0xff]
      %v729 = vld [vmem:[%s2 + $0x288] sm:$0xff]
      %v730 = vld [vmem:[%s2 + $0x290] sm:$0xff]
      %v731 = vld [vmem:[%s2 + $0x298] sm:$0xff]
      %v732 = vld [vmem:[%s2 + $0x2a0] sm:$0xff]
      %v733 = vld [vmem:[%s2 + $0x2a8] sm:$0xff]
      %v734 = vld [vmem:[%s2 + $0x2b0] sm:$0xff]
      %v735 = vld [vmem:[%s2 + $0x2b8] sm:$0xff]
      %v736 = vld [vmem:[%s2 + $0x2c0] sm:$0xff]
      %v737 = vld [vmem:[%s2 + $0x2c8] sm:$0xff]
      %v738 = vld [vmem:[%s2 + $0x2d0] sm:$0xff]
      %v739 = vld [vmem:[%s2 + $0x2d8] sm:$0xff]
      %v740 = vld [vmem:[%s2 + $0x2e0] sm:$0xff]
      %v741 = vld [vmem:[%s2 + $0x2e8] sm:$0xff]
      %v742 = vld [vmem:[%s2 + $0x2f0] sm:$0xff]
      %v743 = vld [vmem:[%s2 + $0x2f8] sm:$0xff]
      %745 = vset.pattern.permute.xlu0 0
      %746 = vperm.xlu0 %745, %v648
      %v747 = vpop.permute.xlu0 %746
      %750 = vset.pattern.permute.xlu0 0
      %751 = vperm.xlu0 %750, %v649
      %v752 = vpop.permute.xlu0 %751
      %755 = vset.pattern.permute.xlu0 0
      %756 = vperm.xlu0 %755, %v650
      %v757 = vpop.permute.xlu0 %756
      %760 = vset.pattern.permute.xlu0 0
      %761 = vperm.xlu0 %760, %v651
      %v762 = vpop.permute.xlu0 %761
      %765 = vset.pattern.permute.xlu0 0
      %766 = vperm.xlu0 %765, %v652
      %v767 = vpop.permute.xlu0 %766
      %770 = vset.pattern.permute.xlu0 0
      %771 = vperm.xlu0 %770, %v653
      %v772 = vpop.permute.xlu0 %771
      %775 = vset.pattern.permute.xlu0 0
      %776 = vperm.xlu0 %775, %v654
      %v777 = vpop.permute.xlu0 %776
      %780 = vset.pattern.permute.xlu0 0
      %781 = vperm.xlu0 %780, %v655
      %v782 = vpop.permute.xlu0 %781
      %785 = vset.pattern.permute.xlu0 0
      %786 = vperm.xlu0 %785, %v656
      %v787 = vpop.permute.xlu0 %786
      %790 = vset.pattern.permute.xlu0 0
      %791 = vperm.xlu0 %790, %v657
      %v792 = vpop.permute.xlu0 %791
      %795 = vset.pattern.permute.xlu0 0
      %796 = vperm.xlu0 %795, %v658
      %v797 = vpop.permute.xlu0 %796
      %800 = vset.pattern.permute.xlu0 0
      %801 = vperm.xlu0 %800, %v659
      %v802 = vpop.permute.xlu0 %801
      %805 = vset.pattern.permute.xlu0 0
      %806 = vperm.xlu0 %805, %v660
      %v807 = vpop.permute.xlu0 %806
      %810 = vset.pattern.permute.xlu0 0
      %811 = vperm.xlu0 %810, %v661
      %v812 = vpop.permute.xlu0 %811
      %815 = vset.pattern.permute.xlu0 0
      %816 = vperm.xlu0 %815, %v662
      %v817 = vpop.permute.xlu0 %816
      %820 = vset.pattern.permute.xlu0 0
      %821 = vperm.xlu0 %820, %v663
      %v822 = vpop.permute.xlu0 %821
      %825 = vset.pattern.permute.xlu0 0
      %826 = vperm.xlu0 %825, %v664
      %v827 = vpop.permute.xlu0 %826
      %830 = vset.pattern.permute.xlu0 0
      %831 = vperm.xlu0 %830, %v665
      %v832 = vpop.permute.xlu0 %831
      %835 = vset.pattern.permute.xlu0 0
      %836 = vperm.xlu0 %835, %v666
      %v837 = vpop.permute.xlu0 %836
      %840 = vset.pattern.permute.xlu0 0
      %841 = vperm.xlu0 %840, %v667
      %v842 = vpop.permute.xlu0 %841
      %845 = vset.pattern.permute.xlu0 0
      %846 = vperm.xlu0 %845, %v668
      %v847 = vpop.permute.xlu0 %846
      %850 = vset.pattern.permute.xlu0 0
      %851 = vperm.xlu0 %850, %v669
      %v852 = vpop.permute.xlu0 %851
      %855 = vset.pattern.permute.xlu0 0
      %856 = vperm.xlu0 %855, %v670
      %v857 = vpop.permute.xlu0 %856
      %860 = vset.pattern.permute.xlu0 0
      %861 = vperm.xlu0 %860, %v671
      %v862 = vpop.permute.xlu0 %861
      %865 = vset.pattern.permute.xlu0 0
      %866 = vperm.xlu0 %865, %v672
      %v867 = vpop.permute.xlu0 %866
      %870 = vset.pattern.permute.xlu0 0
      %871 = vperm.xlu0 %870, %v673
      %v872 = vpop.permute.xlu0 %871
      %875 = vset.pattern.permute.xlu0 0
      %876 = vperm.xlu0 %875, %v674
      %v877 = vpop.permute.xlu0 %876
      %880 = vset.pattern.permute.xlu0 0
      %881 = vperm.xlu0 %880, %v675
      %v882 = vpop.permute.xlu0 %881
      %885 = vset.pattern.permute.xlu0 0
      %886 = vperm.xlu0 %885, %v676
      %v887 = vpop.permute.xlu0 %886
      %890 = vset.pattern.permute.xlu0 0
      %891 = vperm.xlu0 %890, %v677
      %v892 = vpop.permute.xlu0 %891
      %895 = vset.pattern.permute.xlu0 0
      %896 = vperm.xlu0 %895, %v678
      %v897 = vpop.permute.xlu0 %896
      %900 = vset.pattern.permute.xlu0 0
      %901 = vperm.xlu0 %900, %v679
      %v902 = vpop.permute.xlu0 %901
      %905 = vset.pattern.permute.xlu0 0
      %906 = vperm.xlu0 %905, %v680
      %v907 = vpop.permute.xlu0 %906
      %910 = vset.pattern.permute.xlu0 0
      %911 = vperm.xlu0 %910, %v681
      %v912 = vpop.permute.xlu0 %911
      %915 = vset.pattern.permute.xlu0 0
      %916 = vperm.xlu0 %915, %v682
      %v917 = vpop.permute.xlu0 %916
      %920 = vset.pattern.permute.xlu0 0
      %921 = vperm.xlu0 %920, %v683
      %v922 = vpop.permute.xlu0 %921
      %925 = vset.pattern.permute.xlu0 0
      %926 = vperm.xlu0 %925, %v684
      %v927 = vpop.permute.xlu0 %926
      %930 = vset.pattern.permute.xlu0 0
      %931 = vperm.xlu0 %930, %v685
      %v932 = vpop.permute.xlu0 %931
      %935 = vset.pattern.permute.xlu0 0
      %936 = vperm.xlu0 %935, %v686
      %v937 = vpop.permute.xlu0 %936
      %940 = vset.pattern.permute.xlu0 0
      %941 = vperm.xlu0 %940, %v687
      %v942 = vpop.permute.xlu0 %941
      %945 = vset.pattern.permute.xlu0 0
      %946 = vperm.xlu0 %945, %v688
      %v947 = vpop.permute.xlu0 %946
      %950 = vset.pattern.permute.xlu0 0
      %951 = vperm.xlu0 %950, %v689
      %v952 = vpop.permute.xlu0 %951
      %955 = vset.pattern.permute.xlu0 0
      %956 = vperm.xlu0 %955, %v690
      %v957 = vpop.permute.xlu0 %956
      %960 = vset.pattern.permute.xlu0 0
      %961 = vperm.xlu0 %960, %v691
      %v962 = vpop.permute.xlu0 %961
      %965 = vset.pattern.permute.xlu0 0
      %966 = vperm.xlu0 %965, %v692
      %v967 = vpop.permute.xlu0 %966
      %970 = vset.pattern.permute.xlu0 0
      %971 = vperm.xlu0 %970, %v693
      %v972 = vpop.permute.xlu0 %971
      %975 = vset.pattern.permute.xlu0 0
      %976 = vperm.xlu0 %975, %v694
      %v977 = vpop.permute.xlu0 %976
      %980 = vset.pattern.permute.xlu0 0
      %981 = vperm.xlu0 %980, %v695
      %v982 = vpop.permute.xlu0 %981
      %985 = vset.pattern.permute.xlu0 0
      %986 = vperm.xlu0 %985, %v696
      %v987 = vpop.permute.xlu0 %986
      %990 = vset.pattern.permute.xlu0 0
      %991 = vperm.xlu0 %990, %v697
      %v992 = vpop.permute.xlu0 %991
      %995 = vset.pattern.permute.xlu0 0
      %996 = vperm.xlu0 %995, %v698
      %v997 = vpop.permute.xlu0 %996
      %1000 = vset.pattern.permute.xlu0 0
      %1001 = vperm.xlu0 %1000, %v699
      %v1002 = vpop.permute.xlu0 %1001
      %1005 = vset.pattern.permute.xlu0 0
      %1006 = vperm.xlu0 %1005, %v700
      %v1007 = vpop.permute.xlu0 %1006
      %1010 = vset.pattern.permute.xlu0 0
      %1011 = vperm.xlu0 %1010, %v701
      %v1012 = vpop.permute.xlu0 %1011
      %1015 = vset.pattern.permute.xlu0 0
      %1016 = vperm.xlu0 %1015, %v702
      %v1017 = vpop.permute.xlu0 %1016
      %1020 = vset.pattern.permute.xlu0 0
      %1021 = vperm.xlu0 %1020, %v703
      %v1022 = vpop.permute.xlu0 %1021
      %1025 = vset.pattern.permute.xlu0 0
      %1026 = vperm.xlu0 %1025, %v704
      %v1027 = vpop.permute.xlu0 %1026
      %1030 = vset.pattern.permute.xlu0 0
      %1031 = vperm.xlu0 %1030, %v705
      %v1032 = vpop.permute.xlu0 %1031
      %1035 = vset.pattern.permute.xlu0 0
      %1036 = vperm.xlu0 %1035, %v706
      %v1037 = vpop.permute.xlu0 %1036
      %1040 = vset.pattern.permute.xlu0 0
      %1041 = vperm.xlu0 %1040, %v707
      %v1042 = vpop.permute.xlu0 %1041
      %1045 = vset.pattern.permute.xlu0 0
      %1046 = vperm.xlu0 %1045, %v708
      %v1047 = vpop.permute.xlu0 %1046
      %1050 = vset.pattern.permute.xlu0 0
      %1051 = vperm.xlu0 %1050, %v709
      %v1052 = vpop.permute.xlu0 %1051
      %1055 = vset.pattern.permute.xlu0 0
      %1056 = vperm.xlu0 %1055, %v710
      %v1057 = vpop.permute.xlu0 %1056
      %1060 = vset.pattern.permute.xlu0 0
      %1061 = vperm.xlu0 %1060, %v711
      %v1062 = vpop.permute.xlu0 %1061
      %1065 = vset.pattern.permute.xlu0 0
      %1066 = vperm.xlu0 %1065, %v712
      %v1067 = vpop.permute.xlu0 %1066
      %1070 = vset.pattern.permute.xlu0 0
      %1071 = vperm.xlu0 %1070, %v713
      %v1072 = vpop.permute.xlu0 %1071
      %1075 = vset.pattern.permute.xlu0 0
      %1076 = vperm.xlu0 %1075, %v714
      %v1077 = vpop.permute.xlu0 %1076
      %1080 = vset.pattern.permute.xlu0 0
      %1081 = vperm.xlu0 %1080, %v715
      %v1082 = vpop.permute.xlu0 %1081
      %1085 = vset.pattern.permute.xlu0 0
      %1086 = vperm.xlu0 %1085, %v716
      %v1087 = vpop.permute.xlu0 %1086
      %1090 = vset.pattern.permute.xlu0 0
      %1091 = vperm.xlu0 %1090, %v717
      %v1092 = vpop.permute.xlu0 %1091
      %1095 = vset.pattern.permute.xlu0 0
      %1096 = vperm.xlu0 %1095, %v718
      %v1097 = vpop.permute.xlu0 %1096
      %1100 = vset.pattern.permute.xlu0 0
      %1101 = vperm.xlu0 %1100, %v719
      %v1102 = vpop.permute.xlu0 %1101
      %1105 = vset.pattern.permute.xlu0 0
      %1106 = vperm.xlu0 %1105, %v720
      %v1107 = vpop.permute.xlu0 %1106
      %1110 = vset.pattern.permute.xlu0 0
      %1111 = vperm.xlu0 %1110, %v721
      %v1112 = vpop.permute.xlu0 %1111
      %1115 = vset.pattern.permute.xlu0 0
      %1116 = vperm.xlu0 %1115, %v722
      %v1117 = vpop.permute.xlu0 %1116
      %1120 = vset.pattern.permute.xlu0 0
      %1121 = vperm.xlu0 %1120, %v723
      %v1122 = vpop.permute.xlu0 %1121
      %1125 = vset.pattern.permute.xlu0 0
      %1126 = vperm.xlu0 %1125, %v724
      %v1127 = vpop.permute.xlu0 %1126
      %1130 = vset.pattern.permute.xlu0 0
      %1131 = vperm.xlu0 %1130, %v725
      %v1132 = vpop.permute.xlu0 %1131
      %1135 = vset.pattern.permute.xlu0 0
      %1136 = vperm.xlu0 %1135, %v726
      %v1137 = vpop.permute.xlu0 %1136
      %1140 = vset.pattern.permute.xlu0 0
      %1141 = vperm.xlu0 %1140, %v727
      %v1142 = vpop.permute.xlu0 %1141
      %1145 = vset.pattern.permute.xlu0 0
      %1146 = vperm.xlu0 %1145, %v728
      %v1147 = vpop.permute.xlu0 %1146
      %1150 = vset.pattern.permute.xlu0 0
      %1151 = vperm.xlu0 %1150, %v729
      %v1152 = vpop.permute.xlu0 %1151
      %1155 = vset.pattern.permute.xlu0 0
      %1156 = vperm.xlu0 %1155, %v730
      %v1157 = vpop.permute.xlu0 %1156
      %1160 = vset.pattern.permute.xlu0 0
      %1161 = vperm.xlu0 %1160, %v731
      %v1162 = vpop.permute.xlu0 %1161
      %1165 = vset.pattern.permute.xlu0 0
      %1166 = vperm.xlu0 %1165, %v732
      %v1167 = vpop.permute.xlu0 %1166
      %1170 = vset.pattern.permute.xlu0 0
      %1171 = vperm.xlu0 %1170, %v733
      %v1172 = vpop.permute.xlu0 %1171
      %1175 = vset.pattern.permute.xlu0 0
      %1176 = vperm.xlu0 %1175, %v734
      %v1177 = vpop.permute.xlu0 %1176
      %1180 = vset.pattern.permute.xlu0 0
      %1181 = vperm.xlu0 %1180, %v735
      %v1182 = vpop.permute.xlu0 %1181
      %1185 = vset.pattern.permute.xlu0 0
      %1186 = vperm.xlu0 %1185, %v736
      %v1187 = vpop.permute.xlu0 %1186
      %1190 = vset.pattern.permute.xlu0 0
      %1191 = vperm.xlu0 %1190, %v737
      %v1192 = vpop.permute.xlu0 %1191
      %1195 = vset.pattern.permute.xlu0 0
      %1196 = vperm.xlu0 %1195, %v738
      %v1197 = vpop.permute.xlu0 %1196
      %1200 = vset.pattern.permute.xlu0 0
      %1201 = vperm.xlu0 %1200, %v739
      %v1202 = vpop.permute.xlu0 %1201
      %1205 = vset.pattern.permute.xlu0 0
      %1206 = vperm.xlu0 %1205, %v740
      %v1207 = vpop.permute.xlu0 %1206
      %1210 = vset.pattern.permute.xlu0 0
      %1211 = vperm.xlu0 %1210, %v741
      %v1212 = vpop.permute.xlu0 %1211
      %1215 = vset.pattern.permute.xlu0 0
      %1216 = vperm.xlu0 %1215, %v742
      %v1217 = vpop.permute.xlu0 %1216
      %1220 = vset.pattern.permute.xlu0 0
      %1221 = vperm.xlu0 %1220, %v743
      %v1222 = vpop.permute.xlu0 %1221
      %v1416 = vunpack.c.l.b16 %v392
      %v1417 = vunpack.c.h.b16 %v392
      %v1418 = vunpack.c.l.b16 %v393
      %v1419 = vunpack.c.h.b16 %v393
      %v1420 = vunpack.c.l.b16 %v394
      %v1421 = vunpack.c.h.b16 %v394
      %v1422 = vunpack.c.l.b16 %v395
      %v1423 = vunpack.c.h.b16 %v395
      %v1424 = vunpack.c.l.b16 %v396
      %v1425 = vunpack.c.h.b16 %v396
      %v1426 = vunpack.c.l.b16 %v397
      %v1427 = vunpack.c.h.b16 %v397
      %v1428 = vunpack.c.l.b16 %v398
      %v1429 = vunpack.c.h.b16 %v398
      %v1430 = vunpack.c.l.b16 %v399
      %v1431 = vunpack.c.h.b16 %v399
      %v1432 = vunpack.c.l.b16 %v400
      %v1433 = vunpack.c.h.b16 %v400
      %v1434 = vunpack.c.l.b16 %v401
      %v1435 = vunpack.c.h.b16 %v401
      %v1436 = vunpack.c.l.b16 %v402
      %v1437 = vunpack.c.h.b16 %v402
      %v1438 = vunpack.c.l.b16 %v403
      %v1439 = vunpack.c.h.b16 %v403
      %v1440 = vunpack.c.l.b16 %v404
      %v1441 = vunpack.c.h.b16 %v404
      %v1442 = vunpack.c.l.b16 %v405
      %v1443 = vunpack.c.h.b16 %v405
      %v1444 = vunpack.c.l.b16 %v406
      %v1445 = vunpack.c.h.b16 %v406
      %v1446 = vunpack.c.l.b16 %v407
      %v1447 = vunpack.c.h.b16 %v407
      %v1448 = vunpack.c.l.b16 %v408
      %v1449 = vunpack.c.h.b16 %v408
      %v1450 = vunpack.c.l.b16 %v409
      %v1451 = vunpack.c.h.b16 %v409
      %v1452 = vunpack.c.l.b16 %v410
      %v1453 = vunpack.c.h.b16 %v410
      %v1454 = vunpack.c.l.b16 %v411
      %v1455 = vunpack.c.h.b16 %v411
      %v1456 = vunpack.c.l.b16 %v412
      %v1457 = vunpack.c.h.b16 %v412
      %v1458 = vunpack.c.l.b16 %v413
      %v1459 = vunpack.c.h.b16 %v413
      %v1460 = vunpack.c.l.b16 %v414
      %v1461 = vunpack.c.h.b16 %v414
      %v1462 = vunpack.c.l.b16 %v415
      %v1463 = vunpack.c.h.b16 %v415
      %v1464 = vunpack.c.l.b16 %v416
      %v1465 = vunpack.c.h.b16 %v416
      %v1466 = vunpack.c.l.b16 %v417
      %v1467 = vunpack.c.h.b16 %v417
      %v1468 = vunpack.c.l.b16 %v418
      %v1469 = vunpack.c.h.b16 %v418
      %v1470 = vunpack.c.l.b16 %v419
      %v1471 = vunpack.c.h.b16 %v419
      %v1472 = vunpack.c.l.b16 %v420
      %v1473 = vunpack.c.h.b16 %v420
      %v1474 = vunpack.c.l.b16 %v421
      %v1475 = vunpack.c.h.b16 %v421
      %v1476 = vunpack.c.l.b16 %v422
      %v1477 = vunpack.c.h.b16 %v422
      %v1478 = vunpack.c.l.b16 %v423
      %v1479 = vunpack.c.h.b16 %v423
      %v1480 = vunpack.c.l.b16 %v424
      %v1481 = vunpack.c.h.b16 %v424
      %v1482 = vunpack.c.l.b16 %v425
      %v1483 = vunpack.c.h.b16 %v425
      %v1484 = vunpack.c.l.b16 %v426
      %v1485 = vunpack.c.h.b16 %v426
      %v1486 = vunpack.c.l.b16 %v427
      %v1487 = vunpack.c.h.b16 %v427
      %v1488 = vunpack.c.l.b16 %v428
      %v1489 = vunpack.c.h.b16 %v428
      %v1490 = vunpack.c.l.b16 %v429
      %v1491 = vunpack.c.h.b16 %v429
      %v1492 = vunpack.c.l.b16 %v430
      %v1493 = vunpack.c.h.b16 %v430
      %v1494 = vunpack.c.l.b16 %v431
      %v1495 = vunpack.c.h.b16 %v431
      %v1496 = vunpack.c.l.b16 %v432
      %v1497 = vunpack.c.h.b16 %v432
      %v1498 = vunpack.c.l.b16 %v433
      %v1499 = vunpack.c.h.b16 %v433
      %v1500 = vunpack.c.l.b16 %v434
      %v1501 = vunpack.c.h.b16 %v434
      %v1502 = vunpack.c.l.b16 %v435
      %v1503 = vunpack.c.h.b16 %v435
      %v1504 = vunpack.c.l.b16 %v436
      %v1505 = vunpack.c.h.b16 %v436
      %v1506 = vunpack.c.l.b16 %v437
      %v1507 = vunpack.c.h.b16 %v437
      %v1508 = vunpack.c.l.b16 %v438
      %v1509 = vunpack.c.h.b16 %v438
      %v1510 = vunpack.c.l.b16 %v439
      %v1511 = vunpack.c.h.b16 %v439
      %v1512 = vunpack.c.l.b16 %v440
      %v1513 = vunpack.c.h.b16 %v440
      %v1514 = vunpack.c.l.b16 %v441
      %v1515 = vunpack.c.h.b16 %v441
      %v1516 = vunpack.c.l.b16 %v442
      %v1517 = vunpack.c.h.b16 %v442
      %v1518 = vunpack.c.l.b16 %v443
      %v1519 = vunpack.c.h.b16 %v443
      %v1520 = vunpack.c.l.b16 %v444
      %v1521 = vunpack.c.h.b16 %v444
      %v1522 = vunpack.c.l.b16 %v445
      %v1523 = vunpack.c.h.b16 %v445
      %v1524 = vunpack.c.l.b16 %v446
      %v1525 = vunpack.c.h.b16 %v446
      %v1526 = vunpack.c.l.b16 %v447
      %v1527 = vunpack.c.h.b16 %v447
      %v1528 = vunpack.c.l.b16 %v448
      %v1529 = vunpack.c.h.b16 %v448
      %v1530 = vunpack.c.l.b16 %v449
      %v1531 = vunpack.c.h.b16 %v449
      %v1532 = vunpack.c.l.b16 %v450
      %v1533 = vunpack.c.h.b16 %v450
      %v1534 = vunpack.c.l.b16 %v451
      %v1535 = vunpack.c.h.b16 %v451
      %v1536 = vunpack.c.l.b16 %v452
      %v1537 = vunpack.c.h.b16 %v452
      %v1538 = vunpack.c.l.b16 %v453
      %v1539 = vunpack.c.h.b16 %v453
      %v1540 = vunpack.c.l.b16 %v454
      %v1541 = vunpack.c.h.b16 %v454
      %v1542 = vunpack.c.l.b16 %v455
      %v1543 = vunpack.c.h.b16 %v455
      %v1544 = vunpack.c.l.b16 %v456
      %v1545 = vunpack.c.h.b16 %v456
      %v1546 = vunpack.c.l.b16 %v457
      %v1547 = vunpack.c.h.b16 %v457
      %v1548 = vunpack.c.l.b16 %v458
      %v1549 = vunpack.c.h.b16 %v458
      %v1550 = vunpack.c.l.b16 %v459
      %v1551 = vunpack.c.h.b16 %v459
      %v1552 = vunpack.c.l.b16 %v460
      %v1553 = vunpack.c.h.b16 %v460
      %v1554 = vunpack.c.l.b16 %v461
      %v1555 = vunpack.c.h.b16 %v461
      %v1556 = vunpack.c.l.b16 %v462
      %v1557 = vunpack.c.h.b16 %v462
      %v1558 = vunpack.c.l.b16 %v463
      %v1559 = vunpack.c.h.b16 %v463
      %v1560 = vunpack.c.l.b16 %v464
      %v1561 = vunpack.c.h.b16 %v464
      %v1562 = vunpack.c.l.b16 %v465
      %v1563 = vunpack.c.h.b16 %v465
      %v1564 = vunpack.c.l.b16 %v466
      %v1565 = vunpack.c.h.b16 %v466
      %v1566 = vunpack.c.l.b16 %v467
      %v1567 = vunpack.c.h.b16 %v467
      %v1568 = vunpack.c.l.b16 %v468
      %v1569 = vunpack.c.h.b16 %v468
      %v1570 = vunpack.c.l.b16 %v469
      %v1571 = vunpack.c.h.b16 %v469
      %v1572 = vunpack.c.l.b16 %v470
      %v1573 = vunpack.c.h.b16 %v470
      %v1574 = vunpack.c.l.b16 %v471
      %v1575 = vunpack.c.h.b16 %v471
      %v1576 = vunpack.c.l.b16 %v472
      %v1577 = vunpack.c.h.b16 %v472
      %v1578 = vunpack.c.l.b16 %v473
      %v1579 = vunpack.c.h.b16 %v473
      %v1580 = vunpack.c.l.b16 %v474
      %v1581 = vunpack.c.h.b16 %v474
      %v1582 = vunpack.c.l.b16 %v475
      %v1583 = vunpack.c.h.b16 %v475
      %v1584 = vunpack.c.l.b16 %v476
      %v1585 = vunpack.c.h.b16 %v476
      %v1586 = vunpack.c.l.b16 %v477
      %v1587 = vunpack.c.h.b16 %v477
      %v1588 = vunpack.c.l.b16 %v478
      %v1589 = vunpack.c.h.b16 %v478
      %v1590 = vunpack.c.l.b16 %v479
      %v1591 = vunpack.c.h.b16 %v479
      %v1592 = vunpack.c.l.b16 %v480
      %v1593 = vunpack.c.h.b16 %v480
      %v1594 = vunpack.c.l.b16 %v481
      %v1595 = vunpack.c.h.b16 %v481
      %v1596 = vunpack.c.l.b16 %v482
      %v1597 = vunpack.c.h.b16 %v482
      %v1598 = vunpack.c.l.b16 %v483
      %v1599 = vunpack.c.h.b16 %v483
      %v1600 = vunpack.c.l.b16 %v484
      %v1601 = vunpack.c.h.b16 %v484
      %v1602 = vunpack.c.l.b16 %v485
      %v1603 = vunpack.c.h.b16 %v485
      %v1604 = vunpack.c.l.b16 %v486
      %v1605 = vunpack.c.h.b16 %v486
      %v1606 = vunpack.c.l.b16 %v487
      %v1607 = vunpack.c.h.b16 %v487
      %v1608 = vunpack.c.l.b16 %v488
      %v1609 = vunpack.c.h.b16 %v488
      %v1610 = vunpack.c.l.b16 %v489
      %v1611 = vunpack.c.h.b16 %v489
      %v1612 = vunpack.c.l.b16 %v490
      %v1613 = vunpack.c.h.b16 %v490
      %v1614 = vunpack.c.l.b16 %v491
      %v1615 = vunpack.c.h.b16 %v491
      %v1616 = vunpack.c.l.b16 %v492
      %v1617 = vunpack.c.h.b16 %v492
      %v1618 = vunpack.c.l.b16 %v493
      %v1619 = vunpack.c.h.b16 %v493
      %v1620 = vunpack.c.l.b16 %v494
      %v1621 = vunpack.c.h.b16 %v494
      %v1622 = vunpack.c.l.b16 %v495
      %v1623 = vunpack.c.h.b16 %v495
      %v1624 = vunpack.c.l.b16 %v496
      %v1625 = vunpack.c.h.b16 %v496
      %v1626 = vunpack.c.l.b16 %v497
      %v1627 = vunpack.c.h.b16 %v497
      %v1628 = vunpack.c.l.b16 %v498
      %v1629 = vunpack.c.h.b16 %v498
      %v1630 = vunpack.c.l.b16 %v499
      %v1631 = vunpack.c.h.b16 %v499
      %v1632 = vunpack.c.l.b16 %v500
      %v1633 = vunpack.c.h.b16 %v500
      %v1634 = vunpack.c.l.b16 %v501
      %v1635 = vunpack.c.h.b16 %v501
      %v1636 = vunpack.c.l.b16 %v502
      %v1637 = vunpack.c.h.b16 %v502
      %v1638 = vunpack.c.l.b16 %v503
      %v1639 = vunpack.c.h.b16 %v503
      %v1640 = vunpack.c.l.b16 %v504
      %v1641 = vunpack.c.h.b16 %v504
      %v1642 = vunpack.c.l.b16 %v505
      %v1643 = vunpack.c.h.b16 %v505
      %v1644 = vunpack.c.l.b16 %v506
      %v1645 = vunpack.c.h.b16 %v506
      %v1646 = vunpack.c.l.b16 %v507
      %v1647 = vunpack.c.h.b16 %v507
      %v1648 = vunpack.c.l.b16 %v508
      %v1649 = vunpack.c.h.b16 %v508
      %v1650 = vunpack.c.l.b16 %v509
      %v1651 = vunpack.c.h.b16 %v509
      %v1652 = vunpack.c.l.b16 %v510
      %v1653 = vunpack.c.h.b16 %v510
      %v1654 = vunpack.c.l.b16 %v511
      %v1655 = vunpack.c.h.b16 %v511
      %v1656 = vunpack.c.l.b16 %v512
      %v1657 = vunpack.c.h.b16 %v512
      %v1658 = vunpack.c.l.b16 %v513
      %v1659 = vunpack.c.h.b16 %v513
      %v1660 = vunpack.c.l.b16 %v514
      %v1661 = vunpack.c.h.b16 %v514
      %v1662 = vunpack.c.l.b16 %v515
      %v1663 = vunpack.c.h.b16 %v515
      %v1664 = vunpack.c.l.b16 %v516
      %v1665 = vunpack.c.h.b16 %v516
      %v1666 = vunpack.c.l.b16 %v517
      %v1667 = vunpack.c.h.b16 %v517
      %v1668 = vunpack.c.l.b16 %v518
      %v1669 = vunpack.c.h.b16 %v518
      %v1670 = vunpack.c.l.b16 %v519
      %v1671 = vunpack.c.h.b16 %v519
      %v1672 = vunpack.c.l.b16 %v520
      %v1673 = vunpack.c.h.b16 %v520
      %v1674 = vunpack.c.l.b16 %v521
      %v1675 = vunpack.c.h.b16 %v521
      %v1676 = vunpack.c.l.b16 %v522
      %v1677 = vunpack.c.h.b16 %v522
      %v1678 = vunpack.c.l.b16 %v523
      %v1679 = vunpack.c.h.b16 %v523
      %v1680 = vunpack.c.l.b16 %v524
      %v1681 = vunpack.c.h.b16 %v524
      %v1682 = vunpack.c.l.b16 %v525
      %v1683 = vunpack.c.h.b16 %v525
      %v1684 = vunpack.c.l.b16 %v526
      %v1685 = vunpack.c.h.b16 %v526
      %v1686 = vunpack.c.l.b16 %v527
      %v1687 = vunpack.c.h.b16 %v527
      %v1688 = vunpack.c.l.b16 %v528
      %v1689 = vunpack.c.h.b16 %v528
      %v1690 = vunpack.c.l.b16 %v529
      %v1691 = vunpack.c.h.b16 %v529
      %v1692 = vunpack.c.l.b16 %v530
      %v1693 = vunpack.c.h.b16 %v530
      %v1694 = vunpack.c.l.b16 %v531
      %v1695 = vunpack.c.h.b16 %v531
      %v1696 = vunpack.c.l.b16 %v532
      %v1697 = vunpack.c.h.b16 %v532
      %v1698 = vunpack.c.l.b16 %v533
      %v1699 = vunpack.c.h.b16 %v533
      %v1700 = vunpack.c.l.b16 %v534
      %v1701 = vunpack.c.h.b16 %v534
      %v1702 = vunpack.c.l.b16 %v535
      %v1703 = vunpack.c.h.b16 %v535
      %v1704 = vunpack.c.l.b16 %v536
      %v1705 = vunpack.c.h.b16 %v536
      %v1706 = vunpack.c.l.b16 %v537
      %v1707 = vunpack.c.h.b16 %v537
      %v1708 = vunpack.c.l.b16 %v538
      %v1709 = vunpack.c.h.b16 %v538
      %v1710 = vunpack.c.l.b16 %v539
      %v1711 = vunpack.c.h.b16 %v539
      %v1712 = vunpack.c.l.b16 %v540
      %v1713 = vunpack.c.h.b16 %v540
      %v1714 = vunpack.c.l.b16 %v541
      %v1715 = vunpack.c.h.b16 %v541
      %v1716 = vunpack.c.l.b16 %v542
      %v1717 = vunpack.c.h.b16 %v542
      %v1718 = vunpack.c.l.b16 %v543
      %v1719 = vunpack.c.h.b16 %v543
      %v1720 = vunpack.c.l.b16 %v544
      %v1721 = vunpack.c.h.b16 %v544
      %v1722 = vunpack.c.l.b16 %v545
      %v1723 = vunpack.c.h.b16 %v545
      %v1724 = vunpack.c.l.b16 %v546
      %v1725 = vunpack.c.h.b16 %v546
      %v1726 = vunpack.c.l.b16 %v547
      %v1727 = vunpack.c.h.b16 %v547
      %v1728 = vunpack.c.l.b16 %v548
      %v1729 = vunpack.c.h.b16 %v548
      %v1730 = vunpack.c.l.b16 %v549
      %v1731 = vunpack.c.h.b16 %v549
      %v1732 = vunpack.c.l.b16 %v550
      %v1733 = vunpack.c.h.b16 %v550
      %v1734 = vunpack.c.l.b16 %v551
      %v1735 = vunpack.c.h.b16 %v551
      %v1736 = vunpack.c.l.b16 %v552
      %v1737 = vunpack.c.h.b16 %v552
      %v1738 = vunpack.c.l.b16 %v553
      %v1739 = vunpack.c.h.b16 %v553
      %v1740 = vunpack.c.l.b16 %v554
      %v1741 = vunpack.c.h.b16 %v554
      %v1742 = vunpack.c.l.b16 %v555
      %v1743 = vunpack.c.h.b16 %v555
      %v1744 = vunpack.c.l.b16 %v556
      %v1745 = vunpack.c.h.b16 %v556
      %v1746 = vunpack.c.l.b16 %v557
      %v1747 = vunpack.c.h.b16 %v557
      %v1748 = vunpack.c.l.b16 %v558
      %v1749 = vunpack.c.h.b16 %v558
      %v1750 = vunpack.c.l.b16 %v559
      %v1751 = vunpack.c.h.b16 %v559
      %v1752 = vunpack.c.l.b16 %v560
      %v1753 = vunpack.c.h.b16 %v560
      %v1754 = vunpack.c.l.b16 %v561
      %v1755 = vunpack.c.h.b16 %v561
      %v1756 = vunpack.c.l.b16 %v562
      %v1757 = vunpack.c.h.b16 %v562
      %v1758 = vunpack.c.l.b16 %v563
      %v1759 = vunpack.c.h.b16 %v563
      %v1760 = vunpack.c.l.b16 %v564
      %v1761 = vunpack.c.h.b16 %v564
      %v1762 = vunpack.c.l.b16 %v565
      %v1763 = vunpack.c.h.b16 %v565
      %v1764 = vunpack.c.l.b16 %v566
      %v1765 = vunpack.c.h.b16 %v566
      %v1766 = vunpack.c.l.b16 %v567
      %v1767 = vunpack.c.h.b16 %v567
      %v1768 = vunpack.c.l.b16 %v568
      %v1769 = vunpack.c.h.b16 %v568
      %v1770 = vunpack.c.l.b16 %v569
      %v1771 = vunpack.c.h.b16 %v569
      %v1772 = vunpack.c.l.b16 %v570
      %v1773 = vunpack.c.h.b16 %v570
      %v1774 = vunpack.c.l.b16 %v571
      %v1775 = vunpack.c.h.b16 %v571
      %v1776 = vunpack.c.l.b16 %v572
      %v1777 = vunpack.c.h.b16 %v572
      %v1778 = vunpack.c.l.b16 %v573
      %v1779 = vunpack.c.h.b16 %v573
      %v1780 = vunpack.c.l.b16 %v574
      %v1781 = vunpack.c.h.b16 %v574
      %v1782 = vunpack.c.l.b16 %v575
      %v1783 = vunpack.c.h.b16 %v575
      %v1784 = vunpack.c.l.b16 %v576
      %v1785 = vunpack.c.h.b16 %v576
      %v1786 = vunpack.c.l.b16 %v577
      %v1787 = vunpack.c.h.b16 %v577
      %v1788 = vunpack.c.l.b16 %v578
      %v1789 = vunpack.c.h.b16 %v578
      %v1790 = vunpack.c.l.b16 %v579
      %v1791 = vunpack.c.h.b16 %v579
      %v1792 = vunpack.c.l.b16 %v580
      %v1793 = vunpack.c.h.b16 %v580
      %v1794 = vunpack.c.l.b16 %v581
      %v1795 = vunpack.c.h.b16 %v581
      %v1796 = vunpack.c.l.b16 %v582
      %v1797 = vunpack.c.h.b16 %v582
      %v1798 = vunpack.c.l.b16 %v583
      %v1799 = vunpack.c.h.b16 %v583
      %v1800 = vpack.c.b16 %v1420, %v1416
      %v1801 = vpack.c.b16 %v1421, %v1417
      %v1802 = vpack.c.b16 %v1422, %v1418
      %v1803 = vpack.c.b16 %v1423, %v1419
      %v1804 = vpack.c.b16 %v1428, %v1424
      %v1805 = vpack.c.b16 %v1429, %v1425
      %v1806 = vpack.c.b16 %v1430, %v1426
      %v1807 = vpack.c.b16 %v1431, %v1427
      %v1808 = vpack.c.b16 %v1436, %v1432
      %v1809 = vpack.c.b16 %v1437, %v1433
      %v1810 = vpack.c.b16 %v1438, %v1434
      %v1811 = vpack.c.b16 %v1439, %v1435
      %v1812 = vpack.c.b16 %v1444, %v1440
      %v1813 = vpack.c.b16 %v1445, %v1441
      %v1814 = vpack.c.b16 %v1446, %v1442
      %v1815 = vpack.c.b16 %v1447, %v1443
      %v1816 = vpack.c.b16 %v1452, %v1448
      %v1817 = vpack.c.b16 %v1453, %v1449
      %v1818 = vpack.c.b16 %v1454, %v1450
      %v1819 = vpack.c.b16 %v1455, %v1451
      %v1820 = vpack.c.b16 %v1460, %v1456
      %v1821 = vpack.c.b16 %v1461, %v1457
      %v1822 = vpack.c.b16 %v1462, %v1458
      %v1823 = vpack.c.b16 %v1463, %v1459
      %v1824 = vpack.c.b16 %v1468, %v1464
      %v1825 = vpack.c.b16 %v1469, %v1465
      %v1826 = vpack.c.b16 %v1470, %v1466
      %v1827 = vpack.c.b16 %v1471, %v1467
      %v1828 = vpack.c.b16 %v1476, %v1472
      %v1829 = vpack.c.b16 %v1477, %v1473
      %v1830 = vpack.c.b16 %v1478, %v1474
      %v1831 = vpack.c.b16 %v1479, %v1475
      %v1832 = vpack.c.b16 %v1484, %v1480
      %v1833 = vpack.c.b16 %v1485, %v1481
      %v1834 = vpack.c.b16 %v1486, %v1482
      %v1835 = vpack.c.b16 %v1487, %v1483
      %v1836 = vpack.c.b16 %v1492, %v1488
      %v1837 = vpack.c.b16 %v1493, %v1489
      %v1838 = vpack.c.b16 %v1494, %v1490
      %v1839 = vpack.c.b16 %v1495, %v1491
      %v1840 = vpack.c.b16 %v1500, %v1496
      %v1841 = vpack.c.b16 %v1501, %v1497
      %v1842 = vpack.c.b16 %v1502, %v1498
      %v1843 = vpack.c.b16 %v1503, %v1499
      %v1844 = vpack.c.b16 %v1508, %v1504
      %v1845 = vpack.c.b16 %v1509, %v1505
      %v1846 = vpack.c.b16 %v1510, %v1506
      %v1847 = vpack.c.b16 %v1511, %v1507
      %v1848 = vpack.c.b16 %v1516, %v1512
      %v1849 = vpack.c.b16 %v1517, %v1513
      %v1850 = vpack.c.b16 %v1518, %v1514
      %v1851 = vpack.c.b16 %v1519, %v1515
      %v1852 = vpack.c.b16 %v1524, %v1520
      %v1853 = vpack.c.b16 %v1525, %v1521
      %v1854 = vpack.c.b16 %v1526, %v1522
      %v1855 = vpack.c.b16 %v1527, %v1523
      %v1856 = vpack.c.b16 %v1532, %v1528
      %v1857 = vpack.c.b16 %v1533, %v1529
      %v1858 = vpack.c.b16 %v1534, %v1530
      %v1859 = vpack.c.b16 %v1535, %v1531
      %v1860 = vpack.c.b16 %v1540, %v1536
      %v1861 = vpack.c.b16 %v1541, %v1537
      %v1862 = vpack.c.b16 %v1542, %v1538
      %v1863 = vpack.c.b16 %v1543, %v1539
      %v1864 = vpack.c.b16 %v1548, %v1544
      %v1865 = vpack.c.b16 %v1549, %v1545
      %v1866 = vpack.c.b16 %v1550, %v1546
      %v1867 = vpack.c.b16 %v1551, %v1547
      %v1868 = vpack.c.b16 %v1556, %v1552
      %v1869 = vpack.c.b16 %v1557, %v1553
      %v1870 = vpack.c.b16 %v1558, %v1554
      %v1871 = vpack.c.b16 %v1559, %v1555
      %v1872 = vpack.c.b16 %v1564, %v1560
      %v1873 = vpack.c.b16 %v1565, %v1561
      %v1874 = vpack.c.b16 %v1566, %v1562
      %v1875 = vpack.c.b16 %v1567, %v1563
      %v1876 = vpack.c.b16 %v1572, %v1568
      %v1877 = vpack.c.b16 %v1573, %v1569
      %v1878 = vpack.c.b16 %v1574, %v1570
      %v1879 = vpack.c.b16 %v1575, %v1571
      %v1880 = vpack.c.b16 %v1580, %v1576
      %v1881 = vpack.c.b16 %v1581, %v1577
      %v1882 = vpack.c.b16 %v1582, %v1578
      %v1883 = vpack.c.b16 %v1583, %v1579
      %v1884 = vpack.c.b16 %v1588, %v1584
      %v1885 = vpack.c.b16 %v1589, %v1585
      %v1886 = vpack.c.b16 %v1590, %v1586
      %v1887 = vpack.c.b16 %v1591, %v1587
      %v1888 = vpack.c.b16 %v1596, %v1592
      %v1889 = vpack.c.b16 %v1597, %v1593
      %v1890 = vpack.c.b16 %v1598, %v1594
      %v1891 = vpack.c.b16 %v1599, %v1595
      %v1892 = vpack.c.b16 %v1604, %v1600
      %v1893 = vpack.c.b16 %v1605, %v1601
      %v1894 = vpack.c.b16 %v1606, %v1602
      %v1895 = vpack.c.b16 %v1607, %v1603
      %v1896 = vpack.c.b16 %v1612, %v1608
      %v1897 = vpack.c.b16 %v1613, %v1609
      %v1898 = vpack.c.b16 %v1614, %v1610
      %v1899 = vpack.c.b16 %v1615, %v1611
      %v1900 = vpack.c.b16 %v1620, %v1616
      %v1901 = vpack.c.b16 %v1621, %v1617
      %v1902 = vpack.c.b16 %v1622, %v1618
      %v1903 = vpack.c.b16 %v1623, %v1619
      %v1904 = vpack.c.b16 %v1628, %v1624
      %v1905 = vpack.c.b16 %v1629, %v1625
      %v1906 = vpack.c.b16 %v1630, %v1626
      %v1907 = vpack.c.b16 %v1631, %v1627
      %v1908 = vpack.c.b16 %v1636, %v1632
      %v1909 = vpack.c.b16 %v1637, %v1633
      %v1910 = vpack.c.b16 %v1638, %v1634
      %v1911 = vpack.c.b16 %v1639, %v1635
      %v1912 = vpack.c.b16 %v1644, %v1640
      %v1913 = vpack.c.b16 %v1645, %v1641
      %v1914 = vpack.c.b16 %v1646, %v1642
      %v1915 = vpack.c.b16 %v1647, %v1643
      %v1916 = vpack.c.b16 %v1652, %v1648
      %v1917 = vpack.c.b16 %v1653, %v1649
      %v1918 = vpack.c.b16 %v1654, %v1650
      %v1919 = vpack.c.b16 %v1655, %v1651
      %v1920 = vpack.c.b16 %v1660, %v1656
      %v1921 = vpack.c.b16 %v1661, %v1657
      %v1922 = vpack.c.b16 %v1662, %v1658
      %v1923 = vpack.c.b16 %v1663, %v1659
      %v1924 = vpack.c.b16 %v1668, %v1664
      %v1925 = vpack.c.b16 %v1669, %v1665
      %v1926 = vpack.c.b16 %v1670, %v1666
      %v1927 = vpack.c.b16 %v1671, %v1667
      %v1928 = vpack.c.b16 %v1676, %v1672
      %v1929 = vpack.c.b16 %v1677, %v1673
      %v1930 = vpack.c.b16 %v1678, %v1674
      %v1931 = vpack.c.b16 %v1679, %v1675
      %v1932 = vpack.c.b16 %v1684, %v1680
      %v1933 = vpack.c.b16 %v1685, %v1681
      %v1934 = vpack.c.b16 %v1686, %v1682
      %v1935 = vpack.c.b16 %v1687, %v1683
      %v1936 = vpack.c.b16 %v1692, %v1688
      %v1937 = vpack.c.b16 %v1693, %v1689
      %v1938 = vpack.c.b16 %v1694, %v1690
      %v1939 = vpack.c.b16 %v1695, %v1691
      %v1940 = vpack.c.b16 %v1700, %v1696
      %v1941 = vpack.c.b16 %v1701, %v1697
      %v1942 = vpack.c.b16 %v1702, %v1698
      %v1943 = vpack.c.b16 %v1703, %v1699
      %v1944 = vpack.c.b16 %v1708, %v1704
      %v1945 = vpack.c.b16 %v1709, %v1705
      %v1946 = vpack.c.b16 %v1710, %v1706
      %v1947 = vpack.c.b16 %v1711, %v1707
      %v1948 = vpack.c.b16 %v1716, %v1712
      %v1949 = vpack.c.b16 %v1717, %v1713
      %v1950 = vpack.c.b16 %v1718, %v1714
      %v1951 = vpack.c.b16 %v1719, %v1715
      %v1952 = vpack.c.b16 %v1724, %v1720
      %v1953 = vpack.c.b16 %v1725, %v1721
      %v1954 = vpack.c.b16 %v1726, %v1722
      %v1955 = vpack.c.b16 %v1727, %v1723
      %v1956 = vpack.c.b16 %v1732, %v1728
      %v1957 = vpack.c.b16 %v1733, %v1729
      %v1958 = vpack.c.b16 %v1734, %v1730
      %v1959 = vpack.c.b16 %v1735, %v1731
      %v1960 = vpack.c.b16 %v1740, %v1736
      %v1961 = vpack.c.b16 %v1741, %v1737
      %v1962 = vpack.c.b16 %v1742, %v1738
      %v1963 = vpack.c.b16 %v1743, %v1739
      %v1964 = vpack.c.b16 %v1748, %v1744
      %v1965 = vpack.c.b16 %v1749, %v1745
      %v1966 = vpack.c.b16 %v1750, %v1746
      %v1967 = vpack.c.b16 %v1751, %v1747
      %v1968 = vpack.c.b16 %v1756, %v1752
      %v1969 = vpack.c.b16 %v1757, %v1753
      %v1970 = vpack.c.b16 %v1758, %v1754
      %v1971 = vpack.c.b16 %v1759, %v1755
      %v1972 = vpack.c.b16 %v1764, %v1760
      %v1973 = vpack.c.b16 %v1765, %v1761
      %v1974 = vpack.c.b16 %v1766, %v1762
      %v1975 = vpack.c.b16 %v1767, %v1763
      %v1976 = vpack.c.b16 %v1772, %v1768
      %v1977 = vpack.c.b16 %v1773, %v1769
      %v1978 = vpack.c.b16 %v1774, %v1770
      %v1979 = vpack.c.b16 %v1775, %v1771
      %v1980 = vpack.c.b16 %v1780, %v1776
      %v1981 = vpack.c.b16 %v1781, %v1777
      %v1982 = vpack.c.b16 %v1782, %v1778
      %v1983 = vpack.c.b16 %v1783, %v1779
      %v1984 = vpack.c.b16 %v1788, %v1784
      %v1985 = vpack.c.b16 %v1789, %v1785
      %v1986 = vpack.c.b16 %v1790, %v1786
      %v1987 = vpack.c.b16 %v1791, %v1787
      %v1988 = vpack.c.b16 %v1796, %v1792
      %v1989 = vpack.c.b16 %v1797, %v1793
      %v1990 = vpack.c.b16 %v1798, %v1794
      %v1991 = vpack.c.b16 %v1799, %v1795
      %2184 = vmatprep.subr.bf16.mxu0 %v599
      %2185 = vmatpush1.bf16.msra.mxu0 %v598
      %2186 = vmatprep.subr.bf16.mxu0 %v597
      %2187 = vmatpush1.bf16.msra.mxu0 %v596
      %2188 = vmatprep.subr.bf16.mxu0 %v595
      %2189 = vmatpush1.bf16.msra.mxu0 %v594
      %2190 = vmatprep.subr.bf16.mxu0 %v593
      %2191 = vmatpush1.bf16.msra.mxu0 %v592
      %2192 = vmatprep.subr.bf16.mxu0 %v591
      %2193 = vmatpush1.bf16.msra.mxu0 %v590
      %2194 = vmatprep.subr.bf16.mxu0 %v589
      %2195 = vmatpush1.bf16.msra.mxu0 %v588
      %2196 = vmatprep.subr.bf16.mxu0 %v587
      %2197 = vmatpush1.bf16.msra.mxu0 %v586
      %2198 = vmatprep.subr.bf16.mxu0 %v585
      %2199 = vmatpush1.bf16.msra.mxu0 %v584
      %2200 = vmatprep.subr.bf16.mxu0 %v615
      %2201 = vmatpush2.bf16.msra.mxu0 %v614
      %2202 = vmatprep.subr.bf16.mxu0 %v613
      %2203 = vmatpush2.bf16.msra.mxu0 %v612
      %2204 = vmatprep.subr.bf16.mxu0 %v611
      %2205 = vmatpush2.bf16.msra.mxu0 %v610
      %2206 = vmatprep.subr.bf16.mxu0 %v609
      %2207 = vmatpush2.bf16.msra.mxu0 %v608
      %2208 = vmatprep.subr.bf16.mxu0 %v607
      %2209 = vmatpush2.bf16.msra.mxu0 %v606
      %2210 = vmatprep.subr.bf16.mxu0 %v605
      %2211 = vmatpush2.bf16.msra.mxu0 %v604
      %2212 = vmatprep.subr.bf16.mxu0 %v603
      %2213 = vmatpush2.bf16.msra.mxu0 %v602
      %2214 = vmatprep.subr.bf16.mxu0 %v601
      %2215 = vmatpush2.bf16.msra.mxu0 %v600
      %2216 = vmatprep.mubr.bf16.mxu0 %v1801
      %2217 = vmatmul.mubr.bf16.gmra.mxu0 %v1800
      %v2218 = vpop.f32.mrf.mxu0
      %v2219 = vadd.f32 %v747, %v2218
      %v2220 = vpop.f32.mrf.mxu0
      %v2221 = vadd.f32 %v747, %v2220
      %v2222 = vpop.f32.mrf.mxu0
      %v2223 = vadd.f32 %v752, %v2222
      %v2224 = vpop.f32.mrf.mxu0
      %v2225 = vadd.f32 %v752, %v2224
      %2226 = vmatprep.mubr.bf16.mxu0 %v1805
      %2227 = vmatmul.mubr.bf16.gmra.mxu0 %v1804
      %v2228 = vpop.f32.mrf.mxu0
      %v2229 = vadd.f32 %v757, %v2228
      %v2230 = vpop.f32.mrf.mxu0
      %v2231 = vadd.f32 %v757, %v2230
      %v2232 = vpop.f32.mrf.mxu0
      %v2233 = vadd.f32 %v762, %v2232
      %v2234 = vpop.f32.mrf.mxu0
      %v2235 = vadd.f32 %v762, %v2234
      %2236 = vmatprep.mubr.bf16.mxu0 %v1809
      %2237 = vmatmul.mubr.bf16.gmra.mxu0 %v1808
      %v2238 = vpop.f32.mrf.mxu0
      %v2239 = vadd.f32 %v767, %v2238
      %v2240 = vpop.f32.mrf.mxu0
      %v2241 = vadd.f32 %v767, %v2240
      %v2242 = vpop.f32.mrf.mxu0
      %v2243 = vadd.f32 %v772, %v2242
      %v2244 = vpop.f32.mrf.mxu0
      %v2245 = vadd.f32 %v772, %v2244
      %2246 = vmatprep.mubr.bf16.mxu0 %v1813
      %2247 = vmatmul.mubr.bf16.gmra.mxu0 %v1812
      %v2248 = vpop.f32.mrf.mxu0
      %v2249 = vadd.f32 %v777, %v2248
      %v2250 = vpop.f32.mrf.mxu0
      %v2251 = vadd.f32 %v777, %v2250
      %v2252 = vpop.f32.mrf.mxu0
      %v2253 = vadd.f32 %v782, %v2252
      %v2254 = vpop.f32.mrf.mxu0
      %v2255 = vadd.f32 %v782, %v2254
      %2256 = vmatprep.mubr.bf16.mxu0 %v1817
      %2257 = vmatmul.mubr.bf16.gmra.mxu0 %v1816
      %v2258 = vpop.f32.mrf.mxu0
      %v2259 = vadd.f32 %v787, %v2258
      %v2260 = vpop.f32.mrf.mxu0
      %v2261 = vadd.f32 %v787, %v2260
      %v2262 = vpop.f32.mrf.mxu0
      %v2263 = vadd.f32 %v792, %v2262
      %v2264 = vpop.f32.mrf.mxu0
      %v2265 = vadd.f32 %v792, %v2264
      %2266 = vmatprep.mubr.bf16.mxu0 %v1821
      %2267 = vmatmul.mubr.bf16.gmra.mxu0 %v1820
      %v2268 = vpop.f32.mrf.mxu0
      %v2269 = vadd.f32 %v797, %v2268
      %v2270 = vpop.f32.mrf.mxu0
      %v2271 = vadd.f32 %v797, %v2270
      %v2272 = vpop.f32.mrf.mxu0
      %v2273 = vadd.f32 %v802, %v2272
      %v2274 = vpop.f32.mrf.mxu0
      %v2275 = vadd.f32 %v802, %v2274
      %2276 = vmatprep.mubr.bf16.mxu0 %v1825
      %2277 = vmatmul.mubr.bf16.gmra.mxu0 %v1824
      %v2278 = vpop.f32.mrf.mxu0
      %v2279 = vadd.f32 %v807, %v2278
      %v2280 = vpop.f32.mrf.mxu0
      %v2281 = vadd.f32 %v807, %v2280
      %v2282 = vpop.f32.mrf.mxu0
      %v2283 = vadd.f32 %v812, %v2282
      %v2284 = vpop.f32.mrf.mxu0
      %v2285 = vadd.f32 %v812, %v2284
      %2286 = vmatprep.mubr.bf16.mxu0 %v1829
      %2287 = vmatmul.mubr.bf16.gmra.mxu0 %v1828
      %v2288 = vpop.f32.mrf.mxu0
      %v2289 = vadd.f32 %v817, %v2288
      %v2290 = vpop.f32.mrf.mxu0
      %v2291 = vadd.f32 %v817, %v2290
      %v2292 = vpop.f32.mrf.mxu0
      %v2293 = vadd.f32 %v822, %v2292
      %v2294 = vpop.f32.mrf.mxu0
      %v2295 = vadd.f32 %v822, %v2294
      %2296 = vmatprep.mubr.bf16.mxu0 %v1833
      %2297 = vmatmul.mubr.bf16.gmra.mxu0 %v1832
      %v2298 = vpop.f32.mrf.mxu0
      %v2299 = vadd.f32 %v827, %v2298
      %v2300 = vpop.f32.mrf.mxu0
      %v2301 = vadd.f32 %v827, %v2300
      %v2302 = vpop.f32.mrf.mxu0
      %v2303 = vadd.f32 %v832, %v2302
      %v2304 = vpop.f32.mrf.mxu0
      %v2305 = vadd.f32 %v832, %v2304
      %2306 = vmatprep.mubr.bf16.mxu0 %v1837
      %2307 = vmatmul.mubr.bf16.gmra.mxu0 %v1836
      %v2308 = vpop.f32.mrf.mxu0
      %v2309 = vadd.f32 %v837, %v2308
      %v2310 = vpop.f32.mrf.mxu0
      %v2311 = vadd.f32 %v837, %v2310
      %v2312 = vpop.f32.mrf.mxu0
      %v2313 = vadd.f32 %v842, %v2312
      %v2314 = vpop.f32.mrf.mxu0
      %v2315 = vadd.f32 %v842, %v2314
      %2316 = vmatprep.mubr.bf16.mxu0 %v1841
      %2317 = vmatmul.mubr.bf16.gmra.mxu0 %v1840
      %v2318 = vpop.f32.mrf.mxu0
      %v2319 = vadd.f32 %v847, %v2318
      %v2320 = vpop.f32.mrf.mxu0
      %v2321 = vadd.f32 %v847, %v2320
      %v2322 = vpop.f32.mrf.mxu0
      %v2323 = vadd.f32 %v852, %v2322
      %v2324 = vpop.f32.mrf.mxu0
      %v2325 = vadd.f32 %v852, %v2324
      %2326 = vmatprep.mubr.bf16.mxu0 %v1845
      %2327 = vmatmul.mubr.bf16.gmra.mxu0 %v1844
      %v2328 = vpop.f32.mrf.mxu0
      %v2329 = vadd.f32 %v857, %v2328
      %v2330 = vpop.f32.mrf.mxu0
      %v2331 = vadd.f32 %v857, %v2330
      %v2332 = vpop.f32.mrf.mxu0
      %v2333 = vadd.f32 %v862, %v2332
      %v2334 = vpop.f32.mrf.mxu0
      %v2335 = vadd.f32 %v862, %v2334
      %2336 = vmatprep.mubr.bf16.mxu0 %v1849
      %2337 = vmatmul.mubr.bf16.gmra.mxu0 %v1848
      %v2338 = vpop.f32.mrf.mxu0
      %v2339 = vadd.f32 %v867, %v2338
      %v2340 = vpop.f32.mrf.mxu0
      %v2341 = vadd.f32 %v867, %v2340
      %v2342 = vpop.f32.mrf.mxu0
      %v2343 = vadd.f32 %v872, %v2342
      %v2344 = vpop.f32.mrf.mxu0
      %v2345 = vadd.f32 %v872, %v2344
      %2346 = vmatprep.mubr.bf16.mxu0 %v1853
      %2347 = vmatmul.mubr.bf16.gmra.mxu0 %v1852
      %v2348 = vpop.f32.mrf.mxu0
      %v2349 = vadd.f32 %v877, %v2348
      %v2350 = vpop.f32.mrf.mxu0
      %v2351 = vadd.f32 %v877, %v2350
      %v2352 = vpop.f32.mrf.mxu0
      %v2353 = vadd.f32 %v882, %v2352
      %v2354 = vpop.f32.mrf.mxu0
      %v2355 = vadd.f32 %v882, %v2354
      %2356 = vmatprep.mubr.bf16.mxu0 %v1857
      %2357 = vmatmul.mubr.bf16.gmra.mxu0 %v1856
      %v2358 = vpop.f32.mrf.mxu0
      %v2359 = vadd.f32 %v887, %v2358
      %v2360 = vpop.f32.mrf.mxu0
      %v2361 = vadd.f32 %v887, %v2360
      %v2362 = vpop.f32.mrf.mxu0
      %v2363 = vadd.f32 %v892, %v2362
      %v2364 = vpop.f32.mrf.mxu0
      %v2365 = vadd.f32 %v892, %v2364
      %2366 = vmatprep.mubr.bf16.mxu0 %v1861
      %2367 = vmatmul.mubr.bf16.gmra.mxu0 %v1860
      %v2368 = vpop.f32.mrf.mxu0
      %v2369 = vadd.f32 %v897, %v2368
      %v2370 = vpop.f32.mrf.mxu0
      %v2371 = vadd.f32 %v897, %v2370
      %v2372 = vpop.f32.mrf.mxu0
      %v2373 = vadd.f32 %v902, %v2372
      %v2374 = vpop.f32.mrf.mxu0
      %v2375 = vadd.f32 %v902, %v2374
      %2376 = vmatprep.mubr.bf16.mxu0 %v1865
      %2377 = vmatmul.mubr.bf16.gmra.mxu0 %v1864
      %v2378 = vpop.f32.mrf.mxu0
      %v2379 = vadd.f32 %v907, %v2378
      %v2380 = vpop.f32.mrf.mxu0
      %v2381 = vadd.f32 %v907, %v2380
      %v2382 = vpop.f32.mrf.mxu0
      %v2383 = vadd.f32 %v912, %v2382
      %v2384 = vpop.f32.mrf.mxu0
      %v2385 = vadd.f32 %v912, %v2384
      %2386 = vmatprep.mubr.bf16.mxu0 %v1869
      %2387 = vmatmul.mubr.bf16.gmra.mxu0 %v1868
      %v2388 = vpop.f32.mrf.mxu0
      %v2389 = vadd.f32 %v917, %v2388
      %v2390 = vpop.f32.mrf.mxu0
      %v2391 = vadd.f32 %v917, %v2390
      %v2392 = vpop.f32.mrf.mxu0
      %v2393 = vadd.f32 %v922, %v2392
      %v2394 = vpop.f32.mrf.mxu0
      %v2395 = vadd.f32 %v922, %v2394
      %2396 = vmatprep.mubr.bf16.mxu0 %v1873
      %2397 = vmatmul.mubr.bf16.gmra.mxu0 %v1872
      %v2398 = vpop.f32.mrf.mxu0
      %v2399 = vadd.f32 %v927, %v2398
      %v2400 = vpop.f32.mrf.mxu0
      %v2401 = vadd.f32 %v927, %v2400
      %v2402 = vpop.f32.mrf.mxu0
      %v2403 = vadd.f32 %v932, %v2402
      %v2404 = vpop.f32.mrf.mxu0
      %v2405 = vadd.f32 %v932, %v2404
      %2406 = vmatprep.mubr.bf16.mxu0 %v1877
      %2407 = vmatmul.mubr.bf16.gmra.mxu0 %v1876
      %v2408 = vpop.f32.mrf.mxu0
      %v2409 = vadd.f32 %v937, %v2408
      %v2410 = vpop.f32.mrf.mxu0
      %v2411 = vadd.f32 %v937, %v2410
      %v2412 = vpop.f32.mrf.mxu0
      %v2413 = vadd.f32 %v942, %v2412
      %v2414 = vpop.f32.mrf.mxu0
      %v2415 = vadd.f32 %v942, %v2414
      %2416 = vmatprep.mubr.bf16.mxu0 %v1881
      %2417 = vmatmul.mubr.bf16.gmra.mxu0 %v1880
      %v2418 = vpop.f32.mrf.mxu0
      %v2419 = vadd.f32 %v947, %v2418
      %v2420 = vpop.f32.mrf.mxu0
      %v2421 = vadd.f32 %v947, %v2420
      %v2422 = vpop.f32.mrf.mxu0
      %v2423 = vadd.f32 %v952, %v2422
      %v2424 = vpop.f32.mrf.mxu0
      %v2425 = vadd.f32 %v952, %v2424
      %2426 = vmatprep.mubr.bf16.mxu0 %v1885
      %2427 = vmatmul.mubr.bf16.gmra.mxu0 %v1884
      %v2428 = vpop.f32.mrf.mxu0
      %v2429 = vadd.f32 %v957, %v2428
      %v2430 = vpop.f32.mrf.mxu0
      %v2431 = vadd.f32 %v957, %v2430
      %v2432 = vpop.f32.mrf.mxu0
      %v2433 = vadd.f32 %v962, %v2432
      %v2434 = vpop.f32.mrf.mxu0
      %v2435 = vadd.f32 %v962, %v2434
      %2436 = vmatprep.mubr.bf16.mxu0 %v1889
      %2437 = vmatmul.mubr.bf16.gmra.mxu0 %v1888
      %v2438 = vpop.f32.mrf.mxu0
      %v2439 = vadd.f32 %v967, %v2438
      %v2440 = vpop.f32.mrf.mxu0
      %v2441 = vadd.f32 %v967, %v2440
      %v2442 = vpop.f32.mrf.mxu0
      %v2443 = vadd.f32 %v972, %v2442
      %v2444 = vpop.f32.mrf.mxu0
      %v2445 = vadd.f32 %v972, %v2444
      %2446 = vmatprep.mubr.bf16.mxu0 %v1893
      %2447 = vmatmul.mubr.bf16.gmra.mxu0 %v1892
      %v2448 = vpop.f32.mrf.mxu0
      %v2449 = vadd.f32 %v977, %v2448
      %v2450 = vpop.f32.mrf.mxu0
      %v2451 = vadd.f32 %v977, %v2450
      %v2452 = vpop.f32.mrf.mxu0
      %v2453 = vadd.f32 %v982, %v2452
      %v2454 = vpop.f32.mrf.mxu0
      %v2455 = vadd.f32 %v982, %v2454
      %2456 = vmatprep.mubr.bf16.mxu0 %v1897
      %2457 = vmatmul.mubr.bf16.gmra.mxu0 %v1896
      %v2458 = vpop.f32.mrf.mxu0
      %v2459 = vadd.f32 %v987, %v2458
      %v2460 = vpop.f32.mrf.mxu0
      %v2461 = vadd.f32 %v987, %v2460
      %v2462 = vpop.f32.mrf.mxu0
      %v2463 = vadd.f32 %v992, %v2462
      %v2464 = vpop.f32.mrf.mxu0
      %v2465 = vadd.f32 %v992, %v2464
      %2466 = vmatprep.mubr.bf16.mxu0 %v1901
      %2467 = vmatmul.mubr.bf16.gmra.mxu0 %v1900
      %v2468 = vpop.f32.mrf.mxu0
      %v2469 = vadd.f32 %v997, %v2468
      %v2470 = vpop.f32.mrf.mxu0
      %v2471 = vadd.f32 %v997, %v2470
      %v2472 = vpop.f32.mrf.mxu0
      %v2473 = vadd.f32 %v1002, %v2472
      %v2474 = vpop.f32.mrf.mxu0
      %v2475 = vadd.f32 %v1002, %v2474
      %2476 = vmatprep.mubr.bf16.mxu0 %v1905
      %2477 = vmatmul.mubr.bf16.gmra.mxu0 %v1904
      %v2478 = vpop.f32.mrf.mxu0
      %v2479 = vadd.f32 %v1007, %v2478
      %v2480 = vpop.f32.mrf.mxu0
      %v2481 = vadd.f32 %v1007, %v2480
      %v2482 = vpop.f32.mrf.mxu0
      %v2483 = vadd.f32 %v1012, %v2482
      %v2484 = vpop.f32.mrf.mxu0
      %v2485 = vadd.f32 %v1012, %v2484
      %2486 = vmatprep.mubr.bf16.mxu0 %v1909
      %2487 = vmatmul.mubr.bf16.gmra.mxu0 %v1908
      %v2488 = vpop.f32.mrf.mxu0
      %v2489 = vadd.f32 %v1017, %v2488
      %v2490 = vpop.f32.mrf.mxu0
      %v2491 = vadd.f32 %v1017, %v2490
      %v2492 = vpop.f32.mrf.mxu0
      %v2493 = vadd.f32 %v1022, %v2492
      %v2494 = vpop.f32.mrf.mxu0
      %v2495 = vadd.f32 %v1022, %v2494
      %2496 = vmatprep.mubr.bf16.mxu0 %v1913
      %2497 = vmatmul.mubr.bf16.gmra.mxu0 %v1912
      %v2498 = vpop.f32.mrf.mxu0
      %v2499 = vadd.f32 %v1027, %v2498
      %v2500 = vpop.f32.mrf.mxu0
      %v2501 = vadd.f32 %v1027, %v2500
      %v2502 = vpop.f32.mrf.mxu0
      %v2503 = vadd.f32 %v1032, %v2502
      %v2504 = vpop.f32.mrf.mxu0
      %v2505 = vadd.f32 %v1032, %v2504
      %2506 = vmatprep.mubr.bf16.mxu0 %v1917
      %2507 = vmatmul.mubr.bf16.gmra.mxu0 %v1916
      %v2508 = vpop.f32.mrf.mxu0
      %v2509 = vadd.f32 %v1037, %v2508
      %v2510 = vpop.f32.mrf.mxu0
      %v2511 = vadd.f32 %v1037, %v2510
      %v2512 = vpop.f32.mrf.mxu0
      %v2513 = vadd.f32 %v1042, %v2512
      %v2514 = vpop.f32.mrf.mxu0
      %v2515 = vadd.f32 %v1042, %v2514
      %2516 = vmatprep.mubr.bf16.mxu0 %v1921
      %2517 = vmatmul.mubr.bf16.gmra.mxu0 %v1920
      %v2518 = vpop.f32.mrf.mxu0
      %v2519 = vadd.f32 %v1047, %v2518
      %v2520 = vpop.f32.mrf.mxu0
      %v2521 = vadd.f32 %v1047, %v2520
      %v2522 = vpop.f32.mrf.mxu0
      %v2523 = vadd.f32 %v1052, %v2522
      %v2524 = vpop.f32.mrf.mxu0
      %v2525 = vadd.f32 %v1052, %v2524
      %2526 = vmatprep.mubr.bf16.mxu0 %v1925
      %2527 = vmatmul.mubr.bf16.gmra.mxu0 %v1924
      %v2528 = vpop.f32.mrf.mxu0
      %v2529 = vadd.f32 %v1057, %v2528
      %v2530 = vpop.f32.mrf.mxu0
      %v2531 = vadd.f32 %v1057, %v2530
      %v2532 = vpop.f32.mrf.mxu0
      %v2533 = vadd.f32 %v1062, %v2532
      %v2534 = vpop.f32.mrf.mxu0
      %v2535 = vadd.f32 %v1062, %v2534
      %2536 = vmatprep.mubr.bf16.mxu0 %v1929
      %2537 = vmatmul.mubr.bf16.gmra.mxu0 %v1928
      %v2538 = vpop.f32.mrf.mxu0
      %v2539 = vadd.f32 %v1067, %v2538
      %v2540 = vpop.f32.mrf.mxu0
      %v2541 = vadd.f32 %v1067, %v2540
      %v2542 = vpop.f32.mrf.mxu0
      %v2543 = vadd.f32 %v1072, %v2542
      %v2544 = vpop.f32.mrf.mxu0
      %v2545 = vadd.f32 %v1072, %v2544
      %2546 = vmatprep.mubr.bf16.mxu0 %v1933
      %2547 = vmatmul.mubr.bf16.gmra.mxu0 %v1932
      %v2548 = vpop.f32.mrf.mxu0
      %v2549 = vadd.f32 %v1077, %v2548
      %v2550 = vpop.f32.mrf.mxu0
      %v2551 = vadd.f32 %v1077, %v2550
      %v2552 = vpop.f32.mrf.mxu0
      %v2553 = vadd.f32 %v1082, %v2552
      %v2554 = vpop.f32.mrf.mxu0
      %v2555 = vadd.f32 %v1082, %v2554
      %2556 = vmatprep.mubr.bf16.mxu0 %v1937
      %2557 = vmatmul.mubr.bf16.gmra.mxu0 %v1936
      %v2558 = vpop.f32.mrf.mxu0
      %v2559 = vadd.f32 %v1087, %v2558
      %v2560 = vpop.f32.mrf.mxu0
      %v2561 = vadd.f32 %v1087, %v2560
      %v2562 = vpop.f32.mrf.mxu0
      %v2563 = vadd.f32 %v1092, %v2562
      %v2564 = vpop.f32.mrf.mxu0
      %v2565 = vadd.f32 %v1092, %v2564
      %2566 = vmatprep.mubr.bf16.mxu0 %v1941
      %2567 = vmatmul.mubr.bf16.gmra.mxu0 %v1940
      %v2568 = vpop.f32.mrf.mxu0
      %v2569 = vadd.f32 %v1097, %v2568
      %v2570 = vpop.f32.mrf.mxu0
      %v2571 = vadd.f32 %v1097, %v2570
      %v2572 = vpop.f32.mrf.mxu0
      %v2573 = vadd.f32 %v1102, %v2572
      %v2574 = vpop.f32.mrf.mxu0
      %v2575 = vadd.f32 %v1102, %v2574
      %2576 = vmatprep.mubr.bf16.mxu0 %v1945
      %2577 = vmatmul.mubr.bf16.gmra.mxu0 %v1944
      %v2578 = vpop.f32.mrf.mxu0
      %v2579 = vadd.f32 %v1107, %v2578
      %v2580 = vpop.f32.mrf.mxu0
      %v2581 = vadd.f32 %v1107, %v2580
      %v2582 = vpop.f32.mrf.mxu0
      %v2583 = vadd.f32 %v1112, %v2582
      %v2584 = vpop.f32.mrf.mxu0
      %v2585 = vadd.f32 %v1112, %v2584
      %2586 = vmatprep.mubr.bf16.mxu0 %v1949
      %2587 = vmatmul.mubr.bf16.gmra.mxu0 %v1948
      %v2588 = vpop.f32.mrf.mxu0
      %v2589 = vadd.f32 %v1117, %v2588
      %v2590 = vpop.f32.mrf.mxu0
      %v2591 = vadd.f32 %v1117, %v2590
      %v2592 = vpop.f32.mrf.mxu0
      %v2593 = vadd.f32 %v1122, %v2592
      %v2594 = vpop.f32.mrf.mxu0
      %v2595 = vadd.f32 %v1122, %v2594
      %2596 = vmatprep.mubr.bf16.mxu0 %v1953
      %2597 = vmatmul.mubr.bf16.gmra.mxu0 %v1952
      %v2598 = vpop.f32.mrf.mxu0
      %v2599 = vadd.f32 %v1127, %v2598
      %v2600 = vpop.f32.mrf.mxu0
      %v2601 = vadd.f32 %v1127, %v2600
      %v2602 = vpop.f32.mrf.mxu0
      %v2603 = vadd.f32 %v1132, %v2602
      %v2604 = vpop.f32.mrf.mxu0
      %v2605 = vadd.f32 %v1132, %v2604
      %2606 = vmatprep.mubr.bf16.mxu0 %v1957
      %2607 = vmatmul.mubr.bf16.gmra.mxu0 %v1956
      %v2608 = vpop.f32.mrf.mxu0
      %v2609 = vadd.f32 %v1137, %v2608
      %v2610 = vpop.f32.mrf.mxu0
      %v2611 = vadd.f32 %v1137, %v2610
      %v2612 = vpop.f32.mrf.mxu0
      %v2613 = vadd.f32 %v1142, %v2612
      %v2614 = vpop.f32.mrf.mxu0
      %v2615 = vadd.f32 %v1142, %v2614
      %2616 = vmatprep.mubr.bf16.mxu0 %v1961
      %2617 = vmatmul.mubr.bf16.gmra.mxu0 %v1960
      %v2618 = vpop.f32.mrf.mxu0
      %v2619 = vadd.f32 %v1147, %v2618
      %v2620 = vpop.f32.mrf.mxu0
      %v2621 = vadd.f32 %v1147, %v2620
      %v2622 = vpop.f32.mrf.mxu0
      %v2623 = vadd.f32 %v1152, %v2622
      %v2624 = vpop.f32.mrf.mxu0
      %v2625 = vadd.f32 %v1152, %v2624
      %2626 = vmatprep.mubr.bf16.mxu0 %v1965
      %2627 = vmatmul.mubr.bf16.gmra.mxu0 %v1964
      %v2628 = vpop.f32.mrf.mxu0
      %v2629 = vadd.f32 %v1157, %v2628
      %v2630 = vpop.f32.mrf.mxu0
      %v2631 = vadd.f32 %v1157, %v2630
      %v2632 = vpop.f32.mrf.mxu0
      %v2633 = vadd.f32 %v1162, %v2632
      %v2634 = vpop.f32.mrf.mxu0
      %v2635 = vadd.f32 %v1162, %v2634
      %2636 = vmatprep.mubr.bf16.mxu0 %v1969
      %2637 = vmatmul.mubr.bf16.gmra.mxu0 %v1968
      %v2638 = vpop.f32.mrf.mxu0
      %v2639 = vadd.f32 %v1167, %v2638
      %v2640 = vpop.f32.mrf.mxu0
      %v2641 = vadd.f32 %v1167, %v2640
      %v2642 = vpop.f32.mrf.mxu0
      %v2643 = vadd.f32 %v1172, %v2642
      %v2644 = vpop.f32.mrf.mxu0
      %v2645 = vadd.f32 %v1172, %v2644
      %2646 = vmatprep.mubr.bf16.mxu0 %v1973
      %2647 = vmatmul.mubr.bf16.gmra.mxu0 %v1972
      %v2648 = vpop.f32.mrf.mxu0
      %v2649 = vadd.f32 %v1177, %v2648
      %v2650 = vpop.f32.mrf.mxu0
      %v2651 = vadd.f32 %v1177, %v2650
      %v2652 = vpop.f32.mrf.mxu0
      %v2653 = vadd.f32 %v1182, %v2652
      %v2654 = vpop.f32.mrf.mxu0
      %v2655 = vadd.f32 %v1182, %v2654
      %2656 = vmatprep.mubr.bf16.mxu0 %v1977
      %2657 = vmatmul.mubr.bf16.gmra.mxu0 %v1976
      %v2658 = vpop.f32.mrf.mxu0
      %v2659 = vadd.f32 %v1187, %v2658
      %v2660 = vpop.f32.mrf.mxu0
      %v2661 = vadd.f32 %v1187, %v2660
      %v2662 = vpop.f32.mrf.mxu0
      %v2663 = vadd.f32 %v1192, %v2662
      %v2664 = vpop.f32.mrf.mxu0
      %v2665 = vadd.f32 %v1192, %v2664
      %2666 = vmatprep.mubr.bf16.mxu0 %v1981
      %2667 = vmatmul.mubr.bf16.gmra.mxu0 %v1980
      %v2668 = vpop.f32.mrf.mxu0
      %v2669 = vadd.f32 %v1197, %v2668
      %v2670 = vpop.f32.mrf.mxu0
      %v2671 = vadd.f32 %v1197, %v2670
      %v2672 = vpop.f32.mrf.mxu0
      %v2673 = vadd.f32 %v1202, %v2672
      %v2674 = vpop.f32.mrf.mxu0
      %v2675 = vadd.f32 %v1202, %v2674
      %2676 = vmatprep.mubr.bf16.mxu0 %v1985
      %2677 = vmatmul.mubr.bf16.gmra.mxu0 %v1984
      %v2678 = vpop.f32.mrf.mxu0
      %v2679 = vadd.f32 %v1207, %v2678
      %v2680 = vpop.f32.mrf.mxu0
      %v2681 = vadd.f32 %v1207, %v2680
      %v2682 = vpop.f32.mrf.mxu0
      %v2683 = vadd.f32 %v1212, %v2682
      %v2684 = vpop.f32.mrf.mxu0
      %v2685 = vadd.f32 %v1212, %v2684
      %2686 = vmatprep.mubr.bf16.mxu0 %v1989
      %2687 = vmatmul.mubr.bf16.gmra.mxu0 %v1988
      %v2688 = vpop.f32.mrf.mxu0
      %v2689 = vadd.f32 %v1217, %v2688
      %v2690 = vpop.f32.mrf.mxu0
      %v2691 = vadd.f32 %v1217, %v2690
      %v2692 = vpop.f32.mrf.mxu0
      %v2693 = vadd.f32 %v1222, %v2692
      %v2694 = vpop.f32.mrf.mxu0
      %v2695 = vadd.f32 %v1222, %v2694
      %2696 = vdwg.mxu0
      %2697 = vmatprep.subr.bf16.mxu0 %v631
      %2698 = vmatpush1.bf16.msra.mxu0 %v630
      %2699 = vmatprep.subr.bf16.mxu0 %v629
      %2700 = vmatpush1.bf16.msra.mxu0 %v628
      %2701 = vmatprep.subr.bf16.mxu0 %v627
      %2702 = vmatpush1.bf16.msra.mxu0 %v626
      %2703 = vmatprep.subr.bf16.mxu0 %v625
      %2704 = vmatpush1.bf16.msra.mxu0 %v624
      %2705 = vmatprep.subr.bf16.mxu0 %v623
      %2706 = vmatpush1.bf16.msra.mxu0 %v622
      %2707 = vmatprep.subr.bf16.mxu0 %v621
      %2708 = vmatpush1.bf16.msra.mxu0 %v620
      %2709 = vmatprep.subr.bf16.mxu0 %v619
      %2710 = vmatpush1.bf16.msra.mxu0 %v618
      %2711 = vmatprep.subr.bf16.mxu0 %v617
      %2712 = vmatpush1.bf16.msra.mxu0 %v616
      %2713 = vmatprep.subr.bf16.mxu0 %v647
      %2714 = vmatpush2.bf16.msra.mxu0 %v646
      %2715 = vmatprep.subr.bf16.mxu0 %v645
      %2716 = vmatpush2.bf16.msra.mxu0 %v644
      %2717 = vmatprep.subr.bf16.mxu0 %v643
      %2718 = vmatpush2.bf16.msra.mxu0 %v642
      %2719 = vmatprep.subr.bf16.mxu0 %v641
      %2720 = vmatpush2.bf16.msra.mxu0 %v640
      %2721 = vmatprep.subr.bf16.mxu0 %v639
      %2722 = vmatpush2.bf16.msra.mxu0 %v638
      %2723 = vmatprep.subr.bf16.mxu0 %v637
      %2724 = vmatpush2.bf16.msra.mxu0 %v636
      %2725 = vmatprep.subr.bf16.mxu0 %v635
      %2726 = vmatpush2.bf16.msra.mxu0 %v634
      %2727 = vmatprep.subr.bf16.mxu0 %v633
      %2728 = vmatpush2.bf16.msra.mxu0 %v632
      %2729 = vmatprep.mubr.bf16.mxu0 %v1803
      %2730 = vmatmul.mubr.bf16.gmra.mxu0 %v1802
      %v2731 = vpop.f32.mrf.mxu0
      %v2732 = vadd.f32 %v2219, %v2731
      %v2733 = vpop.f32.mrf.mxu0
      %v2734 = vadd.f32 %v2221, %v2733
      %v2735 = vpop.f32.mrf.mxu0
      %v2736 = vadd.f32 %v2223, %v2735
      %v2737 = vpop.f32.mrf.mxu0
      %v2738 = vadd.f32 %v2225, %v2737
      %2739 = vmatprep.mubr.bf16.mxu0 %v1807
      %2740 = vmatmul.mubr.bf16.gmra.mxu0 %v1806
      %v2741 = vpop.f32.mrf.mxu0
      %v2742 = vadd.f32 %v2229, %v2741
      %v2743 = vpop.f32.mrf.mxu0
      %v2744 = vadd.f32 %v2231, %v2743
      %v2745 = vpop.f32.mrf.mxu0
      %v2746 = vadd.f32 %v2233, %v2745
      %v2747 = vpop.f32.mrf.mxu0
      %v2748 = vadd.f32 %v2235, %v2747
      %2749 = vmatprep.mubr.bf16.mxu0 %v1811
      %2750 = vmatmul.mubr.bf16.gmra.mxu0 %v1810
      %v2751 = vpop.f32.mrf.mxu0
      %v2752 = vadd.f32 %v2239, %v2751
      %v2753 = vpop.f32.mrf.mxu0
      %v2754 = vadd.f32 %v2241, %v2753
      %v2755 = vpop.f32.mrf.mxu0
      %v2756 = vadd.f32 %v2243, %v2755
      %v2757 = vpop.f32.mrf.mxu0
      %v2758 = vadd.f32 %v2245, %v2757
      %2759 = vmatprep.mubr.bf16.mxu0 %v1815
      %2760 = vmatmul.mubr.bf16.gmra.mxu0 %v1814
      %v2761 = vpop.f32.mrf.mxu0
      %v2762 = vadd.f32 %v2249, %v2761
      %v2763 = vpop.f32.mrf.mxu0
      %v2764 = vadd.f32 %v2251, %v2763
      %v2765 = vpop.f32.mrf.mxu0
      %v2766 = vadd.f32 %v2253, %v2765
      %v2767 = vpop.f32.mrf.mxu0
      %v2768 = vadd.f32 %v2255, %v2767
      %2769 = vmatprep.mubr.bf16.mxu0 %v1819
      %2770 = vmatmul.mubr.bf16.gmra.mxu0 %v1818
      %v2771 = vpop.f32.mrf.mxu0
      %v2772 = vadd.f32 %v2259, %v2771
      %v2773 = vpop.f32.mrf.mxu0
      %v2774 = vadd.f32 %v2261, %v2773
      %v2775 = vpop.f32.mrf.mxu0
      %v2776 = vadd.f32 %v2263, %v2775
      %v2777 = vpop.f32.mrf.mxu0
      %v2778 = vadd.f32 %v2265, %v2777
      %2779 = vmatprep.mubr.bf16.mxu0 %v1823
      %2780 = vmatmul.mubr.bf16.gmra.mxu0 %v1822
      %v2781 = vpop.f32.mrf.mxu0
      %v2782 = vadd.f32 %v2269, %v2781
      %v2783 = vpop.f32.mrf.mxu0
      %v2784 = vadd.f32 %v2271, %v2783
      %v2785 = vpop.f32.mrf.mxu0
      %v2786 = vadd.f32 %v2273, %v2785
      %v2787 = vpop.f32.mrf.mxu0
      %v2788 = vadd.f32 %v2275, %v2787
      %2789 = vmatprep.mubr.bf16.mxu0 %v1827
      %2790 = vmatmul.mubr.bf16.gmra.mxu0 %v1826
      %v2791 = vpop.f32.mrf.mxu0
      %v2792 = vadd.f32 %v2279, %v2791
      %v2793 = vpop.f32.mrf.mxu0
      %v2794 = vadd.f32 %v2281, %v2793
      %v2795 = vpop.f32.mrf.mxu0
      %v2796 = vadd.f32 %v2283, %v2795
      %v2797 = vpop.f32.mrf.mxu0
      %v2798 = vadd.f32 %v2285, %v2797
      %2799 = vmatprep.mubr.bf16.mxu0 %v1831
      %2800 = vmatmul.mubr.bf16.gmra.mxu0 %v1830
      %v2801 = vpop.f32.mrf.mxu0
      %v2802 = vadd.f32 %v2289, %v2801
      %v2803 = vpop.f32.mrf.mxu0
      %v2804 = vadd.f32 %v2291, %v2803
      %v2805 = vpop.f32.mrf.mxu0
      %v2806 = vadd.f32 %v2293, %v2805
      %v2807 = vpop.f32.mrf.mxu0
      %v2808 = vadd.f32 %v2295, %v2807
      %2809 = vmatprep.mubr.bf16.mxu0 %v1835
      %2810 = vmatmul.mubr.bf16.gmra.mxu0 %v1834
      %v2811 = vpop.f32.mrf.mxu0
      %v2812 = vadd.f32 %v2299, %v2811
      %v2813 = vpop.f32.mrf.mxu0
      %v2814 = vadd.f32 %v2301, %v2813
      %v2815 = vpop.f32.mrf.mxu0
      %v2816 = vadd.f32 %v2303, %v2815
      %v2817 = vpop.f32.mrf.mxu0
      %v2818 = vadd.f32 %v2305, %v2817
      %2819 = vmatprep.mubr.bf16.mxu0 %v1839
      %2820 = vmatmul.mubr.bf16.gmra.mxu0 %v1838
      %v2821 = vpop.f32.mrf.mxu0
      %v2822 = vadd.f32 %v2309, %v2821
      %v2823 = vpop.f32.mrf.mxu0
      %v2824 = vadd.f32 %v2311, %v2823
      %v2825 = vpop.f32.mrf.mxu0
      %v2826 = vadd.f32 %v2313, %v2825
      %v2827 = vpop.f32.mrf.mxu0
      %v2828 = vadd.f32 %v2315, %v2827
      %2829 = vmatprep.mubr.bf16.mxu0 %v1843
      %2830 = vmatmul.mubr.bf16.gmra.mxu0 %v1842
      %v2831 = vpop.f32.mrf.mxu0
      %v2832 = vadd.f32 %v2319, %v2831
      %v2833 = vpop.f32.mrf.mxu0
      %v2834 = vadd.f32 %v2321, %v2833
      %v2835 = vpop.f32.mrf.mxu0
      %v2836 = vadd.f32 %v2323, %v2835
      %v2837 = vpop.f32.mrf.mxu0
      %v2838 = vadd.f32 %v2325, %v2837
      %2839 = vmatprep.mubr.bf16.mxu0 %v1847
      %2840 = vmatmul.mubr.bf16.gmra.mxu0 %v1846
      %v2841 = vpop.f32.mrf.mxu0
      %v2842 = vadd.f32 %v2329, %v2841
      %v2843 = vpop.f32.mrf.mxu0
      %v2844 = vadd.f32 %v2331, %v2843
      %v2845 = vpop.f32.mrf.mxu0
      %v2846 = vadd.f32 %v2333, %v2845
      %v2847 = vpop.f32.mrf.mxu0
      %v2848 = vadd.f32 %v2335, %v2847
      %2849 = vmatprep.mubr.bf16.mxu0 %v1851
      %2850 = vmatmul.mubr.bf16.gmra.mxu0 %v1850
      %v2851 = vpop.f32.mrf.mxu0
      %v2852 = vadd.f32 %v2339, %v2851
      %v2853 = vpop.f32.mrf.mxu0
      %v2854 = vadd.f32 %v2341, %v2853
      %v2855 = vpop.f32.mrf.mxu0
      %v2856 = vadd.f32 %v2343, %v2855
      %v2857 = vpop.f32.mrf.mxu0
      %v2858 = vadd.f32 %v2345, %v2857
      %2859 = vmatprep.mubr.bf16.mxu0 %v1855
      %2860 = vmatmul.mubr.bf16.gmra.mxu0 %v1854
      %v2861 = vpop.f32.mrf.mxu0
      %v2862 = vadd.f32 %v2349, %v2861
      %v2863 = vpop.f32.mrf.mxu0
      %v2864 = vadd.f32 %v2351, %v2863
      %v2865 = vpop.f32.mrf.mxu0
      %v2866 = vadd.f32 %v2353, %v2865
      %v2867 = vpop.f32.mrf.mxu0
      %v2868 = vadd.f32 %v2355, %v2867
      %2869 = vmatprep.mubr.bf16.mxu0 %v1859
      %2870 = vmatmul.mubr.bf16.gmra.mxu0 %v1858
      %v2871 = vpop.f32.mrf.mxu0
      %v2872 = vadd.f32 %v2359, %v2871
      %v2873 = vpop.f32.mrf.mxu0
      %v2874 = vadd.f32 %v2361, %v2873
      %v2875 = vpop.f32.mrf.mxu0
      %v2876 = vadd.f32 %v2363, %v2875
      %v2877 = vpop.f32.mrf.mxu0
      %v2878 = vadd.f32 %v2365, %v2877
      %2879 = vmatprep.mubr.bf16.mxu0 %v1863
      %2880 = vmatmul.mubr.bf16.gmra.mxu0 %v1862
      %v2881 = vpop.f32.mrf.mxu0
      %v2882 = vadd.f32 %v2369, %v2881
      %v2883 = vpop.f32.mrf.mxu0
      %v2884 = vadd.f32 %v2371, %v2883
      %v2885 = vpop.f32.mrf.mxu0
      %v2886 = vadd.f32 %v2373, %v2885
      %v2887 = vpop.f32.mrf.mxu0
      %v2888 = vadd.f32 %v2375, %v2887
      %2889 = vmatprep.mubr.bf16.mxu0 %v1867
      %2890 = vmatmul.mubr.bf16.gmra.mxu0 %v1866
      %v2891 = vpop.f32.mrf.mxu0
      %v2892 = vadd.f32 %v2379, %v2891
      %v2893 = vpop.f32.mrf.mxu0
      %v2894 = vadd.f32 %v2381, %v2893
      %v2895 = vpop.f32.mrf.mxu0
      %v2896 = vadd.f32 %v2383, %v2895
      %v2897 = vpop.f32.mrf.mxu0
      %v2898 = vadd.f32 %v2385, %v2897
      %2899 = vmatprep.mubr.bf16.mxu0 %v1871
      %2900 = vmatmul.mubr.bf16.gmra.mxu0 %v1870
      %v2901 = vpop.f32.mrf.mxu0
      %v2902 = vadd.f32 %v2389, %v2901
      %v2903 = vpop.f32.mrf.mxu0
      %v2904 = vadd.f32 %v2391, %v2903
      %v2905 = vpop.f32.mrf.mxu0
      %v2906 = vadd.f32 %v2393, %v2905
      %v2907 = vpop.f32.mrf.mxu0
      %v2908 = vadd.f32 %v2395, %v2907
      %2909 = vmatprep.mubr.bf16.mxu0 %v1875
      %2910 = vmatmul.mubr.bf16.gmra.mxu0 %v1874
      %v2911 = vpop.f32.mrf.mxu0
      %v2912 = vadd.f32 %v2399, %v2911
      %v2913 = vpop.f32.mrf.mxu0
      %v2914 = vadd.f32 %v2401, %v2913
      %v2915 = vpop.f32.mrf.mxu0
      %v2916 = vadd.f32 %v2403, %v2915
      %v2917 = vpop.f32.mrf.mxu0
      %v2918 = vadd.f32 %v2405, %v2917
      %2919 = vmatprep.mubr.bf16.mxu0 %v1879
      %2920 = vmatmul.mubr.bf16.gmra.mxu0 %v1878
      %v2921 = vpop.f32.mrf.mxu0
      %v2922 = vadd.f32 %v2409, %v2921
      %v2923 = vpop.f32.mrf.mxu0
      %v2924 = vadd.f32 %v2411, %v2923
      %v2925 = vpop.f32.mrf.mxu0
      %v2926 = vadd.f32 %v2413, %v2925
      %v2927 = vpop.f32.mrf.mxu0
      %v2928 = vadd.f32 %v2415, %v2927
      %2929 = vmatprep.mubr.bf16.mxu0 %v1883
      %2930 = vmatmul.mubr.bf16.gmra.mxu0 %v1882
      %v2931 = vpop.f32.mrf.mxu0
      %v2932 = vadd.f32 %v2419, %v2931
      %v2933 = vpop.f32.mrf.mxu0
      %v2934 = vadd.f32 %v2421, %v2933
      %v2935 = vpop.f32.mrf.mxu0
      %v2936 = vadd.f32 %v2423, %v2935
      %v2937 = vpop.f32.mrf.mxu0
      %v2938 = vadd.f32 %v2425, %v2937
      %2939 = vmatprep.mubr.bf16.mxu0 %v1887
      %2940 = vmatmul.mubr.bf16.gmra.mxu0 %v1886
      %v2941 = vpop.f32.mrf.mxu0
      %v2942 = vadd.f32 %v2429, %v2941
      %v2943 = vpop.f32.mrf.mxu0
      %v2944 = vadd.f32 %v2431, %v2943
      %v2945 = vpop.f32.mrf.mxu0
      %v2946 = vadd.f32 %v2433, %v2945
      %v2947 = vpop.f32.mrf.mxu0
      %v2948 = vadd.f32 %v2435, %v2947
      %2949 = vmatprep.mubr.bf16.mxu0 %v1891
      %2950 = vmatmul.mubr.bf16.gmra.mxu0 %v1890
      %v2951 = vpop.f32.mrf.mxu0
      %v2952 = vadd.f32 %v2439, %v2951
      %v2953 = vpop.f32.mrf.mxu0
      %v2954 = vadd.f32 %v2441, %v2953
      %v2955 = vpop.f32.mrf.mxu0
      %v2956 = vadd.f32 %v2443, %v2955
      %v2957 = vpop.f32.mrf.mxu0
      %v2958 = vadd.f32 %v2445, %v2957
      %2959 = vmatprep.mubr.bf16.mxu0 %v1895
      %2960 = vmatmul.mubr.bf16.gmra.mxu0 %v1894
      %v2961 = vpop.f32.mrf.mxu0
      %v2962 = vadd.f32 %v2449, %v2961
      %v2963 = vpop.f32.mrf.mxu0
      %v2964 = vadd.f32 %v2451, %v2963
      %v2965 = vpop.f32.mrf.mxu0
      %v2966 = vadd.f32 %v2453, %v2965
      %v2967 = vpop.f32.mrf.mxu0
      %v2968 = vadd.f32 %v2455, %v2967
      %2969 = vmatprep.mubr.bf16.mxu0 %v1899
      %2970 = vmatmul.mubr.bf16.gmra.mxu0 %v1898
      %v2971 = vpop.f32.mrf.mxu0
      %v2972 = vadd.f32 %v2459, %v2971
      %v2973 = vpop.f32.mrf.mxu0
      %v2974 = vadd.f32 %v2461, %v2973
      %v2975 = vpop.f32.mrf.mxu0
      %v2976 = vadd.f32 %v2463, %v2975
      %v2977 = vpop.f32.mrf.mxu0
      %v2978 = vadd.f32 %v2465, %v2977
      %2979 = vmatprep.mubr.bf16.mxu0 %v1903
      %2980 = vmatmul.mubr.bf16.gmra.mxu0 %v1902
      %v2981 = vpop.f32.mrf.mxu0
      %v2982 = vadd.f32 %v2469, %v2981
      %v2983 = vpop.f32.mrf.mxu0
      %v2984 = vadd.f32 %v2471, %v2983
      %v2985 = vpop.f32.mrf.mxu0
      %v2986 = vadd.f32 %v2473, %v2985
      %v2987 = vpop.f32.mrf.mxu0
      %v2988 = vadd.f32 %v2475, %v2987
      %2989 = vmatprep.mubr.bf16.mxu0 %v1907
      %2990 = vmatmul.mubr.bf16.gmra.mxu0 %v1906
      %v2991 = vpop.f32.mrf.mxu0
      %v2992 = vadd.f32 %v2479, %v2991
      %v2993 = vpop.f32.mrf.mxu0
      %v2994 = vadd.f32 %v2481, %v2993
      %v2995 = vpop.f32.mrf.mxu0
      %v2996 = vadd.f32 %v2483, %v2995
      %v2997 = vpop.f32.mrf.mxu0
      %v2998 = vadd.f32 %v2485, %v2997
      %2999 = vmatprep.mubr.bf16.mxu0 %v1911
      %3000 = vmatmul.mubr.bf16.gmra.mxu0 %v1910
      %v3001 = vpop.f32.mrf.mxu0
      %v3002 = vadd.f32 %v2489, %v3001
      %v3003 = vpop.f32.mrf.mxu0
      %v3004 = vadd.f32 %v2491, %v3003
      %v3005 = vpop.f32.mrf.mxu0
      %v3006 = vadd.f32 %v2493, %v3005
      %v3007 = vpop.f32.mrf.mxu0
      %v3008 = vadd.f32 %v2495, %v3007
      %3009 = vmatprep.mubr.bf16.mxu0 %v1915
      %3010 = vmatmul.mubr.bf16.gmra.mxu0 %v1914
      %v3011 = vpop.f32.mrf.mxu0
      %v3012 = vadd.f32 %v2499, %v3011
      %v3013 = vpop.f32.mrf.mxu0
      %v3014 = vadd.f32 %v2501, %v3013
      %v3015 = vpop.f32.mrf.mxu0
      %v3016 = vadd.f32 %v2503, %v3015
      %v3017 = vpop.f32.mrf.mxu0
      %v3018 = vadd.f32 %v2505, %v3017
      %3019 = vmatprep.mubr.bf16.mxu0 %v1919
      %3020 = vmatmul.mubr.bf16.gmra.mxu0 %v1918
      %v3021 = vpop.f32.mrf.mxu0
      %v3022 = vadd.f32 %v2509, %v3021
      %v3023 = vpop.f32.mrf.mxu0
      %v3024 = vadd.f32 %v2511, %v3023
      %v3025 = vpop.f32.mrf.mxu0
      %v3026 = vadd.f32 %v2513, %v3025
      %v3027 = vpop.f32.mrf.mxu0
      %v3028 = vadd.f32 %v2515, %v3027
      %3029 = vmatprep.mubr.bf16.mxu0 %v1923
      %3030 = vmatmul.mubr.bf16.gmra.mxu0 %v1922
      %v3031 = vpop.f32.mrf.mxu0
      %v3032 = vadd.f32 %v2519, %v3031
      %v3033 = vpop.f32.mrf.mxu0
      %v3034 = vadd.f32 %v2521, %v3033
      %v3035 = vpop.f32.mrf.mxu0
      %v3036 = vadd.f32 %v2523, %v3035
      %v3037 = vpop.f32.mrf.mxu0
      %v3038 = vadd.f32 %v2525, %v3037
      %3039 = vmatprep.mubr.bf16.mxu0 %v1927
      %3040 = vmatmul.mubr.bf16.gmra.mxu0 %v1926
      %v3041 = vpop.f32.mrf.mxu0
      %v3042 = vadd.f32 %v2529, %v3041
      %v3043 = vpop.f32.mrf.mxu0
      %v3044 = vadd.f32 %v2531, %v3043
      %v3045 = vpop.f32.mrf.mxu0
      %v3046 = vadd.f32 %v2533, %v3045
      %v3047 = vpop.f32.mrf.mxu0
      %v3048 = vadd.f32 %v2535, %v3047
      %3049 = vmatprep.mubr.bf16.mxu0 %v1931
      %3050 = vmatmul.mubr.bf16.gmra.mxu0 %v1930
      %v3051 = vpop.f32.mrf.mxu0
      %v3052 = vadd.f32 %v2539, %v3051
      %v3053 = vpop.f32.mrf.mxu0
      %v3054 = vadd.f32 %v2541, %v3053
      %v3055 = vpop.f32.mrf.mxu0
      %v3056 = vadd.f32 %v2543, %v3055
      %v3057 = vpop.f32.mrf.mxu0
      %v3058 = vadd.f32 %v2545, %v3057
      %3059 = vmatprep.mubr.bf16.mxu0 %v1935
      %3060 = vmatmul.mubr.bf16.gmra.mxu0 %v1934
      %v3061 = vpop.f32.mrf.mxu0
      %v3062 = vadd.f32 %v2549, %v3061
      %v3063 = vpop.f32.mrf.mxu0
      %v3064 = vadd.f32 %v2551, %v3063
      %v3065 = vpop.f32.mrf.mxu0
      %v3066 = vadd.f32 %v2553, %v3065
      %v3067 = vpop.f32.mrf.mxu0
      %v3068 = vadd.f32 %v2555, %v3067
      %3069 = vmatprep.mubr.bf16.mxu0 %v1939
      %3070 = vmatmul.mubr.bf16.gmra.mxu0 %v1938
      %v3071 = vpop.f32.mrf.mxu0
      %v3072 = vadd.f32 %v2559, %v3071
      %v3073 = vpop.f32.mrf.mxu0
      %v3074 = vadd.f32 %v2561, %v3073
      %v3075 = vpop.f32.mrf.mxu0
      %v3076 = vadd.f32 %v2563, %v3075
      %v3077 = vpop.f32.mrf.mxu0
      %v3078 = vadd.f32 %v2565, %v3077
      %3079 = vmatprep.mubr.bf16.mxu0 %v1943
      %3080 = vmatmul.mubr.bf16.gmra.mxu0 %v1942
      %v3081 = vpop.f32.mrf.mxu0
      %v3082 = vadd.f32 %v2569, %v3081
      %v3083 = vpop.f32.mrf.mxu0
      %v3084 = vadd.f32 %v2571, %v3083
      %v3085 = vpop.f32.mrf.mxu0
      %v3086 = vadd.f32 %v2573, %v3085
      %v3087 = vpop.f32.mrf.mxu0
      %v3088 = vadd.f32 %v2575, %v3087
      %3089 = vmatprep.mubr.bf16.mxu0 %v1947
      %3090 = vmatmul.mubr.bf16.gmra.mxu0 %v1946
      %v3091 = vpop.f32.mrf.mxu0
      %v3092 = vadd.f32 %v2579, %v3091
      %v3093 = vpop.f32.mrf.mxu0
      %v3094 = vadd.f32 %v2581, %v3093
      %v3095 = vpop.f32.mrf.mxu0
      %v3096 = vadd.f32 %v2583, %v3095
      %v3097 = vpop.f32.mrf.mxu0
      %v3098 = vadd.f32 %v2585, %v3097
      %3099 = vmatprep.mubr.bf16.mxu0 %v1951
      %3100 = vmatmul.mubr.bf16.gmra.mxu0 %v1950
      %v3101 = vpop.f32.mrf.mxu0
      %v3102 = vadd.f32 %v2589, %v3101
      %v3103 = vpop.f32.mrf.mxu0
      %v3104 = vadd.f32 %v2591, %v3103
      %v3105 = vpop.f32.mrf.mxu0
      %v3106 = vadd.f32 %v2593, %v3105
      %v3107 = vpop.f32.mrf.mxu0
      %v3108 = vadd.f32 %v2595, %v3107
      %3109 = vmatprep.mubr.bf16.mxu0 %v1955
      %3110 = vmatmul.mubr.bf16.gmra.mxu0 %v1954
      %v3111 = vpop.f32.mrf.mxu0
      %v3112 = vadd.f32 %v2599, %v3111
      %v3113 = vpop.f32.mrf.mxu0
      %v3114 = vadd.f32 %v2601, %v3113
      %v3115 = vpop.f32.mrf.mxu0
      %v3116 = vadd.f32 %v2603, %v3115
      %v3117 = vpop.f32.mrf.mxu0
      %v3118 = vadd.f32 %v2605, %v3117
      %3119 = vmatprep.mubr.bf16.mxu0 %v1959
      %3120 = vmatmul.mubr.bf16.gmra.mxu0 %v1958
      %v3121 = vpop.f32.mrf.mxu0
      %v3122 = vadd.f32 %v2609, %v3121
      %v3123 = vpop.f32.mrf.mxu0
      %v3124 = vadd.f32 %v2611, %v3123
      %v3125 = vpop.f32.mrf.mxu0
      %v3126 = vadd.f32 %v2613, %v3125
      %v3127 = vpop.f32.mrf.mxu0
      %v3128 = vadd.f32 %v2615, %v3127
      %3129 = vmatprep.mubr.bf16.mxu0 %v1963
      %3130 = vmatmul.mubr.bf16.gmra.mxu0 %v1962
      %v3131 = vpop.f32.mrf.mxu0
      %v3132 = vadd.f32 %v2619, %v3131
      %v3133 = vpop.f32.mrf.mxu0
      %v3134 = vadd.f32 %v2621, %v3133
      %v3135 = vpop.f32.mrf.mxu0
      %v3136 = vadd.f32 %v2623, %v3135
      %v3137 = vpop.f32.mrf.mxu0
      %v3138 = vadd.f32 %v2625, %v3137
      %3139 = vmatprep.mubr.bf16.mxu0 %v1967
      %3140 = vmatmul.mubr.bf16.gmra.mxu0 %v1966
      %v3141 = vpop.f32.mrf.mxu0
      %v3142 = vadd.f32 %v2629, %v3141
      %v3143 = vpop.f32.mrf.mxu0
      %v3144 = vadd.f32 %v2631, %v3143
      %v3145 = vpop.f32.mrf.mxu0
      %v3146 = vadd.f32 %v2633, %v3145
      %v3147 = vpop.f32.mrf.mxu0
      %v3148 = vadd.f32 %v2635, %v3147
      %3149 = vmatprep.mubr.bf16.mxu0 %v1971
      %3150 = vmatmul.mubr.bf16.gmra.mxu0 %v1970
      %v3151 = vpop.f32.mrf.mxu0
      %v3152 = vadd.f32 %v2639, %v3151
      %v3153 = vpop.f32.mrf.mxu0
      %v3154 = vadd.f32 %v2641, %v3153
      %v3155 = vpop.f32.mrf.mxu0
      %v3156 = vadd.f32 %v2643, %v3155
      %v3157 = vpop.f32.mrf.mxu0
      %v3158 = vadd.f32 %v2645, %v3157
      %3159 = vmatprep.mubr.bf16.mxu0 %v1975
      %3160 = vmatmul.mubr.bf16.gmra.mxu0 %v1974
      %v3161 = vpop.f32.mrf.mxu0
      %v3162 = vadd.f32 %v2649, %v3161
      %v3163 = vpop.f32.mrf.mxu0
      %v3164 = vadd.f32 %v2651, %v3163
      %v3165 = vpop.f32.mrf.mxu0
      %v3166 = vadd.f32 %v2653, %v3165
      %v3167 = vpop.f32.mrf.mxu0
      %v3168 = vadd.f32 %v2655, %v3167
      %3169 = vmatprep.mubr.bf16.mxu0 %v1979
      %3170 = vmatmul.mubr.bf16.gmra.mxu0 %v1978
      %v3171 = vpop.f32.mrf.mxu0
      %v3172 = vadd.f32 %v2659, %v3171
      %v3173 = vpop.f32.mrf.mxu0
      %v3174 = vadd.f32 %v2661, %v3173
      %v3175 = vpop.f32.mrf.mxu0
      %v3176 = vadd.f32 %v2663, %v3175
      %v3177 = vpop.f32.mrf.mxu0
      %v3178 = vadd.f32 %v2665, %v3177
      %3179 = vmatprep.mubr.bf16.mxu0 %v1983
      %3180 = vmatmul.mubr.bf16.gmra.mxu0 %v1982
      %v3181 = vpop.f32.mrf.mxu0
      %v3182 = vadd.f32 %v2669, %v3181
      %v3183 = vpop.f32.mrf.mxu0
      %v3184 = vadd.f32 %v2671, %v3183
      %v3185 = vpop.f32.mrf.mxu0
      %v3186 = vadd.f32 %v2673, %v3185
      %v3187 = vpop.f32.mrf.mxu0
      %v3188 = vadd.f32 %v2675, %v3187
      %3189 = vmatprep.mubr.bf16.mxu0 %v1987
      %3190 = vmatmul.mubr.bf16.gmra.mxu0 %v1986
      %v3191 = vpop.f32.mrf.mxu0
      %v3192 = vadd.f32 %v2679, %v3191
      %v3193 = vpop.f32.mrf.mxu0
      %v3194 = vadd.f32 %v2681, %v3193
      %v3195 = vpop.f32.mrf.mxu0
      %v3196 = vadd.f32 %v2683, %v3195
      %v3197 = vpop.f32.mrf.mxu0
      %v3198 = vadd.f32 %v2685, %v3197
      %3199 = vmatprep.mubr.bf16.mxu0 %v1991
      %3200 = vmatmul.mubr.bf16.gmra.mxu0 %v1990
      %v3201 = vpop.f32.mrf.mxu0
      %v3202 = vadd.f32 %v2689, %v3201
      %v3203 = vpop.f32.mrf.mxu0
      %v3204 = vadd.f32 %v2691, %v3203
      %v3205 = vpop.f32.mrf.mxu0
      %v3206 = vadd.f32 %v2693, %v3205
      %v3207 = vpop.f32.mrf.mxu0
      %v3208 = vadd.f32 %v2695, %v3207
      %3209 = vdwg.mxu0
      %v3210 = vmul.f32 %v2732, %v2892
      %v3211 = vmul.f32 %v2734, %v2894
      %v3212 = vmul.f32 %v2736, %v2896
      %v3213 = vmul.f32 %v2738, %v2898
      %v3214 = vmul.f32 %v2742, %v2902
      %v3215 = vmul.f32 %v2744, %v2904
      %v3216 = vmul.f32 %v2746, %v2906
      %v3217 = vmul.f32 %v2748, %v2908
      %v3218 = vadd.f32 %v3210, %v3212
      %v3219 = vadd.f32 %v3218, %v3214
      %v3220 = vadd.f32 %v3219, %v3216
      %v3221 = vrot.slane %v3220, 4
      %v3222 = vadd.f32 %v3220, %v3221
      %v3223 = vrot.slane %v3222, 2
      %v3224 = vadd.f32 %v3222, %v3223
      %v3225 = vrot.slane %v3224, 1
      %v3226 = vadd.f32 %v3224, %v3225
      %v3227 = vadd.f32 %v3211, %v3213
      %v3228 = vadd.f32 %v3227, %v3215
      %v3229 = vadd.f32 %v3228, %v3217
      %v3230 = vrot.slane %v3229, 4
      %v3231 = vadd.f32 %v3229, %v3230
      %v3232 = vrot.slane %v3231, 2
      %v3233 = vadd.f32 %v3231, %v3232
      %v3234 = vrot.slane %v3233, 1
      %v3235 = vadd.f32 %v3233, %v3234
      %v3236 = vmul.f32 %v2752, %v2892
      %v3237 = vmul.f32 %v2754, %v2894
      %v3238 = vmul.f32 %v2756, %v2896
      %v3239 = vmul.f32 %v2758, %v2898
      %v3240 = vmul.f32 %v2762, %v2902
      %v3241 = vmul.f32 %v2764, %v2904
      %v3242 = vmul.f32 %v2766, %v2906
      %v3243 = vmul.f32 %v2768, %v2908
      %v3244 = vadd.f32 %v3236, %v3238
      %v3245 = vadd.f32 %v3244, %v3240
      %v3246 = vadd.f32 %v3245, %v3242
      %v3247 = vrot.slane %v3246, 4
      %v3248 = vadd.f32 %v3246, %v3247
      %v3249 = vrot.slane %v3248, 2
      %v3250 = vadd.f32 %v3248, %v3249
      %v3251 = vrot.slane %v3250, 1
      %v3252 = vadd.f32 %v3250, %v3251
      %v3253 = vadd.f32 %v3237, %v3239
      %v3254 = vadd.f32 %v3253, %v3241
      %v3255 = vadd.f32 %v3254, %v3243
      %v3256 = vrot.slane %v3255, 4
      %v3257 = vadd.f32 %v3255, %v3256
      %v3258 = vrot.slane %v3257, 2
      %v3259 = vadd.f32 %v3257, %v3258
      %v3260 = vrot.slane %v3259, 1
      %v3261 = vadd.f32 %v3259, %v3260
      %v3262 = vmul.f32 %v2772, %v2892
      %v3263 = vmul.f32 %v2774, %v2894
      %v3264 = vmul.f32 %v2776, %v2896
      %v3265 = vmul.f32 %v2778, %v2898
      %v3266 = vmul.f32 %v2782, %v2902
      %v3267 = vmul.f32 %v2784, %v2904
      %v3268 = vmul.f32 %v2786, %v2906
      %v3269 = vmul.f32 %v2788, %v2908
      %v3270 = vadd.f32 %v3262, %v3264
      %v3271 = vadd.f32 %v3270, %v3266
      %v3272 = vadd.f32 %v3271, %v3268
      %v3273 = vrot.slane %v3272, 4
      %v3274 = vadd.f32 %v3272, %v3273
      %v3275 = vrot.slane %v3274, 2
      %v3276 = vadd.f32 %v3274, %v3275
      %v3277 = vrot.slane %v3276, 1
      %v3278 = vadd.f32 %v3276, %v3277
      %v3279 = vadd.f32 %v3263, %v3265
      %v3280 = vadd.f32 %v3279, %v3267
      %v3281 = vadd.f32 %v3280, %v3269
      %v3282 = vrot.slane %v3281, 4
      %v3283 = vadd.f32 %v3281, %v3282
      %v3284 = vrot.slane %v3283, 2
      %v3285 = vadd.f32 %v3283, %v3284
      %v3286 = vrot.slane %v3285, 1
      %v3287 = vadd.f32 %v3285, %v3286
      %v3288 = vmul.f32 %v2792, %v2892
      %v3289 = vmul.f32 %v2794, %v2894
      %v3290 = vmul.f32 %v2796, %v2896
      %v3291 = vmul.f32 %v2798, %v2898
      %v3292 = vmul.f32 %v2802, %v2902
      %v3293 = vmul.f32 %v2804, %v2904
      %v3294 = vmul.f32 %v2806, %v2906
      %v3295 = vmul.f32 %v2808, %v2908
      %v3296 = vadd.f32 %v3288, %v3290
      %v3297 = vadd.f32 %v3296, %v3292
      %v3298 = vadd.f32 %v3297, %v3294
      %v3299 = vrot.slane %v3298, 4
      %v3300 = vadd.f32 %v3298, %v3299
      %v3301 = vrot.slane %v3300, 2
      %v3302 = vadd.f32 %v3300, %v3301
      %v3303 = vrot.slane %v3302, 1
      %v3304 = vadd.f32 %v3302, %v3303
      %v3305 = vadd.f32 %v3289, %v3291
      %v3306 = vadd.f32 %v3305, %v3293
      %v3307 = vadd.f32 %v3306, %v3295
      %v3308 = vrot.slane %v3307, 4
      %v3309 = vadd.f32 %v3307, %v3308
      %v3310 = vrot.slane %v3309, 2
      %v3311 = vadd.f32 %v3309, %v3310
      %v3312 = vrot.slane %v3311, 1
      %v3313 = vadd.f32 %v3311, %v3312
      %v3314 = vmul.f32 %v2812, %v2892
      %v3315 = vmul.f32 %v2814, %v2894
      %v3316 = vmul.f32 %v2816, %v2896
      %v3317 = vmul.f32 %v2818, %v2898
      %v3318 = vmul.f32 %v2822, %v2902
      %v3319 = vmul.f32 %v2824, %v2904
      %v3320 = vmul.f32 %v2826, %v2906
      %v3321 = vmul.f32 %v2828, %v2908
      %v3322 = vadd.f32 %v3314, %v3316
      %v3323 = vadd.f32 %v3322, %v3318
      %v3324 = vadd.f32 %v3323, %v3320
      %v3325 = vrot.slane %v3324, 4
      %v3326 = vadd.f32 %v3324, %v3325
      %v3327 = vrot.slane %v3326, 2
      %v3328 = vadd.f32 %v3326, %v3327
      %v3329 = vrot.slane %v3328, 1
      %v3330 = vadd.f32 %v3328, %v3329
      %v3331 = vadd.f32 %v3315, %v3317
      %v3332 = vadd.f32 %v3331, %v3319
      %v3333 = vadd.f32 %v3332, %v3321
      %v3334 = vrot.slane %v3333, 4
      %v3335 = vadd.f32 %v3333, %v3334
      %v3336 = vrot.slane %v3335, 2
      %v3337 = vadd.f32 %v3335, %v3336
      %v3338 = vrot.slane %v3337, 1
      %v3339 = vadd.f32 %v3337, %v3338
      %v3340 = vmul.f32 %v2832, %v2892
      %v3341 = vmul.f32 %v2834, %v2894
      %v3342 = vmul.f32 %v2836, %v2896
      %v3343 = vmul.f32 %v2838, %v2898
      %v3344 = vmul.f32 %v2842, %v2902
      %v3345 = vmul.f32 %v2844, %v2904
      %v3346 = vmul.f32 %v2846, %v2906
      %v3347 = vmul.f32 %v2848, %v2908
      %v3348 = vadd.f32 %v3340, %v3342
      %v3349 = vadd.f32 %v3348, %v3344
      %v3350 = vadd.f32 %v3349, %v3346
      %v3351 = vrot.slane %v3350, 4
      %v3352 = vadd.f32 %v3350, %v3351
      %v3353 = vrot.slane %v3352, 2
      %v3354 = vadd.f32 %v3352, %v3353
      %v3355 = vrot.slane %v3354, 1
      %v3356 = vadd.f32 %v3354, %v3355
      %v3357 = vadd.f32 %v3341, %v3343
      %v3358 = vadd.f32 %v3357, %v3345
      %v3359 = vadd.f32 %v3358, %v3347
      %v3360 = vrot.slane %v3359, 4
      %v3361 = vadd.f32 %v3359, %v3360
      %v3362 = vrot.slane %v3361, 2
      %v3363 = vadd.f32 %v3361, %v3362
      %v3364 = vrot.slane %v3363, 1
      %v3365 = vadd.f32 %v3363, %v3364
      %v3366 = vmul.f32 %v2852, %v2892
      %v3367 = vmul.f32 %v2854, %v2894
      %v3368 = vmul.f32 %v2856, %v2896
      %v3369 = vmul.f32 %v2858, %v2898
      %v3370 = vmul.f32 %v2862, %v2902
      %v3371 = vmul.f32 %v2864, %v2904
      %v3372 = vmul.f32 %v2866, %v2906
      %v3373 = vmul.f32 %v2868, %v2908
      %v3374 = vadd.f32 %v3366, %v3368
      %v3375 = vadd.f32 %v3374, %v3370
      %v3376 = vadd.f32 %v3375, %v3372
      %v3377 = vrot.slane %v3376, 4
      %v3378 = vadd.f32 %v3376, %v3377
      %v3379 = vrot.slane %v3378, 2
      %v3380 = vadd.f32 %v3378, %v3379
      %v3381 = vrot.slane %v3380, 1
      %v3382 = vadd.f32 %v3380, %v3381
      %v3383 = vadd.f32 %v3367, %v3369
      %v3384 = vadd.f32 %v3383, %v3371
      %v3385 = vadd.f32 %v3384, %v3373
      %v3386 = vrot.slane %v3385, 4
      %v3387 = vadd.f32 %v3385, %v3386
      %v3388 = vrot.slane %v3387, 2
      %v3389 = vadd.f32 %v3387, %v3388
      %v3390 = vrot.slane %v3389, 1
      %v3391 = vadd.f32 %v3389, %v3390
      %v3392 = vmul.f32 %v2872, %v2892
      %v3393 = vmul.f32 %v2874, %v2894
      %v3394 = vmul.f32 %v2876, %v2896
      %v3395 = vmul.f32 %v2878, %v2898
      %v3396 = vmul.f32 %v2882, %v2902
      %v3397 = vmul.f32 %v2884, %v2904
      %v3398 = vmul.f32 %v2886, %v2906
      %v3399 = vmul.f32 %v2888, %v2908
      %v3400 = vadd.f32 %v3392, %v3394
      %v3401 = vadd.f32 %v3400, %v3396
      %v3402 = vadd.f32 %v3401, %v3398
      %v3403 = vrot.slane %v3402, 4
      %v3404 = vadd.f32 %v3402, %v3403
      %v3405 = vrot.slane %v3404, 2
      %v3406 = vadd.f32 %v3404, %v3405
      %v3407 = vrot.slane %v3406, 1
      %v3408 = vadd.f32 %v3406, %v3407
      %v3409 = vadd.f32 %v3393, %v3395
      %v3410 = vadd.f32 %v3409, %v3397
      %v3411 = vadd.f32 %v3410, %v3399
      %v3412 = vrot.slane %v3411, 4
      %v3413 = vadd.f32 %v3411, %v3412
      %v3414 = vrot.slane %v3413, 2
      %v3415 = vadd.f32 %v3413, %v3414
      %v3416 = vrot.slane %v3415, 1
      %v3417 = vadd.f32 %v3415, %v3416
      %vm3418 = vcmask 1040384
      %v3419 = vsel %vm3418, %v3226, %v3252
      %v3420 = vsel %vm3418, %v3235, %v3261
      %vm3421 = vcmask 1041408
      %v3422 = vsel %vm3421, %v3419, %v3278
      %v3423 = vsel %vm3421, %v3420, %v3287
      %vm3424 = vcmask 1042432
      %v3425 = vsel %vm3424, %v3422, %v3304
      %v3426 = vsel %vm3424, %v3423, %v3313
      %vm3427 = vcmask 1043456
      %v3428 = vsel %vm3427, %v3425, %v3330
      %v3429 = vsel %vm3427, %v3426, %v3339
      %vm3430 = vcmask 1044480
      %v3431 = vsel %vm3430, %v3428, %v3356
      %v3432 = vsel %vm3430, %v3429, %v3365
      %vm3433 = vcmask 1045504
      %v3434 = vsel %vm3433, %v3431, %v3382
      %v3435 = vsel %vm3433, %v3432, %v3391
      %vm3436 = vcmask 1046528
      %v3437 = vsel %vm3436, %v3434, %v3408
      %v3438 = vsel %vm3436, %v3435, %v3417
      %v3439 = vmul.f32 %v3437, 0.17677669
      %v3440 = vmul.f32 %v3438, 0.17677669
      %v3441 = vrot.slane %v3439, 4
      %v3442 = vmax.f32 %v3439, %v3441
      %v3443 = vrot.slane %v3442, 2
      %v3444 = vmax.f32 %v3442, %v3443
      %v3445 = vrot.slane %v3444, 1
      %v3446 = vmax.f32 %v3444, %v3445
      %v3447 = vrot.slane %v3440, 4
      %v3448 = vmax.f32 %v3440, %v3447
      %v3449 = vrot.slane %v3448, 2
      %v3450 = vmax.f32 %v3448, %v3449
      %v3451 = vrot.slane %v3450, 1
      %v3452 = vmax.f32 %v3450, %v3451
      %v3453 = vsub.f32 %v3439, %v3446
      %v3454 = vsub.f32 %v3440, %v3452
      %v3455 = vmul.f32 %v3453, 1.442695
      %v3456 = vpow.pop %v3455
      %v3457 = vmul.f32 %v3454, 1.442695
      %v3458 = vpow.pop %v3457
      %v3459 = vrot.slane %v3456, 4
      %v3460 = vadd.f32 %v3456, %v3459
      %v3461 = vrot.slane %v3460, 2
      %v3462 = vadd.f32 %v3460, %v3461
      %v3463 = vrot.slane %v3462, 1
      %v3464 = vadd.f32 %v3462, %v3463
      %v3465 = vrot.slane %v3458, 4
      %v3466 = vadd.f32 %v3458, %v3465
      %v3467 = vrot.slane %v3466, 2
      %v3468 = vadd.f32 %v3466, %v3467
      %v3469 = vrot.slane %v3468, 1
      %v3470 = vadd.f32 %v3468, %v3469
      %v3471 = vrcp.pop %v3464
      %v3472 = vrcp.pop %v3470
      %v3473 = vmul.f32 %v3456, %v3471
      %v3474 = vmul.f32 %v3458, %v3472
      %v3475 = vlaneseq
      %v3476 = vshrl.u32 %v3475, 7
      %v3477 = vsub.s32 0, %v3476
      %v3478 = vrot.slane %v3473, %v3477
      %v3479 = vlaneseq
      %v3480 = vshrl.u32 %v3479, 7
      %v3481 = vsub.s32 0, %v3480
      %v3482 = vrot.slane %v3474, %v3481
      %v3483 = vmul.f32 %v3478, %v3052
      %v3484 = vmul.f32 %v3482, %v3054
      %v3485 = vmul.f32 %v3478, %v3056
      %v3486 = vmul.f32 %v3482, %v3058
      %v3487 = vmul.f32 %v3478, %v3062
      %v3488 = vmul.f32 %v3482, %v3064
      %v3489 = vmul.f32 %v3478, %v3066
      %v3490 = vmul.f32 %v3482, %v3068
      %v3491 = vlaneseq
      %v3492 = vshrl.u32 %v3491, 7
      %v3493 = vsub.s32 1, %v3492
      %v3494 = vrot.slane %v3473, %v3493
      %v3495 = vlaneseq
      %v3496 = vshrl.u32 %v3495, 7
      %v3497 = vsub.s32 1, %v3496
      %v3498 = vrot.slane %v3474, %v3497
      %v3499 = vmul.f32 %v3494, %v3072
      %v3500 = vmul.f32 %v3498, %v3074
      %v3501 = vmul.f32 %v3494, %v3076
      %v3502 = vmul.f32 %v3498, %v3078
      %v3503 = vmul.f32 %v3494, %v3082
      %v3504 = vmul.f32 %v3498, %v3084
      %v3505 = vmul.f32 %v3494, %v3086
      %v3506 = vmul.f32 %v3498, %v3088
      %v3507 = vadd.f32 %v3483, %v3499
      %v3508 = vadd.f32 %v3484, %v3500
      %v3509 = vadd.f32 %v3485, %v3501
      %v3510 = vadd.f32 %v3486, %v3502
      %v3511 = vadd.f32 %v3487, %v3503
      %v3512 = vadd.f32 %v3488, %v3504
      %v3513 = vadd.f32 %v3489, %v3505
      %v3514 = vadd.f32 %v3490, %v3506
      %v3515 = vlaneseq
      %v3516 = vshrl.u32 %v3515, 7
      %v3517 = vsub.s32 2, %v3516
      %v3518 = vrot.slane %v3473, %v3517
      %v3519 = vlaneseq
      %v3520 = vshrl.u32 %v3519, 7
      %v3521 = vsub.s32 2, %v3520
      %v3522 = vrot.slane %v3474, %v3521
      %v3523 = vmul.f32 %v3518, %v3092
      %v3524 = vmul.f32 %v3522, %v3094
      %v3525 = vmul.f32 %v3518, %v3096
      %v3526 = vmul.f32 %v3522, %v3098
      %v3527 = vmul.f32 %v3518, %v3102
      %v3528 = vmul.f32 %v3522, %v3104
      %v3529 = vmul.f32 %v3518, %v3106
      %v3530 = vmul.f32 %v3522, %v3108
      %v3531 = vadd.f32 %v3507, %v3523
      %v3532 = vadd.f32 %v3508, %v3524
      %v3533 = vadd.f32 %v3509, %v3525
      %v3534 = vadd.f32 %v3510, %v3526
      %v3535 = vadd.f32 %v3511, %v3527
      %v3536 = vadd.f32 %v3512, %v3528
      %v3537 = vadd.f32 %v3513, %v3529
      %v3538 = vadd.f32 %v3514, %v3530
      %v3539 = vlaneseq
      %v3540 = vshrl.u32 %v3539, 7
      %v3541 = vsub.s32 3, %v3540
      %v3542 = vrot.slane %v3473, %v3541
      %v3543 = vlaneseq
      %v3544 = vshrl.u32 %v3543, 7
      %v3545 = vsub.s32 3, %v3544
      %v3546 = vrot.slane %v3474, %v3545
      %v3547 = vmul.f32 %v3542, %v3112
      %v3548 = vmul.f32 %v3546, %v3114
      %v3549 = vmul.f32 %v3542, %v3116
      %v3550 = vmul.f32 %v3546, %v3118
      %v3551 = vmul.f32 %v3542, %v3122
      %v3552 = vmul.f32 %v3546, %v3124
      %v3553 = vmul.f32 %v3542, %v3126
      %v3554 = vmul.f32 %v3546, %v3128
      %v3555 = vadd.f32 %v3531, %v3547
      %v3556 = vadd.f32 %v3532, %v3548
      %v3557 = vadd.f32 %v3533, %v3549
      %v3558 = vadd.f32 %v3534, %v3550
      %v3559 = vadd.f32 %v3535, %v3551
      %v3560 = vadd.f32 %v3536, %v3552
      %v3561 = vadd.f32 %v3537, %v3553
      %v3562 = vadd.f32 %v3538, %v3554
      %v3563 = vlaneseq
      %v3564 = vshrl.u32 %v3563, 7
      %v3565 = vsub.s32 4, %v3564
      %v3566 = vrot.slane %v3473, %v3565
      %v3567 = vlaneseq
      %v3568 = vshrl.u32 %v3567, 7
      %v3569 = vsub.s32 4, %v3568
      %v3570 = vrot.slane %v3474, %v3569
      %v3571 = vmul.f32 %v3566, %v3132
      %v3572 = vmul.f32 %v3570, %v3134
      %v3573 = vmul.f32 %v3566, %v3136
      %v3574 = vmul.f32 %v3570, %v3138
      %v3575 = vmul.f32 %v3566, %v3142
      %v3576 = vmul.f32 %v3570, %v3144
      %v3577 = vmul.f32 %v3566, %v3146
      %v3578 = vmul.f32 %v3570, %v3148
      %v3579 = vadd.f32 %v3555, %v3571
      %v3580 = vadd.f32 %v3556, %v3572
      %v3581 = vadd.f32 %v3557, %v3573
      %v3582 = vadd.f32 %v3558, %v3574
      %v3583 = vadd.f32 %v3559, %v3575
      %v3584 = vadd.f32 %v3560, %v3576
      %v3585 = vadd.f32 %v3561, %v3577
      %v3586 = vadd.f32 %v3562, %v3578
      %v3587 = vlaneseq
      %v3588 = vshrl.u32 %v3587, 7
      %v3589 = vsub.s32 5, %v3588
      %v3590 = vrot.slane %v3473, %v3589
      %v3591 = vlaneseq
      %v3592 = vshrl.u32 %v3591, 7
      %v3593 = vsub.s32 5, %v3592
      %v3594 = vrot.slane %v3474, %v3593
      %v3595 = vmul.f32 %v3590, %v3152
      %v3596 = vmul.f32 %v3594, %v3154
      %v3597 = vmul.f32 %v3590, %v3156
      %v3598 = vmul.f32 %v3594, %v3158
      %v3599 = vmul.f32 %v3590, %v3162
      %v3600 = vmul.f32 %v3594, %v3164
      %v3601 = vmul.f32 %v3590, %v3166
      %v3602 = vmul.f32 %v3594, %v3168
      %v3603 = vadd.f32 %v3579, %v3595
      %v3604 = vadd.f32 %v3580, %v3596
      %v3605 = vadd.f32 %v3581, %v3597
      %v3606 = vadd.f32 %v3582, %v3598
      %v3607 = vadd.f32 %v3583, %v3599
      %v3608 = vadd.f32 %v3584, %v3600
      %v3609 = vadd.f32 %v3585, %v3601
      %v3610 = vadd.f32 %v3586, %v3602
      %v3611 = vlaneseq
      %v3612 = vshrl.u32 %v3611, 7
      %v3613 = vsub.s32 6, %v3612
      %v3614 = vrot.slane %v3473, %v3613
      %v3615 = vlaneseq
      %v3616 = vshrl.u32 %v3615, 7
      %v3617 = vsub.s32 6, %v3616
      %v3618 = vrot.slane %v3474, %v3617
      %v3619 = vmul.f32 %v3614, %v3172
      %v3620 = vmul.f32 %v3618, %v3174
      %v3621 = vmul.f32 %v3614, %v3176
      %v3622 = vmul.f32 %v3618, %v3178
      %v3623 = vmul.f32 %v3614, %v3182
      %v3624 = vmul.f32 %v3618, %v3184
      %v3625 = vmul.f32 %v3614, %v3186
      %v3626 = vmul.f32 %v3618, %v3188
      %v3627 = vadd.f32 %v3603, %v3619
      %v3628 = vadd.f32 %v3604, %v3620
      %v3629 = vadd.f32 %v3605, %v3621
      %v3630 = vadd.f32 %v3606, %v3622
      %v3631 = vadd.f32 %v3607, %v3623
      %v3632 = vadd.f32 %v3608, %v3624
      %v3633 = vadd.f32 %v3609, %v3625
      %v3634 = vadd.f32 %v3610, %v3626
      %v3635 = vlaneseq
      %v3636 = vshrl.u32 %v3635, 7
      %v3637 = vsub.s32 7, %v3636
      %v3638 = vrot.slane %v3473, %v3637
      %v3639 = vlaneseq
      %v3640 = vshrl.u32 %v3639, 7
      %v3641 = vsub.s32 7, %v3640
      %v3642 = vrot.slane %v3474, %v3641
      %v3643 = vmul.f32 %v3638, %v3192
      %v3644 = vmul.f32 %v3642, %v3194
      %v3645 = vmul.f32 %v3638, %v3196
      %v3646 = vmul.f32 %v3642, %v3198
      %v3647 = vmul.f32 %v3638, %v3202
      %v3648 = vmul.f32 %v3642, %v3204
      %v3649 = vmul.f32 %v3638, %v3206
      %v3650 = vmul.f32 %v3642, %v3208
      %v3651 = vadd.f32 %v3627, %v3643
      %v3652 = vadd.f32 %v3628, %v3644
      %v3653 = vadd.f32 %v3629, %v3645
      %v3654 = vadd.f32 %v3630, %v3646
      %v3655 = vadd.f32 %v3631, %v3647
      %v3656 = vadd.f32 %v3632, %v3648
      %v3657 = vadd.f32 %v3633, %v3649
      %v3658 = vadd.f32 %v3634, %v3650
      %v3659 = vmul.f32 %v2732, %v2912
      %v3660 = vmul.f32 %v2734, %v2914
      %v3661 = vmul.f32 %v2736, %v2916
      %v3662 = vmul.f32 %v2738, %v2918
      %v3663 = vmul.f32 %v2742, %v2922
      %v3664 = vmul.f32 %v2744, %v2924
      %v3665 = vmul.f32 %v2746, %v2926
      %v3666 = vmul.f32 %v2748, %v2928
      %v3667 = vadd.f32 %v3659, %v3661
      %v3668 = vadd.f32 %v3667, %v3663
      %v3669 = vadd.f32 %v3668, %v3665
      %v3670 = vrot.slane %v3669, 4
      %v3671 = vadd.f32 %v3669, %v3670
      %v3672 = vrot.slane %v3671, 2
      %v3673 = vadd.f32 %v3671, %v3672
      %v3674 = vrot.slane %v3673, 1
      %v3675 = vadd.f32 %v3673, %v3674
      %v3676 = vadd.f32 %v3660, %v3662
      %v3677 = vadd.f32 %v3676, %v3664
      %v3678 = vadd.f32 %v3677, %v3666
      %v3679 = vrot.slane %v3678, 4
      %v3680 = vadd.f32 %v3678, %v3679
      %v3681 = vrot.slane %v3680, 2
      %v3682 = vadd.f32 %v3680, %v3681
      %v3683 = vrot.slane %v3682, 1
      %v3684 = vadd.f32 %v3682, %v3683
      %v3685 = vmul.f32 %v2752, %v2912
      %v3686 = vmul.f32 %v2754, %v2914
      %v3687 = vmul.f32 %v2756, %v2916
      %v3688 = vmul.f32 %v2758, %v2918
      %v3689 = vmul.f32 %v2762, %v2922
      %v3690 = vmul.f32 %v2764, %v2924
      %v3691 = vmul.f32 %v2766, %v2926
      %v3692 = vmul.f32 %v2768, %v2928
      %v3693 = vadd.f32 %v3685, %v3687
      %v3694 = vadd.f32 %v3693, %v3689
      %v3695 = vadd.f32 %v3694, %v3691
      %v3696 = vrot.slane %v3695, 4
      %v3697 = vadd.f32 %v3695, %v3696
      %v3698 = vrot.slane %v3697, 2
      %v3699 = vadd.f32 %v3697, %v3698
      %v3700 = vrot.slane %v3699, 1
      %v3701 = vadd.f32 %v3699, %v3700
      %v3702 = vadd.f32 %v3686, %v3688
      %v3703 = vadd.f32 %v3702, %v3690
      %v3704 = vadd.f32 %v3703, %v3692
      %v3705 = vrot.slane %v3704, 4
      %v3706 = vadd.f32 %v3704, %v3705
      %v3707 = vrot.slane %v3706, 2
      %v3708 = vadd.f32 %v3706, %v3707
      %v3709 = vrot.slane %v3708, 1
      %v3710 = vadd.f32 %v3708, %v3709
      %v3711 = vmul.f32 %v2772, %v2912
      %v3712 = vmul.f32 %v2774, %v2914
      %v3713 = vmul.f32 %v2776, %v2916
      %v3714 = vmul.f32 %v2778, %v2918
      %v3715 = vmul.f32 %v2782, %v2922
      %v3716 = vmul.f32 %v2784, %v2924
      %v3717 = vmul.f32 %v2786, %v2926
      %v3718 = vmul.f32 %v2788, %v2928
      %v3719 = vadd.f32 %v3711, %v3713
      %v3720 = vadd.f32 %v3719, %v3715
      %v3721 = vadd.f32 %v3720, %v3717
      %v3722 = vrot.slane %v3721, 4
      %v3723 = vadd.f32 %v3721, %v3722
      %v3724 = vrot.slane %v3723, 2
      %v3725 = vadd.f32 %v3723, %v3724
      %v3726 = vrot.slane %v3725, 1
      %v3727 = vadd.f32 %v3725, %v3726
      %v3728 = vadd.f32 %v3712, %v3714
      %v3729 = vadd.f32 %v3728, %v3716
      %v3730 = vadd.f32 %v3729, %v3718
      %v3731 = vrot.slane %v3730, 4
      %v3732 = vadd.f32 %v3730, %v3731
      %v3733 = vrot.slane %v3732, 2
      %v3734 = vadd.f32 %v3732, %v3733
      %v3735 = vrot.slane %v3734, 1
      %v3736 = vadd.f32 %v3734, %v3735
      %v3737 = vmul.f32 %v2792, %v2912
      %v3738 = vmul.f32 %v2794, %v2914
      %v3739 = vmul.f32 %v2796, %v2916
      %v3740 = vmul.f32 %v2798, %v2918
      %v3741 = vmul.f32 %v2802, %v2922
      %v3742 = vmul.f32 %v2804, %v2924
      %v3743 = vmul.f32 %v2806, %v2926
      %v3744 = vmul.f32 %v2808, %v2928
      %v3745 = vadd.f32 %v3737, %v3739
      %v3746 = vadd.f32 %v3745, %v3741
      %v3747 = vadd.f32 %v3746, %v3743
      %v3748 = vrot.slane %v3747, 4
      %v3749 = vadd.f32 %v3747, %v3748
      %v3750 = vrot.slane %v3749, 2
      %v3751 = vadd.f32 %v3749, %v3750
      %v3752 = vrot.slane %v3751, 1
      %v3753 = vadd.f32 %v3751, %v3752
      %v3754 = vadd.f32 %v3738, %v3740
      %v3755 = vadd.f32 %v3754, %v3742
      %v3756 = vadd.f32 %v3755, %v3744
      %v3757 = vrot.slane %v3756, 4
      %v3758 = vadd.f32 %v3756, %v3757
      %v3759 = vrot.slane %v3758, 2
      %v3760 = vadd.f32 %v3758, %v3759
      %v3761 = vrot.slane %v3760, 1
      %v3762 = vadd.f32 %v3760, %v3761
      %v3763 = vmul.f32 %v2812, %v2912
      %v3764 = vmul.f32 %v2814, %v2914
      %v3765 = vmul.f32 %v2816, %v2916
      %v3766 = vmul.f32 %v2818, %v2918
      %v3767 = vmul.f32 %v2822, %v2922
      %v3768 = vmul.f32 %v2824, %v2924
      %v3769 = vmul.f32 %v2826, %v2926
      %v3770 = vmul.f32 %v2828, %v2928
      %v3771 = vadd.f32 %v3763, %v3765
      %v3772 = vadd.f32 %v3771, %v3767
      %v3773 = vadd.f32 %v3772, %v3769
      %v3774 = vrot.slane %v3773, 4
      %v3775 = vadd.f32 %v3773, %v3774
      %v3776 = vrot.slane %v3775, 2
      %v3777 = vadd.f32 %v3775, %v3776
      %v3778 = vrot.slane %v3777, 1
      %v3779 = vadd.f32 %v3777, %v3778
      %v3780 = vadd.f32 %v3764, %v3766
      %v3781 = vadd.f32 %v3780, %v3768
      %v3782 = vadd.f32 %v3781, %v3770
      %v3783 = vrot.slane %v3782, 4
      %v3784 = vadd.f32 %v3782, %v3783
      %v3785 = vrot.slane %v3784, 2
      %v3786 = vadd.f32 %v3784, %v3785
      %v3787 = vrot.slane %v3786, 1
      %v3788 = vadd.f32 %v3786, %v3787
      %v3789 = vmul.f32 %v2832, %v2912
      %v3790 = vmul.f32 %v2834, %v2914
      %v3791 = vmul.f32 %v2836, %v2916
      %v3792 = vmul.f32 %v2838, %v2918
      %v3793 = vmul.f32 %v2842, %v2922
      %v3794 = vmul.f32 %v2844, %v2924
      %v3795 = vmul.f32 %v2846, %v2926
      %v3796 = vmul.f32 %v2848, %v2928
      %v3797 = vadd.f32 %v3789, %v3791
      %v3798 = vadd.f32 %v3797, %v3793
      %v3799 = vadd.f32 %v3798, %v3795
      %v3800 = vrot.slane %v3799, 4
      %v3801 = vadd.f32 %v3799, %v3800
      %v3802 = vrot.slane %v3801, 2
      %v3803 = vadd.f32 %v3801, %v3802
      %v3804 = vrot.slane %v3803, 1
      %v3805 = vadd.f32 %v3803, %v3804
      %v3806 = vadd.f32 %v3790, %v3792
      %v3807 = vadd.f32 %v3806, %v3794
      %v3808 = vadd.f32 %v3807, %v3796
      %v3809 = vrot.slane %v3808, 4
      %v3810 = vadd.f32 %v3808, %v3809
      %v3811 = vrot.slane %v3810, 2
      %v3812 = vadd.f32 %v3810, %v3811
      %v3813 = vrot.slane %v3812, 1
      %v3814 = vadd.f32 %v3812, %v3813
      %v3815 = vmul.f32 %v2852, %v2912
      %v3816 = vmul.f32 %v2854, %v2914
      %v3817 = vmul.f32 %v2856, %v2916
      %v3818 = vmul.f32 %v2858, %v2918
      %v3819 = vmul.f32 %v2862, %v2922
      %v3820 = vmul.f32 %v2864, %v2924
      %v3821 = vmul.f32 %v2866, %v2926
      %v3822 = vmul.f32 %v2868, %v2928
      %v3823 = vadd.f32 %v3815, %v3817
      %v3824 = vadd.f32 %v3823, %v3819
      %v3825 = vadd.f32 %v3824, %v3821
      %v3826 = vrot.slane %v3825, 4
      %v3827 = vadd.f32 %v3825, %v3826
      %v3828 = vrot.slane %v3827, 2
      %v3829 = vadd.f32 %v3827, %v3828
      %v3830 = vrot.slane %v3829, 1
      %v3831 = vadd.f32 %v3829, %v3830
      %v3832 = vadd.f32 %v3816, %v3818
      %v3833 = vadd.f32 %v3832, %v3820
      %v3834 = vadd.f32 %v3833, %v3822
      %v3835 = vrot.slane %v3834, 4
      %v3836 = vadd.f32 %v3834, %v3835
      %v3837 = vrot.slane %v3836, 2
      %v3838 = vadd.f32 %v3836, %v3837
      %v3839 = vrot.slane %v3838, 1
      %v3840 = vadd.f32 %v3838, %v3839
      %v3841 = vmul.f32 %v2872, %v2912
      %v3842 = vmul.f32 %v2874, %v2914
      %v3843 = vmul.f32 %v2876, %v2916
      %v3844 = vmul.f32 %v2878, %v2918
      %v3845 = vmul.f32 %v2882, %v2922
      %v3846 = vmul.f32 %v2884, %v2924
      %v3847 = vmul.f32 %v2886, %v2926
      %v3848 = vmul.f32 %v2888, %v2928
      %v3849 = vadd.f32 %v3841, %v3843
      %v3850 = vadd.f32 %v3849, %v3845
      %v3851 = vadd.f32 %v3850, %v3847
      %v3852 = vrot.slane %v3851, 4
      %v3853 = vadd.f32 %v3851, %v3852
      %v3854 = vrot.slane %v3853, 2
      %v3855 = vadd.f32 %v3853, %v3854
      %v3856 = vrot.slane %v3855, 1
      %v3857 = vadd.f32 %v3855, %v3856
      %v3858 = vadd.f32 %v3842, %v3844
      %v3859 = vadd.f32 %v3858, %v3846
      %v3860 = vadd.f32 %v3859, %v3848
      %v3861 = vrot.slane %v3860, 4
      %v3862 = vadd.f32 %v3860, %v3861
      %v3863 = vrot.slane %v3862, 2
      %v3864 = vadd.f32 %v3862, %v3863
      %v3865 = vrot.slane %v3864, 1
      %v3866 = vadd.f32 %v3864, %v3865
      %v3867 = vsel %vm3418, %v3675, %v3701
      %v3868 = vsel %vm3418, %v3684, %v3710
      %v3869 = vsel %vm3421, %v3867, %v3727
      %v3870 = vsel %vm3421, %v3868, %v3736
      %v3871 = vsel %vm3424, %v3869, %v3753
      %v3872 = vsel %vm3424, %v3870, %v3762
      %v3873 = vsel %vm3427, %v3871, %v3779
      %v3874 = vsel %vm3427, %v3872, %v3788
      %v3875 = vsel %vm3430, %v3873, %v3805
      %v3876 = vsel %vm3430, %v3874, %v3814
      %v3877 = vsel %vm3433, %v3875, %v3831
      %v3878 = vsel %vm3433, %v3876, %v3840
      %v3879 = vsel %vm3436, %v3877, %v3857
      %v3880 = vsel %vm3436, %v3878, %v3866
      %v3881 = vmul.f32 %v3879, 0.17677669
      %v3882 = vmul.f32 %v3880, 0.17677669
      %v3883 = vrot.slane %v3881, 4
      %v3884 = vmax.f32 %v3881, %v3883
      %v3885 = vrot.slane %v3884, 2
      %v3886 = vmax.f32 %v3884, %v3885
      %v3887 = vrot.slane %v3886, 1
      %v3888 = vmax.f32 %v3886, %v3887
      %v3889 = vrot.slane %v3882, 4
      %v3890 = vmax.f32 %v3882, %v3889
      %v3891 = vrot.slane %v3890, 2
      %v3892 = vmax.f32 %v3890, %v3891
      %v3893 = vrot.slane %v3892, 1
      %v3894 = vmax.f32 %v3892, %v3893
      %v3895 = vsub.f32 %v3881, %v3888
      %v3896 = vsub.f32 %v3882, %v3894
      %v3897 = vmul.f32 %v3895, 1.442695
      %v3898 = vpow.pop %v3897
      %v3899 = vmul.f32 %v3896, 1.442695
      %v3900 = vpow.pop %v3899
      %v3901 = vrot.slane %v3898, 4
      %v3902 = vadd.f32 %v3898, %v3901
      %v3903 = vrot.slane %v3902, 2
      %v3904 = vadd.f32 %v3902, %v3903
      %v3905 = vrot.slane %v3904, 1
      %v3906 = vadd.f32 %v3904, %v3905
      %v3907 = vrot.slane %v3900, 4
      %v3908 = vadd.f32 %v3900, %v3907
      %v3909 = vrot.slane %v3908, 2
      %v3910 = vadd.f32 %v3908, %v3909
      %v3911 = vrot.slane %v3910, 1
      %v3912 = vadd.f32 %v3910, %v3911
      %v3913 = vrcp.pop %v3906
      %v3914 = vrcp.pop %v3912
      %v3915 = vmul.f32 %v3898, %v3913
      %v3916 = vmul.f32 %v3900, %v3914
      %v3917 = vlaneseq
      %v3918 = vshrl.u32 %v3917, 7
      %v3919 = vsub.s32 0, %v3918
      %v3920 = vrot.slane %v3915, %v3919
      %v3921 = vlaneseq
      %v3922 = vshrl.u32 %v3921, 7
      %v3923 = vsub.s32 0, %v3922
      %v3924 = vrot.slane %v3916, %v3923
      %v3925 = vmul.f32 %v3920, %v3052
      %v3926 = vmul.f32 %v3924, %v3054
      %v3927 = vmul.f32 %v3920, %v3056
      %v3928 = vmul.f32 %v3924, %v3058
      %v3929 = vmul.f32 %v3920, %v3062
      %v3930 = vmul.f32 %v3924, %v3064
      %v3931 = vmul.f32 %v3920, %v3066
      %v3932 = vmul.f32 %v3924, %v3068
      %v3933 = vlaneseq
      %v3934 = vshrl.u32 %v3933, 7
      %v3935 = vsub.s32 1, %v3934
      %v3936 = vrot.slane %v3915, %v3935
      %v3937 = vlaneseq
      %v3938 = vshrl.u32 %v3937, 7
      %v3939 = vsub.s32 1, %v3938
      %v3940 = vrot.slane %v3916, %v3939
      %v3941 = vmul.f32 %v3936, %v3072
      %v3942 = vmul.f32 %v3940, %v3074
      %v3943 = vmul.f32 %v3936, %v3076
      %v3944 = vmul.f32 %v3940, %v3078
      %v3945 = vmul.f32 %v3936, %v3082
      %v3946 = vmul.f32 %v3940, %v3084
      %v3947 = vmul.f32 %v3936, %v3086
      %v3948 = vmul.f32 %v3940, %v3088
      %v3949 = vadd.f32 %v3925, %v3941
      %v3950 = vadd.f32 %v3926, %v3942
      %v3951 = vadd.f32 %v3927, %v3943
      %v3952 = vadd.f32 %v3928, %v3944
      %v3953 = vadd.f32 %v3929, %v3945
      %v3954 = vadd.f32 %v3930, %v3946
      %v3955 = vadd.f32 %v3931, %v3947
      %v3956 = vadd.f32 %v3932, %v3948
      %v3957 = vlaneseq
      %v3958 = vshrl.u32 %v3957, 7
      %v3959 = vsub.s32 2, %v3958
      %v3960 = vrot.slane %v3915, %v3959
      %v3961 = vlaneseq
      %v3962 = vshrl.u32 %v3961, 7
      %v3963 = vsub.s32 2, %v3962
      %v3964 = vrot.slane %v3916, %v3963
      %v3965 = vmul.f32 %v3960, %v3092
      %v3966 = vmul.f32 %v3964, %v3094
      %v3967 = vmul.f32 %v3960, %v3096
      %v3968 = vmul.f32 %v3964, %v3098
      %v3969 = vmul.f32 %v3960, %v3102
      %v3970 = vmul.f32 %v3964, %v3104
      %v3971 = vmul.f32 %v3960, %v3106
      %v3972 = vmul.f32 %v3964, %v3108
      %v3973 = vadd.f32 %v3949, %v3965
      %v3974 = vadd.f32 %v3950, %v3966
      %v3975 = vadd.f32 %v3951, %v3967
      %v3976 = vadd.f32 %v3952, %v3968
      %v3977 = vadd.f32 %v3953, %v3969
      %v3978 = vadd.f32 %v3954, %v3970
      %v3979 = vadd.f32 %v3955, %v3971
      %v3980 = vadd.f32 %v3956, %v3972
      %v3981 = vlaneseq
      %v3982 = vshrl.u32 %v3981, 7
      %v3983 = vsub.s32 3, %v3982
      %v3984 = vrot.slane %v3915, %v3983
      %v3985 = vlaneseq
      %v3986 = vshrl.u32 %v3985, 7
      %v3987 = vsub.s32 3, %v3986
      %v3988 = vrot.slane %v3916, %v3987
      %v3989 = vmul.f32 %v3984, %v3112
      %v3990 = vmul.f32 %v3988, %v3114
      %v3991 = vmul.f32 %v3984, %v3116
      %v3992 = vmul.f32 %v3988, %v3118
      %v3993 = vmul.f32 %v3984, %v3122
      %v3994 = vmul.f32 %v3988, %v3124
      %v3995 = vmul.f32 %v3984, %v3126
      %v3996 = vmul.f32 %v3988, %v3128
      %v3997 = vadd.f32 %v3973, %v3989
      %v3998 = vadd.f32 %v3974, %v3990
      %v3999 = vadd.f32 %v3975, %v3991
      %v4000 = vadd.f32 %v3976, %v3992
      %v4001 = vadd.f32 %v3977, %v3993
      %v4002 = vadd.f32 %v3978, %v3994
      %v4003 = vadd.f32 %v3979, %v3995
      %v4004 = vadd.f32 %v3980, %v3996
      %v4005 = vlaneseq
      %v4006 = vshrl.u32 %v4005, 7
      %v4007 = vsub.s32 4, %v4006
      %v4008 = vrot.slane %v3915, %v4007
      %v4009 = vlaneseq
      %v4010 = vshrl.u32 %v4009, 7
      %v4011 = vsub.s32 4, %v4010
      %v4012 = vrot.slane %v3916, %v4011
      %v4013 = vmul.f32 %v4008, %v3132
      %v4014 = vmul.f32 %v4012, %v3134
      %v4015 = vmul.f32 %v4008, %v3136
      %v4016 = vmul.f32 %v4012, %v3138
      %v4017 = vmul.f32 %v4008, %v3142
      %v4018 = vmul.f32 %v4012, %v3144
      %v4019 = vmul.f32 %v4008, %v3146
      %v4020 = vmul.f32 %v4012, %v3148
      %v4021 = vadd.f32 %v3997, %v4013
      %v4022 = vadd.f32 %v3998, %v4014
      %v4023 = vadd.f32 %v3999, %v4015
      %v4024 = vadd.f32 %v4000, %v4016
      %v4025 = vadd.f32 %v4001, %v4017
      %v4026 = vadd.f32 %v4002, %v4018
      %v4027 = vadd.f32 %v4003, %v4019
      %v4028 = vadd.f32 %v4004, %v4020
      %v4029 = vlaneseq
      %v4030 = vshrl.u32 %v4029, 7
      %v4031 = vsub.s32 5, %v4030
      %v4032 = vrot.slane %v3915, %v4031
      %v4033 = vlaneseq
      %v4034 = vshrl.u32 %v4033, 7
      %v4035 = vsub.s32 5, %v4034
      %v4036 = vrot.slane %v3916, %v4035
      %v4037 = vmul.f32 %v4032, %v3152
      %v4038 = vmul.f32 %v4036, %v3154
      %v4039 = vmul.f32 %v4032, %v3156
      %v4040 = vmul.f32 %v4036, %v3158
      %v4041 = vmul.f32 %v4032, %v3162
      %v4042 = vmul.f32 %v4036, %v3164
      %v4043 = vmul.f32 %v4032, %v3166
      %v4044 = vmul.f32 %v4036, %v3168
      %v4045 = vadd.f32 %v4021, %v4037
      %v4046 = vadd.f32 %v4022, %v4038
      %v4047 = vadd.f32 %v4023, %v4039
      %v4048 = vadd.f32 %v4024, %v4040
      %v4049 = vadd.f32 %v4025, %v4041
      %v4050 = vadd.f32 %v4026, %v4042
      %v4051 = vadd.f32 %v4027, %v4043
      %v4052 = vadd.f32 %v4028, %v4044
      %v4053 = vlaneseq
      %v4054 = vshrl.u32 %v4053, 7
      %v4055 = vsub.s32 6, %v4054
      %v4056 = vrot.slane %v3915, %v4055
      %v4057 = vlaneseq
      %v4058 = vshrl.u32 %v4057, 7
      %v4059 = vsub.s32 6, %v4058
      %v4060 = vrot.slane %v3916, %v4059
      %v4061 = vmul.f32 %v4056, %v3172
      %v4062 = vmul.f32 %v4060, %v3174
      %v4063 = vmul.f32 %v4056, %v3176
      %v4064 = vmul.f32 %v4060, %v3178
      %v4065 = vmul.f32 %v4056, %v3182
      %v4066 = vmul.f32 %v4060, %v3184
      %v4067 = vmul.f32 %v4056, %v3186
      %v4068 = vmul.f32 %v4060, %v3188
      %v4069 = vadd.f32 %v4045, %v4061
      %v4070 = vadd.f32 %v4046, %v4062
      %v4071 = vadd.f32 %v4047, %v4063
      %v4072 = vadd.f32 %v4048, %v4064
      %v4073 = vadd.f32 %v4049, %v4065
      %v4074 = vadd.f32 %v4050, %v4066
      %v4075 = vadd.f32 %v4051, %v4067
      %v4076 = vadd.f32 %v4052, %v4068
      %v4077 = vlaneseq
      %v4078 = vshrl.u32 %v4077, 7
      %v4079 = vsub.s32 7, %v4078
      %v4080 = vrot.slane %v3915, %v4079
      %v4081 = vlaneseq
      %v4082 = vshrl.u32 %v4081, 7
      %v4083 = vsub.s32 7, %v4082
      %v4084 = vrot.slane %v3916, %v4083
      %v4085 = vmul.f32 %v4080, %v3192
      %v4086 = vmul.f32 %v4084, %v3194
      %v4087 = vmul.f32 %v4080, %v3196
      %v4088 = vmul.f32 %v4084, %v3198
      %v4089 = vmul.f32 %v4080, %v3202
      %v4090 = vmul.f32 %v4084, %v3204
      %v4091 = vmul.f32 %v4080, %v3206
      %v4092 = vmul.f32 %v4084, %v3208
      %v4093 = vadd.f32 %v4069, %v4085
      %v4094 = vadd.f32 %v4070, %v4086
      %v4095 = vadd.f32 %v4071, %v4087
      %v4096 = vadd.f32 %v4072, %v4088
      %v4097 = vadd.f32 %v4073, %v4089
      %v4098 = vadd.f32 %v4074, %v4090
      %v4099 = vadd.f32 %v4075, %v4091
      %v4100 = vadd.f32 %v4076, %v4092
      %v4101 = vmul.f32 %v2732, %v2932
      %v4102 = vmul.f32 %v2734, %v2934
      %v4103 = vmul.f32 %v2736, %v2936
      %v4104 = vmul.f32 %v2738, %v2938
      %v4105 = vmul.f32 %v2742, %v2942
      %v4106 = vmul.f32 %v2744, %v2944
      %v4107 = vmul.f32 %v2746, %v2946
      %v4108 = vmul.f32 %v2748, %v2948
      %v4109 = vadd.f32 %v4101, %v4103
      %v4110 = vadd.f32 %v4109, %v4105
      %v4111 = vadd.f32 %v4110, %v4107
      %v4112 = vrot.slane %v4111, 4
      %v4113 = vadd.f32 %v4111, %v4112
      %v4114 = vrot.slane %v4113, 2
      %v4115 = vadd.f32 %v4113, %v4114
      %v4116 = vrot.slane %v4115, 1
      %v4117 = vadd.f32 %v4115, %v4116
      %v4118 = vadd.f32 %v4102, %v4104
      %v4119 = vadd.f32 %v4118, %v4106
      %v4120 = vadd.f32 %v4119, %v4108
      %v4121 = vrot.slane %v4120, 4
      %v4122 = vadd.f32 %v4120, %v4121
      %v4123 = vrot.slane %v4122, 2
      %v4124 = vadd.f32 %v4122, %v4123
      %v4125 = vrot.slane %v4124, 1
      %v4126 = vadd.f32 %v4124, %v4125
      %v4127 = vmul.f32 %v2752, %v2932
      %v4128 = vmul.f32 %v2754, %v2934
      %v4129 = vmul.f32 %v2756, %v2936
      %v4130 = vmul.f32 %v2758, %v2938
      %v4131 = vmul.f32 %v2762, %v2942
      %v4132 = vmul.f32 %v2764, %v2944
      %v4133 = vmul.f32 %v2766, %v2946
      %v4134 = vmul.f32 %v2768, %v2948
      %v4135 = vadd.f32 %v4127, %v4129
      %v4136 = vadd.f32 %v4135, %v4131
      %v4137 = vadd.f32 %v4136, %v4133
      %v4138 = vrot.slane %v4137, 4
      %v4139 = vadd.f32 %v4137, %v4138
      %v4140 = vrot.slane %v4139, 2
      %v4141 = vadd.f32 %v4139, %v4140
      %v4142 = vrot.slane %v4141, 1
      %v4143 = vadd.f32 %v4141, %v4142
      %v4144 = vadd.f32 %v4128, %v4130
      %v4145 = vadd.f32 %v4144, %v4132
      %v4146 = vadd.f32 %v4145, %v4134
      %v4147 = vrot.slane %v4146, 4
      %v4148 = vadd.f32 %v4146, %v4147
      %v4149 = vrot.slane %v4148, 2
      %v4150 = vadd.f32 %v4148, %v4149
      %v4151 = vrot.slane %v4150, 1
      %v4152 = vadd.f32 %v4150, %v4151
      %v4153 = vmul.f32 %v2772, %v2932
      %v4154 = vmul.f32 %v2774, %v2934
      %v4155 = vmul.f32 %v2776, %v2936
      %v4156 = vmul.f32 %v2778, %v2938
      %v4157 = vmul.f32 %v2782, %v2942
      %v4158 = vmul.f32 %v2784, %v2944
      %v4159 = vmul.f32 %v2786, %v2946
      %v4160 = vmul.f32 %v2788, %v2948
      %v4161 = vadd.f32 %v4153, %v4155
      %v4162 = vadd.f32 %v4161, %v4157
      %v4163 = vadd.f32 %v4162, %v4159
      %v4164 = vrot.slane %v4163, 4
      %v4165 = vadd.f32 %v4163, %v4164
      %v4166 = vrot.slane %v4165, 2
      %v4167 = vadd.f32 %v4165, %v4166
      %v4168 = vrot.slane %v4167, 1
      %v4169 = vadd.f32 %v4167, %v4168
      %v4170 = vadd.f32 %v4154, %v4156
      %v4171 = vadd.f32 %v4170, %v4158
      %v4172 = vadd.f32 %v4171, %v4160
      %v4173 = vrot.slane %v4172, 4
      %v4174 = vadd.f32 %v4172, %v4173
      %v4175 = vrot.slane %v4174, 2
      %v4176 = vadd.f32 %v4174, %v4175
      %v4177 = vrot.slane %v4176, 1
      %v4178 = vadd.f32 %v4176, %v4177
      %v4179 = vmul.f32 %v2792, %v2932
      %v4180 = vmul.f32 %v2794, %v2934
      %v4181 = vmul.f32 %v2796, %v2936
      %v4182 = vmul.f32 %v2798, %v2938
      %v4183 = vmul.f32 %v2802, %v2942
      %v4184 = vmul.f32 %v2804, %v2944
      %v4185 = vmul.f32 %v2806, %v2946
      %v4186 = vmul.f32 %v2808, %v2948
      %v4187 = vadd.f32 %v4179, %v4181
      %v4188 = vadd.f32 %v4187, %v4183
      %v4189 = vadd.f32 %v4188, %v4185
      %v4190 = vrot.slane %v4189, 4
      %v4191 = vadd.f32 %v4189, %v4190
      %v4192 = vrot.slane %v4191, 2
      %v4193 = vadd.f32 %v4191, %v4192
      %v4194 = vrot.slane %v4193, 1
      %v4195 = vadd.f32 %v4193, %v4194
      %v4196 = vadd.f32 %v4180, %v4182
      %v4197 = vadd.f32 %v4196, %v4184
      %v4198 = vadd.f32 %v4197, %v4186
      %v4199 = vrot.slane %v4198, 4
      %v4200 = vadd.f32 %v4198, %v4199
      %v4201 = vrot.slane %v4200, 2
      %v4202 = vadd.f32 %v4200, %v4201
      %v4203 = vrot.slane %v4202, 1
      %v4204 = vadd.f32 %v4202, %v4203
      %v4205 = vmul.f32 %v2812, %v2932
      %v4206 = vmul.f32 %v2814, %v2934
      %v4207 = vmul.f32 %v2816, %v2936
      %v4208 = vmul.f32 %v2818, %v2938
      %v4209 = vmul.f32 %v2822, %v2942
      %v4210 = vmul.f32 %v2824, %v2944
      %v4211 = vmul.f32 %v2826, %v2946
      %v4212 = vmul.f32 %v2828, %v2948
      %v4213 = vadd.f32 %v4205, %v4207
      %v4214 = vadd.f32 %v4213, %v4209
      %v4215 = vadd.f32 %v4214, %v4211
      %v4216 = vrot.slane %v4215, 4
      %v4217 = vadd.f32 %v4215, %v4216
      %v4218 = vrot.slane %v4217, 2
      %v4219 = vadd.f32 %v4217, %v4218
      %v4220 = vrot.slane %v4219, 1
      %v4221 = vadd.f32 %v4219, %v4220
      %v4222 = vadd.f32 %v4206, %v4208
      %v4223 = vadd.f32 %v4222, %v4210
      %v4224 = vadd.f32 %v4223, %v4212
      %v4225 = vrot.slane %v4224, 4
      %v4226 = vadd.f32 %v4224, %v4225
      %v4227 = vrot.slane %v4226, 2
      %v4228 = vadd.f32 %v4226, %v4227
      %v4229 = vrot.slane %v4228, 1
      %v4230 = vadd.f32 %v4228, %v4229
      %v4231 = vmul.f32 %v2832, %v2932
      %v4232 = vmul.f32 %v2834, %v2934
      %v4233 = vmul.f32 %v2836, %v2936
      %v4234 = vmul.f32 %v2838, %v2938
      %v4235 = vmul.f32 %v2842, %v2942
      %v4236 = vmul.f32 %v2844, %v2944
      %v4237 = vmul.f32 %v2846, %v2946
      %v4238 = vmul.f32 %v2848, %v2948
      %v4239 = vadd.f32 %v4231, %v4233
      %v4240 = vadd.f32 %v4239, %v4235
      %v4241 = vadd.f32 %v4240, %v4237
      %v4242 = vrot.slane %v4241, 4
      %v4243 = vadd.f32 %v4241, %v4242
      %v4244 = vrot.slane %v4243, 2
      %v4245 = vadd.f32 %v4243, %v4244
      %v4246 = vrot.slane %v4245, 1
      %v4247 = vadd.f32 %v4245, %v4246
      %v4248 = vadd.f32 %v4232, %v4234
      %v4249 = vadd.f32 %v4248, %v4236
      %v4250 = vadd.f32 %v4249, %v4238
      %v4251 = vrot.slane %v4250, 4
      %v4252 = vadd.f32 %v4250, %v4251
      %v4253 = vrot.slane %v4252, 2
      %v4254 = vadd.f32 %v4252, %v4253
      %v4255 = vrot.slane %v4254, 1
      %v4256 = vadd.f32 %v4254, %v4255
      %v4257 = vmul.f32 %v2852, %v2932
      %v4258 = vmul.f32 %v2854, %v2934
      %v4259 = vmul.f32 %v2856, %v2936
      %v4260 = vmul.f32 %v2858, %v2938
      %v4261 = vmul.f32 %v2862, %v2942
      %v4262 = vmul.f32 %v2864, %v2944
      %v4263 = vmul.f32 %v2866, %v2946
      %v4264 = vmul.f32 %v2868, %v2948
      %v4265 = vadd.f32 %v4257, %v4259
      %v4266 = vadd.f32 %v4265, %v4261
      %v4267 = vadd.f32 %v4266, %v4263
      %v4268 = vrot.slane %v4267, 4
      %v4269 = vadd.f32 %v4267, %v4268
      %v4270 = vrot.slane %v4269, 2
      %v4271 = vadd.f32 %v4269, %v4270
      %v4272 = vrot.slane %v4271, 1
      %v4273 = vadd.f32 %v4271, %v4272
      %v4274 = vadd.f32 %v4258, %v4260
      %v4275 = vadd.f32 %v4274, %v4262
      %v4276 = vadd.f32 %v4275, %v4264
      %v4277 = vrot.slane %v4276, 4
      %v4278 = vadd.f32 %v4276, %v4277
      %v4279 = vrot.slane %v4278, 2
      %v4280 = vadd.f32 %v4278, %v4279
      %v4281 = vrot.slane %v4280, 1
      %v4282 = vadd.f32 %v4280, %v4281
      %v4283 = vmul.f32 %v2872, %v2932
      %v4284 = vmul.f32 %v2874, %v2934
      %v4285 = vmul.f32 %v2876, %v2936
      %v4286 = vmul.f32 %v2878, %v2938
      %v4287 = vmul.f32 %v2882, %v2942
      %v4288 = vmul.f32 %v2884, %v2944
      %v4289 = vmul.f32 %v2886, %v2946
      %v4290 = vmul.f32 %v2888, %v2948
      %v4291 = vadd.f32 %v4283, %v4285
      %v4292 = vadd.f32 %v4291, %v4287
      %v4293 = vadd.f32 %v4292, %v4289
      %v4294 = vrot.slane %v4293, 4
      %v4295 = vadd.f32 %v4293, %v4294
      %v4296 = vrot.slane %v4295, 2
      %v4297 = vadd.f32 %v4295, %v4296
      %v4298 = vrot.slane %v4297, 1
      %v4299 = vadd.f32 %v4297, %v4298
      %v4300 = vadd.f32 %v4284, %v4286
      %v4301 = vadd.f32 %v4300, %v4288
      %v4302 = vadd.f32 %v4301, %v4290
      %v4303 = vrot.slane %v4302, 4
      %v4304 = vadd.f32 %v4302, %v4303
      %v4305 = vrot.slane %v4304, 2
      %v4306 = vadd.f32 %v4304, %v4305
      %v4307 = vrot.slane %v4306, 1
      %v4308 = vadd.f32 %v4306, %v4307
      %v4309 = vsel %vm3418, %v4117, %v4143
      %v4310 = vsel %vm3418, %v4126, %v4152
      %v4311 = vsel %vm3421, %v4309, %v4169
      %v4312 = vsel %vm3421, %v4310, %v4178
      %v4313 = vsel %vm3424, %v4311, %v4195
      %v4314 = vsel %vm3424, %v4312, %v4204
      %v4315 = vsel %vm3427, %v4313, %v4221
      %v4316 = vsel %vm3427, %v4314, %v4230
      %v4317 = vsel %vm3430, %v4315, %v4247
      %v4318 = vsel %vm3430, %v4316, %v4256
      %v4319 = vsel %vm3433, %v4317, %v4273
      %v4320 = vsel %vm3433, %v4318, %v4282
      %v4321 = vsel %vm3436, %v4319, %v4299
      %v4322 = vsel %vm3436, %v4320, %v4308
      %v4323 = vmul.f32 %v4321, 0.17677669
      %v4324 = vmul.f32 %v4322, 0.17677669
      %v4325 = vrot.slane %v4323, 4
      %v4326 = vmax.f32 %v4323, %v4325
      %v4327 = vrot.slane %v4326, 2
      %v4328 = vmax.f32 %v4326, %v4327
      %v4329 = vrot.slane %v4328, 1
      %v4330 = vmax.f32 %v4328, %v4329
      %v4331 = vrot.slane %v4324, 4
      %v4332 = vmax.f32 %v4324, %v4331
      %v4333 = vrot.slane %v4332, 2
      %v4334 = vmax.f32 %v4332, %v4333
      %v4335 = vrot.slane %v4334, 1
      %v4336 = vmax.f32 %v4334, %v4335
      %v4337 = vsub.f32 %v4323, %v4330
      %v4338 = vsub.f32 %v4324, %v4336
      %v4339 = vmul.f32 %v4337, 1.442695
      %v4340 = vpow.pop %v4339
      %v4341 = vmul.f32 %v4338, 1.442695
      %v4342 = vpow.pop %v4341
      %v4343 = vrot.slane %v4340, 4
      %v4344 = vadd.f32 %v4340, %v4343
      %v4345 = vrot.slane %v4344, 2
      %v4346 = vadd.f32 %v4344, %v4345
      %v4347 = vrot.slane %v4346, 1
      %v4348 = vadd.f32 %v4346, %v4347
      %v4349 = vrot.slane %v4342, 4
      %v4350 = vadd.f32 %v4342, %v4349
      %v4351 = vrot.slane %v4350, 2
      %v4352 = vadd.f32 %v4350, %v4351
      %v4353 = vrot.slane %v4352, 1
      %v4354 = vadd.f32 %v4352, %v4353
      %v4355 = vrcp.pop %v4348
      %v4356 = vrcp.pop %v4354
      %v4357 = vmul.f32 %v4340, %v4355
      %v4358 = vmul.f32 %v4342, %v4356
      %v4359 = vlaneseq
      %v4360 = vshrl.u32 %v4359, 7
      %v4361 = vsub.s32 0, %v4360
      %v4362 = vrot.slane %v4357, %v4361
      %v4363 = vlaneseq
      %v4364 = vshrl.u32 %v4363, 7
      %v4365 = vsub.s32 0, %v4364
      %v4366 = vrot.slane %v4358, %v4365
      %v4367 = vmul.f32 %v4362, %v3052
      %v4368 = vmul.f32 %v4366, %v3054
      %v4369 = vmul.f32 %v4362, %v3056
      %v4370 = vmul.f32 %v4366, %v3058
      %v4371 = vmul.f32 %v4362, %v3062
      %v4372 = vmul.f32 %v4366, %v3064
      %v4373 = vmul.f32 %v4362, %v3066
      %v4374 = vmul.f32 %v4366, %v3068
      %v4375 = vlaneseq
      %v4376 = vshrl.u32 %v4375, 7
      %v4377 = vsub.s32 1, %v4376
      %v4378 = vrot.slane %v4357, %v4377
      %v4379 = vlaneseq
      %v4380 = vshrl.u32 %v4379, 7
      %v4381 = vsub.s32 1, %v4380
      %v4382 = vrot.slane %v4358, %v4381
      %v4383 = vmul.f32 %v4378, %v3072
      %v4384 = vmul.f32 %v4382, %v3074
      %v4385 = vmul.f32 %v4378, %v3076
      %v4386 = vmul.f32 %v4382, %v3078
      %v4387 = vmul.f32 %v4378, %v3082
      %v4388 = vmul.f32 %v4382, %v3084
      %v4389 = vmul.f32 %v4378, %v3086
      %v4390 = vmul.f32 %v4382, %v3088
      %v4391 = vadd.f32 %v4367, %v4383
      %v4392 = vadd.f32 %v4368, %v4384
      %v4393 = vadd.f32 %v4369, %v4385
      %v4394 = vadd.f32 %v4370, %v4386
      %v4395 = vadd.f32 %v4371, %v4387
      %v4396 = vadd.f32 %v4372, %v4388
      %v4397 = vadd.f32 %v4373, %v4389
      %v4398 = vadd.f32 %v4374, %v4390
      %v4399 = vlaneseq
      %v4400 = vshrl.u32 %v4399, 7
      %v4401 = vsub.s32 2, %v4400
      %v4402 = vrot.slane %v4357, %v4401
      %v4403 = vlaneseq
      %v4404 = vshrl.u32 %v4403, 7
      %v4405 = vsub.s32 2, %v4404
      %v4406 = vrot.slane %v4358, %v4405
      %v4407 = vmul.f32 %v4402, %v3092
      %v4408 = vmul.f32 %v4406, %v3094
      %v4409 = vmul.f32 %v4402, %v3096
      %v4410 = vmul.f32 %v4406, %v3098
      %v4411 = vmul.f32 %v4402, %v3102
      %v4412 = vmul.f32 %v4406, %v3104
      %v4413 = vmul.f32 %v4402, %v3106
      %v4414 = vmul.f32 %v4406, %v3108
      %v4415 = vadd.f32 %v4391, %v4407
      %v4416 = vadd.f32 %v4392, %v4408
      %v4417 = vadd.f32 %v4393, %v4409
      %v4418 = vadd.f32 %v4394, %v4410
      %v4419 = vadd.f32 %v4395, %v4411
      %v4420 = vadd.f32 %v4396, %v4412
      %v4421 = vadd.f32 %v4397, %v4413
      %v4422 = vadd.f32 %v4398, %v4414
      %v4423 = vlaneseq
      %v4424 = vshrl.u32 %v4423, 7
      %v4425 = vsub.s32 3, %v4424
      %v4426 = vrot.slane %v4357, %v4425
      %v4427 = vlaneseq
      %v4428 = vshrl.u32 %v4427, 7
      %v4429 = vsub.s32 3, %v4428
      %v4430 = vrot.slane %v4358, %v4429
      %v4431 = vmul.f32 %v4426, %v3112
      %v4432 = vmul.f32 %v4430, %v3114
      %v4433 = vmul.f32 %v4426, %v3116
      %v4434 = vmul.f32 %v4430, %v3118
      %v4435 = vmul.f32 %v4426, %v3122
      %v4436 = vmul.f32 %v4430, %v3124
      %v4437 = vmul.f32 %v4426, %v3126
      %v4438 = vmul.f32 %v4430, %v3128
      %v4439 = vadd.f32 %v4415, %v4431
      %v4440 = vadd.f32 %v4416, %v4432
      %v4441 = vadd.f32 %v4417, %v4433
      %v4442 = vadd.f32 %v4418, %v4434
      %v4443 = vadd.f32 %v4419, %v4435
      %v4444 = vadd.f32 %v4420, %v4436
      %v4445 = vadd.f32 %v4421, %v4437
      %v4446 = vadd.f32 %v4422, %v4438
      %v4447 = vlaneseq
      %v4448 = vshrl.u32 %v4447, 7
      %v4449 = vsub.s32 4, %v4448
      %v4450 = vrot.slane %v4357, %v4449
      %v4451 = vlaneseq
      %v4452 = vshrl.u32 %v4451, 7
      %v4453 = vsub.s32 4, %v4452
      %v4454 = vrot.slane %v4358, %v4453
      %v4455 = vmul.f32 %v4450, %v3132
      %v4456 = vmul.f32 %v4454, %v3134
      %v4457 = vmul.f32 %v4450, %v3136
      %v4458 = vmul.f32 %v4454, %v3138
      %v4459 = vmul.f32 %v4450, %v3142
      %v4460 = vmul.f32 %v4454, %v3144
      %v4461 = vmul.f32 %v4450, %v3146
      %v4462 = vmul.f32 %v4454, %v3148
      %v4463 = vadd.f32 %v4439, %v4455
      %v4464 = vadd.f32 %v4440, %v4456
      %v4465 = vadd.f32 %v4441, %v4457
      %v4466 = vadd.f32 %v4442, %v4458
      %v4467 = vadd.f32 %v4443, %v4459
      %v4468 = vadd.f32 %v4444, %v4460
      %v4469 = vadd.f32 %v4445, %v4461
      %v4470 = vadd.f32 %v4446, %v4462
      %v4471 = vlaneseq
      %v4472 = vshrl.u32 %v4471, 7
      %v4473 = vsub.s32 5, %v4472
      %v4474 = vrot.slane %v4357, %v4473
      %v4475 = vlaneseq
      %v4476 = vshrl.u32 %v4475, 7
      %v4477 = vsub.s32 5, %v4476
      %v4478 = vrot.slane %v4358, %v4477
      %v4479 = vmul.f32 %v4474, %v3152
      %v4480 = vmul.f32 %v4478, %v3154
      %v4481 = vmul.f32 %v4474, %v3156
      %v4482 = vmul.f32 %v4478, %v3158
      %v4483 = vmul.f32 %v4474, %v3162
      %v4484 = vmul.f32 %v4478, %v3164
      %v4485 = vmul.f32 %v4474, %v3166
      %v4486 = vmul.f32 %v4478, %v3168
      %v4487 = vadd.f32 %v4463, %v4479
      %v4488 = vadd.f32 %v4464, %v4480
      %v4489 = vadd.f32 %v4465, %v4481
      %v4490 = vadd.f32 %v4466, %v4482
      %v4491 = vadd.f32 %v4467, %v4483
      %v4492 = vadd.f32 %v4468, %v4484
      %v4493 = vadd.f32 %v4469, %v4485
      %v4494 = vadd.f32 %v4470, %v4486
      %v4495 = vlaneseq
      %v4496 = vshrl.u32 %v4495, 7
      %v4497 = vsub.s32 6, %v4496
      %v4498 = vrot.slane %v4357, %v4497
      %v4499 = vlaneseq
      %v4500 = vshrl.u32 %v4499, 7
      %v4501 = vsub.s32 6, %v4500
      %v4502 = vrot.slane %v4358, %v4501
      %v4503 = vmul.f32 %v4498, %v3172
      %v4504 = vmul.f32 %v4502, %v3174
      %v4505 = vmul.f32 %v4498, %v3176
      %v4506 = vmul.f32 %v4502, %v3178
      %v4507 = vmul.f32 %v4498, %v3182
      %v4508 = vmul.f32 %v4502, %v3184
      %v4509 = vmul.f32 %v4498, %v3186
      %v4510 = vmul.f32 %v4502, %v3188
      %v4511 = vadd.f32 %v4487, %v4503
      %v4512 = vadd.f32 %v4488, %v4504
      %v4513 = vadd.f32 %v4489, %v4505
      %v4514 = vadd.f32 %v4490, %v4506
      %v4515 = vadd.f32 %v4491, %v4507
      %v4516 = vadd.f32 %v4492, %v4508
      %v4517 = vadd.f32 %v4493, %v4509
      %v4518 = vadd.f32 %v4494, %v4510
      %v4519 = vlaneseq
      %v4520 = vshrl.u32 %v4519, 7
      %v4521 = vsub.s32 7, %v4520
      %v4522 = vrot.slane %v4357, %v4521
      %v4523 = vlaneseq
      %v4524 = vshrl.u32 %v4523, 7
      %v4525 = vsub.s32 7, %v4524
      %v4526 = vrot.slane %v4358, %v4525
      %v4527 = vmul.f32 %v4522, %v3192
      %v4528 = vmul.f32 %v4526, %v3194
      %v4529 = vmul.f32 %v4522, %v3196
      %v4530 = vmul.f32 %v4526, %v3198
      %v4531 = vmul.f32 %v4522, %v3202
      %v4532 = vmul.f32 %v4526, %v3204
      %v4533 = vmul.f32 %v4522, %v3206
      %v4534 = vmul.f32 %v4526, %v3208
      %v4535 = vadd.f32 %v4511, %v4527
      %v4536 = vadd.f32 %v4512, %v4528
      %v4537 = vadd.f32 %v4513, %v4529
      %v4538 = vadd.f32 %v4514, %v4530
      %v4539 = vadd.f32 %v4515, %v4531
      %v4540 = vadd.f32 %v4516, %v4532
      %v4541 = vadd.f32 %v4517, %v4533
      %v4542 = vadd.f32 %v4518, %v4534
      %v4543 = vmul.f32 %v2732, %v2952
      %v4544 = vmul.f32 %v2734, %v2954
      %v4545 = vmul.f32 %v2736, %v2956
      %v4546 = vmul.f32 %v2738, %v2958
      %v4547 = vmul.f32 %v2742, %v2962
      %v4548 = vmul.f32 %v2744, %v2964
      %v4549 = vmul.f32 %v2746, %v2966
      %v4550 = vmul.f32 %v2748, %v2968
      %v4551 = vadd.f32 %v4543, %v4545
      %v4552 = vadd.f32 %v4551, %v4547
      %v4553 = vadd.f32 %v4552, %v4549
      %v4554 = vrot.slane %v4553, 4
      %v4555 = vadd.f32 %v4553, %v4554
      %v4556 = vrot.slane %v4555, 2
      %v4557 = vadd.f32 %v4555, %v4556
      %v4558 = vrot.slane %v4557, 1
      %v4559 = vadd.f32 %v4557, %v4558
      %v4560 = vadd.f32 %v4544, %v4546
      %v4561 = vadd.f32 %v4560, %v4548
      %v4562 = vadd.f32 %v4561, %v4550
      %v4563 = vrot.slane %v4562, 4
      %v4564 = vadd.f32 %v4562, %v4563
      %v4565 = vrot.slane %v4564, 2
      %v4566 = vadd.f32 %v4564, %v4565
      %v4567 = vrot.slane %v4566, 1
      %v4568 = vadd.f32 %v4566, %v4567
      %v4569 = vmul.f32 %v2752, %v2952
      %v4570 = vmul.f32 %v2754, %v2954
      %v4571 = vmul.f32 %v2756, %v2956
      %v4572 = vmul.f32 %v2758, %v2958
      %v4573 = vmul.f32 %v2762, %v2962
      %v4574 = vmul.f32 %v2764, %v2964
      %v4575 = vmul.f32 %v2766, %v2966
      %v4576 = vmul.f32 %v2768, %v2968
      %v4577 = vadd.f32 %v4569, %v4571
      %v4578 = vadd.f32 %v4577, %v4573
      %v4579 = vadd.f32 %v4578, %v4575
      %v4580 = vrot.slane %v4579, 4
      %v4581 = vadd.f32 %v4579, %v4580
      %v4582 = vrot.slane %v4581, 2
      %v4583 = vadd.f32 %v4581, %v4582
      %v4584 = vrot.slane %v4583, 1
      %v4585 = vadd.f32 %v4583, %v4584
      %v4586 = vadd.f32 %v4570, %v4572
      %v4587 = vadd.f32 %v4586, %v4574
      %v4588 = vadd.f32 %v4587, %v4576
      %v4589 = vrot.slane %v4588, 4
      %v4590 = vadd.f32 %v4588, %v4589
      %v4591 = vrot.slane %v4590, 2
      %v4592 = vadd.f32 %v4590, %v4591
      %v4593 = vrot.slane %v4592, 1
      %v4594 = vadd.f32 %v4592, %v4593
      %v4595 = vmul.f32 %v2772, %v2952
      %v4596 = vmul.f32 %v2774, %v2954
      %v4597 = vmul.f32 %v2776, %v2956
      %v4598 = vmul.f32 %v2778, %v2958
      %v4599 = vmul.f32 %v2782, %v2962
      %v4600 = vmul.f32 %v2784, %v2964
      %v4601 = vmul.f32 %v2786, %v2966
      %v4602 = vmul.f32 %v2788, %v2968
      %v4603 = vadd.f32 %v4595, %v4597
      %v4604 = vadd.f32 %v4603, %v4599
      %v4605 = vadd.f32 %v4604, %v4601
      %v4606 = vrot.slane %v4605, 4
      %v4607 = vadd.f32 %v4605, %v4606
      %v4608 = vrot.slane %v4607, 2
      %v4609 = vadd.f32 %v4607, %v4608
      %v4610 = vrot.slane %v4609, 1
      %v4611 = vadd.f32 %v4609, %v4610
      %v4612 = vadd.f32 %v4596, %v4598
      %v4613 = vadd.f32 %v4612, %v4600
      %v4614 = vadd.f32 %v4613, %v4602
      %v4615 = vrot.slane %v4614, 4
      %v4616 = vadd.f32 %v4614, %v4615
      %v4617 = vrot.slane %v4616, 2
      %v4618 = vadd.f32 %v4616, %v4617
      %v4619 = vrot.slane %v4618, 1
      %v4620 = vadd.f32 %v4618, %v4619
      %v4621 = vmul.f32 %v2792, %v2952
      %v4622 = vmul.f32 %v2794, %v2954
      %v4623 = vmul.f32 %v2796, %v2956
      %v4624 = vmul.f32 %v2798, %v2958
      %v4625 = vmul.f32 %v2802, %v2962
      %v4626 = vmul.f32 %v2804, %v2964
      %v4627 = vmul.f32 %v2806, %v2966
      %v4628 = vmul.f32 %v2808, %v2968
      %v4629 = vadd.f32 %v4621, %v4623
      %v4630 = vadd.f32 %v4629, %v4625
      %v4631 = vadd.f32 %v4630, %v4627
      %v4632 = vrot.slane %v4631, 4
      %v4633 = vadd.f32 %v4631, %v4632
      %v4634 = vrot.slane %v4633, 2
      %v4635 = vadd.f32 %v4633, %v4634
      %v4636 = vrot.slane %v4635, 1
      %v4637 = vadd.f32 %v4635, %v4636
      %v4638 = vadd.f32 %v4622, %v4624
      %v4639 = vadd.f32 %v4638, %v4626
      %v4640 = vadd.f32 %v4639, %v4628
      %v4641 = vrot.slane %v4640, 4
      %v4642 = vadd.f32 %v4640, %v4641
      %v4643 = vrot.slane %v4642, 2
      %v4644 = vadd.f32 %v4642, %v4643
      %v4645 = vrot.slane %v4644, 1
      %v4646 = vadd.f32 %v4644, %v4645
      %v4647 = vmul.f32 %v2812, %v2952
      %v4648 = vmul.f32 %v2814, %v2954
      %v4649 = vmul.f32 %v2816, %v2956
      %v4650 = vmul.f32 %v2818, %v2958
      %v4651 = vmul.f32 %v2822, %v2962
      %v4652 = vmul.f32 %v2824, %v2964
      %v4653 = vmul.f32 %v2826, %v2966
      %v4654 = vmul.f32 %v2828, %v2968
      %v4655 = vadd.f32 %v4647, %v4649
      %v4656 = vadd.f32 %v4655, %v4651
      %v4657 = vadd.f32 %v4656, %v4653
      %v4658 = vrot.slane %v4657, 4
      %v4659 = vadd.f32 %v4657, %v4658
      %v4660 = vrot.slane %v4659, 2
      %v4661 = vadd.f32 %v4659, %v4660
      %v4662 = vrot.slane %v4661, 1
      %v4663 = vadd.f32 %v4661, %v4662
      %v4664 = vadd.f32 %v4648, %v4650
      %v4665 = vadd.f32 %v4664, %v4652
      %v4666 = vadd.f32 %v4665, %v4654
      %v4667 = vrot.slane %v4666, 4
      %v4668 = vadd.f32 %v4666, %v4667
      %v4669 = vrot.slane %v4668, 2
      %v4670 = vadd.f32 %v4668, %v4669
      %v4671 = vrot.slane %v4670, 1
      %v4672 = vadd.f32 %v4670, %v4671
      %v4673 = vmul.f32 %v2832, %v2952
      %v4674 = vmul.f32 %v2834, %v2954
      %v4675 = vmul.f32 %v2836, %v2956
      %v4676 = vmul.f32 %v2838, %v2958
      %v4677 = vmul.f32 %v2842, %v2962
      %v4678 = vmul.f32 %v2844, %v2964
      %v4679 = vmul.f32 %v2846, %v2966
      %v4680 = vmul.f32 %v2848, %v2968
      %v4681 = vadd.f32 %v4673, %v4675
      %v4682 = vadd.f32 %v4681, %v4677
      %v4683 = vadd.f32 %v4682, %v4679
      %v4684 = vrot.slane %v4683, 4
      %v4685 = vadd.f32 %v4683, %v4684
      %v4686 = vrot.slane %v4685, 2
      %v4687 = vadd.f32 %v4685, %v4686
      %v4688 = vrot.slane %v4687, 1
      %v4689 = vadd.f32 %v4687, %v4688
      %v4690 = vadd.f32 %v4674, %v4676
      %v4691 = vadd.f32 %v4690, %v4678
      %v4692 = vadd.f32 %v4691, %v4680
      %v4693 = vrot.slane %v4692, 4
      %v4694 = vadd.f32 %v4692, %v4693
      %v4695 = vrot.slane %v4694, 2
      %v4696 = vadd.f32 %v4694, %v4695
      %v4697 = vrot.slane %v4696, 1
      %v4698 = vadd.f32 %v4696, %v4697
      %v4699 = vmul.f32 %v2852, %v2952
      %v4700 = vmul.f32 %v2854, %v2954
      %v4701 = vmul.f32 %v2856, %v2956
      %v4702 = vmul.f32 %v2858, %v2958
      %v4703 = vmul.f32 %v2862, %v2962
      %v4704 = vmul.f32 %v2864, %v2964
      %v4705 = vmul.f32 %v2866, %v2966
      %v4706 = vmul.f32 %v2868, %v2968
      %v4707 = vadd.f32 %v4699, %v4701
      %v4708 = vadd.f32 %v4707, %v4703
      %v4709 = vadd.f32 %v4708, %v4705
      %v4710 = vrot.slane %v4709, 4
      %v4711 = vadd.f32 %v4709, %v4710
      %v4712 = vrot.slane %v4711, 2
      %v4713 = vadd.f32 %v4711, %v4712
      %v4714 = vrot.slane %v4713, 1
      %v4715 = vadd.f32 %v4713, %v4714
      %v4716 = vadd.f32 %v4700, %v4702
      %v4717 = vadd.f32 %v4716, %v4704
      %v4718 = vadd.f32 %v4717, %v4706
      %v4719 = vrot.slane %v4718, 4
      %v4720 = vadd.f32 %v4718, %v4719
      %v4721 = vrot.slane %v4720, 2
      %v4722 = vadd.f32 %v4720, %v4721
      %v4723 = vrot.slane %v4722, 1
      %v4724 = vadd.f32 %v4722, %v4723
      %v4725 = vmul.f32 %v2872, %v2952
      %v4726 = vmul.f32 %v2874, %v2954
      %v4727 = vmul.f32 %v2876, %v2956
      %v4728 = vmul.f32 %v2878, %v2958
      %v4729 = vmul.f32 %v2882, %v2962
      %v4730 = vmul.f32 %v2884, %v2964
      %v4731 = vmul.f32 %v2886, %v2966
      %v4732 = vmul.f32 %v2888, %v2968
      %v4733 = vadd.f32 %v4725, %v4727
      %v4734 = vadd.f32 %v4733, %v4729
      %v4735 = vadd.f32 %v4734, %v4731
      %v4736 = vrot.slane %v4735, 4
      %v4737 = vadd.f32 %v4735, %v4736
      %v4738 = vrot.slane %v4737, 2
      %v4739 = vadd.f32 %v4737, %v4738
      %v4740 = vrot.slane %v4739, 1
      %v4741 = vadd.f32 %v4739, %v4740
      %v4742 = vadd.f32 %v4726, %v4728
      %v4743 = vadd.f32 %v4742, %v4730
      %v4744 = vadd.f32 %v4743, %v4732
      %v4745 = vrot.slane %v4744, 4
      %v4746 = vadd.f32 %v4744, %v4745
      %v4747 = vrot.slane %v4746, 2
      %v4748 = vadd.f32 %v4746, %v4747
      %v4749 = vrot.slane %v4748, 1
      %v4750 = vadd.f32 %v4748, %v4749
      %v4751 = vsel %vm3418, %v4559, %v4585
      %v4752 = vsel %vm3418, %v4568, %v4594
      %v4753 = vsel %vm3421, %v4751, %v4611
      %v4754 = vsel %vm3421, %v4752, %v4620
      %v4755 = vsel %vm3424, %v4753, %v4637
      %v4756 = vsel %vm3424, %v4754, %v4646
      %v4757 = vsel %vm3427, %v4755, %v4663
      %v4758 = vsel %vm3427, %v4756, %v4672
      %v4759 = vsel %vm3430, %v4757, %v4689
      %v4760 = vsel %vm3430, %v4758, %v4698
      %v4761 = vsel %vm3433, %v4759, %v4715
      %v4762 = vsel %vm3433, %v4760, %v4724
      %v4763 = vsel %vm3436, %v4761, %v4741
      %v4764 = vsel %vm3436, %v4762, %v4750
      %v4765 = vmul.f32 %v4763, 0.17677669
      %v4766 = vmul.f32 %v4764, 0.17677669
      %v4767 = vrot.slane %v4765, 4
      %v4768 = vmax.f32 %v4765, %v4767
      %v4769 = vrot.slane %v4768, 2
      %v4770 = vmax.f32 %v4768, %v4769
      %v4771 = vrot.slane %v4770, 1
      %v4772 = vmax.f32 %v4770, %v4771
      %v4773 = vrot.slane %v4766, 4
      %v4774 = vmax.f32 %v4766, %v4773
      %v4775 = vrot.slane %v4774, 2
      %v4776 = vmax.f32 %v4774, %v4775
      %v4777 = vrot.slane %v4776, 1
      %v4778 = vmax.f32 %v4776, %v4777
      %v4779 = vsub.f32 %v4765, %v4772
      %v4780 = vsub.f32 %v4766, %v4778
      %v4781 = vmul.f32 %v4779, 1.442695
      %v4782 = vpow.pop %v4781
      %v4783 = vmul.f32 %v4780, 1.442695
      %v4784 = vpow.pop %v4783
      %v4785 = vrot.slane %v4782, 4
      %v4786 = vadd.f32 %v4782, %v4785
      %v4787 = vrot.slane %v4786, 2
      %v4788 = vadd.f32 %v4786, %v4787
      %v4789 = vrot.slane %v4788, 1
      %v4790 = vadd.f32 %v4788, %v4789
      %v4791 = vrot.slane %v4784, 4
      %v4792 = vadd.f32 %v4784, %v4791
      %v4793 = vrot.slane %v4792, 2
      %v4794 = vadd.f32 %v4792, %v4793
      %v4795 = vrot.slane %v4794, 1
      %v4796 = vadd.f32 %v4794, %v4795
      %v4797 = vrcp.pop %v4790
      %v4798 = vrcp.pop %v4796
      %v4799 = vmul.f32 %v4782, %v4797
      %v4800 = vmul.f32 %v4784, %v4798
      %v4801 = vlaneseq
      %v4802 = vshrl.u32 %v4801, 7
      %v4803 = vsub.s32 0, %v4802
      %v4804 = vrot.slane %v4799, %v4803
      %v4805 = vlaneseq
      %v4806 = vshrl.u32 %v4805, 7
      %v4807 = vsub.s32 0, %v4806
      %v4808 = vrot.slane %v4800, %v4807
      %v4809 = vmul.f32 %v4804, %v3052
      %v4810 = vmul.f32 %v4808, %v3054
      %v4811 = vmul.f32 %v4804, %v3056
      %v4812 = vmul.f32 %v4808, %v3058
      %v4813 = vmul.f32 %v4804, %v3062
      %v4814 = vmul.f32 %v4808, %v3064
      %v4815 = vmul.f32 %v4804, %v3066
      %v4816 = vmul.f32 %v4808, %v3068
      %v4817 = vlaneseq
      %v4818 = vshrl.u32 %v4817, 7
      %v4819 = vsub.s32 1, %v4818
      %v4820 = vrot.slane %v4799, %v4819
      %v4821 = vlaneseq
      %v4822 = vshrl.u32 %v4821, 7
      %v4823 = vsub.s32 1, %v4822
      %v4824 = vrot.slane %v4800, %v4823
      %v4825 = vmul.f32 %v4820, %v3072
      %v4826 = vmul.f32 %v4824, %v3074
      %v4827 = vmul.f32 %v4820, %v3076
      %v4828 = vmul.f32 %v4824, %v3078
      %v4829 = vmul.f32 %v4820, %v3082
      %v4830 = vmul.f32 %v4824, %v3084
      %v4831 = vmul.f32 %v4820, %v3086
      %v4832 = vmul.f32 %v4824, %v3088
      %v4833 = vadd.f32 %v4809, %v4825
      %v4834 = vadd.f32 %v4810, %v4826
      %v4835 = vadd.f32 %v4811, %v4827
      %v4836 = vadd.f32 %v4812, %v4828
      %v4837 = vadd.f32 %v4813, %v4829
      %v4838 = vadd.f32 %v4814, %v4830
      %v4839 = vadd.f32 %v4815, %v4831
      %v4840 = vadd.f32 %v4816, %v4832
      %v4841 = vlaneseq
      %v4842 = vshrl.u32 %v4841, 7
      %v4843 = vsub.s32 2, %v4842
      %v4844 = vrot.slane %v4799, %v4843
      %v4845 = vlaneseq
      %v4846 = vshrl.u32 %v4845, 7
      %v4847 = vsub.s32 2, %v4846
      %v4848 = vrot.slane %v4800, %v4847
      %v4849 = vmul.f32 %v4844, %v3092
      %v4850 = vmul.f32 %v4848, %v3094
      %v4851 = vmul.f32 %v4844, %v3096
      %v4852 = vmul.f32 %v4848, %v3098
      %v4853 = vmul.f32 %v4844, %v3102
      %v4854 = vmul.f32 %v4848, %v3104
      %v4855 = vmul.f32 %v4844, %v3106
      %v4856 = vmul.f32 %v4848, %v3108
      %v4857 = vadd.f32 %v4833, %v4849
      %v4858 = vadd.f32 %v4834, %v4850
      %v4859 = vadd.f32 %v4835, %v4851
      %v4860 = vadd.f32 %v4836, %v4852
      %v4861 = vadd.f32 %v4837, %v4853
      %v4862 = vadd.f32 %v4838, %v4854
      %v4863 = vadd.f32 %v4839, %v4855
      %v4864 = vadd.f32 %v4840, %v4856
      %v4865 = vlaneseq
      %v4866 = vshrl.u32 %v4865, 7
      %v4867 = vsub.s32 3, %v4866
      %v4868 = vrot.slane %v4799, %v4867
      %v4869 = vlaneseq
      %v4870 = vshrl.u32 %v4869, 7
      %v4871 = vsub.s32 3, %v4870
      %v4872 = vrot.slane %v4800, %v4871
      %v4873 = vmul.f32 %v4868, %v3112
      %v4874 = vmul.f32 %v4872, %v3114
      %v4875 = vmul.f32 %v4868, %v3116
      %v4876 = vmul.f32 %v4872, %v3118
      %v4877 = vmul.f32 %v4868, %v3122
      %v4878 = vmul.f32 %v4872, %v3124
      %v4879 = vmul.f32 %v4868, %v3126
      %v4880 = vmul.f32 %v4872, %v3128
      %v4881 = vadd.f32 %v4857, %v4873
      %v4882 = vadd.f32 %v4858, %v4874
      %v4883 = vadd.f32 %v4859, %v4875
      %v4884 = vadd.f32 %v4860, %v4876
      %v4885 = vadd.f32 %v4861, %v4877
      %v4886 = vadd.f32 %v4862, %v4878
      %v4887 = vadd.f32 %v4863, %v4879
      %v4888 = vadd.f32 %v4864, %v4880
      %v4889 = vlaneseq
      %v4890 = vshrl.u32 %v4889, 7
      %v4891 = vsub.s32 4, %v4890
      %v4892 = vrot.slane %v4799, %v4891
      %v4893 = vlaneseq
      %v4894 = vshrl.u32 %v4893, 7
      %v4895 = vsub.s32 4, %v4894
      %v4896 = vrot.slane %v4800, %v4895
      %v4897 = vmul.f32 %v4892, %v3132
      %v4898 = vmul.f32 %v4896, %v3134
      %v4899 = vmul.f32 %v4892, %v3136
      %v4900 = vmul.f32 %v4896, %v3138
      %v4901 = vmul.f32 %v4892, %v3142
      %v4902 = vmul.f32 %v4896, %v3144
      %v4903 = vmul.f32 %v4892, %v3146
      %v4904 = vmul.f32 %v4896, %v3148
      %v4905 = vadd.f32 %v4881, %v4897
      %v4906 = vadd.f32 %v4882, %v4898
      %v4907 = vadd.f32 %v4883, %v4899
      %v4908 = vadd.f32 %v4884, %v4900
      %v4909 = vadd.f32 %v4885, %v4901
      %v4910 = vadd.f32 %v4886, %v4902
      %v4911 = vadd.f32 %v4887, %v4903
      %v4912 = vadd.f32 %v4888, %v4904
      %v4913 = vlaneseq
      %v4914 = vshrl.u32 %v4913, 7
      %v4915 = vsub.s32 5, %v4914
      %v4916 = vrot.slane %v4799, %v4915
      %v4917 = vlaneseq
      %v4918 = vshrl.u32 %v4917, 7
      %v4919 = vsub.s32 5, %v4918
      %v4920 = vrot.slane %v4800, %v4919
      %v4921 = vmul.f32 %v4916, %v3152
      %v4922 = vmul.f32 %v4920, %v3154
      %v4923 = vmul.f32 %v4916, %v3156
      %v4924 = vmul.f32 %v4920, %v3158
      %v4925 = vmul.f32 %v4916, %v3162
      %v4926 = vmul.f32 %v4920, %v3164
      %v4927 = vmul.f32 %v4916, %v3166
      %v4928 = vmul.f32 %v4920, %v3168
      %v4929 = vadd.f32 %v4905, %v4921
      %v4930 = vadd.f32 %v4906, %v4922
      %v4931 = vadd.f32 %v4907, %v4923
      %v4932 = vadd.f32 %v4908, %v4924
      %v4933 = vadd.f32 %v4909, %v4925
      %v4934 = vadd.f32 %v4910, %v4926
      %v4935 = vadd.f32 %v4911, %v4927
      %v4936 = vadd.f32 %v4912, %v4928
      %v4937 = vlaneseq
      %v4938 = vshrl.u32 %v4937, 7
      %v4939 = vsub.s32 6, %v4938
      %v4940 = vrot.slane %v4799, %v4939
      %v4941 = vlaneseq
      %v4942 = vshrl.u32 %v4941, 7
      %v4943 = vsub.s32 6, %v4942
      %v4944 = vrot.slane %v4800, %v4943
      %v4945 = vmul.f32 %v4940, %v3172
      %v4946 = vmul.f32 %v4944, %v3174
      %v4947 = vmul.f32 %v4940, %v3176
      %v4948 = vmul.f32 %v4944, %v3178
      %v4949 = vmul.f32 %v4940, %v3182
      %v4950 = vmul.f32 %v4944, %v3184
      %v4951 = vmul.f32 %v4940, %v3186
      %v4952 = vmul.f32 %v4944, %v3188
      %v4953 = vadd.f32 %v4929, %v4945
      %v4954 = vadd.f32 %v4930, %v4946
      %v4955 = vadd.f32 %v4931, %v4947
      %v4956 = vadd.f32 %v4932, %v4948
      %v4957 = vadd.f32 %v4933, %v4949
      %v4958 = vadd.f32 %v4934, %v4950
      %v4959 = vadd.f32 %v4935, %v4951
      %v4960 = vadd.f32 %v4936, %v4952
      %v4961 = vlaneseq
      %v4962 = vshrl.u32 %v4961, 7
      %v4963 = vsub.s32 7, %v4962
      %v4964 = vrot.slane %v4799, %v4963
      %v4965 = vlaneseq
      %v4966 = vshrl.u32 %v4965, 7
      %v4967 = vsub.s32 7, %v4966
      %v4968 = vrot.slane %v4800, %v4967
      %v4969 = vmul.f32 %v4964, %v3192
      %v4970 = vmul.f32 %v4968, %v3194
      %v4971 = vmul.f32 %v4964, %v3196
      %v4972 = vmul.f32 %v4968, %v3198
      %v4973 = vmul.f32 %v4964, %v3202
      %v4974 = vmul.f32 %v4968, %v3204
      %v4975 = vmul.f32 %v4964, %v3206
      %v4976 = vmul.f32 %v4968, %v3208
      %v4977 = vadd.f32 %v4953, %v4969
      %v4978 = vadd.f32 %v4954, %v4970
      %v4979 = vadd.f32 %v4955, %v4971
      %v4980 = vadd.f32 %v4956, %v4972
      %v4981 = vadd.f32 %v4957, %v4973
      %v4982 = vadd.f32 %v4958, %v4974
      %v4983 = vadd.f32 %v4959, %v4975
      %v4984 = vadd.f32 %v4960, %v4976
      %v4985 = vmul.f32 %v2732, %v2972
      %v4986 = vmul.f32 %v2734, %v2974
      %v4987 = vmul.f32 %v2736, %v2976
      %v4988 = vmul.f32 %v2738, %v2978
      %v4989 = vmul.f32 %v2742, %v2982
      %v4990 = vmul.f32 %v2744, %v2984
      %v4991 = vmul.f32 %v2746, %v2986
      %v4992 = vmul.f32 %v2748, %v2988
      %v4993 = vadd.f32 %v4985, %v4987
      %v4994 = vadd.f32 %v4993, %v4989
      %v4995 = vadd.f32 %v4994, %v4991
      %v4996 = vrot.slane %v4995, 4
      %v4997 = vadd.f32 %v4995, %v4996
      %v4998 = vrot.slane %v4997, 2
      %v4999 = vadd.f32 %v4997, %v4998
      %v5000 = vrot.slane %v4999, 1
      %v5001 = vadd.f32 %v4999, %v5000
      %v5002 = vadd.f32 %v4986, %v4988
      %v5003 = vadd.f32 %v5002, %v4990
      %v5004 = vadd.f32 %v5003, %v4992
      %v5005 = vrot.slane %v5004, 4
      %v5006 = vadd.f32 %v5004, %v5005
      %v5007 = vrot.slane %v5006, 2
      %v5008 = vadd.f32 %v5006, %v5007
      %v5009 = vrot.slane %v5008, 1
      %v5010 = vadd.f32 %v5008, %v5009
      %v5011 = vmul.f32 %v2752, %v2972
      %v5012 = vmul.f32 %v2754, %v2974
      %v5013 = vmul.f32 %v2756, %v2976
      %v5014 = vmul.f32 %v2758, %v2978
      %v5015 = vmul.f32 %v2762, %v2982
      %v5016 = vmul.f32 %v2764, %v2984
      %v5017 = vmul.f32 %v2766, %v2986
      %v5018 = vmul.f32 %v2768, %v2988
      %v5019 = vadd.f32 %v5011, %v5013
      %v5020 = vadd.f32 %v5019, %v5015
      %v5021 = vadd.f32 %v5020, %v5017
      %v5022 = vrot.slane %v5021, 4
      %v5023 = vadd.f32 %v5021, %v5022
      %v5024 = vrot.slane %v5023, 2
      %v5025 = vadd.f32 %v5023, %v5024
      %v5026 = vrot.slane %v5025, 1
      %v5027 = vadd.f32 %v5025, %v5026
      %v5028 = vadd.f32 %v5012, %v5014
      %v5029 = vadd.f32 %v5028, %v5016
      %v5030 = vadd.f32 %v5029, %v5018
      %v5031 = vrot.slane %v5030, 4
      %v5032 = vadd.f32 %v5030, %v5031
      %v5033 = vrot.slane %v5032, 2
      %v5034 = vadd.f32 %v5032, %v5033
      %v5035 = vrot.slane %v5034, 1
      %v5036 = vadd.f32 %v5034, %v5035
      %v5037 = vmul.f32 %v2772, %v2972
      %v5038 = vmul.f32 %v2774, %v2974
      %v5039 = vmul.f32 %v2776, %v2976
      %v5040 = vmul.f32 %v2778, %v2978
      %v5041 = vmul.f32 %v2782, %v2982
      %v5042 = vmul.f32 %v2784, %v2984
      %v5043 = vmul.f32 %v2786, %v2986
      %v5044 = vmul.f32 %v2788, %v2988
      %v5045 = vadd.f32 %v5037, %v5039
      %v5046 = vadd.f32 %v5045, %v5041
      %v5047 = vadd.f32 %v5046, %v5043
      %v5048 = vrot.slane %v5047, 4
      %v5049 = vadd.f32 %v5047, %v5048
      %v5050 = vrot.slane %v5049, 2
      %v5051 = vadd.f32 %v5049, %v5050
      %v5052 = vrot.slane %v5051, 1
      %v5053 = vadd.f32 %v5051, %v5052
      %v5054 = vadd.f32 %v5038, %v5040
      %v5055 = vadd.f32 %v5054, %v5042
      %v5056 = vadd.f32 %v5055, %v5044
      %v5057 = vrot.slane %v5056, 4
      %v5058 = vadd.f32 %v5056, %v5057
      %v5059 = vrot.slane %v5058, 2
      %v5060 = vadd.f32 %v5058, %v5059
      %v5061 = vrot.slane %v5060, 1
      %v5062 = vadd.f32 %v5060, %v5061
      %v5063 = vmul.f32 %v2792, %v2972
      %v5064 = vmul.f32 %v2794, %v2974
      %v5065 = vmul.f32 %v2796, %v2976
      %v5066 = vmul.f32 %v2798, %v2978
      %v5067 = vmul.f32 %v2802, %v2982
      %v5068 = vmul.f32 %v2804, %v2984
      %v5069 = vmul.f32 %v2806, %v2986
      %v5070 = vmul.f32 %v2808, %v2988
      %v5071 = vadd.f32 %v5063, %v5065
      %v5072 = vadd.f32 %v5071, %v5067
      %v5073 = vadd.f32 %v5072, %v5069
      %v5074 = vrot.slane %v5073, 4
      %v5075 = vadd.f32 %v5073, %v5074
      %v5076 = vrot.slane %v5075, 2
      %v5077 = vadd.f32 %v5075, %v5076
      %v5078 = vrot.slane %v5077, 1
      %v5079 = vadd.f32 %v5077, %v5078
      %v5080 = vadd.f32 %v5064, %v5066
      %v5081 = vadd.f32 %v5080, %v5068
      %v5082 = vadd.f32 %v5081, %v5070
      %v5083 = vrot.slane %v5082, 4
      %v5084 = vadd.f32 %v5082, %v5083
      %v5085 = vrot.slane %v5084, 2
      %v5086 = vadd.f32 %v5084, %v5085
      %v5087 = vrot.slane %v5086, 1
      %v5088 = vadd.f32 %v5086, %v5087
      %v5089 = vmul.f32 %v2812, %v2972
      %v5090 = vmul.f32 %v2814, %v2974
      %v5091 = vmul.f32 %v2816, %v2976
      %v5092 = vmul.f32 %v2818, %v2978
      %v5093 = vmul.f32 %v2822, %v2982
      %v5094 = vmul.f32 %v2824, %v2984
      %v5095 = vmul.f32 %v2826, %v2986
      %v5096 = vmul.f32 %v2828, %v2988
      %v5097 = vadd.f32 %v5089, %v5091
      %v5098 = vadd.f32 %v5097, %v5093
      %v5099 = vadd.f32 %v5098, %v5095
      %v5100 = vrot.slane %v5099, 4
      %v5101 = vadd.f32 %v5099, %v5100
      %v5102 = vrot.slane %v5101, 2
      %v5103 = vadd.f32 %v5101, %v5102
      %v5104 = vrot.slane %v5103, 1
      %v5105 = vadd.f32 %v5103, %v5104
      %v5106 = vadd.f32 %v5090, %v5092
      %v5107 = vadd.f32 %v5106, %v5094
      %v5108 = vadd.f32 %v5107, %v5096
      %v5109 = vrot.slane %v5108, 4
      %v5110 = vadd.f32 %v5108, %v5109
      %v5111 = vrot.slane %v5110, 2
      %v5112 = vadd.f32 %v5110, %v5111
      %v5113 = vrot.slane %v5112, 1
      %v5114 = vadd.f32 %v5112, %v5113
      %v5115 = vmul.f32 %v2832, %v2972
      %v5116 = vmul.f32 %v2834, %v2974
      %v5117 = vmul.f32 %v2836, %v2976
      %v5118 = vmul.f32 %v2838, %v2978
      %v5119 = vmul.f32 %v2842, %v2982
      %v5120 = vmul.f32 %v2844, %v2984
      %v5121 = vmul.f32 %v2846, %v2986
      %v5122 = vmul.f32 %v2848, %v2988
      %v5123 = vadd.f32 %v5115, %v5117
      %v5124 = vadd.f32 %v5123, %v5119
      %v5125 = vadd.f32 %v5124, %v5121
      %v5126 = vrot.slane %v5125, 4
      %v5127 = vadd.f32 %v5125, %v5126
      %v5128 = vrot.slane %v5127, 2
      %v5129 = vadd.f32 %v5127, %v5128
      %v5130 = vrot.slane %v5129, 1
      %v5131 = vadd.f32 %v5129, %v5130
      %v5132 = vadd.f32 %v5116, %v5118
      %v5133 = vadd.f32 %v5132, %v5120
      %v5134 = vadd.f32 %v5133, %v5122
      %v5135 = vrot.slane %v5134, 4
      %v5136 = vadd.f32 %v5134, %v5135
      %v5137 = vrot.slane %v5136, 2
      %v5138 = vadd.f32 %v5136, %v5137
      %v5139 = vrot.slane %v5138, 1
      %v5140 = vadd.f32 %v5138, %v5139
      %v5141 = vmul.f32 %v2852, %v2972
      %v5142 = vmul.f32 %v2854, %v2974
      %v5143 = vmul.f32 %v2856, %v2976
      %v5144 = vmul.f32 %v2858, %v2978
      %v5145 = vmul.f32 %v2862, %v2982
      %v5146 = vmul.f32 %v2864, %v2984
      %v5147 = vmul.f32 %v2866, %v2986
      %v5148 = vmul.f32 %v2868, %v2988
      %v5149 = vadd.f32 %v5141, %v5143
      %v5150 = vadd.f32 %v5149, %v5145
      %v5151 = vadd.f32 %v5150, %v5147
      %v5152 = vrot.slane %v5151, 4
      %v5153 = vadd.f32 %v5151, %v5152
      %v5154 = vrot.slane %v5153, 2
      %v5155 = vadd.f32 %v5153, %v5154
      %v5156 = vrot.slane %v5155, 1
      %v5157 = vadd.f32 %v5155, %v5156
      %v5158 = vadd.f32 %v5142, %v5144
      %v5159 = vadd.f32 %v5158, %v5146
      %v5160 = vadd.f32 %v5159, %v5148
      %v5161 = vrot.slane %v5160, 4
      %v5162 = vadd.f32 %v5160, %v5161
      %v5163 = vrot.slane %v5162, 2
      %v5164 = vadd.f32 %v5162, %v5163
      %v5165 = vrot.slane %v5164, 1
      %v5166 = vadd.f32 %v5164, %v5165
      %v5167 = vmul.f32 %v2872, %v2972
      %v5168 = vmul.f32 %v2874, %v2974
      %v5169 = vmul.f32 %v2876, %v2976
      %v5170 = vmul.f32 %v2878, %v2978
      %v5171 = vmul.f32 %v2882, %v2982
      %v5172 = vmul.f32 %v2884, %v2984
      %v5173 = vmul.f32 %v2886, %v2986
      %v5174 = vmul.f32 %v2888, %v2988
      %v5175 = vadd.f32 %v5167, %v5169
      %v5176 = vadd.f32 %v5175, %v5171
      %v5177 = vadd.f32 %v5176, %v5173
      %v5178 = vrot.slane %v5177, 4
      %v5179 = vadd.f32 %v5177, %v5178
      %v5180 = vrot.slane %v5179, 2
      %v5181 = vadd.f32 %v5179, %v5180
      %v5182 = vrot.slane %v5181, 1
      %v5183 = vadd.f32 %v5181, %v5182
      %v5184 = vadd.f32 %v5168, %v5170
      %v5185 = vadd.f32 %v5184, %v5172
      %v5186 = vadd.f32 %v5185, %v5174
      %v5187 = vrot.slane %v5186, 4
      %v5188 = vadd.f32 %v5186, %v5187
      %v5189 = vrot.slane %v5188, 2
      %v5190 = vadd.f32 %v5188, %v5189
      %v5191 = vrot.slane %v5190, 1
      %v5192 = vadd.f32 %v5190, %v5191
      %v5193 = vsel %vm3418, %v5001, %v5027
      %v5194 = vsel %vm3418, %v5010, %v5036
      %v5195 = vsel %vm3421, %v5193, %v5053
      %v5196 = vsel %vm3421, %v5194, %v5062
      %v5197 = vsel %vm3424, %v5195, %v5079
      %v5198 = vsel %vm3424, %v5196, %v5088
      %v5199 = vsel %vm3427, %v5197, %v5105
      %v5200 = vsel %vm3427, %v5198, %v5114
      %v5201 = vsel %vm3430, %v5199, %v5131
      %v5202 = vsel %vm3430, %v5200, %v5140
      %v5203 = vsel %vm3433, %v5201, %v5157
      %v5204 = vsel %vm3433, %v5202, %v5166
      %v5205 = vsel %vm3436, %v5203, %v5183
      %v5206 = vsel %vm3436, %v5204, %v5192
      %v5207 = vmul.f32 %v5205, 0.17677669
      %v5208 = vmul.f32 %v5206, 0.17677669
      %v5209 = vrot.slane %v5207, 4
      %v5210 = vmax.f32 %v5207, %v5209
      %v5211 = vrot.slane %v5210, 2
      %v5212 = vmax.f32 %v5210, %v5211
      %v5213 = vrot.slane %v5212, 1
      %v5214 = vmax.f32 %v5212, %v5213
      %v5215 = vrot.slane %v5208, 4
      %v5216 = vmax.f32 %v5208, %v5215
      %v5217 = vrot.slane %v5216, 2
      %v5218 = vmax.f32 %v5216, %v5217
      %v5219 = vrot.slane %v5218, 1
      %v5220 = vmax.f32 %v5218, %v5219
      %v5221 = vsub.f32 %v5207, %v5214
      %v5222 = vsub.f32 %v5208, %v5220
      %v5223 = vmul.f32 %v5221, 1.442695
      %v5224 = vpow.pop %v5223
      %v5225 = vmul.f32 %v5222, 1.442695
      %v5226 = vpow.pop %v5225
      %v5227 = vrot.slane %v5224, 4
      %v5228 = vadd.f32 %v5224, %v5227
      %v5229 = vrot.slane %v5228, 2
      %v5230 = vadd.f32 %v5228, %v5229
      %v5231 = vrot.slane %v5230, 1
      %v5232 = vadd.f32 %v5230, %v5231
      %v5233 = vrot.slane %v5226, 4
      %v5234 = vadd.f32 %v5226, %v5233
      %v5235 = vrot.slane %v5234, 2
      %v5236 = vadd.f32 %v5234, %v5235
      %v5237 = vrot.slane %v5236, 1
      %v5238 = vadd.f32 %v5236, %v5237
      %v5239 = vrcp.pop %v5232
      %v5240 = vrcp.pop %v5238
      %v5241 = vmul.f32 %v5224, %v5239
      %v5242 = vmul.f32 %v5226, %v5240
      %v5243 = vlaneseq
      %v5244 = vshrl.u32 %v5243, 7
      %v5245 = vsub.s32 0, %v5244
      %v5246 = vrot.slane %v5241, %v5245
      %v5247 = vlaneseq
      %v5248 = vshrl.u32 %v5247, 7
      %v5249 = vsub.s32 0, %v5248
      %v5250 = vrot.slane %v5242, %v5249
      %v5251 = vmul.f32 %v5246, %v3052
      %v5252 = vmul.f32 %v5250, %v3054
      %v5253 = vmul.f32 %v5246, %v3056
      %v5254 = vmul.f32 %v5250, %v3058
      %v5255 = vmul.f32 %v5246, %v3062
      %v5256 = vmul.f32 %v5250, %v3064
      %v5257 = vmul.f32 %v5246, %v3066
      %v5258 = vmul.f32 %v5250, %v3068
      %v5259 = vlaneseq
      %v5260 = vshrl.u32 %v5259, 7
      %v5261 = vsub.s32 1, %v5260
      %v5262 = vrot.slane %v5241, %v5261
      %v5263 = vlaneseq
      %v5264 = vshrl.u32 %v5263, 7
      %v5265 = vsub.s32 1, %v5264
      %v5266 = vrot.slane %v5242, %v5265
      %v5267 = vmul.f32 %v5262, %v3072
      %v5268 = vmul.f32 %v5266, %v3074
      %v5269 = vmul.f32 %v5262, %v3076
      %v5270 = vmul.f32 %v5266, %v3078
      %v5271 = vmul.f32 %v5262, %v3082
      %v5272 = vmul.f32 %v5266, %v3084
      %v5273 = vmul.f32 %v5262, %v3086
      %v5274 = vmul.f32 %v5266, %v3088
      %v5275 = vadd.f32 %v5251, %v5267
      %v5276 = vadd.f32 %v5252, %v5268
      %v5277 = vadd.f32 %v5253, %v5269
      %v5278 = vadd.f32 %v5254, %v5270
      %v5279 = vadd.f32 %v5255, %v5271
      %v5280 = vadd.f32 %v5256, %v5272
      %v5281 = vadd.f32 %v5257, %v5273
      %v5282 = vadd.f32 %v5258, %v5274
      %v5283 = vlaneseq
      %v5284 = vshrl.u32 %v5283, 7
      %v5285 = vsub.s32 2, %v5284
      %v5286 = vrot.slane %v5241, %v5285
      %v5287 = vlaneseq
      %v5288 = vshrl.u32 %v5287, 7
      %v5289 = vsub.s32 2, %v5288
      %v5290 = vrot.slane %v5242, %v5289
      %v5291 = vmul.f32 %v5286, %v3092
      %v5292 = vmul.f32 %v5290, %v3094
      %v5293 = vmul.f32 %v5286, %v3096
      %v5294 = vmul.f32 %v5290, %v3098
      %v5295 = vmul.f32 %v5286, %v3102
      %v5296 = vmul.f32 %v5290, %v3104
      %v5297 = vmul.f32 %v5286, %v3106
      %v5298 = vmul.f32 %v5290, %v3108
      %v5299 = vadd.f32 %v5275, %v5291
      %v5300 = vadd.f32 %v5276, %v5292
      %v5301 = vadd.f32 %v5277, %v5293
      %v5302 = vadd.f32 %v5278, %v5294
      %v5303 = vadd.f32 %v5279, %v5295
      %v5304 = vadd.f32 %v5280, %v5296
      %v5305 = vadd.f32 %v5281, %v5297
      %v5306 = vadd.f32 %v5282, %v5298
      %v5307 = vlaneseq
      %v5308 = vshrl.u32 %v5307, 7
      %v5309 = vsub.s32 3, %v5308
      %v5310 = vrot.slane %v5241, %v5309
      %v5311 = vlaneseq
      %v5312 = vshrl.u32 %v5311, 7
      %v5313 = vsub.s32 3, %v5312
      %v5314 = vrot.slane %v5242, %v5313
      %v5315 = vmul.f32 %v5310, %v3112
      %v5316 = vmul.f32 %v5314, %v3114
      %v5317 = vmul.f32 %v5310, %v3116
      %v5318 = vmul.f32 %v5314, %v3118
      %v5319 = vmul.f32 %v5310, %v3122
      %v5320 = vmul.f32 %v5314, %v3124
      %v5321 = vmul.f32 %v5310, %v3126
      %v5322 = vmul.f32 %v5314, %v3128
      %v5323 = vadd.f32 %v5299, %v5315
      %v5324 = vadd.f32 %v5300, %v5316
      %v5325 = vadd.f32 %v5301, %v5317
      %v5326 = vadd.f32 %v5302, %v5318
      %v5327 = vadd.f32 %v5303, %v5319
      %v5328 = vadd.f32 %v5304, %v5320
      %v5329 = vadd.f32 %v5305, %v5321
      %v5330 = vadd.f32 %v5306, %v5322
      %v5331 = vlaneseq
      %v5332 = vshrl.u32 %v5331, 7
      %v5333 = vsub.s32 4, %v5332
      %v5334 = vrot.slane %v5241, %v5333
      %v5335 = vlaneseq
      %v5336 = vshrl.u32 %v5335, 7
      %v5337 = vsub.s32 4, %v5336
      %v5338 = vrot.slane %v5242, %v5337
      %v5339 = vmul.f32 %v5334, %v3132
      %v5340 = vmul.f32 %v5338, %v3134
      %v5341 = vmul.f32 %v5334, %v3136
      %v5342 = vmul.f32 %v5338, %v3138
      %v5343 = vmul.f32 %v5334, %v3142
      %v5344 = vmul.f32 %v5338, %v3144
      %v5345 = vmul.f32 %v5334, %v3146
      %v5346 = vmul.f32 %v5338, %v3148
      %v5347 = vadd.f32 %v5323, %v5339
      %v5348 = vadd.f32 %v5324, %v5340
      %v5349 = vadd.f32 %v5325, %v5341
      %v5350 = vadd.f32 %v5326, %v5342
      %v5351 = vadd.f32 %v5327, %v5343
      %v5352 = vadd.f32 %v5328, %v5344
      %v5353 = vadd.f32 %v5329, %v5345
      %v5354 = vadd.f32 %v5330, %v5346
      %v5355 = vlaneseq
      %v5356 = vshrl.u32 %v5355, 7
      %v5357 = vsub.s32 5, %v5356
      %v5358 = vrot.slane %v5241, %v5357
      %v5359 = vlaneseq
      %v5360 = vshrl.u32 %v5359, 7
      %v5361 = vsub.s32 5, %v5360
      %v5362 = vrot.slane %v5242, %v5361
      %v5363 = vmul.f32 %v5358, %v3152
      %v5364 = vmul.f32 %v5362, %v3154
      %v5365 = vmul.f32 %v5358, %v3156
      %v5366 = vmul.f32 %v5362, %v3158
      %v5367 = vmul.f32 %v5358, %v3162
      %v5368 = vmul.f32 %v5362, %v3164
      %v5369 = vmul.f32 %v5358, %v3166
      %v5370 = vmul.f32 %v5362, %v3168
      %v5371 = vadd.f32 %v5347, %v5363
      %v5372 = vadd.f32 %v5348, %v5364
      %v5373 = vadd.f32 %v5349, %v5365
      %v5374 = vadd.f32 %v5350, %v5366
      %v5375 = vadd.f32 %v5351, %v5367
      %v5376 = vadd.f32 %v5352, %v5368
      %v5377 = vadd.f32 %v5353, %v5369
      %v5378 = vadd.f32 %v5354, %v5370
      %v5379 = vlaneseq
      %v5380 = vshrl.u32 %v5379, 7
      %v5381 = vsub.s32 6, %v5380
      %v5382 = vrot.slane %v5241, %v5381
      %v5383 = vlaneseq
      %v5384 = vshrl.u32 %v5383, 7
      %v5385 = vsub.s32 6, %v5384
      %v5386 = vrot.slane %v5242, %v5385
      %v5387 = vmul.f32 %v5382, %v3172
      %v5388 = vmul.f32 %v5386, %v3174
      %v5389 = vmul.f32 %v5382, %v3176
      %v5390 = vmul.f32 %v5386, %v3178
      %v5391 = vmul.f32 %v5382, %v3182
      %v5392 = vmul.f32 %v5386, %v3184
      %v5393 = vmul.f32 %v5382, %v3186
      %v5394 = vmul.f32 %v5386, %v3188
      %v5395 = vadd.f32 %v5371, %v5387
      %v5396 = vadd.f32 %v5372, %v5388
      %v5397 = vadd.f32 %v5373, %v5389
      %v5398 = vadd.f32 %v5374, %v5390
      %v5399 = vadd.f32 %v5375, %v5391
      %v5400 = vadd.f32 %v5376, %v5392
      %v5401 = vadd.f32 %v5377, %v5393
      %v5402 = vadd.f32 %v5378, %v5394
      %v5403 = vlaneseq
      %v5404 = vshrl.u32 %v5403, 7
      %v5405 = vsub.s32 7, %v5404
      %v5406 = vrot.slane %v5241, %v5405
      %v5407 = vlaneseq
      %v5408 = vshrl.u32 %v5407, 7
      %v5409 = vsub.s32 7, %v5408
      %v5410 = vrot.slane %v5242, %v5409
      %v5411 = vmul.f32 %v5406, %v3192
      %v5412 = vmul.f32 %v5410, %v3194
      %v5413 = vmul.f32 %v5406, %v3196
      %v5414 = vmul.f32 %v5410, %v3198
      %v5415 = vmul.f32 %v5406, %v3202
      %v5416 = vmul.f32 %v5410, %v3204
      %v5417 = vmul.f32 %v5406, %v3206
      %v5418 = vmul.f32 %v5410, %v3208
      %v5419 = vadd.f32 %v5395, %v5411
      %v5420 = vadd.f32 %v5396, %v5412
      %v5421 = vadd.f32 %v5397, %v5413
      %v5422 = vadd.f32 %v5398, %v5414
      %v5423 = vadd.f32 %v5399, %v5415
      %v5424 = vadd.f32 %v5400, %v5416
      %v5425 = vadd.f32 %v5401, %v5417
      %v5426 = vadd.f32 %v5402, %v5418
      %v5427 = vmul.f32 %v2732, %v2992
      %v5428 = vmul.f32 %v2734, %v2994
      %v5429 = vmul.f32 %v2736, %v2996
      %v5430 = vmul.f32 %v2738, %v2998
      %v5431 = vmul.f32 %v2742, %v3002
      %v5432 = vmul.f32 %v2744, %v3004
      %v5433 = vmul.f32 %v2746, %v3006
      %v5434 = vmul.f32 %v2748, %v3008
      %v5435 = vadd.f32 %v5427, %v5429
      %v5436 = vadd.f32 %v5435, %v5431
      %v5437 = vadd.f32 %v5436, %v5433
      %v5438 = vrot.slane %v5437, 4
      %v5439 = vadd.f32 %v5437, %v5438
      %v5440 = vrot.slane %v5439, 2
      %v5441 = vadd.f32 %v5439, %v5440
      %v5442 = vrot.slane %v5441, 1
      %v5443 = vadd.f32 %v5441, %v5442
      %v5444 = vadd.f32 %v5428, %v5430
      %v5445 = vadd.f32 %v5444, %v5432
      %v5446 = vadd.f32 %v5445, %v5434
      %v5447 = vrot.slane %v5446, 4
      %v5448 = vadd.f32 %v5446, %v5447
      %v5449 = vrot.slane %v5448, 2
      %v5450 = vadd.f32 %v5448, %v5449
      %v5451 = vrot.slane %v5450, 1
      %v5452 = vadd.f32 %v5450, %v5451
      %v5453 = vmul.f32 %v2752, %v2992
      %v5454 = vmul.f32 %v2754, %v2994
      %v5455 = vmul.f32 %v2756, %v2996
      %v5456 = vmul.f32 %v2758, %v2998
      %v5457 = vmul.f32 %v2762, %v3002
      %v5458 = vmul.f32 %v2764, %v3004
      %v5459 = vmul.f32 %v2766, %v3006
      %v5460 = vmul.f32 %v2768, %v3008
      %v5461 = vadd.f32 %v5453, %v5455
      %v5462 = vadd.f32 %v5461, %v5457
      %v5463 = vadd.f32 %v5462, %v5459
      %v5464 = vrot.slane %v5463, 4
      %v5465 = vadd.f32 %v5463, %v5464
      %v5466 = vrot.slane %v5465, 2
      %v5467 = vadd.f32 %v5465, %v5466
      %v5468 = vrot.slane %v5467, 1
      %v5469 = vadd.f32 %v5467, %v5468
      %v5470 = vadd.f32 %v5454, %v5456
      %v5471 = vadd.f32 %v5470, %v5458
      %v5472 = vadd.f32 %v5471, %v5460
      %v5473 = vrot.slane %v5472, 4
      %v5474 = vadd.f32 %v5472, %v5473
      %v5475 = vrot.slane %v5474, 2
      %v5476 = vadd.f32 %v5474, %v5475
      %v5477 = vrot.slane %v5476, 1
      %v5478 = vadd.f32 %v5476, %v5477
      %v5479 = vmul.f32 %v2772, %v2992
      %v5480 = vmul.f32 %v2774, %v2994
      %v5481 = vmul.f32 %v2776, %v2996
      %v5482 = vmul.f32 %v2778, %v2998
      %v5483 = vmul.f32 %v2782, %v3002
      %v5484 = vmul.f32 %v2784, %v3004
      %v5485 = vmul.f32 %v2786, %v3006
      %v5486 = vmul.f32 %v2788, %v3008
      %v5487 = vadd.f32 %v5479, %v5481
      %v5488 = vadd.f32 %v5487, %v5483
      %v5489 = vadd.f32 %v5488, %v5485
      %v5490 = vrot.slane %v5489, 4
      %v5491 = vadd.f32 %v5489, %v5490
      %v5492 = vrot.slane %v5491, 2
      %v5493 = vadd.f32 %v5491, %v5492
      %v5494 = vrot.slane %v5493, 1
      %v5495 = vadd.f32 %v5493, %v5494
      %v5496 = vadd.f32 %v5480, %v5482
      %v5497 = vadd.f32 %v5496, %v5484
      %v5498 = vadd.f32 %v5497, %v5486
      %v5499 = vrot.slane %v5498, 4
      %v5500 = vadd.f32 %v5498, %v5499
      %v5501 = vrot.slane %v5500, 2
      %v5502 = vadd.f32 %v5500, %v5501
      %v5503 = vrot.slane %v5502, 1
      %v5504 = vadd.f32 %v5502, %v5503
      %v5505 = vmul.f32 %v2792, %v2992
      %v5506 = vmul.f32 %v2794, %v2994
      %v5507 = vmul.f32 %v2796, %v2996
      %v5508 = vmul.f32 %v2798, %v2998
      %v5509 = vmul.f32 %v2802, %v3002
      %v5510 = vmul.f32 %v2804, %v3004
      %v5511 = vmul.f32 %v2806, %v3006
      %v5512 = vmul.f32 %v2808, %v3008
      %v5513 = vadd.f32 %v5505, %v5507
      %v5514 = vadd.f32 %v5513, %v5509
      %v5515 = vadd.f32 %v5514, %v5511
      %v5516 = vrot.slane %v5515, 4
      %v5517 = vadd.f32 %v5515, %v5516
      %v5518 = vrot.slane %v5517, 2
      %v5519 = vadd.f32 %v5517, %v5518
      %v5520 = vrot.slane %v5519, 1
      %v5521 = vadd.f32 %v5519, %v5520
      %v5522 = vadd.f32 %v5506, %v5508
      %v5523 = vadd.f32 %v5522, %v5510
      %v5524 = vadd.f32 %v5523, %v5512
      %v5525 = vrot.slane %v5524, 4
      %v5526 = vadd.f32 %v5524, %v5525
      %v5527 = vrot.slane %v5526, 2
      %v5528 = vadd.f32 %v5526, %v5527
      %v5529 = vrot.slane %v5528, 1
      %v5530 = vadd.f32 %v5528, %v5529
      %v5531 = vmul.f32 %v2812, %v2992
      %v5532 = vmul.f32 %v2814, %v2994
      %v5533 = vmul.f32 %v2816, %v2996
      %v5534 = vmul.f32 %v2818, %v2998
      %v5535 = vmul.f32 %v2822, %v3002
      %v5536 = vmul.f32 %v2824, %v3004
      %v5537 = vmul.f32 %v2826, %v3006
      %v5538 = vmul.f32 %v2828, %v3008
      %v5539 = vadd.f32 %v5531, %v5533
      %v5540 = vadd.f32 %v5539, %v5535
      %v5541 = vadd.f32 %v5540, %v5537
      %v5542 = vrot.slane %v5541, 4
      %v5543 = vadd.f32 %v5541, %v5542
      %v5544 = vrot.slane %v5543, 2
      %v5545 = vadd.f32 %v5543, %v5544
      %v5546 = vrot.slane %v5545, 1
      %v5547 = vadd.f32 %v5545, %v5546
      %v5548 = vadd.f32 %v5532, %v5534
      %v5549 = vadd.f32 %v5548, %v5536
      %v5550 = vadd.f32 %v5549, %v5538
      %v5551 = vrot.slane %v5550, 4
      %v5552 = vadd.f32 %v5550, %v5551
      %v5553 = vrot.slane %v5552, 2
      %v5554 = vadd.f32 %v5552, %v5553
      %v5555 = vrot.slane %v5554, 1
      %v5556 = vadd.f32 %v5554, %v5555
      %v5557 = vmul.f32 %v2832, %v2992
      %v5558 = vmul.f32 %v2834, %v2994
      %v5559 = vmul.f32 %v2836, %v2996
      %v5560 = vmul.f32 %v2838, %v2998
      %v5561 = vmul.f32 %v2842, %v3002
      %v5562 = vmul.f32 %v2844, %v3004
      %v5563 = vmul.f32 %v2846, %v3006
      %v5564 = vmul.f32 %v2848, %v3008
      %v5565 = vadd.f32 %v5557, %v5559
      %v5566 = vadd.f32 %v5565, %v5561
      %v5567 = vadd.f32 %v5566, %v5563
      %v5568 = vrot.slane %v5567, 4
      %v5569 = vadd.f32 %v5567, %v5568
      %v5570 = vrot.slane %v5569, 2
      %v5571 = vadd.f32 %v5569, %v5570
      %v5572 = vrot.slane %v5571, 1
      %v5573 = vadd.f32 %v5571, %v5572
      %v5574 = vadd.f32 %v5558, %v5560
      %v5575 = vadd.f32 %v5574, %v5562
      %v5576 = vadd.f32 %v5575, %v5564
      %v5577 = vrot.slane %v5576, 4
      %v5578 = vadd.f32 %v5576, %v5577
      %v5579 = vrot.slane %v5578, 2
      %v5580 = vadd.f32 %v5578, %v5579
      %v5581 = vrot.slane %v5580, 1
      %v5582 = vadd.f32 %v5580, %v5581
      %v5583 = vmul.f32 %v2852, %v2992
      %v5584 = vmul.f32 %v2854, %v2994
      %v5585 = vmul.f32 %v2856, %v2996
      %v5586 = vmul.f32 %v2858, %v2998
      %v5587 = vmul.f32 %v2862, %v3002
      %v5588 = vmul.f32 %v2864, %v3004
      %v5589 = vmul.f32 %v2866, %v3006
      %v5590 = vmul.f32 %v2868, %v3008
      %v5591 = vadd.f32 %v5583, %v5585
      %v5592 = vadd.f32 %v5591, %v5587
      %v5593 = vadd.f32 %v5592, %v5589
      %v5594 = vrot.slane %v5593, 4
      %v5595 = vadd.f32 %v5593, %v5594
      %v5596 = vrot.slane %v5595, 2
      %v5597 = vadd.f32 %v5595, %v5596
      %v5598 = vrot.slane %v5597, 1
      %v5599 = vadd.f32 %v5597, %v5598
      %v5600 = vadd.f32 %v5584, %v5586
      %v5601 = vadd.f32 %v5600, %v5588
      %v5602 = vadd.f32 %v5601, %v5590
      %v5603 = vrot.slane %v5602, 4
      %v5604 = vadd.f32 %v5602, %v5603
      %v5605 = vrot.slane %v5604, 2
      %v5606 = vadd.f32 %v5604, %v5605
      %v5607 = vrot.slane %v5606, 1
      %v5608 = vadd.f32 %v5606, %v5607
      %v5609 = vmul.f32 %v2872, %v2992
      %v5610 = vmul.f32 %v2874, %v2994
      %v5611 = vmul.f32 %v2876, %v2996
      %v5612 = vmul.f32 %v2878, %v2998
      %v5613 = vmul.f32 %v2882, %v3002
      %v5614 = vmul.f32 %v2884, %v3004
      %v5615 = vmul.f32 %v2886, %v3006
      %v5616 = vmul.f32 %v2888, %v3008
      %v5617 = vadd.f32 %v5609, %v5611
      %v5618 = vadd.f32 %v5617, %v5613
      %v5619 = vadd.f32 %v5618, %v5615
      %v5620 = vrot.slane %v5619, 4
      %v5621 = vadd.f32 %v5619, %v5620
      %v5622 = vrot.slane %v5621, 2
      %v5623 = vadd.f32 %v5621, %v5622
      %v5624 = vrot.slane %v5623, 1
      %v5625 = vadd.f32 %v5623, %v5624
      %v5626 = vadd.f32 %v5610, %v5612
      %v5627 = vadd.f32 %v5626, %v5614
      %v5628 = vadd.f32 %v5627, %v5616
      %v5629 = vrot.slane %v5628, 4
      %v5630 = vadd.f32 %v5628, %v5629
      %v5631 = vrot.slane %v5630, 2
      %v5632 = vadd.f32 %v5630, %v5631
      %v5633 = vrot.slane %v5632, 1
      %v5634 = vadd.f32 %v5632, %v5633
      %v5635 = vsel %vm3418, %v5443, %v5469
      %v5636 = vsel %vm3418, %v5452, %v5478
      %v5637 = vsel %vm3421, %v5635, %v5495
      %v5638 = vsel %vm3421, %v5636, %v5504
      %v5639 = vsel %vm3424, %v5637, %v5521
      %v5640 = vsel %vm3424, %v5638, %v5530
      %v5641 = vsel %vm3427, %v5639, %v5547
      %v5642 = vsel %vm3427, %v5640, %v5556
      %v5643 = vsel %vm3430, %v5641, %v5573
      %v5644 = vsel %vm3430, %v5642, %v5582
      %v5645 = vsel %vm3433, %v5643, %v5599
      %v5646 = vsel %vm3433, %v5644, %v5608
      %v5647 = vsel %vm3436, %v5645, %v5625
      %v5648 = vsel %vm3436, %v5646, %v5634
      %v5649 = vmul.f32 %v5647, 0.17677669
      %v5650 = vmul.f32 %v5648, 0.17677669
      %v5651 = vrot.slane %v5649, 4
      %v5652 = vmax.f32 %v5649, %v5651
      %v5653 = vrot.slane %v5652, 2
      %v5654 = vmax.f32 %v5652, %v5653
      %v5655 = vrot.slane %v5654, 1
      %v5656 = vmax.f32 %v5654, %v5655
      %v5657 = vrot.slane %v5650, 4
      %v5658 = vmax.f32 %v5650, %v5657
      %v5659 = vrot.slane %v5658, 2
      %v5660 = vmax.f32 %v5658, %v5659
      %v5661 = vrot.slane %v5660, 1
      %v5662 = vmax.f32 %v5660, %v5661
      %v5663 = vsub.f32 %v5649, %v5656
      %v5664 = vsub.f32 %v5650, %v5662
      %v5665 = vmul.f32 %v5663, 1.442695
      %v5666 = vpow.pop %v5665
      %v5667 = vmul.f32 %v5664, 1.442695
      %v5668 = vpow.pop %v5667
      %v5669 = vrot.slane %v5666, 4
      %v5670 = vadd.f32 %v5666, %v5669
      %v5671 = vrot.slane %v5670, 2
      %v5672 = vadd.f32 %v5670, %v5671
      %v5673 = vrot.slane %v5672, 1
      %v5674 = vadd.f32 %v5672, %v5673
      %v5675 = vrot.slane %v5668, 4
      %v5676 = vadd.f32 %v5668, %v5675
      %v5677 = vrot.slane %v5676, 2
      %v5678 = vadd.f32 %v5676, %v5677
      %v5679 = vrot.slane %v5678, 1
      %v5680 = vadd.f32 %v5678, %v5679
      %v5681 = vrcp.pop %v5674
      %v5682 = vrcp.pop %v5680
      %v5683 = vmul.f32 %v5666, %v5681
      %v5684 = vmul.f32 %v5668, %v5682
      %v5685 = vlaneseq
      %v5686 = vshrl.u32 %v5685, 7
      %v5687 = vsub.s32 0, %v5686
      %v5688 = vrot.slane %v5683, %v5687
      %v5689 = vlaneseq
      %v5690 = vshrl.u32 %v5689, 7
      %v5691 = vsub.s32 0, %v5690
      %v5692 = vrot.slane %v5684, %v5691
      %v5693 = vmul.f32 %v5688, %v3052
      %v5694 = vmul.f32 %v5692, %v3054
      %v5695 = vmul.f32 %v5688, %v3056
      %v5696 = vmul.f32 %v5692, %v3058
      %v5697 = vmul.f32 %v5688, %v3062
      %v5698 = vmul.f32 %v5692, %v3064
      %v5699 = vmul.f32 %v5688, %v3066
      %v5700 = vmul.f32 %v5692, %v3068
      %v5701 = vlaneseq
      %v5702 = vshrl.u32 %v5701, 7
      %v5703 = vsub.s32 1, %v5702
      %v5704 = vrot.slane %v5683, %v5703
      %v5705 = vlaneseq
      %v5706 = vshrl.u32 %v5705, 7
      %v5707 = vsub.s32 1, %v5706
      %v5708 = vrot.slane %v5684, %v5707
      %v5709 = vmul.f32 %v5704, %v3072
      %v5710 = vmul.f32 %v5708, %v3074
      %v5711 = vmul.f32 %v5704, %v3076
      %v5712 = vmul.f32 %v5708, %v3078
      %v5713 = vmul.f32 %v5704, %v3082
      %v5714 = vmul.f32 %v5708, %v3084
      %v5715 = vmul.f32 %v5704, %v3086
      %v5716 = vmul.f32 %v5708, %v3088
      %v5717 = vadd.f32 %v5693, %v5709
      %v5718 = vadd.f32 %v5694, %v5710
      %v5719 = vadd.f32 %v5695, %v5711
      %v5720 = vadd.f32 %v5696, %v5712
      %v5721 = vadd.f32 %v5697, %v5713
      %v5722 = vadd.f32 %v5698, %v5714
      %v5723 = vadd.f32 %v5699, %v5715
      %v5724 = vadd.f32 %v5700, %v5716
      %v5725 = vlaneseq
      %v5726 = vshrl.u32 %v5725, 7
      %v5727 = vsub.s32 2, %v5726
      %v5728 = vrot.slane %v5683, %v5727
      %v5729 = vlaneseq
      %v5730 = vshrl.u32 %v5729, 7
      %v5731 = vsub.s32 2, %v5730
      %v5732 = vrot.slane %v5684, %v5731
      %v5733 = vmul.f32 %v5728, %v3092
      %v5734 = vmul.f32 %v5732, %v3094
      %v5735 = vmul.f32 %v5728, %v3096
      %v5736 = vmul.f32 %v5732, %v3098
      %v5737 = vmul.f32 %v5728, %v3102
      %v5738 = vmul.f32 %v5732, %v3104
      %v5739 = vmul.f32 %v5728, %v3106
      %v5740 = vmul.f32 %v5732, %v3108
      %v5741 = vadd.f32 %v5717, %v5733
      %v5742 = vadd.f32 %v5718, %v5734
      %v5743 = vadd.f32 %v5719, %v5735
      %v5744 = vadd.f32 %v5720, %v5736
      %v5745 = vadd.f32 %v5721, %v5737
      %v5746 = vadd.f32 %v5722, %v5738
      %v5747 = vadd.f32 %v5723, %v5739
      %v5748 = vadd.f32 %v5724, %v5740
      %v5749 = vlaneseq
      %v5750 = vshrl.u32 %v5749, 7
      %v5751 = vsub.s32 3, %v5750
      %v5752 = vrot.slane %v5683, %v5751
      %v5753 = vlaneseq
      %v5754 = vshrl.u32 %v5753, 7
      %v5755 = vsub.s32 3, %v5754
      %v5756 = vrot.slane %v5684, %v5755
      %v5757 = vmul.f32 %v5752, %v3112
      %v5758 = vmul.f32 %v5756, %v3114
      %v5759 = vmul.f32 %v5752, %v3116
      %v5760 = vmul.f32 %v5756, %v3118
      %v5761 = vmul.f32 %v5752, %v3122
      %v5762 = vmul.f32 %v5756, %v3124
      %v5763 = vmul.f32 %v5752, %v3126
      %v5764 = vmul.f32 %v5756, %v3128
      %v5765 = vadd.f32 %v5741, %v5757
      %v5766 = vadd.f32 %v5742, %v5758
      %v5767 = vadd.f32 %v5743, %v5759
      %v5768 = vadd.f32 %v5744, %v5760
      %v5769 = vadd.f32 %v5745, %v5761
      %v5770 = vadd.f32 %v5746, %v5762
      %v5771 = vadd.f32 %v5747, %v5763
      %v5772 = vadd.f32 %v5748, %v5764
      %v5773 = vlaneseq
      %v5774 = vshrl.u32 %v5773, 7
      %v5775 = vsub.s32 4, %v5774
      %v5776 = vrot.slane %v5683, %v5775
      %v5777 = vlaneseq
      %v5778 = vshrl.u32 %v5777, 7
      %v5779 = vsub.s32 4, %v5778
      %v5780 = vrot.slane %v5684, %v5779
      %v5781 = vmul.f32 %v5776, %v3132
      %v5782 = vmul.f32 %v5780, %v3134
      %v5783 = vmul.f32 %v5776, %v3136
      %v5784 = vmul.f32 %v5780, %v3138
      %v5785 = vmul.f32 %v5776, %v3142
      %v5786 = vmul.f32 %v5780, %v3144
      %v5787 = vmul.f32 %v5776, %v3146
      %v5788 = vmul.f32 %v5780, %v3148
      %v5789 = vadd.f32 %v5765, %v5781
      %v5790 = vadd.f32 %v5766, %v5782
      %v5791 = vadd.f32 %v5767, %v5783
      %v5792 = vadd.f32 %v5768, %v5784
      %v5793 = vadd.f32 %v5769, %v5785
      %v5794 = vadd.f32 %v5770, %v5786
      %v5795 = vadd.f32 %v5771, %v5787
      %v5796 = vadd.f32 %v5772, %v5788
      %v5797 = vlaneseq
      %v5798 = vshrl.u32 %v5797, 7
      %v5799 = vsub.s32 5, %v5798
      %v5800 = vrot.slane %v5683, %v5799
      %v5801 = vlaneseq
      %v5802 = vshrl.u32 %v5801, 7
      %v5803 = vsub.s32 5, %v5802
      %v5804 = vrot.slane %v5684, %v5803
      %v5805 = vmul.f32 %v5800, %v3152
      %v5806 = vmul.f32 %v5804, %v3154
      %v5807 = vmul.f32 %v5800, %v3156
      %v5808 = vmul.f32 %v5804, %v3158
      %v5809 = vmul.f32 %v5800, %v3162
      %v5810 = vmul.f32 %v5804, %v3164
      %v5811 = vmul.f32 %v5800, %v3166
      %v5812 = vmul.f32 %v5804, %v3168
      %v5813 = vadd.f32 %v5789, %v5805
      %v5814 = vadd.f32 %v5790, %v5806
      %v5815 = vadd.f32 %v5791, %v5807
      %v5816 = vadd.f32 %v5792, %v5808
      %v5817 = vadd.f32 %v5793, %v5809
      %v5818 = vadd.f32 %v5794, %v5810
      %v5819 = vadd.f32 %v5795, %v5811
      %v5820 = vadd.f32 %v5796, %v5812
      %v5821 = vlaneseq
      %v5822 = vshrl.u32 %v5821, 7
      %v5823 = vsub.s32 6, %v5822
      %v5824 = vrot.slane %v5683, %v5823
      %v5825 = vlaneseq
      %v5826 = vshrl.u32 %v5825, 7
      %v5827 = vsub.s32 6, %v5826
      %v5828 = vrot.slane %v5684, %v5827
      %v5829 = vmul.f32 %v5824, %v3172
      %v5830 = vmul.f32 %v5828, %v3174
      %v5831 = vmul.f32 %v5824, %v3176
      %v5832 = vmul.f32 %v5828, %v3178
      %v5833 = vmul.f32 %v5824, %v3182
      %v5834 = vmul.f32 %v5828, %v3184
      %v5835 = vmul.f32 %v5824, %v3186
      %v5836 = vmul.f32 %v5828, %v3188
      %v5837 = vadd.f32 %v5813, %v5829
      %v5838 = vadd.f32 %v5814, %v5830
      %v5839 = vadd.f32 %v5815, %v5831
      %v5840 = vadd.f32 %v5816, %v5832
      %v5841 = vadd.f32 %v5817, %v5833
      %v5842 = vadd.f32 %v5818, %v5834
      %v5843 = vadd.f32 %v5819, %v5835
      %v5844 = vadd.f32 %v5820, %v5836
      %v5845 = vlaneseq
      %v5846 = vshrl.u32 %v5845, 7
      %v5847 = vsub.s32 7, %v5846
      %v5848 = vrot.slane %v5683, %v5847
      %v5849 = vlaneseq
      %v5850 = vshrl.u32 %v5849, 7
      %v5851 = vsub.s32 7, %v5850
      %v5852 = vrot.slane %v5684, %v5851
      %v5853 = vmul.f32 %v5848, %v3192
      %v5854 = vmul.f32 %v5852, %v3194
      %v5855 = vmul.f32 %v5848, %v3196
      %v5856 = vmul.f32 %v5852, %v3198
      %v5857 = vmul.f32 %v5848, %v3202
      %v5858 = vmul.f32 %v5852, %v3204
      %v5859 = vmul.f32 %v5848, %v3206
      %v5860 = vmul.f32 %v5852, %v3208
      %v5861 = vadd.f32 %v5837, %v5853
      %v5862 = vadd.f32 %v5838, %v5854
      %v5863 = vadd.f32 %v5839, %v5855
      %v5864 = vadd.f32 %v5840, %v5856
      %v5865 = vadd.f32 %v5841, %v5857
      %v5866 = vadd.f32 %v5842, %v5858
      %v5867 = vadd.f32 %v5843, %v5859
      %v5868 = vadd.f32 %v5844, %v5860
      %v5869 = vmul.f32 %v2732, %v3012
      %v5870 = vmul.f32 %v2734, %v3014
      %v5871 = vmul.f32 %v2736, %v3016
      %v5872 = vmul.f32 %v2738, %v3018
      %v5873 = vmul.f32 %v2742, %v3022
      %v5874 = vmul.f32 %v2744, %v3024
      %v5875 = vmul.f32 %v2746, %v3026
      %v5876 = vmul.f32 %v2748, %v3028
      %v5877 = vadd.f32 %v5869, %v5871
      %v5878 = vadd.f32 %v5877, %v5873
      %v5879 = vadd.f32 %v5878, %v5875
      %v5880 = vrot.slane %v5879, 4
      %v5881 = vadd.f32 %v5879, %v5880
      %v5882 = vrot.slane %v5881, 2
      %v5883 = vadd.f32 %v5881, %v5882
      %v5884 = vrot.slane %v5883, 1
      %v5885 = vadd.f32 %v5883, %v5884
      %v5886 = vadd.f32 %v5870, %v5872
      %v5887 = vadd.f32 %v5886, %v5874
      %v5888 = vadd.f32 %v5887, %v5876
      %v5889 = vrot.slane %v5888, 4
      %v5890 = vadd.f32 %v5888, %v5889
      %v5891 = vrot.slane %v5890, 2
      %v5892 = vadd.f32 %v5890, %v5891
      %v5893 = vrot.slane %v5892, 1
      %v5894 = vadd.f32 %v5892, %v5893
      %v5895 = vmul.f32 %v2752, %v3012
      %v5896 = vmul.f32 %v2754, %v3014
      %v5897 = vmul.f32 %v2756, %v3016
      %v5898 = vmul.f32 %v2758, %v3018
      %v5899 = vmul.f32 %v2762, %v3022
      %v5900 = vmul.f32 %v2764, %v3024
      %v5901 = vmul.f32 %v2766, %v3026
      %v5902 = vmul.f32 %v2768, %v3028
      %v5903 = vadd.f32 %v5895, %v5897
      %v5904 = vadd.f32 %v5903, %v5899
      %v5905 = vadd.f32 %v5904, %v5901
      %v5906 = vrot.slane %v5905, 4
      %v5907 = vadd.f32 %v5905, %v5906
      %v5908 = vrot.slane %v5907, 2
      %v5909 = vadd.f32 %v5907, %v5908
      %v5910 = vrot.slane %v5909, 1
      %v5911 = vadd.f32 %v5909, %v5910
      %v5912 = vadd.f32 %v5896, %v5898
      %v5913 = vadd.f32 %v5912, %v5900
      %v5914 = vadd.f32 %v5913, %v5902
      %v5915 = vrot.slane %v5914, 4
      %v5916 = vadd.f32 %v5914, %v5915
      %v5917 = vrot.slane %v5916, 2
      %v5918 = vadd.f32 %v5916, %v5917
      %v5919 = vrot.slane %v5918, 1
      %v5920 = vadd.f32 %v5918, %v5919
      %v5921 = vmul.f32 %v2772, %v3012
      %v5922 = vmul.f32 %v2774, %v3014
      %v5923 = vmul.f32 %v2776, %v3016
      %v5924 = vmul.f32 %v2778, %v3018
      %v5925 = vmul.f32 %v2782, %v3022
      %v5926 = vmul.f32 %v2784, %v3024
      %v5927 = vmul.f32 %v2786, %v3026
      %v5928 = vmul.f32 %v2788, %v3028
      %v5929 = vadd.f32 %v5921, %v5923
      %v5930 = vadd.f32 %v5929, %v5925
      %v5931 = vadd.f32 %v5930, %v5927
      %v5932 = vrot.slane %v5931, 4
      %v5933 = vadd.f32 %v5931, %v5932
      %v5934 = vrot.slane %v5933, 2
      %v5935 = vadd.f32 %v5933, %v5934
      %v5936 = vrot.slane %v5935, 1
      %v5937 = vadd.f32 %v5935, %v5936
      %v5938 = vadd.f32 %v5922, %v5924
      %v5939 = vadd.f32 %v5938, %v5926
      %v5940 = vadd.f32 %v5939, %v5928
      %v5941 = vrot.slane %v5940, 4
      %v5942 = vadd.f32 %v5940, %v5941
      %v5943 = vrot.slane %v5942, 2
      %v5944 = vadd.f32 %v5942, %v5943
      %v5945 = vrot.slane %v5944, 1
      %v5946 = vadd.f32 %v5944, %v5945
      %v5947 = vmul.f32 %v2792, %v3012
      %v5948 = vmul.f32 %v2794, %v3014
      %v5949 = vmul.f32 %v2796, %v3016
      %v5950 = vmul.f32 %v2798, %v3018
      %v5951 = vmul.f32 %v2802, %v3022
      %v5952 = vmul.f32 %v2804, %v3024
      %v5953 = vmul.f32 %v2806, %v3026
      %v5954 = vmul.f32 %v2808, %v3028
      %v5955 = vadd.f32 %v5947, %v5949
      %v5956 = vadd.f32 %v5955, %v5951
      %v5957 = vadd.f32 %v5956, %v5953
      %v5958 = vrot.slane %v5957, 4
      %v5959 = vadd.f32 %v5957, %v5958
      %v5960 = vrot.slane %v5959, 2
      %v5961 = vadd.f32 %v5959, %v5960
      %v5962 = vrot.slane %v5961, 1
      %v5963 = vadd.f32 %v5961, %v5962
      %v5964 = vadd.f32 %v5948, %v5950
      %v5965 = vadd.f32 %v5964, %v5952
      %v5966 = vadd.f32 %v5965, %v5954
      %v5967 = vrot.slane %v5966, 4
      %v5968 = vadd.f32 %v5966, %v5967
      %v5969 = vrot.slane %v5968, 2
      %v5970 = vadd.f32 %v5968, %v5969
      %v5971 = vrot.slane %v5970, 1
      %v5972 = vadd.f32 %v5970, %v5971
      %v5973 = vmul.f32 %v2812, %v3012
      %v5974 = vmul.f32 %v2814, %v3014
      %v5975 = vmul.f32 %v2816, %v3016
      %v5976 = vmul.f32 %v2818, %v3018
      %v5977 = vmul.f32 %v2822, %v3022
      %v5978 = vmul.f32 %v2824, %v3024
      %v5979 = vmul.f32 %v2826, %v3026
      %v5980 = vmul.f32 %v2828, %v3028
      %v5981 = vadd.f32 %v5973, %v5975
      %v5982 = vadd.f32 %v5981, %v5977
      %v5983 = vadd.f32 %v5982, %v5979
      %v5984 = vrot.slane %v5983, 4
      %v5985 = vadd.f32 %v5983, %v5984
      %v5986 = vrot.slane %v5985, 2
      %v5987 = vadd.f32 %v5985, %v5986
      %v5988 = vrot.slane %v5987, 1
      %v5989 = vadd.f32 %v5987, %v5988
      %v5990 = vadd.f32 %v5974, %v5976
      %v5991 = vadd.f32 %v5990, %v5978
      %v5992 = vadd.f32 %v5991, %v5980
      %v5993 = vrot.slane %v5992, 4
      %v5994 = vadd.f32 %v5992, %v5993
      %v5995 = vrot.slane %v5994, 2
      %v5996 = vadd.f32 %v5994, %v5995
      %v5997 = vrot.slane %v5996, 1
      %v5998 = vadd.f32 %v5996, %v5997
      %v5999 = vmul.f32 %v2832, %v3012
      %v6000 = vmul.f32 %v2834, %v3014
      %v6001 = vmul.f32 %v2836, %v3016
      %v6002 = vmul.f32 %v2838, %v3018
      %v6003 = vmul.f32 %v2842, %v3022
      %v6004 = vmul.f32 %v2844, %v3024
      %v6005 = vmul.f32 %v2846, %v3026
      %v6006 = vmul.f32 %v2848, %v3028
      %v6007 = vadd.f32 %v5999, %v6001
      %v6008 = vadd.f32 %v6007, %v6003
      %v6009 = vadd.f32 %v6008, %v6005
      %v6010 = vrot.slane %v6009, 4
      %v6011 = vadd.f32 %v6009, %v6010
      %v6012 = vrot.slane %v6011, 2
      %v6013 = vadd.f32 %v6011, %v6012
      %v6014 = vrot.slane %v6013, 1
      %v6015 = vadd.f32 %v6013, %v6014
      %v6016 = vadd.f32 %v6000, %v6002
      %v6017 = vadd.f32 %v6016, %v6004
      %v6018 = vadd.f32 %v6017, %v6006
      %v6019 = vrot.slane %v6018, 4
      %v6020 = vadd.f32 %v6018, %v6019
      %v6021 = vrot.slane %v6020, 2
      %v6022 = vadd.f32 %v6020, %v6021
      %v6023 = vrot.slane %v6022, 1
      %v6024 = vadd.f32 %v6022, %v6023
      %v6025 = vmul.f32 %v2852, %v3012
      %v6026 = vmul.f32 %v2854, %v3014
      %v6027 = vmul.f32 %v2856, %v3016
      %v6028 = vmul.f32 %v2858, %v3018
      %v6029 = vmul.f32 %v2862, %v3022
      %v6030 = vmul.f32 %v2864, %v3024
      %v6031 = vmul.f32 %v2866, %v3026
      %v6032 = vmul.f32 %v2868, %v3028
      %v6033 = vadd.f32 %v6025, %v6027
      %v6034 = vadd.f32 %v6033, %v6029
      %v6035 = vadd.f32 %v6034, %v6031
      %v6036 = vrot.slane %v6035, 4
      %v6037 = vadd.f32 %v6035, %v6036
      %v6038 = vrot.slane %v6037, 2
      %v6039 = vadd.f32 %v6037, %v6038
      %v6040 = vrot.slane %v6039, 1
      %v6041 = vadd.f32 %v6039, %v6040
      %v6042 = vadd.f32 %v6026, %v6028
      %v6043 = vadd.f32 %v6042, %v6030
      %v6044 = vadd.f32 %v6043, %v6032
      %v6045 = vrot.slane %v6044, 4
      %v6046 = vadd.f32 %v6044, %v6045
      %v6047 = vrot.slane %v6046, 2
      %v6048 = vadd.f32 %v6046, %v6047
      %v6049 = vrot.slane %v6048, 1
      %v6050 = vadd.f32 %v6048, %v6049
      %v6051 = vmul.f32 %v2872, %v3012
      %v6052 = vmul.f32 %v2874, %v3014
      %v6053 = vmul.f32 %v2876, %v3016
      %v6054 = vmul.f32 %v2878, %v3018
      %v6055 = vmul.f32 %v2882, %v3022
      %v6056 = vmul.f32 %v2884, %v3024
      %v6057 = vmul.f32 %v2886, %v3026
      %v6058 = vmul.f32 %v2888, %v3028
      %v6059 = vadd.f32 %v6051, %v6053
      %v6060 = vadd.f32 %v6059, %v6055
      %v6061 = vadd.f32 %v6060, %v6057
      %v6062 = vrot.slane %v6061, 4
      %v6063 = vadd.f32 %v6061, %v6062
      %v6064 = vrot.slane %v6063, 2
      %v6065 = vadd.f32 %v6063, %v6064
      %v6066 = vrot.slane %v6065, 1
      %v6067 = vadd.f32 %v6065, %v6066
      %v6068 = vadd.f32 %v6052, %v6054
      %v6069 = vadd.f32 %v6068, %v6056
      %v6070 = vadd.f32 %v6069, %v6058
      %v6071 = vrot.slane %v6070, 4
      %v6072 = vadd.f32 %v6070, %v6071
      %v6073 = vrot.slane %v6072, 2
      %v6074 = vadd.f32 %v6072, %v6073
      %v6075 = vrot.slane %v6074, 1
      %v6076 = vadd.f32 %v6074, %v6075
      %v6077 = vsel %vm3418, %v5885, %v5911
      %v6078 = vsel %vm3418, %v5894, %v5920
      %v6079 = vsel %vm3421, %v6077, %v5937
      %v6080 = vsel %vm3421, %v6078, %v5946
      %v6081 = vsel %vm3424, %v6079, %v5963
      %v6082 = vsel %vm3424, %v6080, %v5972
      %v6083 = vsel %vm3427, %v6081, %v5989
      %v6084 = vsel %vm3427, %v6082, %v5998
      %v6085 = vsel %vm3430, %v6083, %v6015
      %v6086 = vsel %vm3430, %v6084, %v6024
      %v6087 = vsel %vm3433, %v6085, %v6041
      %v6088 = vsel %vm3433, %v6086, %v6050
      %v6089 = vsel %vm3436, %v6087, %v6067
      %v6090 = vsel %vm3436, %v6088, %v6076
      %v6091 = vmul.f32 %v6089, 0.17677669
      %v6092 = vmul.f32 %v6090, 0.17677669
      %v6093 = vrot.slane %v6091, 4
      %v6094 = vmax.f32 %v6091, %v6093
      %v6095 = vrot.slane %v6094, 2
      %v6096 = vmax.f32 %v6094, %v6095
      %v6097 = vrot.slane %v6096, 1
      %v6098 = vmax.f32 %v6096, %v6097
      %v6099 = vrot.slane %v6092, 4
      %v6100 = vmax.f32 %v6092, %v6099
      %v6101 = vrot.slane %v6100, 2
      %v6102 = vmax.f32 %v6100, %v6101
      %v6103 = vrot.slane %v6102, 1
      %v6104 = vmax.f32 %v6102, %v6103
      %v6105 = vsub.f32 %v6091, %v6098
      %v6106 = vsub.f32 %v6092, %v6104
      %v6107 = vmul.f32 %v6105, 1.442695
      %v6108 = vpow.pop %v6107
      %v6109 = vmul.f32 %v6106, 1.442695
      %v6110 = vpow.pop %v6109
      %v6111 = vrot.slane %v6108, 4
      %v6112 = vadd.f32 %v6108, %v6111
      %v6113 = vrot.slane %v6112, 2
      %v6114 = vadd.f32 %v6112, %v6113
      %v6115 = vrot.slane %v6114, 1
      %v6116 = vadd.f32 %v6114, %v6115
      %v6117 = vrot.slane %v6110, 4
      %v6118 = vadd.f32 %v6110, %v6117
      %v6119 = vrot.slane %v6118, 2
      %v6120 = vadd.f32 %v6118, %v6119
      %v6121 = vrot.slane %v6120, 1
      %v6122 = vadd.f32 %v6120, %v6121
      %v6123 = vrcp.pop %v6116
      %v6124 = vrcp.pop %v6122
      %v6125 = vmul.f32 %v6108, %v6123
      %v6126 = vmul.f32 %v6110, %v6124
      %v6127 = vlaneseq
      %v6128 = vshrl.u32 %v6127, 7
      %v6129 = vsub.s32 0, %v6128
      %v6130 = vrot.slane %v6125, %v6129
      %v6131 = vlaneseq
      %v6132 = vshrl.u32 %v6131, 7
      %v6133 = vsub.s32 0, %v6132
      %v6134 = vrot.slane %v6126, %v6133
      %v6135 = vmul.f32 %v6130, %v3052
      %v6136 = vmul.f32 %v6134, %v3054
      %v6137 = vmul.f32 %v6130, %v3056
      %v6138 = vmul.f32 %v6134, %v3058
      %v6139 = vmul.f32 %v6130, %v3062
      %v6140 = vmul.f32 %v6134, %v3064
      %v6141 = vmul.f32 %v6130, %v3066
      %v6142 = vmul.f32 %v6134, %v3068
      %v6143 = vlaneseq
      %v6144 = vshrl.u32 %v6143, 7
      %v6145 = vsub.s32 1, %v6144
      %v6146 = vrot.slane %v6125, %v6145
      %v6147 = vlaneseq
      %v6148 = vshrl.u32 %v6147, 7
      %v6149 = vsub.s32 1, %v6148
      %v6150 = vrot.slane %v6126, %v6149
      %v6151 = vmul.f32 %v6146, %v3072
      %v6152 = vmul.f32 %v6150, %v3074
      %v6153 = vmul.f32 %v6146, %v3076
      %v6154 = vmul.f32 %v6150, %v3078
      %v6155 = vmul.f32 %v6146, %v3082
      %v6156 = vmul.f32 %v6150, %v3084
      %v6157 = vmul.f32 %v6146, %v3086
      %v6158 = vmul.f32 %v6150, %v3088
      %v6159 = vadd.f32 %v6135, %v6151
      %v6160 = vadd.f32 %v6136, %v6152
      %v6161 = vadd.f32 %v6137, %v6153
      %v6162 = vadd.f32 %v6138, %v6154
      %v6163 = vadd.f32 %v6139, %v6155
      %v6164 = vadd.f32 %v6140, %v6156
      %v6165 = vadd.f32 %v6141, %v6157
      %v6166 = vadd.f32 %v6142, %v6158
      %v6167 = vlaneseq
      %v6168 = vshrl.u32 %v6167, 7
      %v6169 = vsub.s32 2, %v6168
      %v6170 = vrot.slane %v6125, %v6169
      %v6171 = vlaneseq
      %v6172 = vshrl.u32 %v6171, 7
      %v6173 = vsub.s32 2, %v6172
      %v6174 = vrot.slane %v6126, %v6173
      %v6175 = vmul.f32 %v6170, %v3092
      %v6176 = vmul.f32 %v6174, %v3094
      %v6177 = vmul.f32 %v6170, %v3096
      %v6178 = vmul.f32 %v6174, %v3098
      %v6179 = vmul.f32 %v6170, %v3102
      %v6180 = vmul.f32 %v6174, %v3104
      %v6181 = vmul.f32 %v6170, %v3106
      %v6182 = vmul.f32 %v6174, %v3108
      %v6183 = vadd.f32 %v6159, %v6175
      %v6184 = vadd.f32 %v6160, %v6176
      %v6185 = vadd.f32 %v6161, %v6177
      %v6186 = vadd.f32 %v6162, %v6178
      %v6187 = vadd.f32 %v6163, %v6179
      %v6188 = vadd.f32 %v6164, %v6180
      %v6189 = vadd.f32 %v6165, %v6181
      %v6190 = vadd.f32 %v6166, %v6182
      %v6191 = vlaneseq
      %v6192 = vshrl.u32 %v6191, 7
      %v6193 = vsub.s32 3, %v6192
      %v6194 = vrot.slane %v6125, %v6193
      %v6195 = vlaneseq
      %v6196 = vshrl.u32 %v6195, 7
      %v6197 = vsub.s32 3, %v6196
      %v6198 = vrot.slane %v6126, %v6197
      %v6199 = vmul.f32 %v6194, %v3112
      %v6200 = vmul.f32 %v6198, %v3114
      %v6201 = vmul.f32 %v6194, %v3116
      %v6202 = vmul.f32 %v6198, %v3118
      %v6203 = vmul.f32 %v6194, %v3122
      %v6204 = vmul.f32 %v6198, %v3124
      %v6205 = vmul.f32 %v6194, %v3126
      %v6206 = vmul.f32 %v6198, %v3128
      %v6207 = vadd.f32 %v6183, %v6199
      %v6208 = vadd.f32 %v6184, %v6200
      %v6209 = vadd.f32 %v6185, %v6201
      %v6210 = vadd.f32 %v6186, %v6202
      %v6211 = vadd.f32 %v6187, %v6203
      %v6212 = vadd.f32 %v6188, %v6204
      %v6213 = vadd.f32 %v6189, %v6205
      %v6214 = vadd.f32 %v6190, %v6206
      %v6215 = vlaneseq
      %v6216 = vshrl.u32 %v6215, 7
      %v6217 = vsub.s32 4, %v6216
      %v6218 = vrot.slane %v6125, %v6217
      %v6219 = vlaneseq
      %v6220 = vshrl.u32 %v6219, 7
      %v6221 = vsub.s32 4, %v6220
      %v6222 = vrot.slane %v6126, %v6221
      %v6223 = vmul.f32 %v6218, %v3132
      %v6224 = vmul.f32 %v6222, %v3134
      %v6225 = vmul.f32 %v6218, %v3136
      %v6226 = vmul.f32 %v6222, %v3138
      %v6227 = vmul.f32 %v6218, %v3142
      %v6228 = vmul.f32 %v6222, %v3144
      %v6229 = vmul.f32 %v6218, %v3146
      %v6230 = vmul.f32 %v6222, %v3148
      %v6231 = vadd.f32 %v6207, %v6223
      %v6232 = vadd.f32 %v6208, %v6224
      %v6233 = vadd.f32 %v6209, %v6225
      %v6234 = vadd.f32 %v6210, %v6226
      %v6235 = vadd.f32 %v6211, %v6227
      %v6236 = vadd.f32 %v6212, %v6228
      %v6237 = vadd.f32 %v6213, %v6229
      %v6238 = vadd.f32 %v6214, %v6230
      %v6239 = vlaneseq
      %v6240 = vshrl.u32 %v6239, 7
      %v6241 = vsub.s32 5, %v6240
      %v6242 = vrot.slane %v6125, %v6241
      %v6243 = vlaneseq
      %v6244 = vshrl.u32 %v6243, 7
      %v6245 = vsub.s32 5, %v6244
      %v6246 = vrot.slane %v6126, %v6245
      %v6247 = vmul.f32 %v6242, %v3152
      %v6248 = vmul.f32 %v6246, %v3154
      %v6249 = vmul.f32 %v6242, %v3156
      %v6250 = vmul.f32 %v6246, %v3158
      %v6251 = vmul.f32 %v6242, %v3162
      %v6252 = vmul.f32 %v6246, %v3164
      %v6253 = vmul.f32 %v6242, %v3166
      %v6254 = vmul.f32 %v6246, %v3168
      %v6255 = vadd.f32 %v6231, %v6247
      %v6256 = vadd.f32 %v6232, %v6248
      %v6257 = vadd.f32 %v6233, %v6249
      %v6258 = vadd.f32 %v6234, %v6250
      %v6259 = vadd.f32 %v6235, %v6251
      %v6260 = vadd.f32 %v6236, %v6252
      %v6261 = vadd.f32 %v6237, %v6253
      %v6262 = vadd.f32 %v6238, %v6254
      %v6263 = vlaneseq
      %v6264 = vshrl.u32 %v6263, 7
      %v6265 = vsub.s32 6, %v6264
      %v6266 = vrot.slane %v6125, %v6265
      %v6267 = vlaneseq
      %v6268 = vshrl.u32 %v6267, 7
      %v6269 = vsub.s32 6, %v6268
      %v6270 = vrot.slane %v6126, %v6269
      %v6271 = vmul.f32 %v6266, %v3172
      %v6272 = vmul.f32 %v6270, %v3174
      %v6273 = vmul.f32 %v6266, %v3176
      %v6274 = vmul.f32 %v6270, %v3178
      %v6275 = vmul.f32 %v6266, %v3182
      %v6276 = vmul.f32 %v6270, %v3184
      %v6277 = vmul.f32 %v6266, %v3186
      %v6278 = vmul.f32 %v6270, %v3188
      %v6279 = vadd.f32 %v6255, %v6271
      %v6280 = vadd.f32 %v6256, %v6272
      %v6281 = vadd.f32 %v6257, %v6273
      %v6282 = vadd.f32 %v6258, %v6274
      %v6283 = vadd.f32 %v6259, %v6275
      %v6284 = vadd.f32 %v6260, %v6276
      %v6285 = vadd.f32 %v6261, %v6277
      %v6286 = vadd.f32 %v6262, %v6278
      %v6287 = vlaneseq
      %v6288 = vshrl.u32 %v6287, 7
      %v6289 = vsub.s32 7, %v6288
      %v6290 = vrot.slane %v6125, %v6289
      %v6291 = vlaneseq
      %v6292 = vshrl.u32 %v6291, 7
      %v6293 = vsub.s32 7, %v6292
      %v6294 = vrot.slane %v6126, %v6293
      %v6295 = vmul.f32 %v6290, %v3192
      %v6296 = vmul.f32 %v6294, %v3194
      %v6297 = vmul.f32 %v6290, %v3196
      %v6298 = vmul.f32 %v6294, %v3198
      %v6299 = vmul.f32 %v6290, %v3202
      %v6300 = vmul.f32 %v6294, %v3204
      %v6301 = vmul.f32 %v6290, %v3206
      %v6302 = vmul.f32 %v6294, %v3208
      %v6303 = vadd.f32 %v6279, %v6295
      %v6304 = vadd.f32 %v6280, %v6296
      %v6305 = vadd.f32 %v6281, %v6297
      %v6306 = vadd.f32 %v6282, %v6298
      %v6307 = vadd.f32 %v6283, %v6299
      %v6308 = vadd.f32 %v6284, %v6300
      %v6309 = vadd.f32 %v6285, %v6301
      %v6310 = vadd.f32 %v6286, %v6302
      %v6311 = vmul.f32 %v2732, %v3032
      %v6312 = vmul.f32 %v2734, %v3034
      %v6313 = vmul.f32 %v2736, %v3036
      %v6314 = vmul.f32 %v2738, %v3038
      %v6315 = vmul.f32 %v2742, %v3042
      %v6316 = vmul.f32 %v2744, %v3044
      %v6317 = vmul.f32 %v2746, %v3046
      %v6318 = vmul.f32 %v2748, %v3048
      %v6319 = vadd.f32 %v6311, %v6313
      %v6320 = vadd.f32 %v6319, %v6315
      %v6321 = vadd.f32 %v6320, %v6317
      %v6322 = vrot.slane %v6321, 4
      %v6323 = vadd.f32 %v6321, %v6322
      %v6324 = vrot.slane %v6323, 2
      %v6325 = vadd.f32 %v6323, %v6324
      %v6326 = vrot.slane %v6325, 1
      %v6327 = vadd.f32 %v6325, %v6326
      %v6328 = vadd.f32 %v6312, %v6314
      %v6329 = vadd.f32 %v6328, %v6316
      %v6330 = vadd.f32 %v6329, %v6318
      %v6331 = vrot.slane %v6330, 4
      %v6332 = vadd.f32 %v6330, %v6331
      %v6333 = vrot.slane %v6332, 2
      %v6334 = vadd.f32 %v6332, %v6333
      %v6335 = vrot.slane %v6334, 1
      %v6336 = vadd.f32 %v6334, %v6335
      %v6337 = vmul.f32 %v2752, %v3032
      %v6338 = vmul.f32 %v2754, %v3034
      %v6339 = vmul.f32 %v2756, %v3036
      %v6340 = vmul.f32 %v2758, %v3038
      %v6341 = vmul.f32 %v2762, %v3042
      %v6342 = vmul.f32 %v2764, %v3044
      %v6343 = vmul.f32 %v2766, %v3046
      %v6344 = vmul.f32 %v2768, %v3048
      %v6345 = vadd.f32 %v6337, %v6339
      %v6346 = vadd.f32 %v6345, %v6341
      %v6347 = vadd.f32 %v6346, %v6343
      %v6348 = vrot.slane %v6347, 4
      %v6349 = vadd.f32 %v6347, %v6348
      %v6350 = vrot.slane %v6349, 2
      %v6351 = vadd.f32 %v6349, %v6350
      %v6352 = vrot.slane %v6351, 1
      %v6353 = vadd.f32 %v6351, %v6352
      %v6354 = vadd.f32 %v6338, %v6340
      %v6355 = vadd.f32 %v6354, %v6342
      %v6356 = vadd.f32 %v6355, %v6344
      %v6357 = vrot.slane %v6356, 4
      %v6358 = vadd.f32 %v6356, %v6357
      %v6359 = vrot.slane %v6358, 2
      %v6360 = vadd.f32 %v6358, %v6359
      %v6361 = vrot.slane %v6360, 1
      %v6362 = vadd.f32 %v6360, %v6361
      %v6363 = vmul.f32 %v2772, %v3032
      %v6364 = vmul.f32 %v2774, %v3034
      %v6365 = vmul.f32 %v2776, %v3036
      %v6366 = vmul.f32 %v2778, %v3038
      %v6367 = vmul.f32 %v2782, %v3042
      %v6368 = vmul.f32 %v2784, %v3044
      %v6369 = vmul.f32 %v2786, %v3046
      %v6370 = vmul.f32 %v2788, %v3048
      %v6371 = vadd.f32 %v6363, %v6365
      %v6372 = vadd.f32 %v6371, %v6367
      %v6373 = vadd.f32 %v6372, %v6369
      %v6374 = vrot.slane %v6373, 4
      %v6375 = vadd.f32 %v6373, %v6374
      %v6376 = vrot.slane %v6375, 2
      %v6377 = vadd.f32 %v6375, %v6376
      %v6378 = vrot.slane %v6377, 1
      %v6379 = vadd.f32 %v6377, %v6378
      %v6380 = vadd.f32 %v6364, %v6366
      %v6381 = vadd.f32 %v6380, %v6368
      %v6382 = vadd.f32 %v6381, %v6370
      %v6383 = vrot.slane %v6382, 4
      %v6384 = vadd.f32 %v6382, %v6383
      %v6385 = vrot.slane %v6384, 2
      %v6386 = vadd.f32 %v6384, %v6385
      %v6387 = vrot.slane %v6386, 1
      %v6388 = vadd.f32 %v6386, %v6387
      %v6389 = vmul.f32 %v2792, %v3032
      %v6390 = vmul.f32 %v2794, %v3034
      %v6391 = vmul.f32 %v2796, %v3036
      %v6392 = vmul.f32 %v2798, %v3038
      %v6393 = vmul.f32 %v2802, %v3042
      %v6394 = vmul.f32 %v2804, %v3044
      %v6395 = vmul.f32 %v2806, %v3046
      %v6396 = vmul.f32 %v2808, %v3048
      %v6397 = vadd.f32 %v6389, %v6391
      %v6398 = vadd.f32 %v6397, %v6393
      %v6399 = vadd.f32 %v6398, %v6395
      %v6400 = vrot.slane %v6399, 4
      %v6401 = vadd.f32 %v6399, %v6400
      %v6402 = vrot.slane %v6401, 2
      %v6403 = vadd.f32 %v6401, %v6402
      %v6404 = vrot.slane %v6403, 1
      %v6405 = vadd.f32 %v6403, %v6404
      %v6406 = vadd.f32 %v6390, %v6392
      %v6407 = vadd.f32 %v6406, %v6394
      %v6408 = vadd.f32 %v6407, %v6396
      %v6409 = vrot.slane %v6408, 4
      %v6410 = vadd.f32 %v6408, %v6409
      %v6411 = vrot.slane %v6410, 2
      %v6412 = vadd.f32 %v6410, %v6411
      %v6413 = vrot.slane %v6412, 1
      %v6414 = vadd.f32 %v6412, %v6413
      %v6415 = vmul.f32 %v2812, %v3032
      %v6416 = vmul.f32 %v2814, %v3034
      %v6417 = vmul.f32 %v2816, %v3036
      %v6418 = vmul.f32 %v2818, %v3038
      %v6419 = vmul.f32 %v2822, %v3042
      %v6420 = vmul.f32 %v2824, %v3044
      %v6421 = vmul.f32 %v2826, %v3046
      %v6422 = vmul.f32 %v2828, %v3048
      %v6423 = vadd.f32 %v6415, %v6417
      %v6424 = vadd.f32 %v6423, %v6419
      %v6425 = vadd.f32 %v6424, %v6421
      %v6426 = vrot.slane %v6425, 4
      %v6427 = vadd.f32 %v6425, %v6426
      %v6428 = vrot.slane %v6427, 2
      %v6429 = vadd.f32 %v6427, %v6428
      %v6430 = vrot.slane %v6429, 1
      %v6431 = vadd.f32 %v6429, %v6430
      %v6432 = vadd.f32 %v6416, %v6418
      %v6433 = vadd.f32 %v6432, %v6420
      %v6434 = vadd.f32 %v6433, %v6422
      %v6435 = vrot.slane %v6434, 4
      %v6436 = vadd.f32 %v6434, %v6435
      %v6437 = vrot.slane %v6436, 2
      %v6438 = vadd.f32 %v6436, %v6437
      %v6439 = vrot.slane %v6438, 1
      %v6440 = vadd.f32 %v6438, %v6439
      %v6441 = vmul.f32 %v2832, %v3032
      %v6442 = vmul.f32 %v2834, %v3034
      %v6443 = vmul.f32 %v2836, %v3036
      %v6444 = vmul.f32 %v2838, %v3038
      %v6445 = vmul.f32 %v2842, %v3042
      %v6446 = vmul.f32 %v2844, %v3044
      %v6447 = vmul.f32 %v2846, %v3046
      %v6448 = vmul.f32 %v2848, %v3048
      %v6449 = vadd.f32 %v6441, %v6443
      %v6450 = vadd.f32 %v6449, %v6445
      %v6451 = vadd.f32 %v6450, %v6447
      %v6452 = vrot.slane %v6451, 4
      %v6453 = vadd.f32 %v6451, %v6452
      %v6454 = vrot.slane %v6453, 2
      %v6455 = vadd.f32 %v6453, %v6454
      %v6456 = vrot.slane %v6455, 1
      %v6457 = vadd.f32 %v6455, %v6456
      %v6458 = vadd.f32 %v6442, %v6444
      %v6459 = vadd.f32 %v6458, %v6446
      %v6460 = vadd.f32 %v6459, %v6448
      %v6461 = vrot.slane %v6460, 4
      %v6462 = vadd.f32 %v6460, %v6461
      %v6463 = vrot.slane %v6462, 2
      %v6464 = vadd.f32 %v6462, %v6463
      %v6465 = vrot.slane %v6464, 1
      %v6466 = vadd.f32 %v6464, %v6465
      %v6467 = vmul.f32 %v2852, %v3032
      %v6468 = vmul.f32 %v2854, %v3034
      %v6469 = vmul.f32 %v2856, %v3036
      %v6470 = vmul.f32 %v2858, %v3038
      %v6471 = vmul.f32 %v2862, %v3042
      %v6472 = vmul.f32 %v2864, %v3044
      %v6473 = vmul.f32 %v2866, %v3046
      %v6474 = vmul.f32 %v2868, %v3048
      %v6475 = vadd.f32 %v6467, %v6469
      %v6476 = vadd.f32 %v6475, %v6471
      %v6477 = vadd.f32 %v6476, %v6473
      %v6478 = vrot.slane %v6477, 4
      %v6479 = vadd.f32 %v6477, %v6478
      %v6480 = vrot.slane %v6479, 2
      %v6481 = vadd.f32 %v6479, %v6480
      %v6482 = vrot.slane %v6481, 1
      %v6483 = vadd.f32 %v6481, %v6482
      %v6484 = vadd.f32 %v6468, %v6470
      %v6485 = vadd.f32 %v6484, %v6472
      %v6486 = vadd.f32 %v6485, %v6474
      %v6487 = vrot.slane %v6486, 4
      %v6488 = vadd.f32 %v6486, %v6487
      %v6489 = vrot.slane %v6488, 2
      %v6490 = vadd.f32 %v6488, %v6489
      %v6491 = vrot.slane %v6490, 1
      %v6492 = vadd.f32 %v6490, %v6491
      %v6493 = vmul.f32 %v2872, %v3032
      %v6494 = vmul.f32 %v2874, %v3034
      %v6495 = vmul.f32 %v2876, %v3036
      %v6496 = vmul.f32 %v2878, %v3038
      %v6497 = vmul.f32 %v2882, %v3042
      %v6498 = vmul.f32 %v2884, %v3044
      %v6499 = vmul.f32 %v2886, %v3046
      %v6500 = vmul.f32 %v2888, %v3048
      %v6501 = vadd.f32 %v6493, %v6495
      %v6502 = vadd.f32 %v6501, %v6497
      %v6503 = vadd.f32 %v6502, %v6499
      %v6504 = vrot.slane %v6503, 4
      %v6505 = vadd.f32 %v6503, %v6504
      %v6506 = vrot.slane %v6505, 2
      %v6507 = vadd.f32 %v6505, %v6506
      %v6508 = vrot.slane %v6507, 1
      %v6509 = vadd.f32 %v6507, %v6508
      %v6510 = vadd.f32 %v6494, %v6496
      %v6511 = vadd.f32 %v6510, %v6498
      %v6512 = vadd.f32 %v6511, %v6500
      %v6513 = vrot.slane %v6512, 4
      %v6514 = vadd.f32 %v6512, %v6513
      %v6515 = vrot.slane %v6514, 2
      %v6516 = vadd.f32 %v6514, %v6515
      %v6517 = vrot.slane %v6516, 1
      %v6518 = vadd.f32 %v6516, %v6517
      %v6519 = vsel %vm3418, %v6327, %v6353
      %v6520 = vsel %vm3418, %v6336, %v6362
      %v6521 = vsel %vm3421, %v6519, %v6379
      %v6522 = vsel %vm3421, %v6520, %v6388
      %v6523 = vsel %vm3424, %v6521, %v6405
      %v6524 = vsel %vm3424, %v6522, %v6414
      %v6525 = vsel %vm3427, %v6523, %v6431
      %v6526 = vsel %vm3427, %v6524, %v6440
      %v6527 = vsel %vm3430, %v6525, %v6457
      %v6528 = vsel %vm3430, %v6526, %v6466
      %v6529 = vsel %vm3433, %v6527, %v6483
      %v6530 = vsel %vm3433, %v6528, %v6492
      %v6531 = vsel %vm3436, %v6529, %v6509
      %v6532 = vsel %vm3436, %v6530, %v6518
      %v6533 = vmul.f32 %v6531, 0.17677669
      %v6534 = vmul.f32 %v6532, 0.17677669
      %v6535 = vrot.slane %v6533, 4
      %v6536 = vmax.f32 %v6533, %v6535
      %v6537 = vrot.slane %v6536, 2
      %v6538 = vmax.f32 %v6536, %v6537
      %v6539 = vrot.slane %v6538, 1
      %v6540 = vmax.f32 %v6538, %v6539
      %v6541 = vrot.slane %v6534, 4
      %v6542 = vmax.f32 %v6534, %v6541
      %v6543 = vrot.slane %v6542, 2
      %v6544 = vmax.f32 %v6542, %v6543
      %v6545 = vrot.slane %v6544, 1
      %v6546 = vmax.f32 %v6544, %v6545
      %v6547 = vsub.f32 %v6533, %v6540
      %v6548 = vsub.f32 %v6534, %v6546
      %v6549 = vmul.f32 %v6547, 1.442695
      %v6550 = vpow.pop %v6549
      %v6551 = vmul.f32 %v6548, 1.442695
      %v6552 = vpow.pop %v6551
      %v6553 = vrot.slane %v6550, 4
      %v6554 = vadd.f32 %v6550, %v6553
      %v6555 = vrot.slane %v6554, 2
      %v6556 = vadd.f32 %v6554, %v6555
      %v6557 = vrot.slane %v6556, 1
      %v6558 = vadd.f32 %v6556, %v6557
      %v6559 = vrot.slane %v6552, 4
      %v6560 = vadd.f32 %v6552, %v6559
      %v6561 = vrot.slane %v6560, 2
      %v6562 = vadd.f32 %v6560, %v6561
      %v6563 = vrot.slane %v6562, 1
      %v6564 = vadd.f32 %v6562, %v6563
      %v6565 = vrcp.pop %v6558
      %v6566 = vrcp.pop %v6564
      %v6567 = vmul.f32 %v6550, %v6565
      %v6568 = vmul.f32 %v6552, %v6566
      %v6569 = vlaneseq
      %v6570 = vshrl.u32 %v6569, 7
      %v6571 = vsub.s32 0, %v6570
      %v6572 = vrot.slane %v6567, %v6571
      %v6573 = vlaneseq
      %v6574 = vshrl.u32 %v6573, 7
      %v6575 = vsub.s32 0, %v6574
      %v6576 = vrot.slane %v6568, %v6575
      %v6577 = vmul.f32 %v6572, %v3052
      %v6578 = vmul.f32 %v6576, %v3054
      %v6579 = vmul.f32 %v6572, %v3056
      %v6580 = vmul.f32 %v6576, %v3058
      %v6581 = vmul.f32 %v6572, %v3062
      %v6582 = vmul.f32 %v6576, %v3064
      %v6583 = vmul.f32 %v6572, %v3066
      %v6584 = vmul.f32 %v6576, %v3068
      %v6585 = vlaneseq
      %v6586 = vshrl.u32 %v6585, 7
      %v6587 = vsub.s32 1, %v6586
      %v6588 = vrot.slane %v6567, %v6587
      %v6589 = vlaneseq
      %v6590 = vshrl.u32 %v6589, 7
      %v6591 = vsub.s32 1, %v6590
      %v6592 = vrot.slane %v6568, %v6591
      %v6593 = vmul.f32 %v6588, %v3072
      %v6594 = vmul.f32 %v6592, %v3074
      %v6595 = vmul.f32 %v6588, %v3076
      %v6596 = vmul.f32 %v6592, %v3078
      %v6597 = vmul.f32 %v6588, %v3082
      %v6598 = vmul.f32 %v6592, %v3084
      %v6599 = vmul.f32 %v6588, %v3086
      %v6600 = vmul.f32 %v6592, %v3088
      %v6601 = vadd.f32 %v6577, %v6593
      %v6602 = vadd.f32 %v6578, %v6594
      %v6603 = vadd.f32 %v6579, %v6595
      %v6604 = vadd.f32 %v6580, %v6596
      %v6605 = vadd.f32 %v6581, %v6597
      %v6606 = vadd.f32 %v6582, %v6598
      %v6607 = vadd.f32 %v6583, %v6599
      %v6608 = vadd.f32 %v6584, %v6600
      %v6609 = vlaneseq
      %v6610 = vshrl.u32 %v6609, 7
      %v6611 = vsub.s32 2, %v6610
      %v6612 = vrot.slane %v6567, %v6611
      %v6613 = vlaneseq
      %v6614 = vshrl.u32 %v6613, 7
      %v6615 = vsub.s32 2, %v6614
      %v6616 = vrot.slane %v6568, %v6615
      %v6617 = vmul.f32 %v6612, %v3092
      %v6618 = vmul.f32 %v6616, %v3094
      %v6619 = vmul.f32 %v6612, %v3096
      %v6620 = vmul.f32 %v6616, %v3098
      %v6621 = vmul.f32 %v6612, %v3102
      %v6622 = vmul.f32 %v6616, %v3104
      %v6623 = vmul.f32 %v6612, %v3106
      %v6624 = vmul.f32 %v6616, %v3108
      %v6625 = vadd.f32 %v6601, %v6617
      %v6626 = vadd.f32 %v6602, %v6618
      %v6627 = vadd.f32 %v6603, %v6619
      %v6628 = vadd.f32 %v6604, %v6620
      %v6629 = vadd.f32 %v6605, %v6621
      %v6630 = vadd.f32 %v6606, %v6622
      %v6631 = vadd.f32 %v6607, %v6623
      %v6632 = vadd.f32 %v6608, %v6624
      %v6633 = vlaneseq
      %v6634 = vshrl.u32 %v6633, 7
      %v6635 = vsub.s32 3, %v6634
      %v6636 = vrot.slane %v6567, %v6635
      %v6637 = vlaneseq
      %v6638 = vshrl.u32 %v6637, 7
      %v6639 = vsub.s32 3, %v6638
      %v6640 = vrot.slane %v6568, %v6639
      %v6641 = vmul.f32 %v6636, %v3112
      %v6642 = vmul.f32 %v6640, %v3114
      %v6643 = vmul.f32 %v6636, %v3116
      %v6644 = vmul.f32 %v6640, %v3118
      %v6645 = vmul.f32 %v6636, %v3122
      %v6646 = vmul.f32 %v6640, %v3124
      %v6647 = vmul.f32 %v6636, %v3126
      %v6648 = vmul.f32 %v6640, %v3128
      %v6649 = vadd.f32 %v6625, %v6641
      %v6650 = vadd.f32 %v6626, %v6642
      %v6651 = vadd.f32 %v6627, %v6643
      %v6652 = vadd.f32 %v6628, %v6644
      %v6653 = vadd.f32 %v6629, %v6645
      %v6654 = vadd.f32 %v6630, %v6646
      %v6655 = vadd.f32 %v6631, %v6647
      %v6656 = vadd.f32 %v6632, %v6648
      %v6657 = vlaneseq
      %v6658 = vshrl.u32 %v6657, 7
      %v6659 = vsub.s32 4, %v6658
      %v6660 = vrot.slane %v6567, %v6659
      %v6661 = vlaneseq
      %v6662 = vshrl.u32 %v6661, 7
      %v6663 = vsub.s32 4, %v6662
      %v6664 = vrot.slane %v6568, %v6663
      %v6665 = vmul.f32 %v6660, %v3132
      %v6666 = vmul.f32 %v6664, %v3134
      %v6667 = vmul.f32 %v6660, %v3136
      %v6668 = vmul.f32 %v6664, %v3138
      %v6669 = vmul.f32 %v6660, %v3142
      %v6670 = vmul.f32 %v6664, %v3144
      %v6671 = vmul.f32 %v6660, %v3146
      %v6672 = vmul.f32 %v6664, %v3148
      %v6673 = vadd.f32 %v6649, %v6665
      %v6674 = vadd.f32 %v6650, %v6666
      %v6675 = vadd.f32 %v6651, %v6667
      %v6676 = vadd.f32 %v6652, %v6668
      %v6677 = vadd.f32 %v6653, %v6669
      %v6678 = vadd.f32 %v6654, %v6670
      %v6679 = vadd.f32 %v6655, %v6671
      %v6680 = vadd.f32 %v6656, %v6672
      %v6681 = vlaneseq
      %v6682 = vshrl.u32 %v6681, 7
      %v6683 = vsub.s32 5, %v6682
      %v6684 = vrot.slane %v6567, %v6683
      %v6685 = vlaneseq
      %v6686 = vshrl.u32 %v6685, 7
      %v6687 = vsub.s32 5, %v6686
      %v6688 = vrot.slane %v6568, %v6687
      %v6689 = vmul.f32 %v6684, %v3152
      %v6690 = vmul.f32 %v6688, %v3154
      %v6691 = vmul.f32 %v6684, %v3156
      %v6692 = vmul.f32 %v6688, %v3158
      %v6693 = vmul.f32 %v6684, %v3162
      %v6694 = vmul.f32 %v6688, %v3164
      %v6695 = vmul.f32 %v6684, %v3166
      %v6696 = vmul.f32 %v6688, %v3168
      %v6697 = vadd.f32 %v6673, %v6689
      %v6698 = vadd.f32 %v6674, %v6690
      %v6699 = vadd.f32 %v6675, %v6691
      %v6700 = vadd.f32 %v6676, %v6692
      %v6701 = vadd.f32 %v6677, %v6693
      %v6702 = vadd.f32 %v6678, %v6694
      %v6703 = vadd.f32 %v6679, %v6695
      %v6704 = vadd.f32 %v6680, %v6696
      %v6705 = vlaneseq
      %v6706 = vshrl.u32 %v6705, 7
      %v6707 = vsub.s32 6, %v6706
      %v6708 = vrot.slane %v6567, %v6707
      %v6709 = vlaneseq
      %v6710 = vshrl.u32 %v6709, 7
      %v6711 = vsub.s32 6, %v6710
      %v6712 = vrot.slane %v6568, %v6711
      %v6713 = vmul.f32 %v6708, %v3172
      %v6714 = vmul.f32 %v6712, %v3174
      %v6715 = vmul.f32 %v6708, %v3176
      %v6716 = vmul.f32 %v6712, %v3178
      %v6717 = vmul.f32 %v6708, %v3182
      %v6718 = vmul.f32 %v6712, %v3184
      %v6719 = vmul.f32 %v6708, %v3186
      %v6720 = vmul.f32 %v6712, %v3188
      %v6721 = vadd.f32 %v6697, %v6713
      %v6722 = vadd.f32 %v6698, %v6714
      %v6723 = vadd.f32 %v6699, %v6715
      %v6724 = vadd.f32 %v6700, %v6716
      %v6725 = vadd.f32 %v6701, %v6717
      %v6726 = vadd.f32 %v6702, %v6718
      %v6727 = vadd.f32 %v6703, %v6719
      %v6728 = vadd.f32 %v6704, %v6720
      %v6729 = vlaneseq
      %v6730 = vshrl.u32 %v6729, 7
      %v6731 = vsub.s32 7, %v6730
      %v6732 = vrot.slane %v6567, %v6731
      %v6733 = vlaneseq
      %v6734 = vshrl.u32 %v6733, 7
      %v6735 = vsub.s32 7, %v6734
      %v6736 = vrot.slane %v6568, %v6735
      %v6737 = vmul.f32 %v6732, %v3192
      %v6738 = vmul.f32 %v6736, %v3194
      %v6739 = vmul.f32 %v6732, %v3196
      %v6740 = vmul.f32 %v6736, %v3198
      %v6741 = vmul.f32 %v6732, %v3202
      %v6742 = vmul.f32 %v6736, %v3204
      %v6743 = vmul.f32 %v6732, %v3206
      %v6744 = vmul.f32 %v6736, %v3208
      %v6745 = vadd.f32 %v6721, %v6737
      %v6746 = vadd.f32 %v6722, %v6738
      %v6747 = vadd.f32 %v6723, %v6739
      %v6748 = vadd.f32 %v6724, %v6740
      %v6749 = vadd.f32 %v6725, %v6741
      %v6750 = vadd.f32 %v6726, %v6742
      %v6751 = vadd.f32 %v6727, %v6743
      %v6752 = vadd.f32 %v6728, %v6744
      %v6753 = vld [vmem:[%s3] sm:$0xff]
      %v6754 = vld [vmem:[%s3 + $0x8] sm:$0xff]
      %v6755 = vld [vmem:[%s3 + $0x10] sm:$0xff]
      %v6756 = vld [vmem:[%s3 + $0x18] sm:$0xff]
      %v6757 = vld [vmem:[%s3 + $0x20] sm:$0xff]
      %v6758 = vld [vmem:[%s3 + $0x28] sm:$0xff]
      %v6759 = vld [vmem:[%s3 + $0x30] sm:$0xff]
      %v6760 = vld [vmem:[%s3 + $0x38] sm:$0xff]
      %v6761 = vld [vmem:[%s3 + $0x40] sm:$0xff]
      %v6762 = vld [vmem:[%s3 + $0x48] sm:$0xff]
      %v6763 = vld [vmem:[%s3 + $0x50] sm:$0xff]
      %v6764 = vld [vmem:[%s3 + $0x58] sm:$0xff]
      %v6765 = vld [vmem:[%s3 + $0x60] sm:$0xff]
      %v6766 = vld [vmem:[%s3 + $0x68] sm:$0xff]
      %v6767 = vld [vmem:[%s3 + $0x70] sm:$0xff]
      %v6768 = vld [vmem:[%s3 + $0x78] sm:$0xff]
      %v6769 = vld [vmem:[%s3 + $0x80] sm:$0xff]
      %v6770 = vld [vmem:[%s3 + $0x88] sm:$0xff]
      %v6771 = vld [vmem:[%s3 + $0x90] sm:$0xff]
      %v6772 = vld [vmem:[%s3 + $0x98] sm:$0xff]
      %v6773 = vld [vmem:[%s3 + $0xa0] sm:$0xff]
      %v6774 = vld [vmem:[%s3 + $0xa8] sm:$0xff]
      %v6775 = vld [vmem:[%s3 + $0xb0] sm:$0xff]
      %v6776 = vld [vmem:[%s3 + $0xb8] sm:$0xff]
      %v6777 = vld [vmem:[%s3 + $0xc0] sm:$0xff]
      %v6778 = vld [vmem:[%s3 + $0xc8] sm:$0xff]
      %v6779 = vld [vmem:[%s3 + $0xd0] sm:$0xff]
      %v6780 = vld [vmem:[%s3 + $0xd8] sm:$0xff]
      %v6781 = vld [vmem:[%s3 + $0xe0] sm:$0xff]
      %v6782 = vld [vmem:[%s3 + $0xe8] sm:$0xff]
      %v6783 = vld [vmem:[%s3 + $0xf0] sm:$0xff]
      %v6784 = vld [vmem:[%s3 + $0xf8] sm:$0xff]
      %v6785 = vld [vmem:[%s3 + $0x100] sm:$0xff]
      %v6786 = vld [vmem:[%s3 + $0x108] sm:$0xff]
      %v6787 = vld [vmem:[%s3 + $0x110] sm:$0xff]
      %v6788 = vld [vmem:[%s3 + $0x118] sm:$0xff]
      %v6789 = vld [vmem:[%s3 + $0x120] sm:$0xff]
      %v6790 = vld [vmem:[%s3 + $0x128] sm:$0xff]
      %v6791 = vld [vmem:[%s3 + $0x130] sm:$0xff]
      %v6792 = vld [vmem:[%s3 + $0x138] sm:$0xff]
      %v6793 = vld [vmem:[%s3 + $0x140] sm:$0xff]
      %v6794 = vld [vmem:[%s3 + $0x148] sm:$0xff]
      %v6795 = vld [vmem:[%s3 + $0x150] sm:$0xff]
      %v6796 = vld [vmem:[%s3 + $0x158] sm:$0xff]
      %v6797 = vld [vmem:[%s3 + $0x160] sm:$0xff]
      %v6798 = vld [vmem:[%s3 + $0x168] sm:$0xff]
      %v6799 = vld [vmem:[%s3 + $0x170] sm:$0xff]
      %v6800 = vld [vmem:[%s3 + $0x178] sm:$0xff]
      %v6801 = vld [vmem:[%s3 + $0x180] sm:$0xff]
      %v6802 = vld [vmem:[%s3 + $0x188] sm:$0xff]
      %v6803 = vld [vmem:[%s3 + $0x190] sm:$0xff]
      %v6804 = vld [vmem:[%s3 + $0x198] sm:$0xff]
      %v6805 = vld [vmem:[%s3 + $0x1a0] sm:$0xff]
      %v6806 = vld [vmem:[%s3 + $0x1a8] sm:$0xff]
      %v6807 = vld [vmem:[%s3 + $0x1b0] sm:$0xff]
      %v6808 = vld [vmem:[%s3 + $0x1b8] sm:$0xff]
      %v6809 = vld [vmem:[%s3 + $0x1c0] sm:$0xff]
      %v6810 = vld [vmem:[%s3 + $0x1c8] sm:$0xff]
      %v6811 = vld [vmem:[%s3 + $0x1d0] sm:$0xff]
      %v6812 = vld [vmem:[%s3 + $0x1d8] sm:$0xff]
      %v6813 = vld [vmem:[%s3 + $0x1e0] sm:$0xff]
      %v6814 = vld [vmem:[%s3 + $0x1e8] sm:$0xff]
      %v6815 = vld [vmem:[%s3 + $0x1f0] sm:$0xff]
      %v6816 = vld [vmem:[%s3 + $0x1f8] sm:$0xff]
      %v6817 = vpack.c.bf16 %v3653, %v3651
      %v6818 = vpack.c.bf16 %v3654, %v3652
      %v6819 = vpack.c.bf16 %v3657, %v3655
      %v6820 = vpack.c.bf16 %v3658, %v3656
      %v6821 = vpack.c.bf16 %v4095, %v4093
      %v6822 = vpack.c.bf16 %v4096, %v4094
      %v6823 = vpack.c.bf16 %v4099, %v4097
      %v6824 = vpack.c.bf16 %v4100, %v4098
      %v6825 = vpack.c.bf16 %v4537, %v4535
      %v6826 = vpack.c.bf16 %v4538, %v4536
      %v6827 = vpack.c.bf16 %v4541, %v4539
      %v6828 = vpack.c.bf16 %v4542, %v4540
      %v6829 = vpack.c.bf16 %v4979, %v4977
      %v6830 = vpack.c.bf16 %v4980, %v4978
      %v6831 = vpack.c.bf16 %v4983, %v4981
      %v6832 = vpack.c.bf16 %v4984, %v4982
      %v6833 = vpack.c.bf16 %v5421, %v5419
      %v6834 = vpack.c.bf16 %v5422, %v5420
      %v6835 = vpack.c.bf16 %v5425, %v5423
      %v6836 = vpack.c.bf16 %v5426, %v5424
      %v6837 = vpack.c.bf16 %v5863, %v5861
      %v6838 = vpack.c.bf16 %v5864, %v5862
      %v6839 = vpack.c.bf16 %v5867, %v5865
      %v6840 = vpack.c.bf16 %v5868, %v5866
      %v6841 = vpack.c.bf16 %v6305, %v6303
      %v6842 = vpack.c.bf16 %v6306, %v6304
      %v6843 = vpack.c.bf16 %v6309, %v6307
      %v6844 = vpack.c.bf16 %v6310, %v6308
      %v6845 = vpack.c.bf16 %v6747, %v6745
      %v6846 = vpack.c.bf16 %v6748, %v6746
      %v6847 = vpack.c.bf16 %v6751, %v6749
      %v6848 = vpack.c.bf16 %v6752, %v6750
      %v6849 = vld [vmem:[%s4] sm:$0xff]
      %v6850 = vld [vmem:[%s4 + $0x8] sm:$0xff]
      %v6851 = vld [vmem:[%s4 + $0x10] sm:$0xff]
      %v6852 = vld [vmem:[%s4 + $0x18] sm:$0xff]
      %v6853 = vld [vmem:[%s4 + $0x20] sm:$0xff]
      %v6854 = vld [vmem:[%s4 + $0x28] sm:$0xff]
      %v6855 = vld [vmem:[%s4 + $0x30] sm:$0xff]
      %v6856 = vld [vmem:[%s4 + $0x38] sm:$0xff]
      %v6857 = vld [vmem:[%s4 + $0x40] sm:$0xff]
      %v6858 = vld [vmem:[%s4 + $0x48] sm:$0xff]
      %v6859 = vld [vmem:[%s4 + $0x50] sm:$0xff]
      %v6860 = vld [vmem:[%s4 + $0x58] sm:$0xff]
      %v6861 = vld [vmem:[%s4 + $0x60] sm:$0xff]
      %v6862 = vld [vmem:[%s4 + $0x68] sm:$0xff]
      %v6863 = vld [vmem:[%s4 + $0x70] sm:$0xff]
      %v6864 = vld [vmem:[%s4 + $0x78] sm:$0xff]
      %v6865 = vld [vmem:[%s4 + $0x80] sm:$0xff]
      %v6866 = vld [vmem:[%s4 + $0x88] sm:$0xff]
      %v6867 = vld [vmem:[%s4 + $0x90] sm:$0xff]
      %v6868 = vld [vmem:[%s4 + $0x98] sm:$0xff]
      %v6869 = vld [vmem:[%s4 + $0xa0] sm:$0xff]
      %v6870 = vld [vmem:[%s4 + $0xa8] sm:$0xff]
      %v6871 = vld [vmem:[%s4 + $0xb0] sm:$0xff]
      %v6872 = vld [vmem:[%s4 + $0xb8] sm:$0xff]
      %v6873 = vld [vmem:[%s4 + $0xc0] sm:$0xff]
      %v6874 = vld [vmem:[%s4 + $0xc8] sm:$0xff]
      %v6875 = vld [vmem:[%s4 + $0xd0] sm:$0xff]
      %v6876 = vld [vmem:[%s4 + $0xd8] sm:$0xff]
      %v6877 = vld [vmem:[%s4 + $0xe0] sm:$0xff]
      %v6878 = vld [vmem:[%s4 + $0xe8] sm:$0xff]
      %v6879 = vld [vmem:[%s4 + $0xf0] sm:$0xff]
      %v6880 = vld [vmem:[%s4 + $0xf8] sm:$0xff]
      %v6881 = vld [vmem:[%s4 + $0x100] sm:$0xff]
      %v6882 = vld [vmem:[%s4 + $0x108] sm:$0xff]
      %v6883 = vld [vmem:[%s4 + $0x110] sm:$0xff]
      %v6884 = vld [vmem:[%s4 + $0x118] sm:$0xff]
      %v6885 = vld [vmem:[%s4 + $0x120] sm:$0xff]
      %v6886 = vld [vmem:[%s4 + $0x128] sm:$0xff]
      %v6887 = vld [vmem:[%s4 + $0x130] sm:$0xff]
      %v6888 = vld [vmem:[%s4 + $0x138] sm:$0xff]
      %v6889 = vld [vmem:[%s4 + $0x140] sm:$0xff]
      %v6890 = vld [vmem:[%s4 + $0x148] sm:$0xff]
      %v6891 = vld [vmem:[%s4 + $0x150] sm:$0xff]
      %v6892 = vld [vmem:[%s4 + $0x158] sm:$0xff]
      %v6893 = vld [vmem:[%s4 + $0x160] sm:$0xff]
      %v6894 = vld [vmem:[%s4 + $0x168] sm:$0xff]
      %v6895 = vld [vmem:[%s4 + $0x170] sm:$0xff]
      %v6896 = vld [vmem:[%s4 + $0x178] sm:$0xff]
      %v6897 = vld [vmem:[%s4 + $0x180] sm:$0xff]
      %v6898 = vld [vmem:[%s4 + $0x188] sm:$0xff]
      %v6899 = vld [vmem:[%s4 + $0x190] sm:$0xff]
      %v6900 = vld [vmem:[%s4 + $0x198] sm:$0xff]
      %v6901 = vld [vmem:[%s4 + $0x1a0] sm:$0xff]
      %v6902 = vld [vmem:[%s4 + $0x1a8] sm:$0xff]
      %v6903 = vld [vmem:[%s4 + $0x1b0] sm:$0xff]
      %v6904 = vld [vmem:[%s4 + $0x1b8] sm:$0xff]
      %v6905 = vld [vmem:[%s4 + $0x1c0] sm:$0xff]
      %v6906 = vld [vmem:[%s4 + $0x1c8] sm:$0xff]
      %v6907 = vld [vmem:[%s4 + $0x1d0] sm:$0xff]
      %v6908 = vld [vmem:[%s4 + $0x1d8] sm:$0xff]
      %v6909 = vld [vmem:[%s4 + $0x1e0] sm:$0xff]
      %v6910 = vld [vmem:[%s4 + $0x1e8] sm:$0xff]
      %v6911 = vld [vmem:[%s4 + $0x1f0] sm:$0xff]
      %v6912 = vld [vmem:[%s4 + $0x1f8] sm:$0xff]
      %6914 = vset.pattern.permute.xlu0 0
      %6915 = vperm.xlu0 %6914, %v6849
      %v6916 = vpop.permute.xlu0 %6915
      %6919 = vset.pattern.permute.xlu0 0
      %6920 = vperm.xlu0 %6919, %v6850
      %v6921 = vpop.permute.xlu0 %6920
      %6924 = vset.pattern.permute.xlu0 0
      %6925 = vperm.xlu0 %6924, %v6851
      %v6926 = vpop.permute.xlu0 %6925
      %6929 = vset.pattern.permute.xlu0 0
      %6930 = vperm.xlu0 %6929, %v6852
      %v6931 = vpop.permute.xlu0 %6930
      %6934 = vset.pattern.permute.xlu0 0
      %6935 = vperm.xlu0 %6934, %v6853
      %v6936 = vpop.permute.xlu0 %6935
      %6939 = vset.pattern.permute.xlu0 0
      %6940 = vperm.xlu0 %6939, %v6854
      %v6941 = vpop.permute.xlu0 %6940
      %6944 = vset.pattern.permute.xlu0 0
      %6945 = vperm.xlu0 %6944, %v6855
      %v6946 = vpop.permute.xlu0 %6945
      %6949 = vset.pattern.permute.xlu0 0
      %6950 = vperm.xlu0 %6949, %v6856
      %v6951 = vpop.permute.xlu0 %6950
      %6954 = vset.pattern.permute.xlu0 0
      %6955 = vperm.xlu0 %6954, %v6857
      %v6956 = vpop.permute.xlu0 %6955
      %6959 = vset.pattern.permute.xlu0 0
      %6960 = vperm.xlu0 %6959, %v6858
      %v6961 = vpop.permute.xlu0 %6960
      %6964 = vset.pattern.permute.xlu0 0
      %6965 = vperm.xlu0 %6964, %v6859
      %v6966 = vpop.permute.xlu0 %6965
      %6969 = vset.pattern.permute.xlu0 0
      %6970 = vperm.xlu0 %6969, %v6860
      %v6971 = vpop.permute.xlu0 %6970
      %6974 = vset.pattern.permute.xlu0 0
      %6975 = vperm.xlu0 %6974, %v6861
      %v6976 = vpop.permute.xlu0 %6975
      %6979 = vset.pattern.permute.xlu0 0
      %6980 = vperm.xlu0 %6979, %v6862
      %v6981 = vpop.permute.xlu0 %6980
      %6984 = vset.pattern.permute.xlu0 0
      %6985 = vperm.xlu0 %6984, %v6863
      %v6986 = vpop.permute.xlu0 %6985
      %6989 = vset.pattern.permute.xlu0 0
      %6990 = vperm.xlu0 %6989, %v6864
      %v6991 = vpop.permute.xlu0 %6990
      %6994 = vset.pattern.permute.xlu0 0
      %6995 = vperm.xlu0 %6994, %v6865
      %v6996 = vpop.permute.xlu0 %6995
      %6999 = vset.pattern.permute.xlu0 0
      %7000 = vperm.xlu0 %6999, %v6866
      %v7001 = vpop.permute.xlu0 %7000
      %7004 = vset.pattern.permute.xlu0 0
      %7005 = vperm.xlu0 %7004, %v6867
      %v7006 = vpop.permute.xlu0 %7005
      %7009 = vset.pattern.permute.xlu0 0
      %7010 = vperm.xlu0 %7009, %v6868
      %v7011 = vpop.permute.xlu0 %7010
      %7014 = vset.pattern.permute.xlu0 0
      %7015 = vperm.xlu0 %7014, %v6869
      %v7016 = vpop.permute.xlu0 %7015
      %7019 = vset.pattern.permute.xlu0 0
      %7020 = vperm.xlu0 %7019, %v6870
      %v7021 = vpop.permute.xlu0 %7020
      %7024 = vset.pattern.permute.xlu0 0
      %7025 = vperm.xlu0 %7024, %v6871
      %v7026 = vpop.permute.xlu0 %7025
      %7029 = vset.pattern.permute.xlu0 0
      %7030 = vperm.xlu0 %7029, %v6872
      %v7031 = vpop.permute.xlu0 %7030
      %7034 = vset.pattern.permute.xlu0 0
      %7035 = vperm.xlu0 %7034, %v6873
      %v7036 = vpop.permute.xlu0 %7035
      %7039 = vset.pattern.permute.xlu0 0
      %7040 = vperm.xlu0 %7039, %v6874
      %v7041 = vpop.permute.xlu0 %7040
      %7044 = vset.pattern.permute.xlu0 0
      %7045 = vperm.xlu0 %7044, %v6875
      %v7046 = vpop.permute.xlu0 %7045
      %7049 = vset.pattern.permute.xlu0 0
      %7050 = vperm.xlu0 %7049, %v6876
      %v7051 = vpop.permute.xlu0 %7050
      %7054 = vset.pattern.permute.xlu0 0
      %7055 = vperm.xlu0 %7054, %v6877
      %v7056 = vpop.permute.xlu0 %7055
      %7059 = vset.pattern.permute.xlu0 0
      %7060 = vperm.xlu0 %7059, %v6878
      %v7061 = vpop.permute.xlu0 %7060
      %7064 = vset.pattern.permute.xlu0 0
      %7065 = vperm.xlu0 %7064, %v6879
      %v7066 = vpop.permute.xlu0 %7065
      %7069 = vset.pattern.permute.xlu0 0
      %7070 = vperm.xlu0 %7069, %v6880
      %v7071 = vpop.permute.xlu0 %7070
      %7074 = vset.pattern.permute.xlu0 0
      %7075 = vperm.xlu0 %7074, %v6881
      %v7076 = vpop.permute.xlu0 %7075
      %7079 = vset.pattern.permute.xlu0 0
      %7080 = vperm.xlu0 %7079, %v6882
      %v7081 = vpop.permute.xlu0 %7080
      %7084 = vset.pattern.permute.xlu0 0
      %7085 = vperm.xlu0 %7084, %v6883
      %v7086 = vpop.permute.xlu0 %7085
      %7089 = vset.pattern.permute.xlu0 0
      %7090 = vperm.xlu0 %7089, %v6884
      %v7091 = vpop.permute.xlu0 %7090
      %7094 = vset.pattern.permute.xlu0 0
      %7095 = vperm.xlu0 %7094, %v6885
      %v7096 = vpop.permute.xlu0 %7095
      %7099 = vset.pattern.permute.xlu0 0
      %7100 = vperm.xlu0 %7099, %v6886
      %v7101 = vpop.permute.xlu0 %7100
      %7104 = vset.pattern.permute.xlu0 0
      %7105 = vperm.xlu0 %7104, %v6887
      %v7106 = vpop.permute.xlu0 %7105
      %7109 = vset.pattern.permute.xlu0 0
      %7110 = vperm.xlu0 %7109, %v6888
      %v7111 = vpop.permute.xlu0 %7110
      %7114 = vset.pattern.permute.xlu0 0
      %7115 = vperm.xlu0 %7114, %v6889
      %v7116 = vpop.permute.xlu0 %7115
      %7119 = vset.pattern.permute.xlu0 0
      %7120 = vperm.xlu0 %7119, %v6890
      %v7121 = vpop.permute.xlu0 %7120
      %7124 = vset.pattern.permute.xlu0 0
      %7125 = vperm.xlu0 %7124, %v6891
      %v7126 = vpop.permute.xlu0 %7125
      %7129 = vset.pattern.permute.xlu0 0
      %7130 = vperm.xlu0 %7129, %v6892
      %v7131 = vpop.permute.xlu0 %7130
      %7134 = vset.pattern.permute.xlu0 0
      %7135 = vperm.xlu0 %7134, %v6893
      %v7136 = vpop.permute.xlu0 %7135
      %7139 = vset.pattern.permute.xlu0 0
      %7140 = vperm.xlu0 %7139, %v6894
      %v7141 = vpop.permute.xlu0 %7140
      %7144 = vset.pattern.permute.xlu0 0
      %7145 = vperm.xlu0 %7144, %v6895
      %v7146 = vpop.permute.xlu0 %7145
      %7149 = vset.pattern.permute.xlu0 0
      %7150 = vperm.xlu0 %7149, %v6896
      %v7151 = vpop.permute.xlu0 %7150
      %7154 = vset.pattern.permute.xlu0 0
      %7155 = vperm.xlu0 %7154, %v6897
      %v7156 = vpop.permute.xlu0 %7155
      %7159 = vset.pattern.permute.xlu0 0
      %7160 = vperm.xlu0 %7159, %v6898
      %v7161 = vpop.permute.xlu0 %7160
      %7164 = vset.pattern.permute.xlu0 0
      %7165 = vperm.xlu0 %7164, %v6899
      %v7166 = vpop.permute.xlu0 %7165
      %7169 = vset.pattern.permute.xlu0 0
      %7170 = vperm.xlu0 %7169, %v6900
      %v7171 = vpop.permute.xlu0 %7170
      %7174 = vset.pattern.permute.xlu0 0
      %7175 = vperm.xlu0 %7174, %v6901
      %v7176 = vpop.permute.xlu0 %7175
      %7179 = vset.pattern.permute.xlu0 0
      %7180 = vperm.xlu0 %7179, %v6902
      %v7181 = vpop.permute.xlu0 %7180
      %7184 = vset.pattern.permute.xlu0 0
      %7185 = vperm.xlu0 %7184, %v6903
      %v7186 = vpop.permute.xlu0 %7185
      %7189 = vset.pattern.permute.xlu0 0
      %7190 = vperm.xlu0 %7189, %v6904
      %v7191 = vpop.permute.xlu0 %7190
      %7194 = vset.pattern.permute.xlu0 0
      %7195 = vperm.xlu0 %7194, %v6905
      %v7196 = vpop.permute.xlu0 %7195
      %7199 = vset.pattern.permute.xlu0 0
      %7200 = vperm.xlu0 %7199, %v6906
      %v7201 = vpop.permute.xlu0 %7200
      %7204 = vset.pattern.permute.xlu0 0
      %7205 = vperm.xlu0 %7204, %v6907
      %v7206 = vpop.permute.xlu0 %7205
      %7209 = vset.pattern.permute.xlu0 0
      %7210 = vperm.xlu0 %7209, %v6908
      %v7211 = vpop.permute.xlu0 %7210
      %7214 = vset.pattern.permute.xlu0 0
      %7215 = vperm.xlu0 %7214, %v6909
      %v7216 = vpop.permute.xlu0 %7215
      %7219 = vset.pattern.permute.xlu0 0
      %7220 = vperm.xlu0 %7219, %v6910
      %v7221 = vpop.permute.xlu0 %7220
      %7224 = vset.pattern.permute.xlu0 0
      %7225 = vperm.xlu0 %7224, %v6911
      %v7226 = vpop.permute.xlu0 %7225
      %7229 = vset.pattern.permute.xlu0 0
      %7230 = vperm.xlu0 %7229, %v6912
      %v7231 = vpop.permute.xlu0 %7230
      %v7297 = vunpack.c.l.b16 %v6753
      %v7298 = vunpack.c.h.b16 %v6753
      %v7299 = vunpack.c.l.b16 %v6754
      %v7300 = vunpack.c.h.b16 %v6754
      %v7301 = vunpack.c.l.b16 %v6755
      %v7302 = vunpack.c.h.b16 %v6755
      %v7303 = vunpack.c.l.b16 %v6756
      %v7304 = vunpack.c.h.b16 %v6756
      %v7305 = vunpack.c.l.b16 %v6757
      %v7306 = vunpack.c.h.b16 %v6757
      %v7307 = vunpack.c.l.b16 %v6758
      %v7308 = vunpack.c.h.b16 %v6758
      %v7309 = vunpack.c.l.b16 %v6759
      %v7310 = vunpack.c.h.b16 %v6759
      %v7311 = vunpack.c.l.b16 %v6760
      %v7312 = vunpack.c.h.b16 %v6760
      %v7313 = vunpack.c.l.b16 %v6761
      %v7314 = vunpack.c.h.b16 %v6761
      %v7315 = vunpack.c.l.b16 %v6762
      %v7316 = vunpack.c.h.b16 %v6762
      %v7317 = vunpack.c.l.b16 %v6763
      %v7318 = vunpack.c.h.b16 %v6763
      %v7319 = vunpack.c.l.b16 %v6764
      %v7320 = vunpack.c.h.b16 %v6764
      %v7321 = vunpack.c.l.b16 %v6765
      %v7322 = vunpack.c.h.b16 %v6765
      %v7323 = vunpack.c.l.b16 %v6766
      %v7324 = vunpack.c.h.b16 %v6766
      %v7325 = vunpack.c.l.b16 %v6767
      %v7326 = vunpack.c.h.b16 %v6767
      %v7327 = vunpack.c.l.b16 %v6768
      %v7328 = vunpack.c.h.b16 %v6768
      %v7329 = vunpack.c.l.b16 %v6769
      %v7330 = vunpack.c.h.b16 %v6769
      %v7331 = vunpack.c.l.b16 %v6770
      %v7332 = vunpack.c.h.b16 %v6770
      %v7333 = vunpack.c.l.b16 %v6771
      %v7334 = vunpack.c.h.b16 %v6771
      %v7335 = vunpack.c.l.b16 %v6772
      %v7336 = vunpack.c.h.b16 %v6772
      %v7337 = vunpack.c.l.b16 %v6773
      %v7338 = vunpack.c.h.b16 %v6773
      %v7339 = vunpack.c.l.b16 %v6774
      %v7340 = vunpack.c.h.b16 %v6774
      %v7341 = vunpack.c.l.b16 %v6775
      %v7342 = vunpack.c.h.b16 %v6775
      %v7343 = vunpack.c.l.b16 %v6776
      %v7344 = vunpack.c.h.b16 %v6776
      %v7345 = vunpack.c.l.b16 %v6777
      %v7346 = vunpack.c.h.b16 %v6777
      %v7347 = vunpack.c.l.b16 %v6778
      %v7348 = vunpack.c.h.b16 %v6778
      %v7349 = vunpack.c.l.b16 %v6779
      %v7350 = vunpack.c.h.b16 %v6779
      %v7351 = vunpack.c.l.b16 %v6780
      %v7352 = vunpack.c.h.b16 %v6780
      %v7353 = vunpack.c.l.b16 %v6781
      %v7354 = vunpack.c.h.b16 %v6781
      %v7355 = vunpack.c.l.b16 %v6782
      %v7356 = vunpack.c.h.b16 %v6782
      %v7357 = vunpack.c.l.b16 %v6783
      %v7358 = vunpack.c.h.b16 %v6783
      %v7359 = vunpack.c.l.b16 %v6784
      %v7360 = vunpack.c.h.b16 %v6784
      %v7361 = vunpack.c.l.b16 %v6785
      %v7362 = vunpack.c.h.b16 %v6785
      %v7363 = vunpack.c.l.b16 %v6786
      %v7364 = vunpack.c.h.b16 %v6786
      %v7365 = vunpack.c.l.b16 %v6787
      %v7366 = vunpack.c.h.b16 %v6787
      %v7367 = vunpack.c.l.b16 %v6788
      %v7368 = vunpack.c.h.b16 %v6788
      %v7369 = vunpack.c.l.b16 %v6789
      %v7370 = vunpack.c.h.b16 %v6789
      %v7371 = vunpack.c.l.b16 %v6790
      %v7372 = vunpack.c.h.b16 %v6790
      %v7373 = vunpack.c.l.b16 %v6791
      %v7374 = vunpack.c.h.b16 %v6791
      %v7375 = vunpack.c.l.b16 %v6792
      %v7376 = vunpack.c.h.b16 %v6792
      %v7377 = vunpack.c.l.b16 %v6793
      %v7378 = vunpack.c.h.b16 %v6793
      %v7379 = vunpack.c.l.b16 %v6794
      %v7380 = vunpack.c.h.b16 %v6794
      %v7381 = vunpack.c.l.b16 %v6795
      %v7382 = vunpack.c.h.b16 %v6795
      %v7383 = vunpack.c.l.b16 %v6796
      %v7384 = vunpack.c.h.b16 %v6796
      %v7385 = vunpack.c.l.b16 %v6797
      %v7386 = vunpack.c.h.b16 %v6797
      %v7387 = vunpack.c.l.b16 %v6798
      %v7388 = vunpack.c.h.b16 %v6798
      %v7389 = vunpack.c.l.b16 %v6799
      %v7390 = vunpack.c.h.b16 %v6799
      %v7391 = vunpack.c.l.b16 %v6800
      %v7392 = vunpack.c.h.b16 %v6800
      %v7393 = vunpack.c.l.b16 %v6801
      %v7394 = vunpack.c.h.b16 %v6801
      %v7395 = vunpack.c.l.b16 %v6802
      %v7396 = vunpack.c.h.b16 %v6802
      %v7397 = vunpack.c.l.b16 %v6803
      %v7398 = vunpack.c.h.b16 %v6803
      %v7399 = vunpack.c.l.b16 %v6804
      %v7400 = vunpack.c.h.b16 %v6804
      %v7401 = vunpack.c.l.b16 %v6805
      %v7402 = vunpack.c.h.b16 %v6805
      %v7403 = vunpack.c.l.b16 %v6806
      %v7404 = vunpack.c.h.b16 %v6806
      %v7405 = vunpack.c.l.b16 %v6807
      %v7406 = vunpack.c.h.b16 %v6807
      %v7407 = vunpack.c.l.b16 %v6808
      %v7408 = vunpack.c.h.b16 %v6808
      %v7409 = vunpack.c.l.b16 %v6809
      %v7410 = vunpack.c.h.b16 %v6809
      %v7411 = vunpack.c.l.b16 %v6810
      %v7412 = vunpack.c.h.b16 %v6810
      %v7413 = vunpack.c.l.b16 %v6811
      %v7414 = vunpack.c.h.b16 %v6811
      %v7415 = vunpack.c.l.b16 %v6812
      %v7416 = vunpack.c.h.b16 %v6812
      %v7417 = vunpack.c.l.b16 %v6813
      %v7418 = vunpack.c.h.b16 %v6813
      %v7419 = vunpack.c.l.b16 %v6814
      %v7420 = vunpack.c.h.b16 %v6814
      %v7421 = vunpack.c.l.b16 %v6815
      %v7422 = vunpack.c.h.b16 %v6815
      %v7423 = vunpack.c.l.b16 %v6816
      %v7424 = vunpack.c.h.b16 %v6816
      %v7425 = vpack.c.b16 %v7299, %v7297
      %v7426 = vpack.c.b16 %v7300, %v7298
      %v7427 = vpack.c.b16 %v7303, %v7301
      %v7428 = vpack.c.b16 %v7304, %v7302
      %v7429 = vpack.c.b16 %v7307, %v7305
      %v7430 = vpack.c.b16 %v7308, %v7306
      %v7431 = vpack.c.b16 %v7311, %v7309
      %v7432 = vpack.c.b16 %v7312, %v7310
      %v7433 = vpack.c.b16 %v7315, %v7313
      %v7434 = vpack.c.b16 %v7316, %v7314
      %v7435 = vpack.c.b16 %v7319, %v7317
      %v7436 = vpack.c.b16 %v7320, %v7318
      %v7437 = vpack.c.b16 %v7323, %v7321
      %v7438 = vpack.c.b16 %v7324, %v7322
      %v7439 = vpack.c.b16 %v7327, %v7325
      %v7440 = vpack.c.b16 %v7328, %v7326
      %v7441 = vpack.c.b16 %v7331, %v7329
      %v7442 = vpack.c.b16 %v7332, %v7330
      %v7443 = vpack.c.b16 %v7335, %v7333
      %v7444 = vpack.c.b16 %v7336, %v7334
      %v7445 = vpack.c.b16 %v7339, %v7337
      %v7446 = vpack.c.b16 %v7340, %v7338
      %v7447 = vpack.c.b16 %v7343, %v7341
      %v7448 = vpack.c.b16 %v7344, %v7342
      %v7449 = vpack.c.b16 %v7347, %v7345
      %v7450 = vpack.c.b16 %v7348, %v7346
      %v7451 = vpack.c.b16 %v7351, %v7349
      %v7452 = vpack.c.b16 %v7352, %v7350
      %v7453 = vpack.c.b16 %v7355, %v7353
      %v7454 = vpack.c.b16 %v7356, %v7354
      %v7455 = vpack.c.b16 %v7359, %v7357
      %v7456 = vpack.c.b16 %v7360, %v7358
      %v7457 = vpack.c.b16 %v7363, %v7361
      %v7458 = vpack.c.b16 %v7364, %v7362
      %v7459 = vpack.c.b16 %v7367, %v7365
      %v7460 = vpack.c.b16 %v7368, %v7366
      %v7461 = vpack.c.b16 %v7371, %v7369
      %v7462 = vpack.c.b16 %v7372, %v7370
      %v7463 = vpack.c.b16 %v7375, %v7373
      %v7464 = vpack.c.b16 %v7376, %v7374
      %v7465 = vpack.c.b16 %v7379, %v7377
      %v7466 = vpack.c.b16 %v7380, %v7378
      %v7467 = vpack.c.b16 %v7383, %v7381
      %v7468 = vpack.c.b16 %v7384, %v7382
      %v7469 = vpack.c.b16 %v7387, %v7385
      %v7470 = vpack.c.b16 %v7388, %v7386
      %v7471 = vpack.c.b16 %v7391, %v7389
      %v7472 = vpack.c.b16 %v7392, %v7390
      %v7473 = vpack.c.b16 %v7395, %v7393
      %v7474 = vpack.c.b16 %v7396, %v7394
      %v7475 = vpack.c.b16 %v7399, %v7397
      %v7476 = vpack.c.b16 %v7400, %v7398
      %v7477 = vpack.c.b16 %v7403, %v7401
      %v7478 = vpack.c.b16 %v7404, %v7402
      %v7479 = vpack.c.b16 %v7407, %v7405
      %v7480 = vpack.c.b16 %v7408, %v7406
      %v7481 = vpack.c.b16 %v7411, %v7409
      %v7482 = vpack.c.b16 %v7412, %v7410
      %v7483 = vpack.c.b16 %v7415, %v7413
      %v7484 = vpack.c.b16 %v7416, %v7414
      %v7485 = vpack.c.b16 %v7419, %v7417
      %v7486 = vpack.c.b16 %v7420, %v7418
      %v7487 = vpack.c.b16 %v7423, %v7421
      %v7488 = vpack.c.b16 %v7424, %v7422
      %7553 = vmatprep.subr.bf16.mxu0 %v6832
      %7554 = vmatpush1.bf16.msra.mxu0 %v6831
      %7555 = vmatprep.subr.bf16.mxu0 %v6830
      %7556 = vmatpush1.bf16.msra.mxu0 %v6829
      %7557 = vmatprep.subr.bf16.mxu0 %v6828
      %7558 = vmatpush1.bf16.msra.mxu0 %v6827
      %7559 = vmatprep.subr.bf16.mxu0 %v6826
      %7560 = vmatpush1.bf16.msra.mxu0 %v6825
      %7561 = vmatprep.subr.bf16.mxu0 %v6824
      %7562 = vmatpush1.bf16.msra.mxu0 %v6823
      %7563 = vmatprep.subr.bf16.mxu0 %v6822
      %7564 = vmatpush1.bf16.msra.mxu0 %v6821
      %7565 = vmatprep.subr.bf16.mxu0 %v6820
      %7566 = vmatpush1.bf16.msra.mxu0 %v6819
      %7567 = vmatprep.subr.bf16.mxu0 %v6818
      %7568 = vmatpush1.bf16.msra.mxu0 %v6817
      %7569 = vmatprep.subr.bf16.mxu0 %v6848
      %7570 = vmatpush2.bf16.msra.mxu0 %v6847
      %7571 = vmatprep.subr.bf16.mxu0 %v6846
      %7572 = vmatpush2.bf16.msra.mxu0 %v6845
      %7573 = vmatprep.subr.bf16.mxu0 %v6844
      %7574 = vmatpush2.bf16.msra.mxu0 %v6843
      %7575 = vmatprep.subr.bf16.mxu0 %v6842
      %7576 = vmatpush2.bf16.msra.mxu0 %v6841
      %7577 = vmatprep.subr.bf16.mxu0 %v6840
      %7578 = vmatpush2.bf16.msra.mxu0 %v6839
      %7579 = vmatprep.subr.bf16.mxu0 %v6838
      %7580 = vmatpush2.bf16.msra.mxu0 %v6837
      %7581 = vmatprep.subr.bf16.mxu0 %v6836
      %7582 = vmatpush2.bf16.msra.mxu0 %v6835
      %7583 = vmatprep.subr.bf16.mxu0 %v6834
      %7584 = vmatpush2.bf16.msra.mxu0 %v6833
      %7585 = vmatprep.mubr.bf16.mxu0 %v7426
      %7586 = vmatmul.mubr.bf16.gmra.mxu0 %v7425
      %v7587 = vpop.f32.mrf.mxu0
      %v7588 = vadd.f32 %v6916, %v7587
      %v7589 = vpop.f32.mrf.mxu0
      %v7590 = vadd.f32 %v6916, %v7589
      %v7591 = vpop.f32.mrf.mxu0
      %v7592 = vadd.f32 %v6921, %v7591
      %v7593 = vpop.f32.mrf.mxu0
      %v7594 = vadd.f32 %v6921, %v7593
      %7595 = vmatprep.mubr.bf16.mxu0 %v7428
      %7596 = vmatmul.mubr.bf16.gmra.mxu0 %v7427
      %v7597 = vpop.f32.mrf.mxu0
      %v7598 = vadd.f32 %v6926, %v7597
      %v7599 = vpop.f32.mrf.mxu0
      %v7600 = vadd.f32 %v6926, %v7599
      %v7601 = vpop.f32.mrf.mxu0
      %v7602 = vadd.f32 %v6931, %v7601
      %v7603 = vpop.f32.mrf.mxu0
      %v7604 = vadd.f32 %v6931, %v7603
      %7605 = vmatprep.mubr.bf16.mxu0 %v7430
      %7606 = vmatmul.mubr.bf16.gmra.mxu0 %v7429
      %v7607 = vpop.f32.mrf.mxu0
      %v7608 = vadd.f32 %v6936, %v7607
      %v7609 = vpop.f32.mrf.mxu0
      %v7610 = vadd.f32 %v6936, %v7609
      %v7611 = vpop.f32.mrf.mxu0
      %v7612 = vadd.f32 %v6941, %v7611
      %v7613 = vpop.f32.mrf.mxu0
      %v7614 = vadd.f32 %v6941, %v7613
      %7615 = vmatprep.mubr.bf16.mxu0 %v7432
      %7616 = vmatmul.mubr.bf16.gmra.mxu0 %v7431
      %v7617 = vpop.f32.mrf.mxu0
      %v7618 = vadd.f32 %v6946, %v7617
      %v7619 = vpop.f32.mrf.mxu0
      %v7620 = vadd.f32 %v6946, %v7619
      %v7621 = vpop.f32.mrf.mxu0
      %v7622 = vadd.f32 %v6951, %v7621
      %v7623 = vpop.f32.mrf.mxu0
      %v7624 = vadd.f32 %v6951, %v7623
      %7625 = vmatprep.mubr.bf16.mxu0 %v7434
      %7626 = vmatmul.mubr.bf16.gmra.mxu0 %v7433
      %v7627 = vpop.f32.mrf.mxu0
      %v7628 = vadd.f32 %v6956, %v7627
      %v7629 = vpop.f32.mrf.mxu0
      %v7630 = vadd.f32 %v6956, %v7629
      %v7631 = vpop.f32.mrf.mxu0
      %v7632 = vadd.f32 %v6961, %v7631
      %v7633 = vpop.f32.mrf.mxu0
      %v7634 = vadd.f32 %v6961, %v7633
      %7635 = vmatprep.mubr.bf16.mxu0 %v7436
      %7636 = vmatmul.mubr.bf16.gmra.mxu0 %v7435
      %v7637 = vpop.f32.mrf.mxu0
      %v7638 = vadd.f32 %v6966, %v7637
      %v7639 = vpop.f32.mrf.mxu0
      %v7640 = vadd.f32 %v6966, %v7639
      %v7641 = vpop.f32.mrf.mxu0
      %v7642 = vadd.f32 %v6971, %v7641
      %v7643 = vpop.f32.mrf.mxu0
      %v7644 = vadd.f32 %v6971, %v7643
      %7645 = vmatprep.mubr.bf16.mxu0 %v7438
      %7646 = vmatmul.mubr.bf16.gmra.mxu0 %v7437
      %v7647 = vpop.f32.mrf.mxu0
      %v7648 = vadd.f32 %v6976, %v7647
      %v7649 = vpop.f32.mrf.mxu0
      %v7650 = vadd.f32 %v6976, %v7649
      %v7651 = vpop.f32.mrf.mxu0
      %v7652 = vadd.f32 %v6981, %v7651
      %v7653 = vpop.f32.mrf.mxu0
      %v7654 = vadd.f32 %v6981, %v7653
      %7655 = vmatprep.mubr.bf16.mxu0 %v7440
      %7656 = vmatmul.mubr.bf16.gmra.mxu0 %v7439
      %v7657 = vpop.f32.mrf.mxu0
      %v7658 = vadd.f32 %v6986, %v7657
      %v7659 = vpop.f32.mrf.mxu0
      %v7660 = vadd.f32 %v6986, %v7659
      %v7661 = vpop.f32.mrf.mxu0
      %v7662 = vadd.f32 %v6991, %v7661
      %v7663 = vpop.f32.mrf.mxu0
      %v7664 = vadd.f32 %v6991, %v7663
      %7665 = vmatprep.mubr.bf16.mxu0 %v7442
      %7666 = vmatmul.mubr.bf16.gmra.mxu0 %v7441
      %v7667 = vpop.f32.mrf.mxu0
      %v7668 = vadd.f32 %v6996, %v7667
      %v7669 = vpop.f32.mrf.mxu0
      %v7670 = vadd.f32 %v6996, %v7669
      %v7671 = vpop.f32.mrf.mxu0
      %v7672 = vadd.f32 %v7001, %v7671
      %v7673 = vpop.f32.mrf.mxu0
      %v7674 = vadd.f32 %v7001, %v7673
      %7675 = vmatprep.mubr.bf16.mxu0 %v7444
      %7676 = vmatmul.mubr.bf16.gmra.mxu0 %v7443
      %v7677 = vpop.f32.mrf.mxu0
      %v7678 = vadd.f32 %v7006, %v7677
      %v7679 = vpop.f32.mrf.mxu0
      %v7680 = vadd.f32 %v7006, %v7679
      %v7681 = vpop.f32.mrf.mxu0
      %v7682 = vadd.f32 %v7011, %v7681
      %v7683 = vpop.f32.mrf.mxu0
      %v7684 = vadd.f32 %v7011, %v7683
      %7685 = vmatprep.mubr.bf16.mxu0 %v7446
      %7686 = vmatmul.mubr.bf16.gmra.mxu0 %v7445
      %v7687 = vpop.f32.mrf.mxu0
      %v7688 = vadd.f32 %v7016, %v7687
      %v7689 = vpop.f32.mrf.mxu0
      %v7690 = vadd.f32 %v7016, %v7689
      %v7691 = vpop.f32.mrf.mxu0
      %v7692 = vadd.f32 %v7021, %v7691
      %v7693 = vpop.f32.mrf.mxu0
      %v7694 = vadd.f32 %v7021, %v7693
      %7695 = vmatprep.mubr.bf16.mxu0 %v7448
      %7696 = vmatmul.mubr.bf16.gmra.mxu0 %v7447
      %v7697 = vpop.f32.mrf.mxu0
      %v7698 = vadd.f32 %v7026, %v7697
      %v7699 = vpop.f32.mrf.mxu0
      %v7700 = vadd.f32 %v7026, %v7699
      %v7701 = vpop.f32.mrf.mxu0
      %v7702 = vadd.f32 %v7031, %v7701
      %v7703 = vpop.f32.mrf.mxu0
      %v7704 = vadd.f32 %v7031, %v7703
      %7705 = vmatprep.mubr.bf16.mxu0 %v7450
      %7706 = vmatmul.mubr.bf16.gmra.mxu0 %v7449
      %v7707 = vpop.f32.mrf.mxu0
      %v7708 = vadd.f32 %v7036, %v7707
      %v7709 = vpop.f32.mrf.mxu0
      %v7710 = vadd.f32 %v7036, %v7709
      %v7711 = vpop.f32.mrf.mxu0
      %v7712 = vadd.f32 %v7041, %v7711
      %v7713 = vpop.f32.mrf.mxu0
      %v7714 = vadd.f32 %v7041, %v7713
      %7715 = vmatprep.mubr.bf16.mxu0 %v7452
      %7716 = vmatmul.mubr.bf16.gmra.mxu0 %v7451
      %v7717 = vpop.f32.mrf.mxu0
      %v7718 = vadd.f32 %v7046, %v7717
      %v7719 = vpop.f32.mrf.mxu0
      %v7720 = vadd.f32 %v7046, %v7719
      %v7721 = vpop.f32.mrf.mxu0
      %v7722 = vadd.f32 %v7051, %v7721
      %v7723 = vpop.f32.mrf.mxu0
      %v7724 = vadd.f32 %v7051, %v7723
      %7725 = vmatprep.mubr.bf16.mxu0 %v7454
      %7726 = vmatmul.mubr.bf16.gmra.mxu0 %v7453
      %v7727 = vpop.f32.mrf.mxu0
      %v7728 = vadd.f32 %v7056, %v7727
      %v7729 = vpop.f32.mrf.mxu0
      %v7730 = vadd.f32 %v7056, %v7729
      %v7731 = vpop.f32.mrf.mxu0
      %v7732 = vadd.f32 %v7061, %v7731
      %v7733 = vpop.f32.mrf.mxu0
      %v7734 = vadd.f32 %v7061, %v7733
      %7735 = vmatprep.mubr.bf16.mxu0 %v7456
      %7736 = vmatmul.mubr.bf16.gmra.mxu0 %v7455
      %v7737 = vpop.f32.mrf.mxu0
      %v7738 = vadd.f32 %v7066, %v7737
      %v7739 = vpop.f32.mrf.mxu0
      %v7740 = vadd.f32 %v7066, %v7739
      %v7741 = vpop.f32.mrf.mxu0
      %v7742 = vadd.f32 %v7071, %v7741
      %v7743 = vpop.f32.mrf.mxu0
      %v7744 = vadd.f32 %v7071, %v7743
      %7745 = vmatprep.mubr.bf16.mxu0 %v7458
      %7746 = vmatmul.mubr.bf16.gmra.mxu0 %v7457
      %v7747 = vpop.f32.mrf.mxu0
      %v7748 = vadd.f32 %v7076, %v7747
      %v7749 = vpop.f32.mrf.mxu0
      %v7750 = vadd.f32 %v7076, %v7749
      %v7751 = vpop.f32.mrf.mxu0
      %v7752 = vadd.f32 %v7081, %v7751
      %v7753 = vpop.f32.mrf.mxu0
      %v7754 = vadd.f32 %v7081, %v7753
      %7755 = vmatprep.mubr.bf16.mxu0 %v7460
      %7756 = vmatmul.mubr.bf16.gmra.mxu0 %v7459
      %v7757 = vpop.f32.mrf.mxu0
      %v7758 = vadd.f32 %v7086, %v7757
      %v7759 = vpop.f32.mrf.mxu0
      %v7760 = vadd.f32 %v7086, %v7759
      %v7761 = vpop.f32.mrf.mxu0
      %v7762 = vadd.f32 %v7091, %v7761
      %v7763 = vpop.f32.mrf.mxu0
      %v7764 = vadd.f32 %v7091, %v7763
      %7765 = vmatprep.mubr.bf16.mxu0 %v7462
      %7766 = vmatmul.mubr.bf16.gmra.mxu0 %v7461
      %v7767 = vpop.f32.mrf.mxu0
      %v7768 = vadd.f32 %v7096, %v7767
      %v7769 = vpop.f32.mrf.mxu0
      %v7770 = vadd.f32 %v7096, %v7769
      %v7771 = vpop.f32.mrf.mxu0
      %v7772 = vadd.f32 %v7101, %v7771
      %v7773 = vpop.f32.mrf.mxu0
      %v7774 = vadd.f32 %v7101, %v7773
      %7775 = vmatprep.mubr.bf16.mxu0 %v7464
      %7776 = vmatmul.mubr.bf16.gmra.mxu0 %v7463
      %v7777 = vpop.f32.mrf.mxu0
      %v7778 = vadd.f32 %v7106, %v7777
      %v7779 = vpop.f32.mrf.mxu0
      %v7780 = vadd.f32 %v7106, %v7779
      %v7781 = vpop.f32.mrf.mxu0
      %v7782 = vadd.f32 %v7111, %v7781
      %v7783 = vpop.f32.mrf.mxu0
      %v7784 = vadd.f32 %v7111, %v7783
      %7785 = vmatprep.mubr.bf16.mxu0 %v7466
      %7786 = vmatmul.mubr.bf16.gmra.mxu0 %v7465
      %v7787 = vpop.f32.mrf.mxu0
      %v7788 = vadd.f32 %v7116, %v7787
      %v7789 = vpop.f32.mrf.mxu0
      %v7790 = vadd.f32 %v7116, %v7789
      %v7791 = vpop.f32.mrf.mxu0
      %v7792 = vadd.f32 %v7121, %v7791
      %v7793 = vpop.f32.mrf.mxu0
      %v7794 = vadd.f32 %v7121, %v7793
      %7795 = vmatprep.mubr.bf16.mxu0 %v7468
      %7796 = vmatmul.mubr.bf16.gmra.mxu0 %v7467
      %v7797 = vpop.f32.mrf.mxu0
      %v7798 = vadd.f32 %v7126, %v7797
      %v7799 = vpop.f32.mrf.mxu0
      %v7800 = vadd.f32 %v7126, %v7799
      %v7801 = vpop.f32.mrf.mxu0
      %v7802 = vadd.f32 %v7131, %v7801
      %v7803 = vpop.f32.mrf.mxu0
      %v7804 = vadd.f32 %v7131, %v7803
      %7805 = vmatprep.mubr.bf16.mxu0 %v7470
      %7806 = vmatmul.mubr.bf16.gmra.mxu0 %v7469
      %v7807 = vpop.f32.mrf.mxu0
      %v7808 = vadd.f32 %v7136, %v7807
      %v7809 = vpop.f32.mrf.mxu0
      %v7810 = vadd.f32 %v7136, %v7809
      %v7811 = vpop.f32.mrf.mxu0
      %v7812 = vadd.f32 %v7141, %v7811
      %v7813 = vpop.f32.mrf.mxu0
      %v7814 = vadd.f32 %v7141, %v7813
      %7815 = vmatprep.mubr.bf16.mxu0 %v7472
      %7816 = vmatmul.mubr.bf16.gmra.mxu0 %v7471
      %v7817 = vpop.f32.mrf.mxu0
      %v7818 = vadd.f32 %v7146, %v7817
      %v7819 = vpop.f32.mrf.mxu0
      %v7820 = vadd.f32 %v7146, %v7819
      %v7821 = vpop.f32.mrf.mxu0
      %v7822 = vadd.f32 %v7151, %v7821
      %v7823 = vpop.f32.mrf.mxu0
      %v7824 = vadd.f32 %v7151, %v7823
      %7825 = vmatprep.mubr.bf16.mxu0 %v7474
      %7826 = vmatmul.mubr.bf16.gmra.mxu0 %v7473
      %v7827 = vpop.f32.mrf.mxu0
      %v7828 = vadd.f32 %v7156, %v7827
      %v7829 = vpop.f32.mrf.mxu0
      %v7830 = vadd.f32 %v7156, %v7829
      %v7831 = vpop.f32.mrf.mxu0
      %v7832 = vadd.f32 %v7161, %v7831
      %v7833 = vpop.f32.mrf.mxu0
      %v7834 = vadd.f32 %v7161, %v7833
      %7835 = vmatprep.mubr.bf16.mxu0 %v7476
      %7836 = vmatmul.mubr.bf16.gmra.mxu0 %v7475
      %v7837 = vpop.f32.mrf.mxu0
      %v7838 = vadd.f32 %v7166, %v7837
      %v7839 = vpop.f32.mrf.mxu0
      %v7840 = vadd.f32 %v7166, %v7839
      %v7841 = vpop.f32.mrf.mxu0
      %v7842 = vadd.f32 %v7171, %v7841
      %v7843 = vpop.f32.mrf.mxu0
      %v7844 = vadd.f32 %v7171, %v7843
      %7845 = vmatprep.mubr.bf16.mxu0 %v7478
      %7846 = vmatmul.mubr.bf16.gmra.mxu0 %v7477
      %v7847 = vpop.f32.mrf.mxu0
      %v7848 = vadd.f32 %v7176, %v7847
      %v7849 = vpop.f32.mrf.mxu0
      %v7850 = vadd.f32 %v7176, %v7849
      %v7851 = vpop.f32.mrf.mxu0
      %v7852 = vadd.f32 %v7181, %v7851
      %v7853 = vpop.f32.mrf.mxu0
      %v7854 = vadd.f32 %v7181, %v7853
      %7855 = vmatprep.mubr.bf16.mxu0 %v7480
      %7856 = vmatmul.mubr.bf16.gmra.mxu0 %v7479
      %v7857 = vpop.f32.mrf.mxu0
      %v7858 = vadd.f32 %v7186, %v7857
      %v7859 = vpop.f32.mrf.mxu0
      %v7860 = vadd.f32 %v7186, %v7859
      %v7861 = vpop.f32.mrf.mxu0
      %v7862 = vadd.f32 %v7191, %v7861
      %v7863 = vpop.f32.mrf.mxu0
      %v7864 = vadd.f32 %v7191, %v7863
      %7865 = vmatprep.mubr.bf16.mxu0 %v7482
      %7866 = vmatmul.mubr.bf16.gmra.mxu0 %v7481
      %v7867 = vpop.f32.mrf.mxu0
      %v7868 = vadd.f32 %v7196, %v7867
      %v7869 = vpop.f32.mrf.mxu0
      %v7870 = vadd.f32 %v7196, %v7869
      %v7871 = vpop.f32.mrf.mxu0
      %v7872 = vadd.f32 %v7201, %v7871
      %v7873 = vpop.f32.mrf.mxu0
      %v7874 = vadd.f32 %v7201, %v7873
      %7875 = vmatprep.mubr.bf16.mxu0 %v7484
      %7876 = vmatmul.mubr.bf16.gmra.mxu0 %v7483
      %v7877 = vpop.f32.mrf.mxu0
      %v7878 = vadd.f32 %v7206, %v7877
      %v7879 = vpop.f32.mrf.mxu0
      %v7880 = vadd.f32 %v7206, %v7879
      %v7881 = vpop.f32.mrf.mxu0
      %v7882 = vadd.f32 %v7211, %v7881
      %v7883 = vpop.f32.mrf.mxu0
      %v7884 = vadd.f32 %v7211, %v7883
      %7885 = vmatprep.mubr.bf16.mxu0 %v7486
      %7886 = vmatmul.mubr.bf16.gmra.mxu0 %v7485
      %v7887 = vpop.f32.mrf.mxu0
      %v7888 = vadd.f32 %v7216, %v7887
      %v7889 = vpop.f32.mrf.mxu0
      %v7890 = vadd.f32 %v7216, %v7889
      %v7891 = vpop.f32.mrf.mxu0
      %v7892 = vadd.f32 %v7221, %v7891
      %v7893 = vpop.f32.mrf.mxu0
      %v7894 = vadd.f32 %v7221, %v7893
      %7895 = vmatprep.mubr.bf16.mxu0 %v7488
      %7896 = vmatmul.mubr.bf16.gmra.mxu0 %v7487
      %v7897 = vpop.f32.mrf.mxu0
      %v7898 = vadd.f32 %v7226, %v7897
      %v7899 = vpop.f32.mrf.mxu0
      %v7900 = vadd.f32 %v7226, %v7899
      %v7901 = vpop.f32.mrf.mxu0
      %v7902 = vadd.f32 %v7231, %v7901
      %v7903 = vpop.f32.mrf.mxu0
      %v7904 = vadd.f32 %v7231, %v7903
      %7905 = vdwg.mxu0
      %v7906 = vadd.f32 %v264, %v7588
      %v7907 = vadd.f32 %v265, %v7590
      %v7908 = vadd.f32 %v266, %v7592
      %v7909 = vadd.f32 %v267, %v7594
      %v7910 = vadd.f32 %v268, %v7598
      %v7911 = vadd.f32 %v269, %v7600
      %v7912 = vadd.f32 %v270, %v7602
      %v7913 = vadd.f32 %v271, %v7604
      %v7914 = vadd.f32 %v272, %v7608
      %v7915 = vadd.f32 %v273, %v7610
      %v7916 = vadd.f32 %v274, %v7612
      %v7917 = vadd.f32 %v275, %v7614
      %v7918 = vadd.f32 %v276, %v7618
      %v7919 = vadd.f32 %v277, %v7620
      %v7920 = vadd.f32 %v278, %v7622
      %v7921 = vadd.f32 %v279, %v7624
      %v7922 = vadd.f32 %v280, %v7628
      %v7923 = vadd.f32 %v281, %v7630
      %v7924 = vadd.f32 %v282, %v7632
      %v7925 = vadd.f32 %v283, %v7634
      %v7926 = vadd.f32 %v284, %v7638
      %v7927 = vadd.f32 %v285, %v7640
      %v7928 = vadd.f32 %v286, %v7642
      %v7929 = vadd.f32 %v287, %v7644
      %v7930 = vadd.f32 %v288, %v7648
      %v7931 = vadd.f32 %v289, %v7650
      %v7932 = vadd.f32 %v290, %v7652
      %v7933 = vadd.f32 %v291, %v7654
      %v7934 = vadd.f32 %v292, %v7658
      %v7935 = vadd.f32 %v293, %v7660
      %v7936 = vadd.f32 %v294, %v7662
      %v7937 = vadd.f32 %v295, %v7664
      %v7938 = vadd.f32 %v296, %v7668
      %v7939 = vadd.f32 %v297, %v7670
      %v7940 = vadd.f32 %v298, %v7672
      %v7941 = vadd.f32 %v299, %v7674
      %v7942 = vadd.f32 %v300, %v7678
      %v7943 = vadd.f32 %v301, %v7680
      %v7944 = vadd.f32 %v302, %v7682
      %v7945 = vadd.f32 %v303, %v7684
      %v7946 = vadd.f32 %v304, %v7688
      %v7947 = vadd.f32 %v305, %v7690
      %v7948 = vadd.f32 %v306, %v7692
      %v7949 = vadd.f32 %v307, %v7694
      %v7950 = vadd.f32 %v308, %v7698
      %v7951 = vadd.f32 %v309, %v7700
      %v7952 = vadd.f32 %v310, %v7702
      %v7953 = vadd.f32 %v311, %v7704
      %v7954 = vadd.f32 %v312, %v7708
      %v7955 = vadd.f32 %v313, %v7710
      %v7956 = vadd.f32 %v314, %v7712
      %v7957 = vadd.f32 %v315, %v7714
      %v7958 = vadd.f32 %v316, %v7718
      %v7959 = vadd.f32 %v317, %v7720
      %v7960 = vadd.f32 %v318, %v7722
      %v7961 = vadd.f32 %v319, %v7724
      %v7962 = vadd.f32 %v320, %v7728
      %v7963 = vadd.f32 %v321, %v7730
      %v7964 = vadd.f32 %v322, %v7732
      %v7965 = vadd.f32 %v323, %v7734
      %v7966 = vadd.f32 %v324, %v7738
      %v7967 = vadd.f32 %v325, %v7740
      %v7968 = vadd.f32 %v326, %v7742
      %v7969 = vadd.f32 %v327, %v7744
      %v7970 = vadd.f32 %v328, %v7748
      %v7971 = vadd.f32 %v329, %v7750
      %v7972 = vadd.f32 %v330, %v7752
      %v7973 = vadd.f32 %v331, %v7754
      %v7974 = vadd.f32 %v332, %v7758
      %v7975 = vadd.f32 %v333, %v7760
      %v7976 = vadd.f32 %v334, %v7762
      %v7977 = vadd.f32 %v335, %v7764
      %v7978 = vadd.f32 %v336, %v7768
      %v7979 = vadd.f32 %v337, %v7770
      %v7980 = vadd.f32 %v338, %v7772
      %v7981 = vadd.f32 %v339, %v7774
      %v7982 = vadd.f32 %v340, %v7778
      %v7983 = vadd.f32 %v341, %v7780
      %v7984 = vadd.f32 %v342, %v7782
      %v7985 = vadd.f32 %v343, %v7784
      %v7986 = vadd.f32 %v344, %v7788
      %v7987 = vadd.f32 %v345, %v7790
      %v7988 = vadd.f32 %v346, %v7792
      %v7989 = vadd.f32 %v347, %v7794
      %v7990 = vadd.f32 %v348, %v7798
      %v7991 = vadd.f32 %v349, %v7800
      %v7992 = vadd.f32 %v350, %v7802
      %v7993 = vadd.f32 %v351, %v7804
      %v7994 = vadd.f32 %v352, %v7808
      %v7995 = vadd.f32 %v353, %v7810
      %v7996 = vadd.f32 %v354, %v7812
      %v7997 = vadd.f32 %v355, %v7814
      %v7998 = vadd.f32 %v356, %v7818
      %v7999 = vadd.f32 %v357, %v7820
      %v8000 = vadd.f32 %v358, %v7822
      %v8001 = vadd.f32 %v359, %v7824
      %v8002 = vadd.f32 %v360, %v7828
      %v8003 = vadd.f32 %v361, %v7830
      %v8004 = vadd.f32 %v362, %v7832
      %v8005 = vadd.f32 %v363, %v7834
      %v8006 = vadd.f32 %v364, %v7838
      %v8007 = vadd.f32 %v365, %v7840
      %v8008 = vadd.f32 %v366, %v7842
      %v8009 = vadd.f32 %v367, %v7844
      %v8010 = vadd.f32 %v368, %v7848
      %v8011 = vadd.f32 %v369, %v7850
      %v8012 = vadd.f32 %v370, %v7852
      %v8013 = vadd.f32 %v371, %v7854
      %v8014 = vadd.f32 %v372, %v7858
      %v8015 = vadd.f32 %v373, %v7860
      %v8016 = vadd.f32 %v374, %v7862
      %v8017 = vadd.f32 %v375, %v7864
      %v8018 = vadd.f32 %v376, %v7868
      %v8019 = vadd.f32 %v377, %v7870
      %v8020 = vadd.f32 %v378, %v7872
      %v8021 = vadd.f32 %v379, %v7874
      %v8022 = vadd.f32 %v380, %v7878
      %v8023 = vadd.f32 %v381, %v7880
      %v8024 = vadd.f32 %v382, %v7882
      %v8025 = vadd.f32 %v383, %v7884
      %v8026 = vadd.f32 %v384, %v7888
      %v8027 = vadd.f32 %v385, %v7890
      %v8028 = vadd.f32 %v386, %v7892
      %v8029 = vadd.f32 %v387, %v7894
      %v8030 = vadd.f32 %v388, %v7898
      %v8031 = vadd.f32 %v389, %v7900
      %v8032 = vadd.f32 %v390, %v7902
      %v8033 = vadd.f32 %v391, %v7904
      %8034 = vst [vmem:[%s262] sm:$0xff] %v7906
      %8035 = vst [vmem:[%s262 + $0x8] sm:$0xff] %v7907
      %8036 = vst [vmem:[%s262 + $0x10] sm:$0xff] %v7908
      %8037 = vst [vmem:[%s262 + $0x18] sm:$0xff] %v7909
      %8038 = vst [vmem:[%s262 + $0x20] sm:$0xff] %v7910
      %8039 = vst [vmem:[%s262 + $0x28] sm:$0xff] %v7911
      %8040 = vst [vmem:[%s262 + $0x30] sm:$0xff] %v7912
      %8041 = vst [vmem:[%s262 + $0x38] sm:$0xff] %v7913
      %8042 = vst [vmem:[%s262 + $0x40] sm:$0xff] %v7914
      %8043 = vst [vmem:[%s262 + $0x48] sm:$0xff] %v7915
      %8044 = vst [vmem:[%s262 + $0x50] sm:$0xff] %v7916
      %8045 = vst [vmem:[%s262 + $0x58] sm:$0xff] %v7917
      %8046 = vst [vmem:[%s262 + $0x60] sm:$0xff] %v7918
      %8047 = vst [vmem:[%s262 + $0x68] sm:$0xff] %v7919
      %8048 = vst [vmem:[%s262 + $0x70] sm:$0xff] %v7920
      %8049 = vst [vmem:[%s262 + $0x78] sm:$0xff] %v7921
      %8050 = vst [vmem:[%s262 + $0x80] sm:$0xff] %v7922
      %8051 = vst [vmem:[%s262 + $0x88] sm:$0xff] %v7923
      %8052 = vst [vmem:[%s262 + $0x90] sm:$0xff] %v7924
      %8053 = vst [vmem:[%s262 + $0x98] sm:$0xff] %v7925
      %8054 = vst [vmem:[%s262 + $0xa0] sm:$0xff] %v7926
      %8055 = vst [vmem:[%s262 + $0xa8] sm:$0xff] %v7927
      %8056 = vst [vmem:[%s262 + $0xb0] sm:$0xff] %v7928
      %8057 = vst [vmem:[%s262 + $0xb8] sm:$0xff] %v7929
      %8058 = vst [vmem:[%s262 + $0xc0] sm:$0xff] %v7930
      %8059 = vst [vmem:[%s262 + $0xc8] sm:$0xff] %v7931
      %8060 = vst [vmem:[%s262 + $0xd0] sm:$0xff] %v7932
      %8061 = vst [vmem:[%s262 + $0xd8] sm:$0xff] %v7933
      %8062 = vst [vmem:[%s262 + $0xe0] sm:$0xff] %v7934
      %8063 = vst [vmem:[%s262 + $0xe8] sm:$0xff] %v7935
      %8064 = vst [vmem:[%s262 + $0xf0] sm:$0xff] %v7936
      %8065 = vst [vmem:[%s262 + $0xf8] sm:$0xff] %v7937
      %8066 = vst [vmem:[%s262 + $0x100] sm:$0xff] %v7938
      %8067 = vst [vmem:[%s262 + $0x108] sm:$0xff] %v7939
      %8068 = vst [vmem:[%s262 + $0x110] sm:$0xff] %v7940
      %8069 = vst [vmem:[%s262 + $0x118] sm:$0xff] %v7941
      %8070 = vst [vmem:[%s262 + $0x120] sm:$0xff] %v7942
      %8071 = vst [vmem:[%s262 + $0x128] sm:$0xff] %v7943
      %8072 = vst [vmem:[%s262 + $0x130] sm:$0xff] %v7944
      %8073 = vst [vmem:[%s262 + $0x138] sm:$0xff] %v7945
      %8074 = vst [vmem:[%s262 + $0x140] sm:$0xff] %v7946
      %8075 = vst [vmem:[%s262 + $0x148] sm:$0xff] %v7947
      %8076 = vst [vmem:[%s262 + $0x150] sm:$0xff] %v7948
      %8077 = vst [vmem:[%s262 + $0x158] sm:$0xff] %v7949
      %8078 = vst [vmem:[%s262 + $0x160] sm:$0xff] %v7950
      %8079 = vst [vmem:[%s262 + $0x168] sm:$0xff] %v7951
      %8080 = vst [vmem:[%s262 + $0x170] sm:$0xff] %v7952
      %8081 = vst [vmem:[%s262 + $0x178] sm:$0xff] %v7953
      %8082 = vst [vmem:[%s262 + $0x180] sm:$0xff] %v7954
      %8083 = vst [vmem:[%s262 + $0x188] sm:$0xff] %v7955
      %8084 = vst [vmem:[%s262 + $0x190] sm:$0xff] %v7956
      %8085 = vst [vmem:[%s262 + $0x198] sm:$0xff] %v7957
      %8086 = vst [vmem:[%s262 + $0x1a0] sm:$0xff] %v7958
      %8087 = vst [vmem:[%s262 + $0x1a8] sm:$0xff] %v7959
      %8088 = vst [vmem:[%s262 + $0x1b0] sm:$0xff] %v7960
      %8089 = vst [vmem:[%s262 + $0x1b8] sm:$0xff] %v7961
      %8090 = vst [vmem:[%s262 + $0x1c0] sm:$0xff] %v7962
      %8091 = vst [vmem:[%s262 + $0x1c8] sm:$0xff] %v7963
      %8092 = vst [vmem:[%s262 + $0x1d0] sm:$0xff] %v7964
      %8093 = vst [vmem:[%s262 + $0x1d8] sm:$0xff] %v7965
      %8094 = vst [vmem:[%s262 + $0x1e0] sm:$0xff] %v7966
      %8095 = vst [vmem:[%s262 + $0x1e8] sm:$0xff] %v7967
      %8096 = vst [vmem:[%s262 + $0x1f0] sm:$0xff] %v7968
      %8097 = vst [vmem:[%s262 + $0x1f8] sm:$0xff] %v7969
      %8098 = vst [vmem:[%s262 + $0x200] sm:$0xff] %v7970
      %8099 = vst [vmem:[%s262 + $0x208] sm:$0xff] %v7971
      %8100 = vst [vmem:[%s262 + $0x210] sm:$0xff] %v7972
      %8101 = vst [vmem:[%s262 + $0x218] sm:$0xff] %v7973
      %8102 = vst [vmem:[%s262 + $0x220] sm:$0xff] %v7974
      %8103 = vst [vmem:[%s262 + $0x228] sm:$0xff] %v7975
      %8104 = vst [vmem:[%s262 + $0x230] sm:$0xff] %v7976
      %8105 = vst [vmem:[%s262 + $0x238] sm:$0xff] %v7977
      %8106 = vst [vmem:[%s262 + $0x240] sm:$0xff] %v7978
      %8107 = vst [vmem:[%s262 + $0x248] sm:$0xff] %v7979
      %8108 = vst [vmem:[%s262 + $0x250] sm:$0xff] %v7980
      %8109 = vst [vmem:[%s262 + $0x258] sm:$0xff] %v7981
      %8110 = vst [vmem:[%s262 + $0x260] sm:$0xff] %v7982
      %8111 = vst [vmem:[%s262 + $0x268] sm:$0xff] %v7983
      %8112 = vst [vmem:[%s262 + $0x270] sm:$0xff] %v7984
      %8113 = vst [vmem:[%s262 + $0x278] sm:$0xff] %v7985
      %8114 = vst [vmem:[%s262 + $0x280] sm:$0xff] %v7986
      %8115 = vst [vmem:[%s262 + $0x288] sm:$0xff] %v7987
      %8116 = vst [vmem:[%s262 + $0x290] sm:$0xff] %v7988
      %8117 = vst [vmem:[%s262 + $0x298] sm:$0xff] %v7989
      %8118 = vst [vmem:[%s262 + $0x2a0] sm:$0xff] %v7990
      %8119 = vst [vmem:[%s262 + $0x2a8] sm:$0xff] %v7991
      %8120 = vst [vmem:[%s262 + $0x2b0] sm:$0xff] %v7992
      %8121 = vst [vmem:[%s262 + $0x2b8] sm:$0xff] %v7993
      %8122 = vst [vmem:[%s262 + $0x2c0] sm:$0xff] %v7994
      %8123 = vst [vmem:[%s262 + $0x2c8] sm:$0xff] %v7995
      %8124 = vst [vmem:[%s262 + $0x2d0] sm:$0xff] %v7996
      %8125 = vst [vmem:[%s262 + $0x2d8] sm:$0xff] %v7997
      %8126 = vst [vmem:[%s262 + $0x2e0] sm:$0xff] %v7998
      %8127 = vst [vmem:[%s262 + $0x2e8] sm:$0xff] %v7999
      %8128 = vst [vmem:[%s262 + $0x2f0] sm:$0xff] %v8000
      %8129 = vst [vmem:[%s262 + $0x2f8] sm:$0xff] %v8001
      %8130 = vst [vmem:[%s262 + $0x300] sm:$0xff] %v8002
      %8131 = vst [vmem:[%s262 + $0x308] sm:$0xff] %v8003
      %8132 = vst [vmem:[%s262 + $0x310] sm:$0xff] %v8004
      %8133 = vst [vmem:[%s262 + $0x318] sm:$0xff] %v8005
      %8134 = vst [vmem:[%s262 + $0x320] sm:$0xff] %v8006
      %8135 = vst [vmem:[%s262 + $0x328] sm:$0xff] %v8007
      %8136 = vst [vmem:[%s262 + $0x330] sm:$0xff] %v8008
      %8137 = vst [vmem:[%s262 + $0x338] sm:$0xff] %v8009
      %8138 = vst [vmem:[%s262 + $0x340] sm:$0xff] %v8010
      %8139 = vst [vmem:[%s262 + $0x348] sm:$0xff] %v8011
      %8140 = vst [vmem:[%s262 + $0x350] sm:$0xff] %v8012
      %8141 = vst [vmem:[%s262 + $0x358] sm:$0xff] %v8013
      %8142 = vst [vmem:[%s262 + $0x360] sm:$0xff] %v8014
      %8143 = vst [vmem:[%s262 + $0x368] sm:$0xff] %v8015
      %8144 = vst [vmem:[%s262 + $0x370] sm:$0xff] %v8016
      %8145 = vst [vmem:[%s262 + $0x378] sm:$0xff] %v8017
      %8146 = vst [vmem:[%s262 + $0x380] sm:$0xff] %v8018
      %8147 = vst [vmem:[%s262 + $0x388] sm:$0xff] %v8019
      %8148 = vst [vmem:[%s262 + $0x390] sm:$0xff] %v8020
      %8149 = vst [vmem:[%s262 + $0x398] sm:$0xff] %v8021
      %8150 = vst [vmem:[%s262 + $0x3a0] sm:$0xff] %v8022
      %8151 = vst [vmem:[%s262 + $0x3a8] sm:$0xff] %v8023
      %8152 = vst [vmem:[%s262 + $0x3b0] sm:$0xff] %v8024
      %8153 = vst [vmem:[%s262 + $0x3b8] sm:$0xff] %v8025
      %8154 = vst [vmem:[%s262 + $0x3c0] sm:$0xff] %v8026
      %8155 = vst [vmem:[%s262 + $0x3c8] sm:$0xff] %v8027
      %8156 = vst [vmem:[%s262 + $0x3d0] sm:$0xff] %v8028
      %8157 = vst [vmem:[%s262 + $0x3d8] sm:$0xff] %v8029
      %8158 = vst [vmem:[%s262 + $0x3e0] sm:$0xff] %v8030
      %8159 = vst [vmem:[%s262 + $0x3e8] sm:$0xff] %v8031
      %8160 = vst [vmem:[%s262 + $0x3f0] sm:$0xff] %v8032
      %8161 = vst [vmem:[%s262 + $0x3f8] sm:$0xff] %v8033
      %s8162 = smul.u32 2, %s21
      %p8163 = scmp.lt.s32.totalorder %s20, 1
      %s8164 = scalar_select %p8163, %s20, 1
      %p8165 = scmp.lt.s32.totalorder %s8162, 1
      %s8166 = scalar_select %p8165, %s8162, 1
      %s8167 = smul.addr %s8164, 128
      %s8168 = sadd.s32 %s8166, %s8167
      %s8169 = smul.addr %s8168, 8
      %s8170 = scalar_lea.vmem %s5, %s8169
      // Predicated region
      $region41: #{attention_layer.1} parent=39 // pred_check
        %p8171 = pneg %p160
      $region42: #{attention_layer.1} parent=39 // pred_check_branch
        %8173 = sbr.rel (%p8171) target = $region44
      $region43: #{attention_layer.1} parent=39 // pred_region
        %s8174 = smul.u32 2, %s21
      $region44: #{attention_layer.1} parent=39 // pred_fallthru
        _
    $region40: #{attention_layer.1} parent=5 // pred_fallthru
      _
    %p8175 = scmp.le.s32.totalorder 2, %s11
    // Predicated region
    $region45: #{attention_layer.1} parent=5 // pred_check
      %p8176 = pneg %p8175
    $region46: #{attention_layer.1} parent=5 // pred_check_branch
      %8178 = sbr.rel (%p8176) target = $region48
    $region47: #{attention_layer.1} parent=5 // pred_region
      %s8179 = ssub.s32 %s11, 2
      // Predicated region
      $region49: #{attention_layer.1} parent=47 // pred_check
        %p8180 = pneg %p166
      $region50: #{attention_layer.1} parent=47 // pred_check_branch
        %8182 = sbr.rel (%p8180) target = $region52
      $region51: #{attention_layer.1} parent=47 // pred_region
        %s8183 = smul.u32 2, %s23
        %p8184 = scmp.lt.s32.totalorder %s22, 1
        %s8185 = scalar_select %p8184, %s22, 1
        %p8186 = scmp.lt.s32.totalorder %s8183, 1
        %s8187 = scalar_select %p8186, %s8183, 1
        %s8188 = smul.addr %s8185, 128
        %s8189 = sadd.s32 %s8187, %s8188
        %s8190 = smul.addr %s8189, 8
        %s8191 = scalar_lea.vmem %s5, %s8190
      $region52: #{attention_layer.1} parent=47 // pred_fallthru
        _
    $region48: #{attention_layer.1} parent=5 // pred_fallthru
      _
  $region6: #{attention_layer.1} parent=0 // loop_footer
    %s15 = sadd.s32 1, %s11
  $region7: #{attention_layer.1} parent=0 // loop_footer_branch
    %10 = sbr.rel target = $region3
  $region8: #{attention_layer.1} parent=0 // loop_exit
    _

</llo_original>
